<compile_context>
chip_gen: v5e
topology: v5e:2x2
jax: 0.10.0
libtpu: 0.0.40
codegen_flags: <defaults>
</compile_context>

<pallas_src>
import functools

import jax
import jax.numpy as jnp
from jax import lax
from jax.experimental import pallas as pl
from jax.experimental.pallas import tpu as pltpu

LANES = 128

# Sub-pixel (deconv) term table for ConvTranspose2d(k=3, stride=2, padding=1,
# output_padding=1):
#   out[2m+A, 2n+B] = sum over ((dm, dn), (ti, tj)) of
#                     x[m+dm, n+dn] @ W[:, :, ti, tj]
# (x is the deconv input, zero for indices == H_in).
_DECONV_TERMS = {
    (0, 0): (((0, 0), (1, 1)),),
    (0, 1): (((0, 1), (1, 0)), ((0, 0), (1, 2))),
    (1, 0): (((1, 0), (0, 1)), ((0, 0), (2, 1))),
    (1, 1): (((1, 1), (0, 0)), ((1, 0), (0, 2)),
             ((0, 1), (2, 0)), ((0, 0), (2, 2))),
}


# ---------------------------------------------------------------------------
# The fused kernel: conv -> conv -> deconv -> deconv, all in VMEM.
# ---------------------------------------------------------------------------
def _fused_autenc_kernel(p1_ref, w1_ref, w2_ref, w3_ref, w4_ref, b_ref,
                         out_ref, a1_ref, a2_ref, a3_ref, *, nb, s):
    """Shapes (demo: nb=2, s=4):
      p1_ref : (4*nb*s*s, 128)    layer-1 im2col patches, 4 parity groups
                                  stacked along rows (K=27 padded to 128)
      w1_ref : (128, 128)         layer-1 im2col weight (K=27 padded)
      w2/3/4 : (9, 128, 128)      per-tap (Cin, Cout) weight matrices, padded
      b_ref  : (8, 128)           per-layer biases (rows 0..3), padded
      out_ref: (4, 4, nb*s*s, 128) final output, 4x4 sub-pixel phases
      a1/a3  : (4*nb, s+1, s+1, 128) parity-plane padded activations
      a2     : (nb, s+1, s+1, 128)   conv2 output with trailing zero border
    """
    nrow = nb * s * s

    # Zero-init scratch: cells never written below are exactly the zero
    # padding borders the following layers rely on.
    a1_ref[...] = jnp.zeros_like(a1_ref)
    a2_ref[...] = jnp.zeros_like(a2_ref)
    a3_ref[...] = jnp.zeros_like(a3_ref)

    def plane_load(ref, pq, r0, c0):
        blk = ref[pq * nb:(pq + 1) * nb, r0:r0 + s, c0:c0 + s, :]
        return blk.reshape(nrow, LANES)

    def plane_store(ref, pq, r0, c0, val):
        ref[pq * nb:(pq + 1) * nb, r0:r0 + s, c0:c0 + s, :] = (
            val.reshape(nb, s, s, LANES))

    # ---- layer 1: Conv2d(3 -> 5, k3, s2, p1) + ReLU -----------------------
    # All four output-parity groups share the same im2col weight, so the whole
    # layer is ONE (4*nrow, 128) @ (128, 128) matmul; each group's rows land
    # contiguously in the parity-plane layout of the padded act1.
    b1 = b_ref[0:1, :]
    acc1 = jnp.dot(p1_ref[...], w1_ref[...],
                   preferred_element_type=jnp.float32)
    acc1 = jnp.maximum(acc1 + b1, 0.0)
    for alpha in range(2):
        for beta in range(2):
            g = alpha * 2 + beta
            blk = acc1[g * nrow:(g + 1) * nrow, :]
            p, q = (alpha + 1) % 2, (beta + 1) % 2
            plane_store(a1_ref, p * 2 + q,
                        (alpha + 1) // 2, (beta + 1) // 2, blk)

    # ---- layer 2: Conv2d(5 -> 10, k3, s2, p1) + ReLU ----------------------
    # 9 taps; each tap is a contiguous slice of one parity plane of act1.
    b2 = b_ref[1:2, :]
    acc2 = None
    for di in range(3):
        for dj in range(3):
            pq = (di % 2) * 2 + (dj % 2)
            lhs = plane_load(a1_ref, pq, di // 2, dj // 2)
            term = jnp.dot(lhs, w2_ref[di * 3 + dj],
                           preferred_element_type=jnp.float32)
            acc2 = term if acc2 is None else acc2 + term
    acc2 = jnp.maximum(acc2 + b2, 0.0)
    a2_ref[:, 0:s, 0:s, :] = acc2.reshape(nb, s, s, LANES)

    # ---- layer 3: ConvTranspose2d(10 -> 5, k3, s2, p1, op1) + ReLU --------
    # Sub-pixel decomposition: no zero-inserted input, no wasted MACs.
    b3 = b_ref[2:3, :]
    x3 = {}
    for dm in range(2):
        for dn in range(2):
            x3[(dm, dn)] = a2_ref[:, dm:dm + s, dn:dn + s, :].reshape(
                nrow, LANES)
    for A in range(2):
        for B in range(2):
            acc = None
            for (dm, dn), (ti, tj) in _DECONV_TERMS[(A, B)]:
                term = jnp.dot(x3[(dm, dn)], w3_ref[ti * 3 + tj],
                               preferred_element_type=jnp.float32)
                acc = term if acc is None else acc + term
            acc = jnp.maximum(acc + b3, 0.0)
            # phase (A, B) of the 8x8 output is plane (A, B) of act3.
            plane_store(a3_ref, A * 2 + B, 0, 0, acc)

    # ---- layer 4: ConvTranspose2d(5 -> 2, k3, s2, p1, op1) ----------------
    # Decompose both the deconv output phase (A, B) and the input parity
    # (a, b) so every operand is a contiguous slice of an act3 parity plane.
    b4 = b_ref[3:4, :]
    for a in range(2):
        for b in range(2):
            x4 = {}
            for dm in range(2):
                for dn in range(2):
                    u, v = a + dm, b + dn
                    pq = (u % 2) * 2 + (v % 2)
                    x4[(dm, dn)] = plane_load(a3_ref, pq, u // 2, v // 2)
            for A in range(2):
                for B in range(2):
                    acc = None
                    for (dm, dn), (ti, tj) in _DECONV_TERMS[(A, B)]:
                        term = jnp.dot(x4[(dm, dn)], w4_ref[ti * 3 + tj],
                                       preferred_element_type=jnp.float32)
                        acc = term if acc is None else acc + term
                    # output row = 4m + 2a + A, col = 4n + 2b + B
                    out_ref[2 * a + A, 2 * b + B, :, :] = acc + b4


# ---------------------------------------------------------------------------
# One-time parameter packing (hoisted out of the forward pass).
# ---------------------------------------------------------------------------
def _pack_params(p):
    def pad2(m):
        return jnp.pad(m, ((0, LANES - m.shape[0]), (0, LANES - m.shape[1])))

    def pad_taps(w):
        return jnp.pad(w, ((0, 0), (0, LANES - w.shape[1]),
                           (0, LANES - w.shape[2])))

    # layer 1: im2col weight, K ordered (di, dj, ci), padded to 128x128.
    w1m = pad2(jnp.transpose(p["w1"], (2, 3, 1, 0)).reshape(27, 5))
    # conv taps: (di,dj) -> (ci, co) with W[co, ci, di, dj].
    w2t = pad_taps(jnp.transpose(p["w2"], (2, 3, 1, 0)).reshape(9, 5, 10))
    # deconv taps: (ti,tj) -> (ci, co) with W[ci, co, ti, tj].
    w3t = pad_taps(jnp.transpose(p["w3"], (2, 3, 0, 1)).reshape(9, 10, 5))
    w4t = pad_taps(jnp.transpose(p["w4"], (2, 3, 0, 1)).reshape(9, 5, 2))

    def padb(b):
        return jnp.pad(b, (0, LANES - b.shape[0]))

    b_all = jnp.stack([padb(p["b1"]), padb(p["b2"]),
                       padb(p["b3"]), padb(p["b4"])])
    b_all = jnp.pad(b_all, ((0, 4), (0, 0)))          # (8, 128), sublane align
    return {"w1": w1m, "w2": w2t, "w3": w3t, "w4": w4t, "b": b_all}


# ---------------------------------------------------------------------------
# Wrapper glue: layer-1 im2col (parity grouped) + final phase de-interleave.
# ---------------------------------------------------------------------------
def _layer1_patches(x_nchw):
    n = x_nchw.shape[0]
    s = x_nchw.shape[2] // 4
    x = jnp.transpose(x_nchw, (0, 2, 3, 1))                # NCHW -> NHWC
    xp = jnp.pad(x, ((0, 0), (1, 1), (1, 1), (0, 0)))      # (n, H+2, W+2, 3)
    length = 4 * s - 3
    groups = []
    for alpha in range(2):
        for beta in range(2):
            taps = []
            for di in range(3):
                for dj in range(3):
                    r0 = 2 * alpha + di
                    c0 = 2 * beta + dj
                    taps.append(xp[:, r0:r0 + length:4, c0:c0 + length:4, :])
            g = jnp.stack(taps, axis=3).reshape(n * s * s, 27)
            groups.append(g)
    p1 = jnp.concatenate(groups, axis=0)                   # (4*n*s*s, 27)
    return jnp.pad(p1, ((0, 0), (0, LANES - 27)))


def aut_enc_a_forward(x_nchw, packed):
    nb, _, hh, ww = x_nchw.shape
    assert hh == ww and hh % 4 == 0
    s = hh // 4
    nrow = nb * s * s
    p1 = _layer1_patches(x_nchw)

    kernel = functools.partial(_fused_autenc_kernel, nb=nb, s=s)
    out = pl.pallas_call(
        kernel,
        out_shape=jax.ShapeDtypeStruct((4, 4, nrow, LANES), jnp.float32),
        grid=(1,),
        in_specs=[
            pl.BlockSpec((4 * nrow, LANES), lambda i: (0, 0)),
            pl.BlockSpec((LANES, LANES), lambda i: (0, 0)),
            pl.BlockSpec((9, LANES, LANES), lambda i: (0, 0, 0)),
            pl.BlockSpec((9, LANES, LANES), lambda i: (0, 0, 0)),
            pl.BlockSpec((9, LANES, LANES), lambda i: (0, 0, 0)),
            pl.BlockSpec((8, LANES), lambda i: (0, 0)),
        ],
        out_specs=pl.BlockSpec((4, 4, nrow, LANES), lambda i: (0, 0, 0, 0)),
        scratch_shapes=[
            pltpu.VMEM((4 * nb, s + 1, s + 1, LANES), jnp.float32),  # act1
            pltpu.VMEM((nb, s + 1, s + 1, LANES), jnp.float32),      # act2
            pltpu.VMEM((4 * nb, s + 1, s + 1, LANES), jnp.float32),  # act3
        ],
        compiler_params=pltpu.CompilerParams(
            dimension_semantics=("arbitrary",)),
    )(p1, packed["w1"], packed["w2"], packed["w3"], packed["w4"], packed["b"])

    # De-interleave the 4x4 sub-pixel phases of the final deconv output.
    out = out.reshape(4, 4, nb, s, s, LANES)
    out = jnp.transpose(out, (2, 3, 0, 4, 1, 5)).reshape(nb, 4 * s, 4 * s,
                                                         LANES)
    out = out[..., :2]                                 # real output channels
    return jnp.transpose(out, (0, 3, 1, 2))            # NHWC -> NCHW


# ---------------------------------------------------------------------------
# Pure-JAX reference and parameter init (PyTorch layouts).
# ---------------------------------------------------------------------------
def aut_enc_a_reference(x, p):
    dn = ("NCHW", "OIHW", "NCHW")
    h = lax.conv_general_dilated(x, p["w1"], (2, 2), [(1, 1), (1, 1)],
                                 dimension_numbers=dn)
    h = jnp.maximum(h + p["b1"][None, :, None, None], 0.0)
    h = lax.conv_general_dilated(h, p["w2"], (2, 2), [(1, 1), (1, 1)],
                                 dimension_numbers=dn)
    h = jnp.maximum(h + p["b2"][None, :, None, None], 0.0)
    w3c = jnp.transpose(p["w3"][:, :, ::-1, ::-1], (1, 0, 2, 3))
    h = lax.conv_general_dilated(h, w3c, (1, 1), [(1, 2), (1, 2)],
                                 lhs_dilation=(2, 2), dimension_numbers=dn)
    h = jnp.maximum(h + p["b3"][None, :, None, None], 0.0)
    w4c = jnp.transpose(p["w4"][:, :, ::-1, ::-1], (1, 0, 2, 3))
    h = lax.conv_general_dilated(h, w4c, (1, 1), [(1, 2), (1, 2)],
                                 lhs_dilation=(2, 2), dimension_numbers=dn)
    return h + p["b4"][None, :, None, None]


def init_params(key):
    ks = jax.random.split(key, 8)

    def u(k, shape, fan_in):
        bound = 1.0 / jnp.sqrt(fan_in)
        return jax.random.uniform(k, shape, jnp.float32, -bound, bound)

    return {
        # Conv2d(3, 5, 3): weight (OC, IC, KH, KW)
        "w1": u(ks[0], (5, 3, 3, 3), 3 * 9), "b1": u(ks[1], (5,), 3 * 9),
        # Conv2d(5, 10, 3)
        "w2": u(ks[2], (10, 5, 3, 3), 5 * 9), "b2": u(ks[3], (10,), 5 * 9),
        # ConvTranspose2d(10, 5, 3): weight (IC, OC, KH, KW)
        "w3": u(ks[4], (10, 5, 3, 3), 10 * 9), "b3": u(ks[5], (5,), 10 * 9),
        # ConvTranspose2d(5, 2, 3)
        "w4": u(ks[6], (5, 2, 3, 3), 5 * 9), "b4": u(ks[7], (2,), 5 * 9),
    }


if __name__ == "__main__":
    key = jax.random.PRNGKey(0)
    k_x, k_p = jax.random.split(key)
    x = jax.random.normal(k_x, (2, 3, 16, 16), jnp.float32)   # NCHW like torch
    params = init_params(k_p)

    packed = _pack_params(params)            # one-time weight packing
    fwd = jax.jit(aut_enc_a_forward)

    out = jax.block_until_ready(fwd(x, packed))
    ref = jax.block_until_ready(aut_enc_a_reference(x, params))

    assert out.shape == (2, 2, 16, 16), out.shape
    assert jnp.allclose(out, ref, rtol=1e-4, atol=1e-4), \
        float(jnp.max(jnp.abs(out - ref)))
    print("KERNEL_OK")
</pallas_src>

<mosaic_0001>
module attributes {stable_mosaic.version = 11 : i64} {
  func.func @_fused_autenc_kernel(%arg0: i32, %arg1: memref<128x128xf32, #tpu.memory_space<vmem>>, %arg2: memref<128x128xf32, #tpu.memory_space<vmem>>, %arg3: memref<9x128x128xf32, #tpu.memory_space<vmem>>, %arg4: memref<9x128x128xf32, #tpu.memory_space<vmem>>, %arg5: memref<9x128x128xf32, #tpu.memory_space<vmem>>, %arg6: memref<8x128xf32, #tpu.memory_space<vmem>>, %arg7: memref<4x4x32x128xf32, #tpu.memory_space<vmem>>, %arg8: memref<8x5x5x128xf32, #tpu.memory_space<vmem>>, %arg9: memref<2x5x5x128xf32, #tpu.memory_space<vmem>>, %arg10: memref<8x5x5x128xf32, #tpu.memory_space<vmem>>) attributes {dimension_semantics = [#tpu.dimension_semantics<arbitrary>], iteration_bounds = array<i64: 1>, scalar_prefetch = 0 : i64, scratch_operands = 3 : i64, tpu.core_type = #tpu.core_type<tc>, window_params = [{pipeline_mode = #tpu.pipeline_mode<synchronous>, transform_indices = @transform_0, window_bounds = array<i64: 128, 128>}, {pipeline_mode = #tpu.pipeline_mode<synchronous>, transform_indices = @transform_1, window_bounds = array<i64: 128, 128>}, {pipeline_mode = #tpu.pipeline_mode<synchronous>, transform_indices = @transform_2, window_bounds = array<i64: 9, 128, 128>}, {pipeline_mode = #tpu.pipeline_mode<synchronous>, transform_indices = @transform_3, window_bounds = array<i64: 9, 128, 128>}, {pipeline_mode = #tpu.pipeline_mode<synchronous>, transform_indices = @transform_4, window_bounds = array<i64: 9, 128, 128>}, {pipeline_mode = #tpu.pipeline_mode<synchronous>, transform_indices = @transform_5, window_bounds = array<i64: 8, 128>}, {pipeline_mode = #tpu.pipeline_mode<synchronous>, transform_indices = @transform_6, window_bounds = array<i64: 4, 4, 32, 128>}]} {
    %cst = arith.constant 0.000000e+00 : f32
    %0 = vector.broadcast %cst : f32 to vector<8x5x5x128xf32>
    %c0 = arith.constant 0 : index
    %c0_0 = arith.constant 0 : index
    %c0_1 = arith.constant 0 : index
    %c0_2 = arith.constant 0 : index
    %1 = vector.load %arg8[%c0, %c0_0, %c0_1, %c0_2] : memref<8x5x5x128xf32, #tpu.memory_space<vmem>>, vector<8x5x5x128xf32>
    tpu.vector_store %arg8[%c0, %c0_0, %c0_1, %c0_2], %0 {strides = array<i32>} : memref<8x5x5x128xf32, #tpu.memory_space<vmem>>, vector<8x5x5x128xf32>,
    %cst_3 = arith.constant 0.000000e+00 : f32
    %2 = vector.broadcast %cst_3 : f32 to vector<2x5x5x128xf32>
    %c0_4 = arith.constant 0 : index
    %c0_5 = arith.constant 0 : index
    %c0_6 = arith.constant 0 : index
    %c0_7 = arith.constant 0 : index
    %3 = vector.load %arg9[%c0_4, %c0_5, %c0_6, %c0_7] : memref<2x5x5x128xf32, #tpu.memory_space<vmem>>, vector<2x5x5x128xf32>
    tpu.vector_store %arg9[%c0_4, %c0_5, %c0_6, %c0_7], %2 {strides = array<i32>} : memref<2x5x5x128xf32, #tpu.memory_space<vmem>>, vector<2x5x5x128xf32>,
    %cst_8 = arith.constant 0.000000e+00 : f32
    %4 = vector.broadcast %cst_8 : f32 to vector<8x5x5x128xf32>
    %c0_9 = arith.constant 0 : index
    %c0_10 = arith.constant 0 : index
    %c0_11 = arith.constant 0 : index
    %c0_12 = arith.constant 0 : index
    %5 = vector.load %arg10[%c0_9, %c0_10, %c0_11, %c0_12] : memref<8x5x5x128xf32, #tpu.memory_space<vmem>>, vector<8x5x5x128xf32>
    tpu.vector_store %arg10[%c0_9, %c0_10, %c0_11, %c0_12], %4 {strides = array<i32>} : memref<8x5x5x128xf32, #tpu.memory_space<vmem>>, vector<8x5x5x128xf32>,
    %c0_13 = arith.constant 0 : index
    %c0_14 = arith.constant 0 : index
    %6 = vector.load %arg6[%c0_13, %c0_14] : memref<8x128xf32, #tpu.memory_space<vmem>>, vector<1x128xf32>
    %c0_15 = arith.constant 0 : index
    %c0_16 = arith.constant 0 : index
    %7 = vector.load %arg1[%c0_15, %c0_16] : memref<128x128xf32, #tpu.memory_space<vmem>>, vector<128x128xf32>
    %c0_17 = arith.constant 0 : index
    %c0_18 = arith.constant 0 : index
    %8 = vector.load %arg2[%c0_17, %c0_18] : memref<128x128xf32, #tpu.memory_space<vmem>>, vector<128x128xf32>
    %cst_19 = arith.constant dense<0.000000e+00> : vector<128x128xf32>
    %9 = tpu.matmul %7, %8, %cst_19 {dimension_numbers = #tpu.dot_dimension_numbers<[1], [0], [0], [1], [0, 0, 1, 1], [], []>} : vector<128x128xf32>, vector<128x128xf32>, vector<128x128xf32> -> vector<128x128xf32>
    %10 = vector.broadcast %6 : vector<1x128xf32> to vector<128x128xf32>
    %11 = arith.addf %9, %10 : vector<128x128xf32>
    %cst_20 = arith.constant 0.000000e+00 : f32
    %12 = vector.broadcast %cst_20 : f32 to vector<128x128xf32>
    %13 = arith.maximumf %11, %12 : vector<128x128xf32>
    %14 = vector.extract_strided_slice %13 {offsets = [0, 0], sizes = [32, 128], strides = [1, 1]} : vector<128x128xf32> to vector<32x128xf32>
    %15 = vector.shape_cast %14 : vector<32x128xf32> to vector<2x4x4x128xf32>
    %c6 = arith.constant 6 : index
    %c0_21 = arith.constant 0 : index
    %c0_22 = arith.constant 0 : index
    %c0_23 = arith.constant 0 : index
    %16 = vector.load %arg8[%c6, %c0_21, %c0_22, %c0_23] : memref<8x5x5x128xf32, #tpu.memory_space<vmem>>, vector<2x4x4x128xf32>
    tpu.vector_store %arg8[%c6, %c0_21, %c0_22, %c0_23], %15 {strides = array<i32>} : memref<8x5x5x128xf32, #tpu.memory_space<vmem>>, vector<2x4x4x128xf32>,
    %17 = vector.extract_strided_slice %13 {offsets = [32, 0], sizes = [32, 128], strides = [1, 1]} : vector<128x128xf32> to vector<32x128xf32>
    %18 = vector.shape_cast %17 : vector<32x128xf32> to vector<2x4x4x128xf32>
    %c4 = arith.constant 4 : index
    %c0_24 = arith.constant 0 : index
    %c1 = arith.constant 1 : index
    %c0_25 = arith.constant 0 : index
    %19 = vector.load %arg8[%c4, %c0_24, %c1, %c0_25] : memref<8x5x5x128xf32, #tpu.memory_space<vmem>>, vector<2x4x4x128xf32>
    tpu.vector_store %arg8[%c4, %c0_24, %c1, %c0_25], %18 {strides = array<i32>} : memref<8x5x5x128xf32, #tpu.memory_space<vmem>>, vector<2x4x4x128xf32>,
    %20 = vector.extract_strided_slice %13 {offsets = [64, 0], sizes = [32, 128], strides = [1, 1]} : vector<128x128xf32> to vector<32x128xf32>
    %21 = vector.shape_cast %20 : vector<32x128xf32> to vector<2x4x4x128xf32>
    %c2 = arith.constant 2 : index
    %c1_26 = arith.constant 1 : index
    %c0_27 = arith.constant 0 : index
    %c0_28 = arith.constant 0 : index
    %22 = vector.load %arg8[%c2, %c1_26, %c0_27, %c0_28] : memref<8x5x5x128xf32, #tpu.memory_space<vmem>>, vector<2x4x4x128xf32>
    tpu.vector_store %arg8[%c2, %c1_26, %c0_27, %c0_28], %21 {strides = array<i32>} : memref<8x5x5x128xf32, #tpu.memory_space<vmem>>, vector<2x4x4x128xf32>,
    %23 = vector.extract_strided_slice %13 {offsets = [96, 0], sizes = [32, 128], strides = [1, 1]} : vector<128x128xf32> to vector<32x128xf32>
    %24 = vector.shape_cast %23 : vector<32x128xf32> to vector<2x4x4x128xf32>
    %c0_29 = arith.constant 0 : index
    %c1_30 = arith.constant 1 : index
    %c1_31 = arith.constant 1 : index
    %c0_32 = arith.constant 0 : index
    %25 = vector.load %arg8[%c0_29, %c1_30, %c1_31, %c0_32] : memref<8x5x5x128xf32, #tpu.memory_space<vmem>>, vector<2x4x4x128xf32>
    tpu.vector_store %arg8[%c0_29, %c1_30, %c1_31, %c0_32], %24 {strides = array<i32>} : memref<8x5x5x128xf32, #tpu.memory_space<vmem>>, vector<2x4x4x128xf32>,
    %c1_33 = arith.constant 1 : index
    %c0_34 = arith.constant 0 : index
    %26 = vector.load %arg6[%c1_33, %c0_34] : memref<8x128xf32, #tpu.memory_space<vmem>>, vector<1x128xf32>
    %c0_35 = arith.constant 0 : index
    %c0_36 = arith.constant 0 : index
    %c0_37 = arith.constant 0 : index
    %c0_38 = arith.constant 0 : index
    %27 = vector.load %arg8[%c0_35, %c0_36, %c0_37, %c0_38] : memref<8x5x5x128xf32, #tpu.memory_space<vmem>>, vector<2x4x4x128xf32>
    %28 = vector.shape_cast %27 : vector<2x4x4x128xf32> to vector<32x128xf32>
    %c0_39 = arith.constant 0 : index
    %c0_40 = arith.constant 0 : index
    %c0_41 = arith.constant 0 : index
    %29 = vector.load %arg3[%c0_39, %c0_40, %c0_41] : memref<9x128x128xf32, #tpu.memory_space<vmem>>, vector<1x128x128xf32>
    %30 = vector.shape_cast %29 : vector<1x128x128xf32> to vector<128x128xf32>
    %cst_42 = arith.constant dense<0.000000e+00> : vector<32x128xf32>
    %31 = tpu.matmul %28, %30, %cst_42 {dimension_numbers = #tpu.dot_dimension_numbers<[1], [0], [0], [1], [0, 0, 1, 1], [], []>} : vector<32x128xf32>, vector<128x128xf32>, vector<32x128xf32> -> vector<32x128xf32>
    %c2_43 = arith.constant 2 : index
    %c0_44 = arith.constant 0 : index
    %c0_45 = arith.constant 0 : index
    %c0_46 = arith.constant 0 : index
    %32 = vector.load %arg8[%c2_43, %c0_44, %c0_45, %c0_46] : memref<8x5x5x128xf32, #tpu.memory_space<vmem>>, vector<2x4x4x128xf32>
    %33 = vector.shape_cast %32 : vector<2x4x4x128xf32> to vector<32x128xf32>
    %c1_47 = arith.constant 1 : index
    %c0_48 = arith.constant 0 : index
    %c0_49 = arith.constant 0 : index
    %34 = vector.load %arg3[%c1_47, %c0_48, %c0_49] : memref<9x128x128xf32, #tpu.memory_space<vmem>>, vector<1x128x128xf32>
    %35 = vector.shape_cast %34 : vector<1x128x128xf32> to vector<128x128xf32>
    %cst_50 = arith.constant dense<0.000000e+00> : vector<32x128xf32>
    %36 = tpu.matmul %33, %35, %cst_50 {dimension_numbers = #tpu.dot_dimension_numbers<[1], [0], [0], [1], [0, 0, 1, 1], [], []>} : vector<32x128xf32>, vector<128x128xf32>, vector<32x128xf32> -> vector<32x128xf32>
    %37 = arith.addf %31, %36 : vector<32x128xf32>
    %c0_51 = arith.constant 0 : index
    %c0_52 = arith.constant 0 : index
    %c1_53 = arith.constant 1 : index
    %c0_54 = arith.constant 0 : index
    %38 = vector.load %arg8[%c0_51, %c0_52, %c1_53, %c0_54] : memref<8x5x5x128xf32, #tpu.memory_space<vmem>>, vector<2x4x4x128xf32>
    %39 = vector.shape_cast %38 : vector<2x4x4x128xf32> to vector<32x128xf32>
    %c2_55 = arith.constant 2 : index
    %c0_56 = arith.constant 0 : index
    %c0_57 = arith.constant 0 : index
    %40 = vector.load %arg3[%c2_55, %c0_56, %c0_57] : memref<9x128x128xf32, #tpu.memory_space<vmem>>, vector<1x128x128xf32>
    %41 = vector.shape_cast %40 : vector<1x128x128xf32> to vector<128x128xf32>
    %cst_58 = arith.constant dense<0.000000e+00> : vector<32x128xf32>
    %42 = tpu.matmul %39, %41, %cst_58 {dimension_numbers = #tpu.dot_dimension_numbers<[1], [0], [0], [1], [0, 0, 1, 1], [], []>} : vector<32x128xf32>, vector<128x128xf32>, vector<32x128xf32> -> vector<32x128xf32>
    %43 = arith.addf %37, %42 : vector<32x128xf32>
    %c4_59 = arith.constant 4 : index
    %c0_60 = arith.constant 0 : index
    %c0_61 = arith.constant 0 : index
    %c0_62 = arith.constant 0 : index
    %44 = vector.load %arg8[%c4_59, %c0_60, %c0_61, %c0_62] : memref<8x5x5x128xf32, #tpu.memory_space<vmem>>, vector<2x4x4x128xf32>
    %45 = vector.shape_cast %44 : vector<2x4x4x128xf32> to vector<32x128xf32>
    %c3 = arith.constant 3 : index
    %c0_63 = arith.constant 0 : index
    %c0_64 = arith.constant 0 : index
    %46 = vector.load %arg3[%c3, %c0_63, %c0_64] : memref<9x128x128xf32, #tpu.memory_space<vmem>>, vector<1x128x128xf32>
    %47 = vector.shape_cast %46 : vector<1x128x128xf32> to vector<128x128xf32>
    %cst_65 = arith.constant dense<0.000000e+00> : vector<32x128xf32>
    %48 = tpu.matmul %45, %47, %cst_65 {dimension_numbers = #tpu.dot_dimension_numbers<[1], [0], [0], [1], [0, 0, 1, 1], [], []>} : vector<32x128xf32>, vector<128x128xf32>, vector<32x128xf32> -> vector<32x128xf32>
    %49 = arith.addf %43, %48 : vector<32x128xf32>
    %c6_66 = arith.constant 6 : index
    %c0_67 = arith.constant 0 : index
    %c0_68 = arith.constant 0 : index
    %c0_69 = arith.constant 0 : index
    %50 = vector.load %arg8[%c6_66, %c0_67, %c0_68, %c0_69] : memref<8x5x5x128xf32, #tpu.memory_space<vmem>>, vector<2x4x4x128xf32>
    %51 = vector.shape_cast %50 : vector<2x4x4x128xf32> to vector<32x128xf32>
    %c4_70 = arith.constant 4 : index
    %c0_71 = arith.constant 0 : index
    %c0_72 = arith.constant 0 : index
    %52 = vector.load %arg3[%c4_70, %c0_71, %c0_72] : memref<9x128x128xf32, #tpu.memory_space<vmem>>, vector<1x128x128xf32>
    %53 = vector.shape_cast %52 : vector<1x128x128xf32> to vector<128x128xf32>
    %cst_73 = arith.constant dense<0.000000e+00> : vector<32x128xf32>
    %54 = tpu.matmul %51, %53, %cst_73 {dimension_numbers = #tpu.dot_dimension_numbers<[1], [0], [0], [1], [0, 0, 1, 1], [], []>} : vector<32x128xf32>, vector<128x128xf32>, vector<32x128xf32> -> vector<32x128xf32>
    %55 = arith.addf %49, %54 : vector<32x128xf32>
    %c4_74 = arith.constant 4 : index
    %c0_75 = arith.constant 0 : index
    %c1_76 = arith.constant 1 : index
    %c0_77 = arith.constant 0 : index
    %56 = vector.load %arg8[%c4_74, %c0_75, %c1_76, %c0_77] : memref<8x5x5x128xf32, #tpu.memory_space<vmem>>, vector<2x4x4x128xf32>
    %57 = vector.shape_cast %56 : vector<2x4x4x128xf32> to vector<32x128xf32>
    %c5 = arith.constant 5 : index
    %c0_78 = arith.constant 0 : index
    %c0_79 = arith.constant 0 : index
    %58 = vector.load %arg3[%c5, %c0_78, %c0_79] : memref<9x128x128xf32, #tpu.memory_space<vmem>>, vector<1x128x128xf32>
    %59 = vector.shape_cast %58 : vector<1x128x128xf32> to vector<128x128xf32>
    %cst_80 = arith.constant dense<0.000000e+00> : vector<32x128xf32>
    %60 = tpu.matmul %57, %59, %cst_80 {dimension_numbers = #tpu.dot_dimension_numbers<[1], [0], [0], [1], [0, 0, 1, 1], [], []>} : vector<32x128xf32>, vector<128x128xf32>, vector<32x128xf32> -> vector<32x128xf32>
    %61 = arith.addf %55, %60 : vector<32x128xf32>
    %c0_81 = arith.constant 0 : index
    %c1_82 = arith.constant 1 : index
    %c0_83 = arith.constant 0 : index
    %c0_84 = arith.constant 0 : index
    %62 = vector.load %arg8[%c0_81, %c1_82, %c0_83, %c0_84] : memref<8x5x5x128xf32, #tpu.memory_space<vmem>>, vector<2x4x4x128xf32>
    %63 = vector.shape_cast %62 : vector<2x4x4x128xf32> to vector<32x128xf32>
    %c6_85 = arith.constant 6 : index
    %c0_86 = arith.constant 0 : index
    %c0_87 = arith.constant 0 : index
    %64 = vector.load %arg3[%c6_85, %c0_86, %c0_87] : memref<9x128x128xf32, #tpu.memory_space<vmem>>, vector<1x128x128xf32>
    %65 = vector.shape_cast %64 : vector<1x128x128xf32> to vector<128x128xf32>
    %cst_88 = arith.constant dense<0.000000e+00> : vector<32x128xf32>
    %66 = tpu.matmul %63, %65, %cst_88 {dimension_numbers = #tpu.dot_dimension_numbers<[1], [0], [0], [1], [0, 0, 1, 1], [], []>} : vector<32x128xf32>, vector<128x128xf32>, vector<32x128xf32> -> vector<32x128xf32>
    %67 = arith.addf %61, %66 : vector<32x128xf32>
    %c2_89 = arith.constant 2 : index
    %c1_90 = arith.constant 1 : index
    %c0_91 = arith.constant 0 : index
    %c0_92 = arith.constant 0 : index
    %68 = vector.load %arg8[%c2_89, %c1_90, %c0_91, %c0_92] : memref<8x5x5x128xf32, #tpu.memory_space<vmem>>, vector<2x4x4x128xf32>
    %69 = vector.shape_cast %68 : vector<2x4x4x128xf32> to vector<32x128xf32>
    %c7 = arith.constant 7 : index
    %c0_93 = arith.constant 0 : index
    %c0_94 = arith.constant 0 : index
    %70 = vector.load %arg3[%c7, %c0_93, %c0_94] : memref<9x128x128xf32, #tpu.memory_space<vmem>>, vector<1x128x128xf32>
    %71 = vector.shape_cast %70 : vector<1x128x128xf32> to vector<128x128xf32>
    %cst_95 = arith.constant dense<0.000000e+00> : vector<32x128xf32>
    %72 = tpu.matmul %69, %71, %cst_95 {dimension_numbers = #tpu.dot_dimension_numbers<[1], [0], [0], [1], [0, 0, 1, 1], [], []>} : vector<32x128xf32>, vector<128x128xf32>, vector<32x128xf32> -> vector<32x128xf32>
    %73 = arith.addf %67, %72 : vector<32x128xf32>
    %c0_96 = arith.constant 0 : index
    %c1_97 = arith.constant 1 : index
    %c1_98 = arith.constant 1 : index
    %c0_99 = arith.constant 0 : index
    %74 = vector.load %arg8[%c0_96, %c1_97, %c1_98, %c0_99] : memref<8x5x5x128xf32, #tpu.memory_space<vmem>>, vector<2x4x4x128xf32>
    %75 = vector.shape_cast %74 : vector<2x4x4x128xf32> to vector<32x128xf32>
    %c8 = arith.constant 8 : index
    %c0_100 = arith.constant 0 : index
    %c0_101 = arith.constant 0 : index
    %76 = vector.load %arg3[%c8, %c0_100, %c0_101] : memref<9x128x128xf32, #tpu.memory_space<vmem>>, vector<1x128x128xf32>
    %77 = vector.shape_cast %76 : vector<1x128x128xf32> to vector<128x128xf32>
    %cst_102 = arith.constant dense<0.000000e+00> : vector<32x128xf32>
    %78 = tpu.matmul %75, %77, %cst_102 {dimension_numbers = #tpu.dot_dimension_numbers<[1], [0], [0], [1], [0, 0, 1, 1], [], []>} : vector<32x128xf32>, vector<128x128xf32>, vector<32x128xf32> -> vector<32x128xf32>
    %79 = arith.addf %73, %78 : vector<32x128xf32>
    %80 = vector.broadcast %26 : vector<1x128xf32> to vector<32x128xf32>
    %81 = arith.addf %79, %80 : vector<32x128xf32>
    %cst_103 = arith.constant 0.000000e+00 : f32
    %82 = vector.broadcast %cst_103 : f32 to vector<32x128xf32>
    %83 = arith.maximumf %81, %82 : vector<32x128xf32>
    %84 = vector.shape_cast %83 : vector<32x128xf32> to vector<2x4x4x128xf32>
    %c0_104 = arith.constant 0 : index
    %c0_105 = arith.constant 0 : index
    %c0_106 = arith.constant 0 : index
    %c0_107 = arith.constant 0 : index
    %85 = vector.load %arg9[%c0_104, %c0_105, %c0_106, %c0_107] : memref<2x5x5x128xf32, #tpu.memory_space<vmem>>, vector<2x4x4x128xf32>
    tpu.vector_store %arg9[%c0_104, %c0_105, %c0_106, %c0_107], %84 {strides = array<i32>} : memref<2x5x5x128xf32, #tpu.memory_space<vmem>>, vector<2x4x4x128xf32>,
    %c2_108 = arith.constant 2 : index
    %c0_109 = arith.constant 0 : index
    %86 = vector.load %arg6[%c2_108, %c0_109] : memref<8x128xf32, #tpu.memory_space<vmem>>, vector<1x128xf32>
    %c0_110 = arith.constant 0 : index
    %c0_111 = arith.constant 0 : index
    %c0_112 = arith.constant 0 : index
    %c0_113 = arith.constant 0 : index
    %87 = vector.load %arg9[%c0_110, %c0_111, %c0_112, %c0_113] : memref<2x5x5x128xf32, #tpu.memory_space<vmem>>, vector<2x4x4x128xf32>
    %88 = vector.shape_cast %87 : vector<2x4x4x128xf32> to vector<32x128xf32>
    %c0_114 = arith.constant 0 : index
    %c0_115 = arith.constant 0 : index
    %c1_116 = arith.constant 1 : index
    %c0_117 = arith.constant 0 : index
    %89 = vector.load %arg9[%c0_114, %c0_115, %c1_116, %c0_117] : memref<2x5x5x128xf32, #tpu.memory_space<vmem>>, vector<2x4x4x128xf32>
    %90 = vector.shape_cast %89 : vector<2x4x4x128xf32> to vector<32x128xf32>
    %c0_118 = arith.constant 0 : index
    %c1_119 = arith.constant 1 : index
    %c0_120 = arith.constant 0 : index
    %c0_121 = arith.constant 0 : index
    %91 = vector.load %arg9[%c0_118, %c1_119, %c0_120, %c0_121] : memref<2x5x5x128xf32, #tpu.memory_space<vmem>>, vector<2x4x4x128xf32>
    %92 = vector.shape_cast %91 : vector<2x4x4x128xf32> to vector<32x128xf32>
    %c0_122 = arith.constant 0 : index
    %c1_123 = arith.constant 1 : index
    %c1_124 = arith.constant 1 : index
    %c0_125 = arith.constant 0 : index
    %93 = vector.load %arg9[%c0_122, %c1_123, %c1_124, %c0_125] : memref<2x5x5x128xf32, #tpu.memory_space<vmem>>, vector<2x4x4x128xf32>
    %94 = vector.shape_cast %93 : vector<2x4x4x128xf32> to vector<32x128xf32>
    %c4_126 = arith.constant 4 : index
    %c0_127 = arith.constant 0 : index
    %c0_128 = arith.constant 0 : index
    %95 = vector.load %arg4[%c4_126, %c0_127, %c0_128] : memref<9x128x128xf32, #tpu.memory_space<vmem>>, vector<1x128x128xf32>
    %96 = vector.shape_cast %95 : vector<1x128x128xf32> to vector<128x128xf32>
    %cst_129 = arith.constant dense<0.000000e+00> : vector<32x128xf32>
    %97 = tpu.matmul %88, %96, %cst_129 {dimension_numbers = #tpu.dot_dimension_numbers<[1], [0], [0], [1], [0, 0, 1, 1], [], []>} : vector<32x128xf32>, vector<128x128xf32>, vector<32x128xf32> -> vector<32x128xf32>
    %98 = vector.broadcast %86 : vector<1x128xf32> to vector<32x128xf32>
    %99 = arith.addf %97, %98 : vector<32x128xf32>
    %cst_130 = arith.constant 0.000000e+00 : f32
    %100 = vector.broadcast %cst_130 : f32 to vector<32x128xf32>
    %101 = arith.maximumf %99, %100 : vector<32x128xf32>
    %102 = vector.shape_cast %101 : vector<32x128xf32> to vector<2x4x4x128xf32>
    %c0_131 = arith.constant 0 : index
    %c0_132 = arith.constant 0 : index
    %c0_133 = arith.constant 0 : index
    %c0_134 = arith.constant 0 : index
    %103 = vector.load %arg10[%c0_131, %c0_132, %c0_133, %c0_134] : memref<8x5x5x128xf32, #tpu.memory_space<vmem>>, vector<2x4x4x128xf32>
    tpu.vector_store %arg10[%c0_131, %c0_132, %c0_133, %c0_134], %102 {strides = array<i32>} : memref<8x5x5x128xf32, #tpu.memory_space<vmem>>, vector<2x4x4x128xf32>,
    %c3_135 = arith.constant 3 : index
    %c0_136 = arith.constant 0 : index
    %c0_137 = arith.constant 0 : index
    %104 = vector.load %arg4[%c3_135, %c0_136, %c0_137] : memref<9x128x128xf32, #tpu.memory_space<vmem>>, vector<1x128x128xf32>
    %105 = vector.shape_cast %104 : vector<1x128x128xf32> to vector<128x128xf32>
    %cst_138 = arith.constant dense<0.000000e+00> : vector<32x128xf32>
    %106 = tpu.matmul %90, %105, %cst_138 {dimension_numbers = #tpu.dot_dimension_numbers<[1], [0], [0], [1], [0, 0, 1, 1], [], []>} : vector<32x128xf32>, vector<128x128xf32>, vector<32x128xf32> -> vector<32x128xf32>
    %c5_139 = arith.constant 5 : index
    %c0_140 = arith.constant 0 : index
    %c0_141 = arith.constant 0 : index
    %107 = vector.load %arg4[%c5_139, %c0_140, %c0_141] : memref<9x128x128xf32, #tpu.memory_space<vmem>>, vector<1x128x128xf32>
    %108 = vector.shape_cast %107 : vector<1x128x128xf32> to vector<128x128xf32>
    %cst_142 = arith.constant dense<0.000000e+00> : vector<32x128xf32>
    %109 = tpu.matmul %88, %108, %cst_142 {dimension_numbers = #tpu.dot_dimension_numbers<[1], [0], [0], [1], [0, 0, 1, 1], [], []>} : vector<32x128xf32>, vector<128x128xf32>, vector<32x128xf32> -> vector<32x128xf32>
    %110 = arith.addf %106, %109 : vector<32x128xf32>
    %111 = vector.broadcast %86 : vector<1x128xf32> to vector<32x128xf32>
    %112 = arith.addf %110, %111 : vector<32x128xf32>
    %cst_143 = arith.constant 0.000000e+00 : f32
    %113 = vector.broadcast %cst_143 : f32 to vector<32x128xf32>
    %114 = arith.maximumf %112, %113 : vector<32x128xf32>
    %115 = vector.shape_cast %114 : vector<32x128xf32> to vector<2x4x4x128xf32>
    %c2_144 = arith.constant 2 : index
    %c0_145 = arith.constant 0 : index
    %c0_146 = arith.constant 0 : index
    %c0_147 = arith.constant 0 : index
    %116 = vector.load %arg10[%c2_144, %c0_145, %c0_146, %c0_147] : memref<8x5x5x128xf32, #tpu.memory_space<vmem>>, vector<2x4x4x128xf32>
    tpu.vector_store %arg10[%c2_144, %c0_145, %c0_146, %c0_147], %115 {strides = array<i32>} : memref<8x5x5x128xf32, #tpu.memory_space<vmem>>, vector<2x4x4x128xf32>,
    %c1_148 = arith.constant 1 : index
    %c0_149 = arith.constant 0 : index
    %c0_150 = arith.constant 0 : index
    %117 = vector.load %arg4[%c1_148, %c0_149, %c0_150] : memref<9x128x128xf32, #tpu.memory_space<vmem>>, vector<1x128x128xf32>
    %118 = vector.shape_cast %117 : vector<1x128x128xf32> to vector<128x128xf32>
    %cst_151 = arith.constant dense<0.000000e+00> : vector<32x128xf32>
    %119 = tpu.matmul %92, %118, %cst_151 {dimension_numbers = #tpu.dot_dimension_numbers<[1], [0], [0], [1], [0, 0, 1, 1], [], []>} : vector<32x128xf32>, vector<128x128xf32>, vector<32x128xf32> -> vector<32x128xf32>
    %c7_152 = arith.constant 7 : index
    %c0_153 = arith.constant 0 : index
    %c0_154 = arith.constant 0 : index
    %120 = vector.load %arg4[%c7_152, %c0_153, %c0_154] : memref<9x128x128xf32, #tpu.memory_space<vmem>>, vector<1x128x128xf32>
    %121 = vector.shape_cast %120 : vector<1x128x128xf32> to vector<128x128xf32>
    %cst_155 = arith.constant dense<0.000000e+00> : vector<32x128xf32>
    %122 = tpu.matmul %88, %121, %cst_155 {dimension_numbers = #tpu.dot_dimension_numbers<[1], [0], [0], [1], [0, 0, 1, 1], [], []>} : vector<32x128xf32>, vector<128x128xf32>, vector<32x128xf32> -> vector<32x128xf32>
    %123 = arith.addf %119, %122 : vector<32x128xf32>
    %124 = vector.broadcast %86 : vector<1x128xf32> to vector<32x128xf32>
    %125 = arith.addf %123, %124 : vector<32x128xf32>
    %cst_156 = arith.constant 0.000000e+00 : f32
    %126 = vector.broadcast %cst_156 : f32 to vector<32x128xf32>
    %127 = arith.maximumf %125, %126 : vector<32x128xf32>
    %128 = vector.shape_cast %127 : vector<32x128xf32> to vector<2x4x4x128xf32>
    %c4_157 = arith.constant 4 : index
    %c0_158 = arith.constant 0 : index
    %c0_159 = arith.constant 0 : index
    %c0_160 = arith.constant 0 : index
    %129 = vector.load %arg10[%c4_157, %c0_158, %c0_159, %c0_160] : memref<8x5x5x128xf32, #tpu.memory_space<vmem>>, vector<2x4x4x128xf32>
    tpu.vector_store %arg10[%c4_157, %c0_158, %c0_159, %c0_160], %128 {strides = array<i32>} : memref<8x5x5x128xf32, #tpu.memory_space<vmem>>, vector<2x4x4x128xf32>,
    %c0_161 = arith.constant 0 : index
    %c0_162 = arith.constant 0 : index
    %c0_163 = arith.constant 0 : index
    %130 = vector.load %arg4[%c0_161, %c0_162, %c0_163] : memref<9x128x128xf32, #tpu.memory_space<vmem>>, vector<1x128x128xf32>
    %131 = vector.shape_cast %130 : vector<1x128x128xf32> to vector<128x128xf32>
    %cst_164 = arith.constant dense<0.000000e+00> : vector<32x128xf32>
    %132 = tpu.matmul %94, %131, %cst_164 {dimension_numbers = #tpu.dot_dimension_numbers<[1], [0], [0], [1], [0, 0, 1, 1], [], []>} : vector<32x128xf32>, vector<128x128xf32>, vector<32x128xf32> -> vector<32x128xf32>
    %c2_165 = arith.constant 2 : index
    %c0_166 = arith.constant 0 : index
    %c0_167 = arith.constant 0 : index
    %133 = vector.load %arg4[%c2_165, %c0_166, %c0_167] : memref<9x128x128xf32, #tpu.memory_space<vmem>>, vector<1x128x128xf32>
    %134 = vector.shape_cast %133 : vector<1x128x128xf32> to vector<128x128xf32>
    %cst_168 = arith.constant dense<0.000000e+00> : vector<32x128xf32>
    %135 = tpu.matmul %92, %134, %cst_168 {dimension_numbers = #tpu.dot_dimension_numbers<[1], [0], [0], [1], [0, 0, 1, 1], [], []>} : vector<32x128xf32>, vector<128x128xf32>, vector<32x128xf32> -> vector<32x128xf32>
    %136 = arith.addf %132, %135 : vector<32x128xf32>
    %c6_169 = arith.constant 6 : index
    %c0_170 = arith.constant 0 : index
    %c0_171 = arith.constant 0 : index
    %137 = vector.load %arg4[%c6_169, %c0_170, %c0_171] : memref<9x128x128xf32, #tpu.memory_space<vmem>>, vector<1x128x128xf32>
    %138 = vector.shape_cast %137 : vector<1x128x128xf32> to vector<128x128xf32>
    %cst_172 = arith.constant dense<0.000000e+00> : vector<32x128xf32>
    %139 = tpu.matmul %90, %138, %cst_172 {dimension_numbers = #tpu.dot_dimension_numbers<[1], [0], [0], [1], [0, 0, 1, 1], [], []>} : vector<32x128xf32>, vector<128x128xf32>, vector<32x128xf32> -> vector<32x128xf32>
    %140 = arith.addf %136, %139 : vector<32x128xf32>
    %c8_173 = arith.constant 8 : index
    %c0_174 = arith.constant 0 : index
    %c0_175 = arith.constant 0 : index
    %141 = vector.load %arg4[%c8_173, %c0_174, %c0_175] : memref<9x128x128xf32, #tpu.memory_space<vmem>>, vector<1x128x128xf32>
    %142 = vector.shape_cast %141 : vector<1x128x128xf32> to vector<128x128xf32>
    %cst_176 = arith.constant dense<0.000000e+00> : vector<32x128xf32>
    %143 = tpu.matmul %88, %142, %cst_176 {dimension_numbers = #tpu.dot_dimension_numbers<[1], [0], [0], [1], [0, 0, 1, 1], [], []>} : vector<32x128xf32>, vector<128x128xf32>, vector<32x128xf32> -> vector<32x128xf32>
    %144 = arith.addf %140, %143 : vector<32x128xf32>
    %145 = vector.broadcast %86 : vector<1x128xf32> to vector<32x128xf32>
    %146 = arith.addf %144, %145 : vector<32x128xf32>
    %cst_177 = arith.constant 0.000000e+00 : f32
    %147 = vector.broadcast %cst_177 : f32 to vector<32x128xf32>
    %148 = arith.maximumf %146, %147 : vector<32x128xf32>
    %149 = vector.shape_cast %148 : vector<32x128xf32> to vector<2x4x4x128xf32>
    %c6_178 = arith.constant 6 : index
    %c0_179 = arith.constant 0 : index
    %c0_180 = arith.constant 0 : index
    %c0_181 = arith.constant 0 : index
    %150 = vector.load %arg10[%c6_178, %c0_179, %c0_180, %c0_181] : memref<8x5x5x128xf32, #tpu.memory_space<vmem>>, vector<2x4x4x128xf32>
    tpu.vector_store %arg10[%c6_178, %c0_179, %c0_180, %c0_181], %149 {strides = array<i32>} : memref<8x5x5x128xf32, #tpu.memory_space<vmem>>, vector<2x4x4x128xf32>,
    %c3_182 = arith.constant 3 : index
    %c0_183 = arith.constant 0 : index
    %151 = vector.load %arg6[%c3_182, %c0_183] : memref<8x128xf32, #tpu.memory_space<vmem>>, vector<1x128xf32>
    %c0_184 = arith.constant 0 : index
    %c0_185 = arith.constant 0 : index
    %c0_186 = arith.constant 0 : index
    %c0_187 = arith.constant 0 : index
    %152 = vector.load %arg10[%c0_184, %c0_185, %c0_186, %c0_187] : memref<8x5x5x128xf32, #tpu.memory_space<vmem>>, vector<2x4x4x128xf32>
    %153 = vector.shape_cast %152 : vector<2x4x4x128xf32> to vector<32x128xf32>
    %c2_188 = arith.constant 2 : index
    %c0_189 = arith.constant 0 : index
    %c0_190 = arith.constant 0 : index
    %c0_191 = arith.constant 0 : index
    %154 = vector.load %arg10[%c2_188, %c0_189, %c0_190, %c0_191] : memref<8x5x5x128xf32, #tpu.memory_space<vmem>>, vector<2x4x4x128xf32>
    %155 = vector.shape_cast %154 : vector<2x4x4x128xf32> to vector<32x128xf32>
    %c4_192 = arith.constant 4 : index
    %c0_193 = arith.constant 0 : index
    %c0_194 = arith.constant 0 : index
    %c0_195 = arith.constant 0 : index
    %156 = vector.load %arg10[%c4_192, %c0_193, %c0_194, %c0_195] : memref<8x5x5x128xf32, #tpu.memory_space<vmem>>, vector<2x4x4x128xf32>
    %157 = vector.shape_cast %156 : vector<2x4x4x128xf32> to vector<32x128xf32>
    %c6_196 = arith.constant 6 : index
    %c0_197 = arith.constant 0 : index
    %c0_198 = arith.constant 0 : index
    %c0_199 = arith.constant 0 : index
    %158 = vector.load %arg10[%c6_196, %c0_197, %c0_198, %c0_199] : memref<8x5x5x128xf32, #tpu.memory_space<vmem>>, vector<2x4x4x128xf32>
    %159 = vector.shape_cast %158 : vector<2x4x4x128xf32> to vector<32x128xf32>
    %c4_200 = arith.constant 4 : index
    %c0_201 = arith.constant 0 : index
    %c0_202 = arith.constant 0 : index
    %160 = vector.load %arg5[%c4_200, %c0_201, %c0_202] : memref<9x128x128xf32, #tpu.memory_space<vmem>>, vector<1x128x128xf32>
    %161 = vector.shape_cast %160 : vector<1x128x128xf32> to vector<128x128xf32>
    %cst_203 = arith.constant dense<0.000000e+00> : vector<32x128xf32>
    %162 = tpu.matmul %153, %161, %cst_203 {dimension_numbers = #tpu.dot_dimension_numbers<[1], [0], [0], [1], [0, 0, 1, 1], [], []>} : vector<32x128xf32>, vector<128x128xf32>, vector<32x128xf32> -> vector<32x128xf32>
    %163 = vector.broadcast %151 : vector<1x128xf32> to vector<32x128xf32>
    %164 = arith.addf %162, %163 : vector<32x128xf32>
    %c0_204 = arith.constant 0 : index
    %c0_205 = arith.constant 0 : index
    %c0_206 = arith.constant 0 : index
    %c0_207 = arith.constant 0 : index
    %165 = vector.load %arg7[%c0_204, %c0_205, %c0_206, %c0_207] : memref<4x4x32x128xf32, #tpu.memory_space<vmem>>, vector<1x1x32x128xf32>
    %166 = vector.shape_cast %165 : vector<1x1x32x128xf32> to vector<32x128xf32>
    %167 = vector.shape_cast %164 : vector<32x128xf32> to vector<1x1x32x128xf32>
    tpu.vector_store %arg7[%c0_204, %c0_205, %c0_206, %c0_207], %167 {strides = array<i32>} : memref<4x4x32x128xf32, #tpu.memory_space<vmem>>, vector<1x1x32x128xf32>,
    %c3_208 = arith.constant 3 : index
    %c0_209 = arith.constant 0 : index
    %c0_210 = arith.constant 0 : index
    %168 = vector.load %arg5[%c3_208, %c0_209, %c0_210] : memref<9x128x128xf32, #tpu.memory_space<vmem>>, vector<1x128x128xf32>
    %169 = vector.shape_cast %168 : vector<1x128x128xf32> to vector<128x128xf32>
    %cst_211 = arith.constant dense<0.000000e+00> : vector<32x128xf32>
    %170 = tpu.matmul %155, %169, %cst_211 {dimension_numbers = #tpu.dot_dimension_numbers<[1], [0], [0], [1], [0, 0, 1, 1], [], []>} : vector<32x128xf32>, vector<128x128xf32>, vector<32x128xf32> -> vector<32x128xf32>
    %c5_212 = arith.constant 5 : index
    %c0_213 = arith.constant 0 : index
    %c0_214 = arith.constant 0 : index
    %171 = vector.load %arg5[%c5_212, %c0_213, %c0_214] : memref<9x128x128xf32, #tpu.memory_space<vmem>>, vector<1x128x128xf32>
    %172 = vector.shape_cast %171 : vector<1x128x128xf32> to vector<128x128xf32>
    %cst_215 = arith.constant dense<0.000000e+00> : vector<32x128xf32>
    %173 = tpu.matmul %153, %172, %cst_215 {dimension_numbers = #tpu.dot_dimension_numbers<[1], [0], [0], [1], [0, 0, 1, 1], [], []>} : vector<32x128xf32>, vector<128x128xf32>, vector<32x128xf32> -> vector<32x128xf32>
    %174 = arith.addf %170, %173 : vector<32x128xf32>
    %175 = vector.broadcast %151 : vector<1x128xf32> to vector<32x128xf32>
    %176 = arith.addf %174, %175 : vector<32x128xf32>
    %c0_216 = arith.constant 0 : index
    %c1_217 = arith.constant 1 : index
    %c0_218 = arith.constant 0 : index
    %c0_219 = arith.constant 0 : index
    %177 = vector.load %arg7[%c0_216, %c1_217, %c0_218, %c0_219] : memref<4x4x32x128xf32, #tpu.memory_space<vmem>>, vector<1x1x32x128xf32>
    %178 = vector.shape_cast %177 : vector<1x1x32x128xf32> to vector<32x128xf32>
    %179 = vector.shape_cast %176 : vector<32x128xf32> to vector<1x1x32x128xf32>
    tpu.vector_store %arg7[%c0_216, %c1_217, %c0_218, %c0_219], %179 {strides = array<i32>} : memref<4x4x32x128xf32, #tpu.memory_space<vmem>>, vector<1x1x32x128xf32>,
    %c1_220 = arith.constant 1 : index
    %c0_221 = arith.constant 0 : index
    %c0_222 = arith.constant 0 : index
    %180 = vector.load %arg5[%c1_220, %c0_221, %c0_222] : memref<9x128x128xf32, #tpu.memory_space<vmem>>, vector<1x128x128xf32>
    %181 = vector.shape_cast %180 : vector<1x128x128xf32> to vector<128x128xf32>
    %cst_223 = arith.constant dense<0.000000e+00> : vector<32x128xf32>
    %182 = tpu.matmul %157, %181, %cst_223 {dimension_numbers = #tpu.dot_dimension_numbers<[1], [0], [0], [1], [0, 0, 1, 1], [], []>} : vector<32x128xf32>, vector<128x128xf32>, vector<32x128xf32> -> vector<32x128xf32>
    %c7_224 = arith.constant 7 : index
    %c0_225 = arith.constant 0 : index
    %c0_226 = arith.constant 0 : index
    %183 = vector.load %arg5[%c7_224, %c0_225, %c0_226] : memref<9x128x128xf32, #tpu.memory_space<vmem>>, vector<1x128x128xf32>
    %184 = vector.shape_cast %183 : vector<1x128x128xf32> to vector<128x128xf32>
    %cst_227 = arith.constant dense<0.000000e+00> : vector<32x128xf32>
    %185 = tpu.matmul %153, %184, %cst_227 {dimension_numbers = #tpu.dot_dimension_numbers<[1], [0], [0], [1], [0, 0, 1, 1], [], []>} : vector<32x128xf32>, vector<128x128xf32>, vector<32x128xf32> -> vector<32x128xf32>
    %186 = arith.addf %182, %185 : vector<32x128xf32>
    %187 = vector.broadcast %151 : vector<1x128xf32> to vector<32x128xf32>
    %188 = arith.addf %186, %187 : vector<32x128xf32>
    %c1_228 = arith.constant 1 : index
    %c0_229 = arith.constant 0 : index
    %c0_230 = arith.constant 0 : index
    %c0_231 = arith.constant 0 : index
    %189 = vector.load %arg7[%c1_228, %c0_229, %c0_230, %c0_231] : memref<4x4x32x128xf32, #tpu.memory_space<vmem>>, vector<1x1x32x128xf32>
    %190 = vector.shape_cast %189 : vector<1x1x32x128xf32> to vector<32x128xf32>
    %191 = vector.shape_cast %188 : vector<32x128xf32> to vector<1x1x32x128xf32>
    tpu.vector_store %arg7[%c1_228, %c0_229, %c0_230, %c0_231], %191 {strides = array<i32>} : memref<4x4x32x128xf32, #tpu.memory_space<vmem>>, vector<1x1x32x128xf32>,
    %c0_232 = arith.constant 0 : index
    %c0_233 = arith.constant 0 : index
    %c0_234 = arith.constant 0 : index
    %192 = vector.load %arg5[%c0_232, %c0_233, %c0_234] : memref<9x128x128xf32, #tpu.memory_space<vmem>>, vector<1x128x128xf32>
    %193 = vector.shape_cast %192 : vector<1x128x128xf32> to vector<128x128xf32>
    %cst_235 = arith.constant dense<0.000000e+00> : vector<32x128xf32>
    %194 = tpu.matmul %159, %193, %cst_235 {dimension_numbers = #tpu.dot_dimension_numbers<[1], [0], [0], [1], [0, 0, 1, 1], [], []>} : vector<32x128xf32>, vector<128x128xf32>, vector<32x128xf32> -> vector<32x128xf32>
    %c2_236 = arith.constant 2 : index
    %c0_237 = arith.constant 0 : index
    %c0_238 = arith.constant 0 : index
    %195 = vector.load %arg5[%c2_236, %c0_237, %c0_238] : memref<9x128x128xf32, #tpu.memory_space<vmem>>, vector<1x128x128xf32>
    %196 = vector.shape_cast %195 : vector<1x128x128xf32> to vector<128x128xf32>
    %cst_239 = arith.constant dense<0.000000e+00> : vector<32x128xf32>
    %197 = tpu.matmul %157, %196, %cst_239 {dimension_numbers = #tpu.dot_dimension_numbers<[1], [0], [0], [1], [0, 0, 1, 1], [], []>} : vector<32x128xf32>, vector<128x128xf32>, vector<32x128xf32> -> vector<32x128xf32>
    %198 = arith.addf %194, %197 : vector<32x128xf32>
    %c6_240 = arith.constant 6 : index
    %c0_241 = arith.constant 0 : index
    %c0_242 = arith.constant 0 : index
    %199 = vector.load %arg5[%c6_240, %c0_241, %c0_242] : memref<9x128x128xf32, #tpu.memory_space<vmem>>, vector<1x128x128xf32>
    %200 = vector.shape_cast %199 : vector<1x128x128xf32> to vector<128x128xf32>
    %cst_243 = arith.constant dense<0.000000e+00> : vector<32x128xf32>
    %201 = tpu.matmul %155, %200, %cst_243 {dimension_numbers = #tpu.dot_dimension_numbers<[1], [0], [0], [1], [0, 0, 1, 1], [], []>} : vector<32x128xf32>, vector<128x128xf32>, vector<32x128xf32> -> vector<32x128xf32>
    %202 = arith.addf %198, %201 : vector<32x128xf32>
    %c8_244 = arith.constant 8 : index
    %c0_245 = arith.constant 0 : index
    %c0_246 = arith.constant 0 : index
    %203 = vector.load %arg5[%c8_244, %c0_245, %c0_246] : memref<9x128x128xf32, #tpu.memory_space<vmem>>, vector<1x128x128xf32>
    %204 = vector.shape_cast %203 : vector<1x128x128xf32> to vector<128x128xf32>
    %cst_247 = arith.constant dense<0.000000e+00> : vector<32x128xf32>
    %205 = tpu.matmul %153, %204, %cst_247 {dimension_numbers = #tpu.dot_dimension_numbers<[1], [0], [0], [1], [0, 0, 1, 1], [], []>} : vector<32x128xf32>, vector<128x128xf32>, vector<32x128xf32> -> vector<32x128xf32>
    %206 = arith.addf %202, %205 : vector<32x128xf32>
    %207 = vector.broadcast %151 : vector<1x128xf32> to vector<32x128xf32>
    %208 = arith.addf %206, %207 : vector<32x128xf32>
    %c1_248 = arith.constant 1 : index
    %c1_249 = arith.constant 1 : index
    %c0_250 = arith.constant 0 : index
    %c0_251 = arith.constant 0 : index
    %209 = vector.load %arg7[%c1_248, %c1_249, %c0_250, %c0_251] : memref<4x4x32x128xf32, #tpu.memory_space<vmem>>, vector<1x1x32x128xf32>
    %210 = vector.shape_cast %209 : vector<1x1x32x128xf32> to vector<32x128xf32>
    %211 = vector.shape_cast %208 : vector<32x128xf32> to vector<1x1x32x128xf32>
    tpu.vector_store %arg7[%c1_248, %c1_249, %c0_250, %c0_251], %211 {strides = array<i32>} : memref<4x4x32x128xf32, #tpu.memory_space<vmem>>, vector<1x1x32x128xf32>,
    %c2_252 = arith.constant 2 : index
    %c0_253 = arith.constant 0 : index
    %c0_254 = arith.constant 0 : index
    %c0_255 = arith.constant 0 : index
    %212 = vector.load %arg10[%c2_252, %c0_253, %c0_254, %c0_255] : memref<8x5x5x128xf32, #tpu.memory_space<vmem>>, vector<2x4x4x128xf32>
    %213 = vector.shape_cast %212 : vector<2x4x4x128xf32> to vector<32x128xf32>
    %c0_256 = arith.constant 0 : index
    %c0_257 = arith.constant 0 : index
    %c1_258 = arith.constant 1 : index
    %c0_259 = arith.constant 0 : index
    %214 = vector.load %arg10[%c0_256, %c0_257, %c1_258, %c0_259] : memref<8x5x5x128xf32, #tpu.memory_space<vmem>>, vector<2x4x4x128xf32>
    %215 = vector.shape_cast %214 : vector<2x4x4x128xf32> to vector<32x128xf32>
    %c6_260 = arith.constant 6 : index
    %c0_261 = arith.constant 0 : index
    %c0_262 = arith.constant 0 : index
    %c0_263 = arith.constant 0 : index
    %216 = vector.load %arg10[%c6_260, %c0_261, %c0_262, %c0_263] : memref<8x5x5x128xf32, #tpu.memory_space<vmem>>, vector<2x4x4x128xf32>
    %217 = vector.shape_cast %216 : vector<2x4x4x128xf32> to vector<32x128xf32>
    %c4_264 = arith.constant 4 : index
    %c0_265 = arith.constant 0 : index
    %c1_266 = arith.constant 1 : index
    %c0_267 = arith.constant 0 : index
    %218 = vector.load %arg10[%c4_264, %c0_265, %c1_266, %c0_267] : memref<8x5x5x128xf32, #tpu.memory_space<vmem>>, vector<2x4x4x128xf32>
    %219 = vector.shape_cast %218 : vector<2x4x4x128xf32> to vector<32x128xf32>
    %c4_268 = arith.constant 4 : index
    %c0_269 = arith.constant 0 : index
    %c0_270 = arith.constant 0 : index
    %220 = vector.load %arg5[%c4_268, %c0_269, %c0_270] : memref<9x128x128xf32, #tpu.memory_space<vmem>>, vector<1x128x128xf32>
    %221 = vector.shape_cast %220 : vector<1x128x128xf32> to vector<128x128xf32>
    %cst_271 = arith.constant dense<0.000000e+00> : vector<32x128xf32>
    %222 = tpu.matmul %213, %221, %cst_271 {dimension_numbers = #tpu.dot_dimension_numbers<[1], [0], [0], [1], [0, 0, 1, 1], [], []>} : vector<32x128xf32>, vector<128x128xf32>, vector<32x128xf32> -> vector<32x128xf32>
    %223 = vector.broadcast %151 : vector<1x128xf32> to vector<32x128xf32>
    %224 = arith.addf %222, %223 : vector<32x128xf32>
    %c0_272 = arith.constant 0 : index
    %c2_273 = arith.constant 2 : index
    %c0_274 = arith.constant 0 : index
    %c0_275 = arith.constant 0 : index
    %225 = vector.load %arg7[%c0_272, %c2_273, %c0_274, %c0_275] : memref<4x4x32x128xf32, #tpu.memory_space<vmem>>, vector<1x1x32x128xf32>
    %226 = vector.shape_cast %225 : vector<1x1x32x128xf32> to vector<32x128xf32>
    %227 = vector.shape_cast %224 : vector<32x128xf32> to vector<1x1x32x128xf32>
    tpu.vector_store %arg7[%c0_272, %c2_273, %c0_274, %c0_275], %227 {strides = array<i32>} : memref<4x4x32x128xf32, #tpu.memory_space<vmem>>, vector<1x1x32x128xf32>,
    %c3_276 = arith.constant 3 : index
    %c0_277 = arith.constant 0 : index
    %c0_278 = arith.constant 0 : index
    %228 = vector.load %arg5[%c3_276, %c0_277, %c0_278] : memref<9x128x128xf32, #tpu.memory_space<vmem>>, vector<1x128x128xf32>
    %229 = vector.shape_cast %228 : vector<1x128x128xf32> to vector<128x128xf32>
    %cst_279 = arith.constant dense<0.000000e+00> : vector<32x128xf32>
    %230 = tpu.matmul %215, %229, %cst_279 {dimension_numbers = #tpu.dot_dimension_numbers<[1], [0], [0], [1], [0, 0, 1, 1], [], []>} : vector<32x128xf32>, vector<128x128xf32>, vector<32x128xf32> -> vector<32x128xf32>
    %c5_280 = arith.constant 5 : index
    %c0_281 = arith.constant 0 : index
    %c0_282 = arith.constant 0 : index
    %231 = vector.load %arg5[%c5_280, %c0_281, %c0_282] : memref<9x128x128xf32, #tpu.memory_space<vmem>>, vector<1x128x128xf32>
    %232 = vector.shape_cast %231 : vector<1x128x128xf32> to vector<128x128xf32>
    %cst_283 = arith.constant dense<0.000000e+00> : vector<32x128xf32>
    %233 = tpu.matmul %213, %232, %cst_283 {dimension_numbers = #tpu.dot_dimension_numbers<[1], [0], [0], [1], [0, 0, 1, 1], [], []>} : vector<32x128xf32>, vector<128x128xf32>, vector<32x128xf32> -> vector<32x128xf32>
    %234 = arith.addf %230, %233 : vector<32x128xf32>
    %235 = vector.broadcast %151 : vector<1x128xf32> to vector<32x128xf32>
    %236 = arith.addf %234, %235 : vector<32x128xf32>
    %c0_284 = arith.constant 0 : index
    %c3_285 = arith.constant 3 : index
    %c0_286 = arith.constant 0 : index
    %c0_287 = arith.constant 0 : index
    %237 = vector.load %arg7[%c0_284, %c3_285, %c0_286, %c0_287] : memref<4x4x32x128xf32, #tpu.memory_space<vmem>>, vector<1x1x32x128xf32>
    %238 = vector.shape_cast %237 : vector<1x1x32x128xf32> to vector<32x128xf32>
    %239 = vector.shape_cast %236 : vector<32x128xf32> to vector<1x1x32x128xf32>
    tpu.vector_store %arg7[%c0_284, %c3_285, %c0_286, %c0_287], %239 {strides = array<i32>} : memref<4x4x32x128xf32, #tpu.memory_space<vmem>>, vector<1x1x32x128xf32>,
    %c1_288 = arith.constant 1 : index
    %c0_289 = arith.constant 0 : index
    %c0_290 = arith.constant 0 : index
    %240 = vector.load %arg5[%c1_288, %c0_289, %c0_290] : memref<9x128x128xf32, #tpu.memory_space<vmem>>, vector<1x128x128xf32>
    %241 = vector.shape_cast %240 : vector<1x128x128xf32> to vector<128x128xf32>
    %cst_291 = arith.constant dense<0.000000e+00> : vector<32x128xf32>
    %242 = tpu.matmul %217, %241, %cst_291 {dimension_numbers = #tpu.dot_dimension_numbers<[1], [0], [0], [1], [0, 0, 1, 1], [], []>} : vector<32x128xf32>, vector<128x128xf32>, vector<32x128xf32> -> vector<32x128xf32>
    %c7_292 = arith.constant 7 : index
    %c0_293 = arith.constant 0 : index
    %c0_294 = arith.constant 0 : index
    %243 = vector.load %arg5[%c7_292, %c0_293, %c0_294] : memref<9x128x128xf32, #tpu.memory_space<vmem>>, vector<1x128x128xf32>
    %244 = vector.shape_cast %243 : vector<1x128x128xf32> to vector<128x128xf32>
    %cst_295 = arith.constant dense<0.000000e+00> : vector<32x128xf32>
    %245 = tpu.matmul %213, %244, %cst_295 {dimension_numbers = #tpu.dot_dimension_numbers<[1], [0], [0], [1], [0, 0, 1, 1], [], []>} : vector<32x128xf32>, vector<128x128xf32>, vector<32x128xf32> -> vector<32x128xf32>
    %246 = arith.addf %242, %245 : vector<32x128xf32>
    %247 = vector.broadcast %151 : vector<1x128xf32> to vector<32x128xf32>
    %248 = arith.addf %246, %247 : vector<32x128xf32>
    %c1_296 = arith.constant 1 : index
    %c2_297 = arith.constant 2 : index
    %c0_298 = arith.constant 0 : index
    %c0_299 = arith.constant 0 : index
    %249 = vector.load %arg7[%c1_296, %c2_297, %c0_298, %c0_299] : memref<4x4x32x128xf32, #tpu.memory_space<vmem>>, vector<1x1x32x128xf32>
    %250 = vector.shape_cast %249 : vector<1x1x32x128xf32> to vector<32x128xf32>
    %251 = vector.shape_cast %248 : vector<32x128xf32> to vector<1x1x32x128xf32>
    tpu.vector_store %arg7[%c1_296, %c2_297, %c0_298, %c0_299], %251 {strides = array<i32>} : memref<4x4x32x128xf32, #tpu.memory_space<vmem>>, vector<1x1x32x128xf32>,
    %c0_300 = arith.constant 0 : index
    %c0_301 = arith.constant 0 : index
    %c0_302 = arith.constant 0 : index
    %252 = vector.load %arg5[%c0_300, %c0_301, %c0_302] : memref<9x128x128xf32, #tpu.memory_space<vmem>>, vector<1x128x128xf32>
    %253 = vector.shape_cast %252 : vector<1x128x128xf32> to vector<128x128xf32>
    %cst_303 = arith.constant dense<0.000000e+00> : vector<32x128xf32>
    %254 = tpu.matmul %219, %253, %cst_303 {dimension_numbers = #tpu.dot_dimension_numbers<[1], [0], [0], [1], [0, 0, 1, 1], [], []>} : vector<32x128xf32>, vector<128x128xf32>, vector<32x128xf32> -> vector<32x128xf32>
    %c2_304 = arith.constant 2 : index
    %c0_305 = arith.constant 0 : index
    %c0_306 = arith.constant 0 : index
    %255 = vector.load %arg5[%c2_304, %c0_305, %c0_306] : memref<9x128x128xf32, #tpu.memory_space<vmem>>, vector<1x128x128xf32>
    %256 = vector.shape_cast %255 : vector<1x128x128xf32> to vector<128x128xf32>
    %cst_307 = arith.constant dense<0.000000e+00> : vector<32x128xf32>
    %257 = tpu.matmul %217, %256, %cst_307 {dimension_numbers = #tpu.dot_dimension_numbers<[1], [0], [0], [1], [0, 0, 1, 1], [], []>} : vector<32x128xf32>, vector<128x128xf32>, vector<32x128xf32> -> vector<32x128xf32>
    %258 = arith.addf %254, %257 : vector<32x128xf32>
    %c6_308 = arith.constant 6 : index
    %c0_309 = arith.constant 0 : index
    %c0_310 = arith.constant 0 : index
    %259 = vector.load %arg5[%c6_308, %c0_309, %c0_310] : memref<9x128x128xf32, #tpu.memory_space<vmem>>, vector<1x128x128xf32>
    %260 = vector.shape_cast %259 : vector<1x128x128xf32> to vector<128x128xf32>
    %cst_311 = arith.constant dense<0.000000e+00> : vector<32x128xf32>
    %261 = tpu.matmul %215, %260, %cst_311 {dimension_numbers = #tpu.dot_dimension_numbers<[1], [0], [0], [1], [0, 0, 1, 1], [], []>} : vector<32x128xf32>, vector<128x128xf32>, vector<32x128xf32> -> vector<32x128xf32>
    %262 = arith.addf %258, %261 : vector<32x128xf32>
    %c8_312 = arith.constant 8 : index
    %c0_313 = arith.constant 0 : index
    %c0_314 = arith.constant 0 : index
    %263 = vector.load %arg5[%c8_312, %c0_313, %c0_314] : memref<9x128x128xf32, #tpu.memory_space<vmem>>, vector<1x128x128xf32>
    %264 = vector.shape_cast %263 : vector<1x128x128xf32> to vector<128x128xf32>
    %cst_315 = arith.constant dense<0.000000e+00> : vector<32x128xf32>
    %265 = tpu.matmul %213, %264, %cst_315 {dimension_numbers = #tpu.dot_dimension_numbers<[1], [0], [0], [1], [0, 0, 1, 1], [], []>} : vector<32x128xf32>, vector<128x128xf32>, vector<32x128xf32> -> vector<32x128xf32>
    %266 = arith.addf %262, %265 : vector<32x128xf32>
    %267 = vector.broadcast %151 : vector<1x128xf32> to vector<32x128xf32>
    %268 = arith.addf %266, %267 : vector<32x128xf32>
    %c1_316 = arith.constant 1 : index
    %c3_317 = arith.constant 3 : index
    %c0_318 = arith.constant 0 : index
    %c0_319 = arith.constant 0 : index
    %269 = vector.load %arg7[%c1_316, %c3_317, %c0_318, %c0_319] : memref<4x4x32x128xf32, #tpu.memory_space<vmem>>, vector<1x1x32x128xf32>
    %270 = vector.shape_cast %269 : vector<1x1x32x128xf32> to vector<32x128xf32>
    %271 = vector.shape_cast %268 : vector<32x128xf32> to vector<1x1x32x128xf32>
    tpu.vector_store %arg7[%c1_316, %c3_317, %c0_318, %c0_319], %271 {strides = array<i32>} : memref<4x4x32x128xf32, #tpu.memory_space<vmem>>, vector<1x1x32x128xf32>,
    %c4_320 = arith.constant 4 : index
    %c0_321 = arith.constant 0 : index
    %c0_322 = arith.constant 0 : index
    %c0_323 = arith.constant 0 : index
    %272 = vector.load %arg10[%c4_320, %c0_321, %c0_322, %c0_323] : memref<8x5x5x128xf32, #tpu.memory_space<vmem>>, vector<2x4x4x128xf32>
    %273 = vector.shape_cast %272 : vector<2x4x4x128xf32> to vector<32x128xf32>
    %c6_324 = arith.constant 6 : index
    %c0_325 = arith.constant 0 : index
    %c0_326 = arith.constant 0 : index
    %c0_327 = arith.constant 0 : index
    %274 = vector.load %arg10[%c6_324, %c0_325, %c0_326, %c0_327] : memref<8x5x5x128xf32, #tpu.memory_space<vmem>>, vector<2x4x4x128xf32>
    %275 = vector.shape_cast %274 : vector<2x4x4x128xf32> to vector<32x128xf32>
    %c0_328 = arith.constant 0 : index
    %c1_329 = arith.constant 1 : index
    %c0_330 = arith.constant 0 : index
    %c0_331 = arith.constant 0 : index
    %276 = vector.load %arg10[%c0_328, %c1_329, %c0_330, %c0_331] : memref<8x5x5x128xf32, #tpu.memory_space<vmem>>, vector<2x4x4x128xf32>
    %277 = vector.shape_cast %276 : vector<2x4x4x128xf32> to vector<32x128xf32>
    %c2_332 = arith.constant 2 : index
    %c1_333 = arith.constant 1 : index
    %c0_334 = arith.constant 0 : index
    %c0_335 = arith.constant 0 : index
    %278 = vector.load %arg10[%c2_332, %c1_333, %c0_334, %c0_335] : memref<8x5x5x128xf32, #tpu.memory_space<vmem>>, vector<2x4x4x128xf32>
    %279 = vector.shape_cast %278 : vector<2x4x4x128xf32> to vector<32x128xf32>
    %c4_336 = arith.constant 4 : index
    %c0_337 = arith.constant 0 : index
    %c0_338 = arith.constant 0 : index
    %280 = vector.load %arg5[%c4_336, %c0_337, %c0_338] : memref<9x128x128xf32, #tpu.memory_space<vmem>>, vector<1x128x128xf32>
    %281 = vector.shape_cast %280 : vector<1x128x128xf32> to vector<128x128xf32>
    %cst_339 = arith.constant dense<0.000000e+00> : vector<32x128xf32>
    %282 = tpu.matmul %273, %281, %cst_339 {dimension_numbers = #tpu.dot_dimension_numbers<[1], [0], [0], [1], [0, 0, 1, 1], [], []>} : vector<32x128xf32>, vector<128x128xf32>, vector<32x128xf32> -> vector<32x128xf32>
    %283 = vector.broadcast %151 : vector<1x128xf32> to vector<32x128xf32>
    %284 = arith.addf %282, %283 : vector<32x128xf32>
    %c2_340 = arith.constant 2 : index
    %c0_341 = arith.constant 0 : index
    %c0_342 = arith.constant 0 : index
    %c0_343 = arith.constant 0 : index
    %285 = vector.load %arg7[%c2_340, %c0_341, %c0_342, %c0_343] : memref<4x4x32x128xf32, #tpu.memory_space<vmem>>, vector<1x1x32x128xf32>
    %286 = vector.shape_cast %285 : vector<1x1x32x128xf32> to vector<32x128xf32>
    %287 = vector.shape_cast %284 : vector<32x128xf32> to vector<1x1x32x128xf32>
    tpu.vector_store %arg7[%c2_340, %c0_341, %c0_342, %c0_343], %287 {strides = array<i32>} : memref<4x4x32x128xf32, #tpu.memory_space<vmem>>, vector<1x1x32x128xf32>,
    %c3_344 = arith.constant 3 : index
    %c0_345 = arith.constant 0 : index
    %c0_346 = arith.constant 0 : index
    %288 = vector.load %arg5[%c3_344, %c0_345, %c0_346] : memref<9x128x128xf32, #tpu.memory_space<vmem>>, vector<1x128x128xf32>
    %289 = vector.shape_cast %288 : vector<1x128x128xf32> to vector<128x128xf32>
    %cst_347 = arith.constant dense<0.000000e+00> : vector<32x128xf32>
    %290 = tpu.matmul %275, %289, %cst_347 {dimension_numbers = #tpu.dot_dimension_numbers<[1], [0], [0], [1], [0, 0, 1, 1], [], []>} : vector<32x128xf32>, vector<128x128xf32>, vector<32x128xf32> -> vector<32x128xf32>
    %c5_348 = arith.constant 5 : index
    %c0_349 = arith.constant 0 : index
    %c0_350 = arith.constant 0 : index
    %291 = vector.load %arg5[%c5_348, %c0_349, %c0_350] : memref<9x128x128xf32, #tpu.memory_space<vmem>>, vector<1x128x128xf32>
    %292 = vector.shape_cast %291 : vector<1x128x128xf32> to vector<128x128xf32>
    %cst_351 = arith.constant dense<0.000000e+00> : vector<32x128xf32>
    %293 = tpu.matmul %273, %292, %cst_351 {dimension_numbers = #tpu.dot_dimension_numbers<[1], [0], [0], [1], [0, 0, 1, 1], [], []>} : vector<32x128xf32>, vector<128x128xf32>, vector<32x128xf32> -> vector<32x128xf32>
    %294 = arith.addf %290, %293 : vector<32x128xf32>
    %295 = vector.broadcast %151 : vector<1x128xf32> to vector<32x128xf32>
    %296 = arith.addf %294, %295 : vector<32x128xf32>
    %c2_352 = arith.constant 2 : index
    %c1_353 = arith.constant 1 : index
    %c0_354 = arith.constant 0 : index
    %c0_355 = arith.constant 0 : index
    %297 = vector.load %arg7[%c2_352, %c1_353, %c0_354, %c0_355] : memref<4x4x32x128xf32, #tpu.memory_space<vmem>>, vector<1x1x32x128xf32>
    %298 = vector.shape_cast %297 : vector<1x1x32x128xf32> to vector<32x128xf32>
    %299 = vector.shape_cast %296 : vector<32x128xf32> to vector<1x1x32x128xf32>
    tpu.vector_store %arg7[%c2_352, %c1_353, %c0_354, %c0_355], %299 {strides = array<i32>} : memref<4x4x32x128xf32, #tpu.memory_space<vmem>>, vector<1x1x32x128xf32>,
    %c1_356 = arith.constant 1 : index
    %c0_357 = arith.constant 0 : index
    %c0_358 = arith.constant 0 : index
    %300 = vector.load %arg5[%c1_356, %c0_357, %c0_358] : memref<9x128x128xf32, #tpu.memory_space<vmem>>, vector<1x128x128xf32>
    %301 = vector.shape_cast %300 : vector<1x128x128xf32> to vector<128x128xf32>
    %cst_359 = arith.constant dense<0.000000e+00> : vector<32x128xf32>
    %302 = tpu.matmul %277, %301, %cst_359 {dimension_numbers = #tpu.dot_dimension_numbers<[1], [0], [0], [1], [0, 0, 1, 1], [], []>} : vector<32x128xf32>, vector<128x128xf32>, vector<32x128xf32> -> vector<32x128xf32>
    %c7_360 = arith.constant 7 : index
    %c0_361 = arith.constant 0 : index
    %c0_362 = arith.constant 0 : index
    %303 = vector.load %arg5[%c7_360, %c0_361, %c0_362] : memref<9x128x128xf32, #tpu.memory_space<vmem>>, vector<1x128x128xf32>
    %304 = vector.shape_cast %303 : vector<1x128x128xf32> to vector<128x128xf32>
    %cst_363 = arith.constant dense<0.000000e+00> : vector<32x128xf32>
    %305 = tpu.matmul %273, %304, %cst_363 {dimension_numbers = #tpu.dot_dimension_numbers<[1], [0], [0], [1], [0, 0, 1, 1], [], []>} : vector<32x128xf32>, vector<128x128xf32>, vector<32x128xf32> -> vector<32x128xf32>
    %306 = arith.addf %302, %305 : vector<32x128xf32>
    %307 = vector.broadcast %151 : vector<1x128xf32> to vector<32x128xf32>
    %308 = arith.addf %306, %307 : vector<32x128xf32>
    %c3_364 = arith.constant 3 : index
    %c0_365 = arith.constant 0 : index
    %c0_366 = arith.constant 0 : index
    %c0_367 = arith.constant 0 : index
    %309 = vector.load %arg7[%c3_364, %c0_365, %c0_366, %c0_367] : memref<4x4x32x128xf32, #tpu.memory_space<vmem>>, vector<1x1x32x128xf32>
    %310 = vector.shape_cast %309 : vector<1x1x32x128xf32> to vector<32x128xf32>
    %311 = vector.shape_cast %308 : vector<32x128xf32> to vector<1x1x32x128xf32>
    tpu.vector_store %arg7[%c3_364, %c0_365, %c0_366, %c0_367], %311 {strides = array<i32>} : memref<4x4x32x128xf32, #tpu.memory_space<vmem>>, vector<1x1x32x128xf32>,
    %c0_368 = arith.constant 0 : index
    %c0_369 = arith.constant 0 : index
    %c0_370 = arith.constant 0 : index
    %312 = vector.load %arg5[%c0_368, %c0_369, %c0_370] : memref<9x128x128xf32, #tpu.memory_space<vmem>>, vector<1x128x128xf32>
    %313 = vector.shape_cast %312 : vector<1x128x128xf32> to vector<128x128xf32>
    %cst_371 = arith.constant dense<0.000000e+00> : vector<32x128xf32>
    %314 = tpu.matmul %279, %313, %cst_371 {dimension_numbers = #tpu.dot_dimension_numbers<[1], [0], [0], [1], [0, 0, 1, 1], [], []>} : vector<32x128xf32>, vector<128x128xf32>, vector<32x128xf32> -> vector<32x128xf32>
    %c2_372 = arith.constant 2 : index
    %c0_373 = arith.constant 0 : index
    %c0_374 = arith.constant 0 : index
    %315 = vector.load %arg5[%c2_372, %c0_373, %c0_374] : memref<9x128x128xf32, #tpu.memory_space<vmem>>, vector<1x128x128xf32>
    %316 = vector.shape_cast %315 : vector<1x128x128xf32> to vector<128x128xf32>
    %cst_375 = arith.constant dense<0.000000e+00> : vector<32x128xf32>
    %317 = tpu.matmul %277, %316, %cst_375 {dimension_numbers = #tpu.dot_dimension_numbers<[1], [0], [0], [1], [0, 0, 1, 1], [], []>} : vector<32x128xf32>, vector<128x128xf32>, vector<32x128xf32> -> vector<32x128xf32>
    %318 = arith.addf %314, %317 : vector<32x128xf32>
    %c6_376 = arith.constant 6 : index
    %c0_377 = arith.constant 0 : index
    %c0_378 = arith.constant 0 : index
    %319 = vector.load %arg5[%c6_376, %c0_377, %c0_378] : memref<9x128x128xf32, #tpu.memory_space<vmem>>, vector<1x128x128xf32>
    %320 = vector.shape_cast %319 : vector<1x128x128xf32> to vector<128x128xf32>
    %cst_379 = arith.constant dense<0.000000e+00> : vector<32x128xf32>
    %321 = tpu.matmul %275, %320, %cst_379 {dimension_numbers = #tpu.dot_dimension_numbers<[1], [0], [0], [1], [0, 0, 1, 1], [], []>} : vector<32x128xf32>, vector<128x128xf32>, vector<32x128xf32> -> vector<32x128xf32>
    %322 = arith.addf %318, %321 : vector<32x128xf32>
    %c8_380 = arith.constant 8 : index
    %c0_381 = arith.constant 0 : index
    %c0_382 = arith.constant 0 : index
    %323 = vector.load %arg5[%c8_380, %c0_381, %c0_382] : memref<9x128x128xf32, #tpu.memory_space<vmem>>, vector<1x128x128xf32>
    %324 = vector.shape_cast %323 : vector<1x128x128xf32> to vector<128x128xf32>
    %cst_383 = arith.constant dense<0.000000e+00> : vector<32x128xf32>
    %325 = tpu.matmul %273, %324, %cst_383 {dimension_numbers = #tpu.dot_dimension_numbers<[1], [0], [0], [1], [0, 0, 1, 1], [], []>} : vector<32x128xf32>, vector<128x128xf32>, vector<32x128xf32> -> vector<32x128xf32>
    %326 = arith.addf %322, %325 : vector<32x128xf32>
    %327 = vector.broadcast %151 : vector<1x128xf32> to vector<32x128xf32>
    %328 = arith.addf %326, %327 : vector<32x128xf32>
    %c3_384 = arith.constant 3 : index
    %c1_385 = arith.constant 1 : index
    %c0_386 = arith.constant 0 : index
    %c0_387 = arith.constant 0 : index
    %329 = vector.load %arg7[%c3_384, %c1_385, %c0_386, %c0_387] : memref<4x4x32x128xf32, #tpu.memory_space<vmem>>, vector<1x1x32x128xf32>
    %330 = vector.shape_cast %329 : vector<1x1x32x128xf32> to vector<32x128xf32>
    %331 = vector.shape_cast %328 : vector<32x128xf32> to vector<1x1x32x128xf32>
    tpu.vector_store %arg7[%c3_384, %c1_385, %c0_386, %c0_387], %331 {strides = array<i32>} : memref<4x4x32x128xf32, #tpu.memory_space<vmem>>, vector<1x1x32x128xf32>,
    %c6_388 = arith.constant 6 : index
    %c0_389 = arith.constant 0 : index
    %c0_390 = arith.constant 0 : index
    %c0_391 = arith.constant 0 : index
    %332 = vector.load %arg10[%c6_388, %c0_389, %c0_390, %c0_391] : memref<8x5x5x128xf32, #tpu.memory_space<vmem>>, vector<2x4x4x128xf32>
    %333 = vector.shape_cast %332 : vector<2x4x4x128xf32> to vector<32x128xf32>
    %c4_392 = arith.constant 4 : index
    %c0_393 = arith.constant 0 : index
    %c1_394 = arith.constant 1 : index
    %c0_395 = arith.constant 0 : index
    %334 = vector.load %arg10[%c4_392, %c0_393, %c1_394, %c0_395] : memref<8x5x5x128xf32, #tpu.memory_space<vmem>>, vector<2x4x4x128xf32>
    %335 = vector.shape_cast %334 : vector<2x4x4x128xf32> to vector<32x128xf32>
    %c2_396 = arith.constant 2 : index
    %c1_397 = arith.constant 1 : index
    %c0_398 = arith.constant 0 : index
    %c0_399 = arith.constant 0 : index
    %336 = vector.load %arg10[%c2_396, %c1_397, %c0_398, %c0_399] : memref<8x5x5x128xf32, #tpu.memory_space<vmem>>, vector<2x4x4x128xf32>
    %337 = vector.shape_cast %336 : vector<2x4x4x128xf32> to vector<32x128xf32>
    %c0_400 = arith.constant 0 : index
    %c1_401 = arith.constant 1 : index
    %c1_402 = arith.constant 1 : index
    %c0_403 = arith.constant 0 : index
    %338 = vector.load %arg10[%c0_400, %c1_401, %c1_402, %c0_403] : memref<8x5x5x128xf32, #tpu.memory_space<vmem>>, vector<2x4x4x128xf32>
    %339 = vector.shape_cast %338 : vector<2x4x4x128xf32> to vector<32x128xf32>
    %c4_404 = arith.constant 4 : index
    %c0_405 = arith.constant 0 : index
    %c0_406 = arith.constant 0 : index
    %340 = vector.load %arg5[%c4_404, %c0_405, %c0_406] : memref<9x128x128xf32, #tpu.memory_space<vmem>>, vector<1x128x128xf32>
    %341 = vector.shape_cast %340 : vector<1x128x128xf32> to vector<128x128xf32>
    %cst_407 = arith.constant dense<0.000000e+00> : vector<32x128xf32>
    %342 = tpu.matmul %333, %341, %cst_407 {dimension_numbers = #tpu.dot_dimension_numbers<[1], [0], [0], [1], [0, 0, 1, 1], [], []>} : vector<32x128xf32>, vector<128x128xf32>, vector<32x128xf32> -> vector<32x128xf32>
    %343 = vector.broadcast %151 : vector<1x128xf32> to vector<32x128xf32>
    %344 = arith.addf %342, %343 : vector<32x128xf32>
    %c2_408 = arith.constant 2 : index
    %c2_409 = arith.constant 2 : index
    %c0_410 = arith.constant 0 : index
    %c0_411 = arith.constant 0 : index
    %345 = vector.load %arg7[%c2_408, %c2_409, %c0_410, %c0_411] : memref<4x4x32x128xf32, #tpu.memory_space<vmem>>, vector<1x1x32x128xf32>
    %346 = vector.shape_cast %345 : vector<1x1x32x128xf32> to vector<32x128xf32>
    %347 = vector.shape_cast %344 : vector<32x128xf32> to vector<1x1x32x128xf32>
    tpu.vector_store %arg7[%c2_408, %c2_409, %c0_410, %c0_411], %347 {strides = array<i32>} : memref<4x4x32x128xf32, #tpu.memory_space<vmem>>, vector<1x1x32x128xf32>,
    %c3_412 = arith.constant 3 : index
    %c0_413 = arith.constant 0 : index
    %c0_414 = arith.constant 0 : index
    %348 = vector.load %arg5[%c3_412, %c0_413, %c0_414] : memref<9x128x128xf32, #tpu.memory_space<vmem>>, vector<1x128x128xf32>
    %349 = vector.shape_cast %348 : vector<1x128x128xf32> to vector<128x128xf32>
    %cst_415 = arith.constant dense<0.000000e+00> : vector<32x128xf32>
    %350 = tpu.matmul %335, %349, %cst_415 {dimension_numbers = #tpu.dot_dimension_numbers<[1], [0], [0], [1], [0, 0, 1, 1], [], []>} : vector<32x128xf32>, vector<128x128xf32>, vector<32x128xf32> -> vector<32x128xf32>
    %c5_416 = arith.constant 5 : index
    %c0_417 = arith.constant 0 : index
    %c0_418 = arith.constant 0 : index
    %351 = vector.load %arg5[%c5_416, %c0_417, %c0_418] : memref<9x128x128xf32, #tpu.memory_space<vmem>>, vector<1x128x128xf32>
    %352 = vector.shape_cast %351 : vector<1x128x128xf32> to vector<128x128xf32>
    %cst_419 = arith.constant dense<0.000000e+00> : vector<32x128xf32>
    %353 = tpu.matmul %333, %352, %cst_419 {dimension_numbers = #tpu.dot_dimension_numbers<[1], [0], [0], [1], [0, 0, 1, 1], [], []>} : vector<32x128xf32>, vector<128x128xf32>, vector<32x128xf32> -> vector<32x128xf32>
    %354 = arith.addf %350, %353 : vector<32x128xf32>
    %355 = vector.broadcast %151 : vector<1x128xf32> to vector<32x128xf32>
    %356 = arith.addf %354, %355 : vector<32x128xf32>
    %c2_420 = arith.constant 2 : index
    %c3_421 = arith.constant 3 : index
    %c0_422 = arith.constant 0 : index
    %c0_423 = arith.constant 0 : index
    %357 = vector.load %arg7[%c2_420, %c3_421, %c0_422, %c0_423] : memref<4x4x32x128xf32, #tpu.memory_space<vmem>>, vector<1x1x32x128xf32>
    %358 = vector.shape_cast %357 : vector<1x1x32x128xf32> to vector<32x128xf32>
    %359 = vector.shape_cast %356 : vector<32x128xf32> to vector<1x1x32x128xf32>
    tpu.vector_store %arg7[%c2_420, %c3_421, %c0_422, %c0_423], %359 {strides = array<i32>} : memref<4x4x32x128xf32, #tpu.memory_space<vmem>>, vector<1x1x32x128xf32>,
    %c1_424 = arith.constant 1 : index
    %c0_425 = arith.constant 0 : index
    %c0_426 = arith.constant 0 : index
    %360 = vector.load %arg5[%c1_424, %c0_425, %c0_426] : memref<9x128x128xf32, #tpu.memory_space<vmem>>, vector<1x128x128xf32>
    %361 = vector.shape_cast %360 : vector<1x128x128xf32> to vector<128x128xf32>
    %cst_427 = arith.constant dense<0.000000e+00> : vector<32x128xf32>
    %362 = tpu.matmul %337, %361, %cst_427 {dimension_numbers = #tpu.dot_dimension_numbers<[1], [0], [0], [1], [0, 0, 1, 1], [], []>} : vector<32x128xf32>, vector<128x128xf32>, vector<32x128xf32> -> vector<32x128xf32>
    %c7_428 = arith.constant 7 : index
    %c0_429 = arith.constant 0 : index
    %c0_430 = arith.constant 0 : index
    %363 = vector.load %arg5[%c7_428, %c0_429, %c0_430] : memref<9x128x128xf32, #tpu.memory_space<vmem>>, vector<1x128x128xf32>
    %364 = vector.shape_cast %363 : vector<1x128x128xf32> to vector<128x128xf32>
    %cst_431 = arith.constant dense<0.000000e+00> : vector<32x128xf32>
    %365 = tpu.matmul %333, %364, %cst_431 {dimension_numbers = #tpu.dot_dimension_numbers<[1], [0], [0], [1], [0, 0, 1, 1], [], []>} : vector<32x128xf32>, vector<128x128xf32>, vector<32x128xf32> -> vector<32x128xf32>
    %366 = arith.addf %362, %365 : vector<32x128xf32>
    %367 = vector.broadcast %151 : vector<1x128xf32> to vector<32x128xf32>
    %368 = arith.addf %366, %367 : vector<32x128xf32>
    %c3_432 = arith.constant 3 : index
    %c2_433 = arith.constant 2 : index
    %c0_434 = arith.constant 0 : index
    %c0_435 = arith.constant 0 : index
    %369 = vector.load %arg7[%c3_432, %c2_433, %c0_434, %c0_435] : memref<4x4x32x128xf32, #tpu.memory_space<vmem>>, vector<1x1x32x128xf32>
    %370 = vector.shape_cast %369 : vector<1x1x32x128xf32> to vector<32x128xf32>
    %371 = vector.shape_cast %368 : vector<32x128xf32> to vector<1x1x32x128xf32>
    tpu.vector_store %arg7[%c3_432, %c2_433, %c0_434, %c0_435], %371 {strides = array<i32>} : memref<4x4x32x128xf32, #tpu.memory_space<vmem>>, vector<1x1x32x128xf32>,
    %c0_436 = arith.constant 0 : index
    %c0_437 = arith.constant 0 : index
    %c0_438 = arith.constant 0 : index
    %372 = vector.load %arg5[%c0_436, %c0_437, %c0_438] : memref<9x128x128xf32, #tpu.memory_space<vmem>>, vector<1x128x128xf32>
    %373 = vector.shape_cast %372 : vector<1x128x128xf32> to vector<128x128xf32>
    %cst_439 = arith.constant dense<0.000000e+00> : vector<32x128xf32>
    %374 = tpu.matmul %339, %373, %cst_439 {dimension_numbers = #tpu.dot_dimension_numbers<[1], [0], [0], [1], [0, 0, 1, 1], [], []>} : vector<32x128xf32>, vector<128x128xf32>, vector<32x128xf32> -> vector<32x128xf32>
    %c2_440 = arith.constant 2 : index
    %c0_441 = arith.constant 0 : index
    %c0_442 = arith.constant 0 : index
    %375 = vector.load %arg5[%c2_440, %c0_441, %c0_442] : memref<9x128x128xf32, #tpu.memory_space<vmem>>, vector<1x128x128xf32>
    %376 = vector.shape_cast %375 : vector<1x128x128xf32> to vector<128x128xf32>
    %cst_443 = arith.constant dense<0.000000e+00> : vector<32x128xf32>
    %377 = tpu.matmul %337, %376, %cst_443 {dimension_numbers = #tpu.dot_dimension_numbers<[1], [0], [0], [1], [0, 0, 1, 1], [], []>} : vector<32x128xf32>, vector<128x128xf32>, vector<32x128xf32> -> vector<32x128xf32>
    %378 = arith.addf %374, %377 : vector<32x128xf32>
    %c6_444 = arith.constant 6 : index
    %c0_445 = arith.constant 0 : index
    %c0_446 = arith.constant 0 : index
    %379 = vector.load %arg5[%c6_444, %c0_445, %c0_446] : memref<9x128x128xf32, #tpu.memory_space<vmem>>, vector<1x128x128xf32>
    %380 = vector.shape_cast %379 : vector<1x128x128xf32> to vector<128x128xf32>
    %cst_447 = arith.constant dense<0.000000e+00> : vector<32x128xf32>
    %381 = tpu.matmul %335, %380, %cst_447 {dimension_numbers = #tpu.dot_dimension_numbers<[1], [0], [0], [1], [0, 0, 1, 1], [], []>} : vector<32x128xf32>, vector<128x128xf32>, vector<32x128xf32> -> vector<32x128xf32>
    %382 = arith.addf %378, %381 : vector<32x128xf32>
    %c8_448 = arith.constant 8 : index
    %c0_449 = arith.constant 0 : index
    %c0_450 = arith.constant 0 : index
    %383 = vector.load %arg5[%c8_448, %c0_449, %c0_450] : memref<9x128x128xf32, #tpu.memory_space<vmem>>, vector<1x128x128xf32>
    %384 = vector.shape_cast %383 : vector<1x128x128xf32> to vector<128x128xf32>
    %cst_451 = arith.constant dense<0.000000e+00> : vector<32x128xf32>
    %385 = tpu.matmul %333, %384, %cst_451 {dimension_numbers = #tpu.dot_dimension_numbers<[1], [0], [0], [1], [0, 0, 1, 1], [], []>} : vector<32x128xf32>, vector<128x128xf32>, vector<32x128xf32> -> vector<32x128xf32>
    %386 = arith.addf %382, %385 : vector<32x128xf32>
    %387 = vector.broadcast %151 : vector<1x128xf32> to vector<32x128xf32>
    %388 = arith.addf %386, %387 : vector<32x128xf32>
    %c3_452 = arith.constant 3 : index
    %c3_453 = arith.constant 3 : index
    %c0_454 = arith.constant 0 : index
    %c0_455 = arith.constant 0 : index
    %389 = vector.load %arg7[%c3_452, %c3_453, %c0_454, %c0_455] : memref<4x4x32x128xf32, #tpu.memory_space<vmem>>, vector<1x1x32x128xf32>
    %390 = vector.shape_cast %389 : vector<1x1x32x128xf32> to vector<32x128xf32>
    %391 = vector.shape_cast %388 : vector<32x128xf32> to vector<1x1x32x128xf32>
    tpu.vector_store %arg7[%c3_452, %c3_453, %c0_454, %c0_455], %391 {strides = array<i32>} : memref<4x4x32x128xf32, #tpu.memory_space<vmem>>, vector<1x1x32x128xf32>,
    return
  }
  func.func @transform_0(%arg0: i32) -> (i32, i32) {
    %c0_i32 = arith.constant 0 : i32
    %c0_i32_0 = arith.constant 0 : i32
    %c0_i32_1 = arith.constant 0 : i32
    return %c0_i32, %c0_i32_0 : i32, i32
  }
  func.func @transform_1(%arg0: i32) -> (i32, i32) {
    %c0_i32 = arith.constant 0 : i32
    %c0_i32_0 = arith.constant 0 : i32
    %c0_i32_1 = arith.constant 0 : i32
    return %c0_i32, %c0_i32_0 : i32, i32
  }
  func.func @transform_2(%arg0: i32) -> (i32, i32, i32) {
    %c0_i32 = arith.constant 0 : i32
    %c0_i32_0 = arith.constant 0 : i32
    %c0_i32_1 = arith.constant 0 : i32
    %c0_i32_2 = arith.constant 0 : i32
    return %c0_i32, %c0_i32_0, %c0_i32_1 : i32, i32, i32
  }
  func.func @transform_3(%arg0: i32) -> (i32, i32, i32) {
    %c0_i32 = arith.constant 0 : i32
    %c0_i32_0 = arith.constant 0 : i32
    %c0_i32_1 = arith.constant 0 : i32
    %c0_i32_2 = arith.constant 0 : i32
    return %c0_i32, %c0_i32_0, %c0_i32_1 : i32, i32, i32
  }
  func.func @transform_4(%arg0: i32) -> (i32, i32, i32) {
    %c0_i32 = arith.constant 0 : i32
    %c0_i32_0 = arith.constant 0 : i32
    %c0_i32_1 = arith.constant 0 : i32
    %c0_i32_2 = arith.constant 0 : i32
    return %c0_i32, %c0_i32_0, %c0_i32_1 : i32, i32, i32
  }
  func.func @transform_5(%arg0: i32) -> (i32, i32) {
    %c0_i32 = arith.constant 0 : i32
    %c0_i32_0 = arith.constant 0 : i32
    %c0_i32_1 = arith.constant 0 : i32
    return %c0_i32, %c0_i32_0 : i32, i32
  }
  func.func @transform_6(%arg0: i32) -> (i32, i32, i32, i32) {
    %c0_i32 = arith.constant 0 : i32
    %c0_i32_0 = arith.constant 0 : i32
    %c0_i32_1 = arith.constant 0 : i32
    %c0_i32_2 = arith.constant 0 : i32
    %c0_i32_3 = arith.constant 0 : i32
    return %c0_i32, %c0_i32_0, %c0_i32_1, %c0_i32_2 : i32, i32, i32, i32
  }
}

</mosaic_0001>

<llo_original>
// kernel: aut_enc_a_forward.1
$region0: #{aut_enc_a_forward.1}
  #allocation0 [shape = 'u32[]', space=smem, size = 0x4, offset = 0x4, fixed_abs, tag = 'smem constant byte address 0x4 - core index']
  #allocation1 [shape = 'u32[72,128]{1,0:T(1,128)}', space=vmem, size = 0x9000, scoped, tag = 'internal scratch']
  #allocation2 [shape = 'f32[8,5,5,128]{3,2,1,0:T(8,128)}', space=vmem, size = 0x28000, scoped, tag = 'scratch operand']
  #allocation3 [shape = 'f32[2,5,5,128]{3,2,1,0:T(8,128)}', space=vmem, size = 0xa000, scoped, tag = 'scratch operand']
  #allocation4 [shape = 'f32[8,5,5,128]{3,2,1,0:T(8,128)}', space=vmem, size = 0x28000, scoped, tag = 'scratch operand']
  %s0 = inlined_call_operand.vmem [shape: f32[128,128], index: 0, kind: input, shape index: {}]
  %s1 = inlined_call_operand.vmem [shape: f32[128,128], index: 1, kind: input, shape index: {}]
  %s2 = inlined_call_operand.vmem [shape: f32[9,128,128], index: 2, kind: input, shape index: {}]
  %s3 = inlined_call_operand.vmem [shape: f32[9,128,128], index: 3, kind: input, shape index: {}]
  %s4 = inlined_call_operand.vmem [shape: f32[9,128,128], index: 4, kind: input, shape index: {}]
  %s5 = inlined_call_operand.vmem [shape: f32[8,128], index: 5, kind: input, shape index: {}]
  %s6 = inlined_call_operand.vmem [shape: f32[4,4,32,128], index: 6, kind: output, shape index: {}]
  %s7 = sld [smem:[#allocation0]]
  $region34: #{aut_enc_a_forward.1} parent=0
    _
  %s9 = ssub.s32 1, %s7
  %s10 = scalar_select 0, %s9, %s7
  // Predicated region
  $region2: #{aut_enc_a_forward.1} parent=0 // pred_check
    _
  $region3: #{aut_enc_a_forward.1} parent=0 // pred_check_branch
    %12 = sbr.rel (0) target = $region5
  $region4: #{aut_enc_a_forward.1} parent=0 // pred_region
    _
  $region5: #{aut_enc_a_forward.1} parent=0 // pred_fallthru
    _
  // Predicated region
  $region6: #{aut_enc_a_forward.1} parent=0 // pred_check
    _
  $region7: #{aut_enc_a_forward.1} parent=0 // pred_check_branch
    %14 = sbr.rel (0) target = $region9
  $region8: #{aut_enc_a_forward.1} parent=0 // pred_region
    _
  $region9: #{aut_enc_a_forward.1} parent=0 // pred_fallthru
    _
  // Predicated region
  $region10: #{aut_enc_a_forward.1} parent=0 // pred_check
    _
  $region11: #{aut_enc_a_forward.1} parent=0 // pred_check_branch
    %16 = sbr.rel (0) target = $region13
  $region12: #{aut_enc_a_forward.1} parent=0 // pred_region
    _
  $region13: #{aut_enc_a_forward.1} parent=0 // pred_fallthru
    _
  // Predicated region
  $region14: #{aut_enc_a_forward.1} parent=0 // pred_check
    _
  $region15: #{aut_enc_a_forward.1} parent=0 // pred_check_branch
    %18 = sbr.rel (0) target = $region17
  $region16: #{aut_enc_a_forward.1} parent=0 // pred_region
    _
  $region17: #{aut_enc_a_forward.1} parent=0 // pred_fallthru
    _
  // Predicated region
  $region18: #{aut_enc_a_forward.1} parent=0 // pred_check
    _
  $region19: #{aut_enc_a_forward.1} parent=0 // pred_check_branch
    %20 = sbr.rel (0) target = $region21
  $region20: #{aut_enc_a_forward.1} parent=0 // pred_region
    _
  $region21: #{aut_enc_a_forward.1} parent=0 // pred_fallthru
    _
  // Predicated region
  $region22: #{aut_enc_a_forward.1} parent=0 // pred_check
    _
  $region23: #{aut_enc_a_forward.1} parent=0 // pred_check_branch
    %22 = sbr.rel (0) target = $region25
  $region24: #{aut_enc_a_forward.1} parent=0 // pred_region
    _
  $region25: #{aut_enc_a_forward.1} parent=0 // pred_fallthru
    _
  %23 = vst [vmem:[#allocation2] sm:$0x1f] 0.0
  %24 = vst [vmem:[#allocation2 + $0x8] sm:$0x1f] 0.0
  %25 = vst [vmem:[#allocation2 + $0x10] sm:$0x1f] 0.0
  %26 = vst [vmem:[#allocation2 + $0x18] sm:$0x1f] 0.0
  %27 = vst [vmem:[#allocation2 + $0x20] sm:$0x1f] 0.0
  %28 = vst [vmem:[#allocation2 + $0x28] sm:$0x1f] 0.0
  %29 = vst [vmem:[#allocation2 + $0x30] sm:$0x1f] 0.0
  %30 = vst [vmem:[#allocation2 + $0x38] sm:$0x1f] 0.0
  %31 = vst [vmem:[#allocation2 + $0x40] sm:$0x1f] 0.0
  %32 = vst [vmem:[#allocation2 + $0x48] sm:$0x1f] 0.0
  %33 = vst [vmem:[#allocation2 + $0x50] sm:$0x1f] 0.0
  %34 = vst [vmem:[#allocation2 + $0x58] sm:$0x1f] 0.0
  %35 = vst [vmem:[#allocation2 + $0x60] sm:$0x1f] 0.0
  %36 = vst [vmem:[#allocation2 + $0x68] sm:$0x1f] 0.0
  %37 = vst [vmem:[#allocation2 + $0x70] sm:$0x1f] 0.0
  %38 = vst [vmem:[#allocation2 + $0x78] sm:$0x1f] 0.0
  %39 = vst [vmem:[#allocation2 + $0x80] sm:$0x1f] 0.0
  %40 = vst [vmem:[#allocation2 + $0x88] sm:$0x1f] 0.0
  %41 = vst [vmem:[#allocation2 + $0x90] sm:$0x1f] 0.0
  %42 = vst [vmem:[#allocation2 + $0x98] sm:$0x1f] 0.0
  %43 = vst [vmem:[#allocation2 + $0xa0] sm:$0x1f] 0.0
  %44 = vst [vmem:[#allocation2 + $0xa8] sm:$0x1f] 0.0
  %45 = vst [vmem:[#allocation2 + $0xb0] sm:$0x1f] 0.0
  %46 = vst [vmem:[#allocation2 + $0xb8] sm:$0x1f] 0.0
  %47 = vst [vmem:[#allocation2 + $0xc0] sm:$0x1f] 0.0
  %48 = vst [vmem:[#allocation2 + $0xc8] sm:$0x1f] 0.0
  %49 = vst [vmem:[#allocation2 + $0xd0] sm:$0x1f] 0.0
  %50 = vst [vmem:[#allocation2 + $0xd8] sm:$0x1f] 0.0
  %51 = vst [vmem:[#allocation2 + $0xe0] sm:$0x1f] 0.0
  %52 = vst [vmem:[#allocation2 + $0xe8] sm:$0x1f] 0.0
  %53 = vst [vmem:[#allocation2 + $0xf0] sm:$0x1f] 0.0
  %54 = vst [vmem:[#allocation2 + $0xf8] sm:$0x1f] 0.0
  %55 = vst [vmem:[#allocation2 + $0x100] sm:$0x1f] 0.0
  %56 = vst [vmem:[#allocation2 + $0x108] sm:$0x1f] 0.0
  %57 = vst [vmem:[#allocation2 + $0x110] sm:$0x1f] 0.0
  %58 = vst [vmem:[#allocation2 + $0x118] sm:$0x1f] 0.0
  %59 = vst [vmem:[#allocation2 + $0x120] sm:$0x1f] 0.0
  %60 = vst [vmem:[#allocation2 + $0x128] sm:$0x1f] 0.0
  %61 = vst [vmem:[#allocation2 + $0x130] sm:$0x1f] 0.0
  %62 = vst [vmem:[#allocation2 + $0x138] sm:$0x1f] 0.0
  %63 = vst [vmem:[#allocation3] sm:$0x1f] 0.0
  %64 = vst [vmem:[#allocation3 + $0x8] sm:$0x1f] 0.0
  %65 = vst [vmem:[#allocation3 + $0x10] sm:$0x1f] 0.0
  %66 = vst [vmem:[#allocation3 + $0x18] sm:$0x1f] 0.0
  %67 = vst [vmem:[#allocation3 + $0x20] sm:$0x1f] 0.0
  %68 = vst [vmem:[#allocation3 + $0x28] sm:$0x1f] 0.0
  %69 = vst [vmem:[#allocation3 + $0x30] sm:$0x1f] 0.0
  %70 = vst [vmem:[#allocation3 + $0x38] sm:$0x1f] 0.0
  %71 = vst [vmem:[#allocation3 + $0x40] sm:$0x1f] 0.0
  %72 = vst [vmem:[#allocation3 + $0x48] sm:$0x1f] 0.0
  %73 = vst [vmem:[#allocation4] sm:$0x1f] 0.0
  %74 = vst [vmem:[#allocation4 + $0x8] sm:$0x1f] 0.0
  %75 = vst [vmem:[#allocation4 + $0x10] sm:$0x1f] 0.0
  %76 = vst [vmem:[#allocation4 + $0x18] sm:$0x1f] 0.0
  %77 = vst [vmem:[#allocation4 + $0x20] sm:$0x1f] 0.0
  %78 = vst [vmem:[#allocation4 + $0x28] sm:$0x1f] 0.0
  %79 = vst [vmem:[#allocation4 + $0x30] sm:$0x1f] 0.0
  %80 = vst [vmem:[#allocation4 + $0x38] sm:$0x1f] 0.0
  %81 = vst [vmem:[#allocation4 + $0x40] sm:$0x1f] 0.0
  %82 = vst [vmem:[#allocation4 + $0x48] sm:$0x1f] 0.0
  %83 = vst [vmem:[#allocation4 + $0x50] sm:$0x1f] 0.0
  %84 = vst [vmem:[#allocation4 + $0x58] sm:$0x1f] 0.0
  %85 = vst [vmem:[#allocation4 + $0x60] sm:$0x1f] 0.0
  %86 = vst [vmem:[#allocation4 + $0x68] sm:$0x1f] 0.0
  %87 = vst [vmem:[#allocation4 + $0x70] sm:$0x1f] 0.0
  %88 = vst [vmem:[#allocation4 + $0x78] sm:$0x1f] 0.0
  %89 = vst [vmem:[#allocation4 + $0x80] sm:$0x1f] 0.0
  %90 = vst [vmem:[#allocation4 + $0x88] sm:$0x1f] 0.0
  %91 = vst [vmem:[#allocation4 + $0x90] sm:$0x1f] 0.0
  %92 = vst [vmem:[#allocation4 + $0x98] sm:$0x1f] 0.0
  %93 = vst [vmem:[#allocation4 + $0xa0] sm:$0x1f] 0.0
  %94 = vst [vmem:[#allocation4 + $0xa8] sm:$0x1f] 0.0
  %95 = vst [vmem:[#allocation4 + $0xb0] sm:$0x1f] 0.0
  %96 = vst [vmem:[#allocation4 + $0xb8] sm:$0x1f] 0.0
  %97 = vst [vmem:[#allocation4 + $0xc0] sm:$0x1f] 0.0
  %98 = vst [vmem:[#allocation4 + $0xc8] sm:$0x1f] 0.0
  %99 = vst [vmem:[#allocation4 + $0xd0] sm:$0x1f] 0.0
  %100 = vst [vmem:[#allocation4 + $0xd8] sm:$0x1f] 0.0
  %101 = vst [vmem:[#allocation4 + $0xe0] sm:$0x1f] 0.0
  %102 = vst [vmem:[#allocation4 + $0xe8] sm:$0x1f] 0.0
  %103 = vst [vmem:[#allocation4 + $0xf0] sm:$0x1f] 0.0
  %104 = vst [vmem:[#allocation4 + $0xf8] sm:$0x1f] 0.0
  %105 = vst [vmem:[#allocation4 + $0x100] sm:$0x1f] 0.0
  %106 = vst [vmem:[#allocation4 + $0x108] sm:$0x1f] 0.0
  %107 = vst [vmem:[#allocation4 + $0x110] sm:$0x1f] 0.0
  %108 = vst [vmem:[#allocation4 + $0x118] sm:$0x1f] 0.0
  %109 = vst [vmem:[#allocation4 + $0x120] sm:$0x1f] 0.0
  %110 = vst [vmem:[#allocation4 + $0x128] sm:$0x1f] 0.0
  %111 = vst [vmem:[#allocation4 + $0x130] sm:$0x1f] 0.0
  %112 = vst [vmem:[#allocation4 + $0x138] sm:$0x1f] 0.0
  %v113 = vld [vmem:[%s5] sm:$0x1]
  %v114 = vld [vmem:[%s0] sm:$0xff]
  %v115 = vld [vmem:[%s0 + $0x8] sm:$0xff]
  %v116 = vld [vmem:[%s0 + $0x10] sm:$0xff]
  %v117 = vld [vmem:[%s0 + $0x18] sm:$0xff]
  %v118 = vld [vmem:[%s0 + $0x20] sm:$0xff]
  %v119 = vld [vmem:[%s0 + $0x28] sm:$0xff]
  %v120 = vld [vmem:[%s0 + $0x30] sm:$0xff]
  %v121 = vld [vmem:[%s0 + $0x38] sm:$0xff]
  %v122 = vld [vmem:[%s0 + $0x40] sm:$0xff]
  %v123 = vld [vmem:[%s0 + $0x48] sm:$0xff]
  %v124 = vld [vmem:[%s0 + $0x50] sm:$0xff]
  %v125 = vld [vmem:[%s0 + $0x58] sm:$0xff]
  %v126 = vld [vmem:[%s0 + $0x60] sm:$0xff]
  %v127 = vld [vmem:[%s0 + $0x68] sm:$0xff]
  %v128 = vld [vmem:[%s0 + $0x70] sm:$0xff]
  %v129 = vld [vmem:[%s0 + $0x78] sm:$0xff]
  %v130 = vld [vmem:[%s1] sm:$0xff]
  %v131 = vld [vmem:[%s1 + $0x8] sm:$0xff]
  %v132 = vld [vmem:[%s1 + $0x10] sm:$0xff]
  %v133 = vld [vmem:[%s1 + $0x18] sm:$0xff]
  %v134 = vld [vmem:[%s1 + $0x20] sm:$0xff]
  %v135 = vld [vmem:[%s1 + $0x28] sm:$0xff]
  %v136 = vld [vmem:[%s1 + $0x30] sm:$0xff]
  %v137 = vld [vmem:[%s1 + $0x38] sm:$0xff]
  %v138 = vld [vmem:[%s1 + $0x40] sm:$0xff]
  %v139 = vld [vmem:[%s1 + $0x48] sm:$0xff]
  %v140 = vld [vmem:[%s1 + $0x50] sm:$0xff]
  %v141 = vld [vmem:[%s1 + $0x58] sm:$0xff]
  %v142 = vld [vmem:[%s1 + $0x60] sm:$0xff]
  %v143 = vld [vmem:[%s1 + $0x68] sm:$0xff]
  %v144 = vld [vmem:[%s1 + $0x70] sm:$0xff]
  %v145 = vld [vmem:[%s1 + $0x78] sm:$0xff]
  %v146 = vperm.slane %v113, 0
  %147 = vmatpush.msra.mxu0 %v145
  %148 = vmatpush.msra.mxu0 %v144
  %149 = vmatpush.msra.mxu0 %v143
  %150 = vmatpush.msra.mxu0 %v142
  %151 = vmatpush.msra.mxu0 %v141
  %152 = vmatpush.msra.mxu0 %v140
  %153 = vmatpush.msra.mxu0 %v139
  %154 = vmatpush.msra.mxu0 %v138
  %155 = vmatpush.msra.mxu0 %v137
  %156 = vmatpush.msra.mxu0 %v136
  %157 = vmatpush.msra.mxu0 %v135
  %158 = vmatpush.msra.mxu0 %v134
  %159 = vmatpush.msra.mxu0 %v133
  %160 = vmatpush.msra.mxu0 %v132
  %161 = vmatpush.msra.mxu0 %v131
  %162 = vmatpush.msra.mxu0 %v130
  %163 = vmatmul.f32.gmra.mxu0 %v114
  %v164 = vpop.f32.mrf.mxu0
  %v165 = vadd.f32 %v146, %v164
  %166 = vmatmul.f32.gmra.mxu0 %v115
  %v167 = vpop.f32.mrf.mxu0
  %v168 = vadd.f32 %v146, %v167
  %169 = vmatmul.f32.gmra.mxu0 %v116
  %v170 = vpop.f32.mrf.mxu0
  %v171 = vadd.f32 %v146, %v170
  %172 = vmatmul.f32.gmra.mxu0 %v117
  %v173 = vpop.f32.mrf.mxu0
  %v174 = vadd.f32 %v146, %v173
  %175 = vmatmul.f32.gmra.mxu0 %v118
  %v176 = vpop.f32.mrf.mxu0
  %v177 = vadd.f32 %v146, %v176
  %178 = vmatmul.f32.gmra.mxu0 %v119
  %v179 = vpop.f32.mrf.mxu0
  %v180 = vadd.f32 %v146, %v179
  %181 = vmatmul.f32.gmra.mxu0 %v120
  %v182 = vpop.f32.mrf.mxu0
  %v183 = vadd.f32 %v146, %v182
  %184 = vmatmul.f32.gmra.mxu0 %v121
  %v185 = vpop.f32.mrf.mxu0
  %v186 = vadd.f32 %v146, %v185
  %187 = vmatmul.f32.gmra.mxu0 %v122
  %v188 = vpop.f32.mrf.mxu0
  %v189 = vadd.f32 %v146, %v188
  %190 = vmatmul.f32.gmra.mxu0 %v123
  %v191 = vpop.f32.mrf.mxu0
  %v192 = vadd.f32 %v146, %v191
  %193 = vmatmul.f32.gmra.mxu0 %v124
  %v194 = vpop.f32.mrf.mxu0
  %v195 = vadd.f32 %v146, %v194
  %196 = vmatmul.f32.gmra.mxu0 %v125
  %v197 = vpop.f32.mrf.mxu0
  %v198 = vadd.f32 %v146, %v197
  %199 = vmatmul.f32.gmra.mxu0 %v126
  %v200 = vpop.f32.mrf.mxu0
  %v201 = vadd.f32 %v146, %v200
  %202 = vmatmul.f32.gmra.mxu0 %v127
  %v203 = vpop.f32.mrf.mxu0
  %v204 = vadd.f32 %v146, %v203
  %205 = vmatmul.f32.gmra.mxu0 %v128
  %v206 = vpop.f32.mrf.mxu0
  %v207 = vadd.f32 %v146, %v206
  %208 = vmatmul.f32.gmra.mxu0 %v129
  %v209 = vpop.f32.mrf.mxu0
  %v210 = vadd.f32 %v146, %v209
  %211 = vdwg.mxu0
  %v212 = vmax.f32 %v165, 0.0
  %v213 = vmax.f32 %v168, 0.0
  %v214 = vmax.f32 %v171, 0.0
  %v215 = vmax.f32 %v174, 0.0
  %v216 = vmax.f32 %v177, 0.0
  %v217 = vmax.f32 %v180, 0.0
  %v218 = vmax.f32 %v183, 0.0
  %v219 = vmax.f32 %v186, 0.0
  %v220 = vmax.f32 %v189, 0.0
  %v221 = vmax.f32 %v192, 0.0
  %v222 = vmax.f32 %v195, 0.0
  %v223 = vmax.f32 %v198, 0.0
  %v224 = vmax.f32 %v201, 0.0
  %v225 = vmax.f32 %v204, 0.0
  %v226 = vmax.f32 %v207, 0.0
  %v227 = vmax.f32 %v210, 0.0
  %v232 = vrot.slane %v212, 4
  %v233 = vrot.slane %v213, 4
  %v234 = vrot.slane %v214, 4
  %v235 = vrot.slane %v215, 4
  %s240 = scalar_lea.vmem [#allocation2], 240
  %241 = vst [vmem:[%s240] sm:$0xf] %v212
  %242 = vst [vmem:[%s240 + $0x8] sm:$0xf] %v232
  %243 = vst [vmem:[%s240 + $0x10] sm:$0xf] %v213
  %244 = vst [vmem:[%s240 + $0x18] sm:$0xf] %v233
  %245 = vst [vmem:[%s240 + $0x28] sm:$0xf] %v214
  %246 = vst [vmem:[%s240 + $0x30] sm:$0xf] %v234
  %247 = vst [vmem:[%s240 + $0x38] sm:$0xf] %v215
  %248 = vst [vmem:[%s240 + $0x40] sm:$0xf] %v235
  %v253 = vrot.slane %v216, 4
  %v254 = vrot.slane %v217, 4
  %v255 = vrot.slane %v218, 4
  %v256 = vrot.slane %v219, 4
  %s261 = scalar_lea.vmem [#allocation2], 160
  %262 = vst [vmem:[%s261 + $0x1] sm:$0xf] %v216
  %263 = vst [vmem:[%s261 + $0x9] sm:$0xf] %v253
  %264 = vst [vmem:[%s261 + $0x11] sm:$0xf] %v217
  %265 = vst [vmem:[%s261 + $0x19] sm:$0xf] %v254
  %266 = vst [vmem:[%s261 + $0x29] sm:$0xf] %v218
  %267 = vst [vmem:[%s261 + $0x31] sm:$0xf] %v255
  %268 = vst [vmem:[%s261 + $0x39] sm:$0xf] %v219
  %269 = vst [vmem:[%s261 + $0x41] sm:$0xf] %v256
  %v274 = vrot.slane %v220, 4
  %v275 = vrot.slane %v221, 4
  %v276 = vrot.slane %v222, 4
  %v277 = vrot.slane %v223, 4
  %s282 = scalar_lea.vmem [#allocation2], 88
  %283 = vst [vmem:[%s282] sm:$0xf] %v220
  %284 = vst [vmem:[%s282 + $0x8] sm:$0xf] %v274
  %285 = vst [vmem:[%s282 + $0x10] sm:$0xf] %v221
  %286 = vst [vmem:[%s282 + $0x18] sm:$0xf] %v275
  %287 = vst [vmem:[%s282 + $0x28] sm:$0xf] %v222
  %288 = vst [vmem:[%s282 + $0x30] sm:$0xf] %v276
  %289 = vst [vmem:[%s282 + $0x38] sm:$0xf] %v223
  %290 = vst [vmem:[%s282 + $0x40] sm:$0xf] %v277
  %v295 = vrot.slane %v224, 4
  %v296 = vrot.slane %v225, 4
  %v297 = vrot.slane %v226, 4
  %v298 = vrot.slane %v227, 4
  %s303 = scalar_lea.vmem [#allocation2], 8
  %304 = vst [vmem:[%s303 + $0x1] sm:$0xf] %v224
  %305 = vst [vmem:[%s303 + $0x9] sm:$0xf] %v295
  %306 = vst [vmem:[%s303 + $0x11] sm:$0xf] %v225
  %307 = vst [vmem:[%s303 + $0x19] sm:$0xf] %v296
  %308 = vst [vmem:[%s303 + $0x29] sm:$0xf] %v226
  %309 = vst [vmem:[%s303 + $0x31] sm:$0xf] %v297
  %310 = vst [vmem:[%s303 + $0x39] sm:$0xf] %v227
  %311 = vst [vmem:[%s303 + $0x41] sm:$0xf] %v298
  %v312 = vld [vmem:[%s5 + $0x1] sm:$0x1]
  %v313 = vld [vmem:[#allocation2] sm:$0xf]
  %v314 = vld [vmem:[#allocation2 + $0x8] sm:$0xf]
  %v315 = vld [vmem:[#allocation2 + $0x10] sm:$0xf]
  %v316 = vld [vmem:[#allocation2 + $0x18] sm:$0xf]
  %v317 = vld [vmem:[#allocation2 + $0x28] sm:$0xf]
  %v318 = vld [vmem:[#allocation2 + $0x30] sm:$0xf]
  %v319 = vld [vmem:[#allocation2 + $0x38] sm:$0xf]
  %v320 = vld [vmem:[#allocation2 + $0x40] sm:$0xf]
  %v321 = vld [vmem:[%s2] sm:$0xff]
  %v322 = vld [vmem:[%s2 + $0x8] sm:$0xff]
  %v323 = vld [vmem:[%s2 + $0x10] sm:$0xff]
  %v324 = vld [vmem:[%s2 + $0x18] sm:$0xff]
  %v325 = vld [vmem:[%s2 + $0x20] sm:$0xff]
  %v326 = vld [vmem:[%s2 + $0x28] sm:$0xff]
  %v327 = vld [vmem:[%s2 + $0x30] sm:$0xff]
  %v328 = vld [vmem:[%s2 + $0x38] sm:$0xff]
  %v329 = vld [vmem:[%s2 + $0x40] sm:$0xff]
  %v330 = vld [vmem:[%s2 + $0x48] sm:$0xff]
  %v331 = vld [vmem:[%s2 + $0x50] sm:$0xff]
  %v332 = vld [vmem:[%s2 + $0x58] sm:$0xff]
  %v333 = vld [vmem:[%s2 + $0x60] sm:$0xff]
  %v334 = vld [vmem:[%s2 + $0x68] sm:$0xff]
  %v335 = vld [vmem:[%s2 + $0x70] sm:$0xff]
  %v336 = vld [vmem:[%s2 + $0x78] sm:$0xff]
  %s337 = scalar_lea.vmem [#allocation2], 80
  %v338 = vld [vmem:[%s337] sm:$0xf]
  %v339 = vld [vmem:[%s337 + $0x8] sm:$0xf]
  %v340 = vld [vmem:[%s337 + $0x10] sm:$0xf]
  %v341 = vld [vmem:[%s337 + $0x18] sm:$0xf]
  %v342 = vld [vmem:[%s337 + $0x28] sm:$0xf]
  %v343 = vld [vmem:[%s337 + $0x30] sm:$0xf]
  %v344 = vld [vmem:[%s337 + $0x38] sm:$0xf]
  %v345 = vld [vmem:[%s337 + $0x40] sm:$0xf]
  %s346 = scalar_lea.vmem %s2, 128
  %v347 = vld [vmem:[%s346] sm:$0xff]
  %v348 = vld [vmem:[%s346 + $0x8] sm:$0xff]
  %v349 = vld [vmem:[%s346 + $0x10] sm:$0xff]
  %v350 = vld [vmem:[%s346 + $0x18] sm:$0xff]
  %v351 = vld [vmem:[%s346 + $0x20] sm:$0xff]
  %v352 = vld [vmem:[%s346 + $0x28] sm:$0xff]
  %v353 = vld [vmem:[%s346 + $0x30] sm:$0xff]
  %v354 = vld [vmem:[%s346 + $0x38] sm:$0xff]
  %v355 = vld [vmem:[%s346 + $0x40] sm:$0xff]
  %v356 = vld [vmem:[%s346 + $0x48] sm:$0xff]
  %v357 = vld [vmem:[%s346 + $0x50] sm:$0xff]
  %v358 = vld [vmem:[%s346 + $0x58] sm:$0xff]
  %v359 = vld [vmem:[%s346 + $0x60] sm:$0xff]
  %v360 = vld [vmem:[%s346 + $0x68] sm:$0xff]
  %v361 = vld [vmem:[%s346 + $0x70] sm:$0xff]
  %v362 = vld [vmem:[%s346 + $0x78] sm:$0xff]
  %371 = vst [vmem:[#allocation1] ss:$2 sm:$0xff] %v338
  %s372 = scalar_lea.vmem [#allocation1], 1
  %373 = vst [vmem:[%s372] ss:$2 sm:$0xff] %v339
  %s374 = scalar_lea.vmem [#allocation1], 16
  %375 = vst [vmem:[%s374] ss:$2 sm:$0xff] %v340
  %s376 = scalar_lea.vmem [#allocation1], 17
  %377 = vst [vmem:[%s376] ss:$2 sm:$0xff] %v341
  %s378 = scalar_lea.vmem [#allocation1], 32
  %379 = vst [vmem:[%s378] ss:$2 sm:$0xff] %v342
  %s380 = scalar_lea.vmem [#allocation1], 33
  %381 = vst [vmem:[%s380] ss:$2 sm:$0xff] %v343
  %s382 = scalar_lea.vmem [#allocation1], 48
  %383 = vst [vmem:[%s382] ss:$2 sm:$0xff] %v344
  %s384 = scalar_lea.vmem [#allocation1], 49
  %385 = vst [vmem:[%s384] ss:$2 sm:$0xff] %v345
  %v386 = vld.sshfl [vmem:[#allocation1] sm:$0xff pattern:$0x75316420]
  %v387 = vld.sshfl [vmem:[#allocation1 + $0x10] sm:$0xff pattern:$0x75316420]
  %v388 = vld.sshfl [vmem:[#allocation1 + $0x20] sm:$0xff pattern:$0x75316420]
  %v389 = vld.sshfl [vmem:[#allocation1 + $0x30] sm:$0xff pattern:$0x75316420]
  %394 = vmatpush.msra.mxu0 %v362
  %395 = vmatpush.msra.mxu0 %v361
  %396 = vmatpush.msra.mxu0 %v360
  %397 = vmatpush.msra.mxu0 %v359
  %398 = vmatpush.msra.mxu0 %v358
  %399 = vmatpush.msra.mxu0 %v357
  %400 = vmatpush.msra.mxu0 %v356
  %401 = vmatpush.msra.mxu0 %v355
  %402 = vmatpush.msra.mxu0 %v354
  %403 = vmatpush.msra.mxu0 %v353
  %404 = vmatpush.msra.mxu0 %v352
  %405 = vmatpush.msra.mxu0 %v351
  %406 = vmatpush.msra.mxu0 %v350
  %407 = vmatpush.msra.mxu0 %v349
  %408 = vmatpush.msra.mxu0 %v348
  %409 = vmatpush.msra.mxu0 %v347
  %410 = vmatmul.f32.gmra.mxu0 %v386
  %v411 = vpop.f32.mrf.mxu0
  %v412 = vadd.f32 0.0, %v411
  %413 = vmatmul.f32.gmra.mxu0 %v387
  %v414 = vpop.f32.mrf.mxu0
  %v415 = vadd.f32 0.0, %v414
  %416 = vmatmul.f32.gmra.mxu0 %v388
  %v417 = vpop.f32.mrf.mxu0
  %v418 = vadd.f32 0.0, %v417
  %419 = vmatmul.f32.gmra.mxu0 %v389
  %v420 = vpop.f32.mrf.mxu0
  %v421 = vadd.f32 0.0, %v420
  %422 = vdwg.mxu0
  %431 = vst [vmem:[#allocation1] ss:$2 sm:$0xff] %v313
  %s432 = scalar_lea.vmem [#allocation1], 1
  %433 = vst [vmem:[%s432] ss:$2 sm:$0xff] %v314
  %s434 = scalar_lea.vmem [#allocation1], 16
  %435 = vst [vmem:[%s434] ss:$2 sm:$0xff] %v315
  %s436 = scalar_lea.vmem [#allocation1], 17
  %437 = vst [vmem:[%s436] ss:$2 sm:$0xff] %v316
  %s438 = scalar_lea.vmem [#allocation1], 32
  %439 = vst [vmem:[%s438] ss:$2 sm:$0xff] %v317
  %s440 = scalar_lea.vmem [#allocation1], 33
  %441 = vst [vmem:[%s440] ss:$2 sm:$0xff] %v318
  %s442 = scalar_lea.vmem [#allocation1], 48
  %443 = vst [vmem:[%s442] ss:$2 sm:$0xff] %v319
  %s444 = scalar_lea.vmem [#allocation1], 49
  %445 = vst [vmem:[%s444] ss:$2 sm:$0xff] %v320
  %v446 = vld.sshfl [vmem:[#allocation1] sm:$0xff pattern:$0x75316420]
  %v447 = vld.sshfl [vmem:[#allocation1 + $0x10] sm:$0xff pattern:$0x75316420]
  %v448 = vld.sshfl [vmem:[#allocation1 + $0x20] sm:$0xff pattern:$0x75316420]
  %v449 = vld.sshfl [vmem:[#allocation1 + $0x30] sm:$0xff pattern:$0x75316420]
  %454 = vmatpush.msra.mxu0 %v336
  %455 = vmatpush.msra.mxu0 %v335
  %456 = vmatpush.msra.mxu0 %v334
  %457 = vmatpush.msra.mxu0 %v333
  %458 = vmatpush.msra.mxu0 %v332
  %459 = vmatpush.msra.mxu0 %v331
  %460 = vmatpush.msra.mxu0 %v330
  %461 = vmatpush.msra.mxu0 %v329
  %462 = vmatpush.msra.mxu0 %v328
  %463 = vmatpush.msra.mxu0 %v327
  %464 = vmatpush.msra.mxu0 %v326
  %465 = vmatpush.msra.mxu0 %v325
  %466 = vmatpush.msra.mxu0 %v324
  %467 = vmatpush.msra.mxu0 %v323
  %468 = vmatpush.msra.mxu0 %v322
  %469 = vmatpush.msra.mxu0 %v321
  %470 = vmatmul.f32.gmra.mxu0 %v446
  %v471 = vpop.f32.mrf.mxu0
  %v472 = vadd.f32 %v412, %v471
  %473 = vmatmul.f32.gmra.mxu0 %v447
  %v474 = vpop.f32.mrf.mxu0
  %v475 = vadd.f32 %v415, %v474
  %476 = vmatmul.f32.gmra.mxu0 %v448
  %v477 = vpop.f32.mrf.mxu0
  %v478 = vadd.f32 %v418, %v477
  %479 = vmatmul.f32.gmra.mxu0 %v449
  %v480 = vpop.f32.mrf.mxu0
  %v481 = vadd.f32 %v421, %v480
  %482 = vdwg.mxu0
  %v483 = vld [vmem:[#allocation2 + $0x1] sm:$0xf]
  %v484 = vld [vmem:[#allocation2 + $0x9] sm:$0xf]
  %v485 = vld [vmem:[#allocation2 + $0x11] sm:$0xf]
  %v486 = vld [vmem:[#allocation2 + $0x19] sm:$0xf]
  %v487 = vld [vmem:[#allocation2 + $0x29] sm:$0xf]
  %v488 = vld [vmem:[#allocation2 + $0x31] sm:$0xf]
  %v489 = vld [vmem:[#allocation2 + $0x39] sm:$0xf]
  %v490 = vld [vmem:[#allocation2 + $0x41] sm:$0xf]
  %s491 = scalar_lea.vmem %s2, 256
  %v492 = vld [vmem:[%s491] sm:$0xff]
  %v493 = vld [vmem:[%s491 + $0x8] sm:$0xff]
  %v494 = vld [vmem:[%s491 + $0x10] sm:$0xff]
  %v495 = vld [vmem:[%s491 + $0x18] sm:$0xff]
  %v496 = vld [vmem:[%s491 + $0x20] sm:$0xff]
  %v497 = vld [vmem:[%s491 + $0x28] sm:$0xff]
  %v498 = vld [vmem:[%s491 + $0x30] sm:$0xff]
  %v499 = vld [vmem:[%s491 + $0x38] sm:$0xff]
  %v500 = vld [vmem:[%s491 + $0x40] sm:$0xff]
  %v501 = vld [vmem:[%s491 + $0x48] sm:$0xff]
  %v502 = vld [vmem:[%s491 + $0x50] sm:$0xff]
  %v503 = vld [vmem:[%s491 + $0x58] sm:$0xff]
  %v504 = vld [vmem:[%s491 + $0x60] sm:$0xff]
  %v505 = vld [vmem:[%s491 + $0x68] sm:$0xff]
  %v506 = vld [vmem:[%s491 + $0x70] sm:$0xff]
  %v507 = vld [vmem:[%s491 + $0x78] sm:$0xff]
  %516 = vst [vmem:[#allocation1] ss:$2 sm:$0xff] %v483
  %s517 = scalar_lea.vmem [#allocation1], 1
  %518 = vst [vmem:[%s517] ss:$2 sm:$0xff] %v484
  %s519 = scalar_lea.vmem [#allocation1], 16
  %520 = vst [vmem:[%s519] ss:$2 sm:$0xff] %v485
  %s521 = scalar_lea.vmem [#allocation1], 17
  %522 = vst [vmem:[%s521] ss:$2 sm:$0xff] %v486
  %s523 = scalar_lea.vmem [#allocation1], 32
  %524 = vst [vmem:[%s523] ss:$2 sm:$0xff] %v487
  %s525 = scalar_lea.vmem [#allocation1], 33
  %526 = vst [vmem:[%s525] ss:$2 sm:$0xff] %v488
  %s527 = scalar_lea.vmem [#allocation1], 48
  %528 = vst [vmem:[%s527] ss:$2 sm:$0xff] %v489
  %s529 = scalar_lea.vmem [#allocation1], 49
  %530 = vst [vmem:[%s529] ss:$2 sm:$0xff] %v490
  %v531 = vld.sshfl [vmem:[#allocation1] sm:$0xff pattern:$0x75316420]
  %v532 = vld.sshfl [vmem:[#allocation1 + $0x10] sm:$0xff pattern:$0x75316420]
  %v533 = vld.sshfl [vmem:[#allocation1 + $0x20] sm:$0xff pattern:$0x75316420]
  %v534 = vld.sshfl [vmem:[#allocation1 + $0x30] sm:$0xff pattern:$0x75316420]
  %539 = vmatpush.msra.mxu0 %v507
  %540 = vmatpush.msra.mxu0 %v506
  %541 = vmatpush.msra.mxu0 %v505
  %542 = vmatpush.msra.mxu0 %v504
  %543 = vmatpush.msra.mxu0 %v503
  %544 = vmatpush.msra.mxu0 %v502
  %545 = vmatpush.msra.mxu0 %v501
  %546 = vmatpush.msra.mxu0 %v500
  %547 = vmatpush.msra.mxu0 %v499
  %548 = vmatpush.msra.mxu0 %v498
  %549 = vmatpush.msra.mxu0 %v497
  %550 = vmatpush.msra.mxu0 %v496
  %551 = vmatpush.msra.mxu0 %v495
  %552 = vmatpush.msra.mxu0 %v494
  %553 = vmatpush.msra.mxu0 %v493
  %554 = vmatpush.msra.mxu0 %v492
  %555 = vmatmul.f32.gmra.mxu0 %v531
  %v556 = vpop.f32.mrf.mxu0
  %v557 = vadd.f32 0.0, %v556
  %558 = vmatmul.f32.gmra.mxu0 %v532
  %v559 = vpop.f32.mrf.mxu0
  %v560 = vadd.f32 0.0, %v559
  %561 = vmatmul.f32.gmra.mxu0 %v533
  %v562 = vpop.f32.mrf.mxu0
  %v563 = vadd.f32 0.0, %v562
  %564 = vmatmul.f32.gmra.mxu0 %v534
  %v565 = vpop.f32.mrf.mxu0
  %v566 = vadd.f32 0.0, %v565
  %567 = vdwg.mxu0
  %v568 = vadd.f32 %v472, %v557
  %v569 = vadd.f32 %v475, %v560
  %v570 = vadd.f32 %v478, %v563
  %v571 = vadd.f32 %v481, %v566
  %v572 = vld [vmem:[%s261] sm:$0xf]
  %v573 = vld [vmem:[%s261 + $0x8] sm:$0xf]
  %v574 = vld [vmem:[%s261 + $0x10] sm:$0xf]
  %v575 = vld [vmem:[%s261 + $0x18] sm:$0xf]
  %v576 = vld [vmem:[%s261 + $0x28] sm:$0xf]
  %v577 = vld [vmem:[%s261 + $0x30] sm:$0xf]
  %v578 = vld [vmem:[%s261 + $0x38] sm:$0xf]
  %v579 = vld [vmem:[%s261 + $0x40] sm:$0xf]
  %s580 = scalar_lea.vmem %s2, 384
  %v581 = vld [vmem:[%s580] sm:$0xff]
  %v582 = vld [vmem:[%s580 + $0x8] sm:$0xff]
  %v583 = vld [vmem:[%s580 + $0x10] sm:$0xff]
  %v584 = vld [vmem:[%s580 + $0x18] sm:$0xff]
  %v585 = vld [vmem:[%s580 + $0x20] sm:$0xff]
  %v586 = vld [vmem:[%s580 + $0x28] sm:$0xff]
  %v587 = vld [vmem:[%s580 + $0x30] sm:$0xff]
  %v588 = vld [vmem:[%s580 + $0x38] sm:$0xff]
  %v589 = vld [vmem:[%s580 + $0x40] sm:$0xff]
  %v590 = vld [vmem:[%s580 + $0x48] sm:$0xff]
  %v591 = vld [vmem:[%s580 + $0x50] sm:$0xff]
  %v592 = vld [vmem:[%s580 + $0x58] sm:$0xff]
  %v593 = vld [vmem:[%s580 + $0x60] sm:$0xff]
  %v594 = vld [vmem:[%s580 + $0x68] sm:$0xff]
  %v595 = vld [vmem:[%s580 + $0x70] sm:$0xff]
  %v596 = vld [vmem:[%s580 + $0x78] sm:$0xff]
  %605 = vst [vmem:[#allocation1] ss:$2 sm:$0xff] %v572
  %s606 = scalar_lea.vmem [#allocation1], 1
  %607 = vst [vmem:[%s606] ss:$2 sm:$0xff] %v573
  %s608 = scalar_lea.vmem [#allocation1], 16
  %609 = vst [vmem:[%s608] ss:$2 sm:$0xff] %v574
  %s610 = scalar_lea.vmem [#allocation1], 17
  %611 = vst [vmem:[%s610] ss:$2 sm:$0xff] %v575
  %s612 = scalar_lea.vmem [#allocation1], 32
  %613 = vst [vmem:[%s612] ss:$2 sm:$0xff] %v576
  %s614 = scalar_lea.vmem [#allocation1], 33
  %615 = vst [vmem:[%s614] ss:$2 sm:$0xff] %v577
  %s616 = scalar_lea.vmem [#allocation1], 48
  %617 = vst [vmem:[%s616] ss:$2 sm:$0xff] %v578
  %s618 = scalar_lea.vmem [#allocation1], 49
  %619 = vst [vmem:[%s618] ss:$2 sm:$0xff] %v579
  %v620 = vld.sshfl [vmem:[#allocation1] sm:$0xff pattern:$0x75316420]
  %v621 = vld.sshfl [vmem:[#allocation1 + $0x10] sm:$0xff pattern:$0x75316420]
  %v622 = vld.sshfl [vmem:[#allocation1 + $0x20] sm:$0xff pattern:$0x75316420]
  %v623 = vld.sshfl [vmem:[#allocation1 + $0x30] sm:$0xff pattern:$0x75316420]
  %628 = vmatpush.msra.mxu0 %v596
  %629 = vmatpush.msra.mxu0 %v595
  %630 = vmatpush.msra.mxu0 %v594
  %631 = vmatpush.msra.mxu0 %v593
  %632 = vmatpush.msra.mxu0 %v592
  %633 = vmatpush.msra.mxu0 %v591
  %634 = vmatpush.msra.mxu0 %v590
  %635 = vmatpush.msra.mxu0 %v589
  %636 = vmatpush.msra.mxu0 %v588
  %637 = vmatpush.msra.mxu0 %v587
  %638 = vmatpush.msra.mxu0 %v586
  %639 = vmatpush.msra.mxu0 %v585
  %640 = vmatpush.msra.mxu0 %v584
  %641 = vmatpush.msra.mxu0 %v583
  %642 = vmatpush.msra.mxu0 %v582
  %643 = vmatpush.msra.mxu0 %v581
  %644 = vmatmul.f32.gmra.mxu0 %v620
  %v645 = vpop.f32.mrf.mxu0
  %v646 = vadd.f32 0.0, %v645
  %647 = vmatmul.f32.gmra.mxu0 %v621
  %v648 = vpop.f32.mrf.mxu0
  %v649 = vadd.f32 0.0, %v648
  %650 = vmatmul.f32.gmra.mxu0 %v622
  %v651 = vpop.f32.mrf.mxu0
  %v652 = vadd.f32 0.0, %v651
  %653 = vmatmul.f32.gmra.mxu0 %v623
  %v654 = vpop.f32.mrf.mxu0
  %v655 = vadd.f32 0.0, %v654
  %656 = vdwg.mxu0
  %v657 = vadd.f32 %v568, %v646
  %v658 = vadd.f32 %v569, %v649
  %v659 = vadd.f32 %v570, %v652
  %v660 = vadd.f32 %v571, %v655
  %v661 = vld [vmem:[%s240] sm:$0xf]
  %v662 = vld [vmem:[%s240 + $0x8] sm:$0xf]
  %v663 = vld [vmem:[%s240 + $0x10] sm:$0xf]
  %v664 = vld [vmem:[%s240 + $0x18] sm:$0xf]
  %v665 = vld [vmem:[%s240 + $0x28] sm:$0xf]
  %v666 = vld [vmem:[%s240 + $0x30] sm:$0xf]
  %v667 = vld [vmem:[%s240 + $0x38] sm:$0xf]
  %v668 = vld [vmem:[%s240 + $0x40] sm:$0xf]
  %s669 = scalar_lea.vmem %s2, 512
  %v670 = vld [vmem:[%s669] sm:$0xff]
  %v671 = vld [vmem:[%s669 + $0x8] sm:$0xff]
  %v672 = vld [vmem:[%s669 + $0x10] sm:$0xff]
  %v673 = vld [vmem:[%s669 + $0x18] sm:$0xff]
  %v674 = vld [vmem:[%s669 + $0x20] sm:$0xff]
  %v675 = vld [vmem:[%s669 + $0x28] sm:$0xff]
  %v676 = vld [vmem:[%s669 + $0x30] sm:$0xff]
  %v677 = vld [vmem:[%s669 + $0x38] sm:$0xff]
  %v678 = vld [vmem:[%s669 + $0x40] sm:$0xff]
  %v679 = vld [vmem:[%s669 + $0x48] sm:$0xff]
  %v680 = vld [vmem:[%s669 + $0x50] sm:$0xff]
  %v681 = vld [vmem:[%s669 + $0x58] sm:$0xff]
  %v682 = vld [vmem:[%s669 + $0x60] sm:$0xff]
  %v683 = vld [vmem:[%s669 + $0x68] sm:$0xff]
  %v684 = vld [vmem:[%s669 + $0x70] sm:$0xff]
  %v685 = vld [vmem:[%s669 + $0x78] sm:$0xff]
  %694 = vst [vmem:[#allocation1] ss:$2 sm:$0xff] %v661
  %s695 = scalar_lea.vmem [#allocation1], 1
  %696 = vst [vmem:[%s695] ss:$2 sm:$0xff] %v662
  %s697 = scalar_lea.vmem [#allocation1], 16
  %698 = vst [vmem:[%s697] ss:$2 sm:$0xff] %v663
  %s699 = scalar_lea.vmem [#allocation1], 17
  %700 = vst [vmem:[%s699] ss:$2 sm:$0xff] %v664
  %s701 = scalar_lea.vmem [#allocation1], 32
  %702 = vst [vmem:[%s701] ss:$2 sm:$0xff] %v665
  %s703 = scalar_lea.vmem [#allocation1], 33
  %704 = vst [vmem:[%s703] ss:$2 sm:$0xff] %v666
  %s705 = scalar_lea.vmem [#allocation1], 48
  %706 = vst [vmem:[%s705] ss:$2 sm:$0xff] %v667
  %s707 = scalar_lea.vmem [#allocation1], 49
  %708 = vst [vmem:[%s707] ss:$2 sm:$0xff] %v668
  %v709 = vld.sshfl [vmem:[#allocation1] sm:$0xff pattern:$0x75316420]
  %v710 = vld.sshfl [vmem:[#allocation1 + $0x10] sm:$0xff pattern:$0x75316420]
  %v711 = vld.sshfl [vmem:[#allocation1 + $0x20] sm:$0xff pattern:$0x75316420]
  %v712 = vld.sshfl [vmem:[#allocation1 + $0x30] sm:$0xff pattern:$0x75316420]
  %717 = vmatpush.msra.mxu0 %v685
  %718 = vmatpush.msra.mxu0 %v684
  %719 = vmatpush.msra.mxu0 %v683
  %720 = vmatpush.msra.mxu0 %v682
  %721 = vmatpush.msra.mxu0 %v681
  %722 = vmatpush.msra.mxu0 %v680
  %723 = vmatpush.msra.mxu0 %v679
  %724 = vmatpush.msra.mxu0 %v678
  %725 = vmatpush.msra.mxu0 %v677
  %726 = vmatpush.msra.mxu0 %v676
  %727 = vmatpush.msra.mxu0 %v675
  %728 = vmatpush.msra.mxu0 %v674
  %729 = vmatpush.msra.mxu0 %v673
  %730 = vmatpush.msra.mxu0 %v672
  %731 = vmatpush.msra.mxu0 %v671
  %732 = vmatpush.msra.mxu0 %v670
  %733 = vmatmul.f32.gmra.mxu0 %v709
  %v734 = vpop.f32.mrf.mxu0
  %v735 = vadd.f32 0.0, %v734
  %736 = vmatmul.f32.gmra.mxu0 %v710
  %v737 = vpop.f32.mrf.mxu0
  %v738 = vadd.f32 0.0, %v737
  %739 = vmatmul.f32.gmra.mxu0 %v711
  %v740 = vpop.f32.mrf.mxu0
  %v741 = vadd.f32 0.0, %v740
  %742 = vmatmul.f32.gmra.mxu0 %v712
  %v743 = vpop.f32.mrf.mxu0
  %v744 = vadd.f32 0.0, %v743
  %745 = vdwg.mxu0
  %v746 = vadd.f32 %v657, %v735
  %v747 = vadd.f32 %v658, %v738
  %v748 = vadd.f32 %v659, %v741
  %v749 = vadd.f32 %v660, %v744
  %v750 = vld [vmem:[%s261 + $0x1] sm:$0xf]
  %v751 = vld [vmem:[%s261 + $0x9] sm:$0xf]
  %v752 = vld [vmem:[%s261 + $0x11] sm:$0xf]
  %v753 = vld [vmem:[%s261 + $0x19] sm:$0xf]
  %v754 = vld [vmem:[%s261 + $0x29] sm:$0xf]
  %v755 = vld [vmem:[%s261 + $0x31] sm:$0xf]
  %v756 = vld [vmem:[%s261 + $0x39] sm:$0xf]
  %v757 = vld [vmem:[%s261 + $0x41] sm:$0xf]
  %s758 = scalar_lea.vmem %s2, 640
  %v759 = vld [vmem:[%s758] sm:$0xff]
  %v760 = vld [vmem:[%s758 + $0x8] sm:$0xff]
  %v761 = vld [vmem:[%s758 + $0x10] sm:$0xff]
  %v762 = vld [vmem:[%s758 + $0x18] sm:$0xff]
  %v763 = vld [vmem:[%s758 + $0x20] sm:$0xff]
  %v764 = vld [vmem:[%s758 + $0x28] sm:$0xff]
  %v765 = vld [vmem:[%s758 + $0x30] sm:$0xff]
  %v766 = vld [vmem:[%s758 + $0x38] sm:$0xff]
  %v767 = vld [vmem:[%s758 + $0x40] sm:$0xff]
  %v768 = vld [vmem:[%s758 + $0x48] sm:$0xff]
  %v769 = vld [vmem:[%s758 + $0x50] sm:$0xff]
  %v770 = vld [vmem:[%s758 + $0x58] sm:$0xff]
  %v771 = vld [vmem:[%s758 + $0x60] sm:$0xff]
  %v772 = vld [vmem:[%s758 + $0x68] sm:$0xff]
  %v773 = vld [vmem:[%s758 + $0x70] sm:$0xff]
  %v774 = vld [vmem:[%s758 + $0x78] sm:$0xff]
  %783 = vst [vmem:[#allocation1] ss:$2 sm:$0xff] %v750
  %s784 = scalar_lea.vmem [#allocation1], 1
  %785 = vst [vmem:[%s784] ss:$2 sm:$0xff] %v751
  %s786 = scalar_lea.vmem [#allocation1], 16
  %787 = vst [vmem:[%s786] ss:$2 sm:$0xff] %v752
  %s788 = scalar_lea.vmem [#allocation1], 17
  %789 = vst [vmem:[%s788] ss:$2 sm:$0xff] %v753
  %s790 = scalar_lea.vmem [#allocation1], 32
  %791 = vst [vmem:[%s790] ss:$2 sm:$0xff] %v754
  %s792 = scalar_lea.vmem [#allocation1], 33
  %793 = vst [vmem:[%s792] ss:$2 sm:$0xff] %v755
  %s794 = scalar_lea.vmem [#allocation1], 48
  %795 = vst [vmem:[%s794] ss:$2 sm:$0xff] %v756
  %s796 = scalar_lea.vmem [#allocation1], 49
  %797 = vst [vmem:[%s796] ss:$2 sm:$0xff] %v757
  %v798 = vld.sshfl [vmem:[#allocation1] sm:$0xff pattern:$0x75316420]
  %v799 = vld.sshfl [vmem:[#allocation1 + $0x10] sm:$0xff pattern:$0x75316420]
  %v800 = vld.sshfl [vmem:[#allocation1 + $0x20] sm:$0xff pattern:$0x75316420]
  %v801 = vld.sshfl [vmem:[#allocation1 + $0x30] sm:$0xff pattern:$0x75316420]
  %806 = vmatpush.msra.mxu0 %v774
  %807 = vmatpush.msra.mxu0 %v773
  %808 = vmatpush.msra.mxu0 %v772
  %809 = vmatpush.msra.mxu0 %v771
  %810 = vmatpush.msra.mxu0 %v770
  %811 = vmatpush.msra.mxu0 %v769
  %812 = vmatpush.msra.mxu0 %v768
  %813 = vmatpush.msra.mxu0 %v767
  %814 = vmatpush.msra.mxu0 %v766
  %815 = vmatpush.msra.mxu0 %v765
  %816 = vmatpush.msra.mxu0 %v764
  %817 = vmatpush.msra.mxu0 %v763
  %818 = vmatpush.msra.mxu0 %v762
  %819 = vmatpush.msra.mxu0 %v761
  %820 = vmatpush.msra.mxu0 %v760
  %821 = vmatpush.msra.mxu0 %v759
  %822 = vmatmul.f32.gmra.mxu0 %v798
  %v823 = vpop.f32.mrf.mxu0
  %v824 = vadd.f32 0.0, %v823
  %825 = vmatmul.f32.gmra.mxu0 %v799
  %v826 = vpop.f32.mrf.mxu0
  %v827 = vadd.f32 0.0, %v826
  %828 = vmatmul.f32.gmra.mxu0 %v800
  %v829 = vpop.f32.mrf.mxu0
  %v830 = vadd.f32 0.0, %v829
  %831 = vmatmul.f32.gmra.mxu0 %v801
  %v832 = vpop.f32.mrf.mxu0
  %v833 = vadd.f32 0.0, %v832
  %834 = vdwg.mxu0
  %v835 = vadd.f32 %v746, %v824
  %v836 = vadd.f32 %v747, %v827
  %v837 = vadd.f32 %v748, %v830
  %v838 = vadd.f32 %v749, %v833
  %v839 = vld [vmem:[%s303] sm:$0xf]
  %v840 = vld [vmem:[%s303 + $0x8] sm:$0xf]
  %v841 = vld [vmem:[%s303 + $0x10] sm:$0xf]
  %v842 = vld [vmem:[%s303 + $0x18] sm:$0xf]
  %v843 = vld [vmem:[%s303 + $0x28] sm:$0xf]
  %v844 = vld [vmem:[%s303 + $0x30] sm:$0xf]
  %v845 = vld [vmem:[%s303 + $0x38] sm:$0xf]
  %v846 = vld [vmem:[%s303 + $0x40] sm:$0xf]
  %s847 = scalar_lea.vmem %s2, 768
  %v848 = vld [vmem:[%s847] sm:$0xff]
  %v849 = vld [vmem:[%s847 + $0x8] sm:$0xff]
  %v850 = vld [vmem:[%s847 + $0x10] sm:$0xff]
  %v851 = vld [vmem:[%s847 + $0x18] sm:$0xff]
  %v852 = vld [vmem:[%s847 + $0x20] sm:$0xff]
  %v853 = vld [vmem:[%s847 + $0x28] sm:$0xff]
  %v854 = vld [vmem:[%s847 + $0x30] sm:$0xff]
  %v855 = vld [vmem:[%s847 + $0x38] sm:$0xff]
  %v856 = vld [vmem:[%s847 + $0x40] sm:$0xff]
  %v857 = vld [vmem:[%s847 + $0x48] sm:$0xff]
  %v858 = vld [vmem:[%s847 + $0x50] sm:$0xff]
  %v859 = vld [vmem:[%s847 + $0x58] sm:$0xff]
  %v860 = vld [vmem:[%s847 + $0x60] sm:$0xff]
  %v861 = vld [vmem:[%s847 + $0x68] sm:$0xff]
  %v862 = vld [vmem:[%s847 + $0x70] sm:$0xff]
  %v863 = vld [vmem:[%s847 + $0x78] sm:$0xff]
  %872 = vst [vmem:[#allocation1] ss:$2 sm:$0xff] %v839
  %s873 = scalar_lea.vmem [#allocation1], 1
  %874 = vst [vmem:[%s873] ss:$2 sm:$0xff] %v840
  %s875 = scalar_lea.vmem [#allocation1], 16
  %876 = vst [vmem:[%s875] ss:$2 sm:$0xff] %v841
  %s877 = scalar_lea.vmem [#allocation1], 17
  %878 = vst [vmem:[%s877] ss:$2 sm:$0xff] %v842
  %s879 = scalar_lea.vmem [#allocation1], 32
  %880 = vst [vmem:[%s879] ss:$2 sm:$0xff] %v843
  %s881 = scalar_lea.vmem [#allocation1], 33
  %882 = vst [vmem:[%s881] ss:$2 sm:$0xff] %v844
  %s883 = scalar_lea.vmem [#allocation1], 48
  %884 = vst [vmem:[%s883] ss:$2 sm:$0xff] %v845
  %s885 = scalar_lea.vmem [#allocation1], 49
  %886 = vst [vmem:[%s885] ss:$2 sm:$0xff] %v846
  %v887 = vld.sshfl [vmem:[#allocation1] sm:$0xff pattern:$0x75316420]
  %v888 = vld.sshfl [vmem:[#allocation1 + $0x10] sm:$0xff pattern:$0x75316420]
  %v889 = vld.sshfl [vmem:[#allocation1 + $0x20] sm:$0xff pattern:$0x75316420]
  %v890 = vld.sshfl [vmem:[#allocation1 + $0x30] sm:$0xff pattern:$0x75316420]
  %895 = vmatpush.msra.mxu0 %v863
  %896 = vmatpush.msra.mxu0 %v862
  %897 = vmatpush.msra.mxu0 %v861
  %898 = vmatpush.msra.mxu0 %v860
  %899 = vmatpush.msra.mxu0 %v859
  %900 = vmatpush.msra.mxu0 %v858
  %901 = vmatpush.msra.mxu0 %v857
  %902 = vmatpush.msra.mxu0 %v856
  %903 = vmatpush.msra.mxu0 %v855
  %904 = vmatpush.msra.mxu0 %v854
  %905 = vmatpush.msra.mxu0 %v853
  %906 = vmatpush.msra.mxu0 %v852
  %907 = vmatpush.msra.mxu0 %v851
  %908 = vmatpush.msra.mxu0 %v850
  %909 = vmatpush.msra.mxu0 %v849
  %910 = vmatpush.msra.mxu0 %v848
  %911 = vmatmul.f32.gmra.mxu0 %v887
  %v912 = vpop.f32.mrf.mxu0
  %v913 = vadd.f32 0.0, %v912
  %914 = vmatmul.f32.gmra.mxu0 %v888
  %v915 = vpop.f32.mrf.mxu0
  %v916 = vadd.f32 0.0, %v915
  %917 = vmatmul.f32.gmra.mxu0 %v889
  %v918 = vpop.f32.mrf.mxu0
  %v919 = vadd.f32 0.0, %v918
  %920 = vmatmul.f32.gmra.mxu0 %v890
  %v921 = vpop.f32.mrf.mxu0
  %v922 = vadd.f32 0.0, %v921
  %923 = vdwg.mxu0
  %v924 = vadd.f32 %v835, %v913
  %v925 = vadd.f32 %v836, %v916
  %v926 = vadd.f32 %v837, %v919
  %v927 = vadd.f32 %v838, %v922
  %v928 = vld [vmem:[%s282] sm:$0xf]
  %v929 = vld [vmem:[%s282 + $0x8] sm:$0xf]
  %v930 = vld [vmem:[%s282 + $0x10] sm:$0xf]
  %v931 = vld [vmem:[%s282 + $0x18] sm:$0xf]
  %v932 = vld [vmem:[%s282 + $0x28] sm:$0xf]
  %v933 = vld [vmem:[%s282 + $0x30] sm:$0xf]
  %v934 = vld [vmem:[%s282 + $0x38] sm:$0xf]
  %v935 = vld [vmem:[%s282 + $0x40] sm:$0xf]
  %s936 = scalar_lea.vmem %s2, 896
  %v937 = vld [vmem:[%s936] sm:$0xff]
  %v938 = vld [vmem:[%s936 + $0x8] sm:$0xff]
  %v939 = vld [vmem:[%s936 + $0x10] sm:$0xff]
  %v940 = vld [vmem:[%s936 + $0x18] sm:$0xff]
  %v941 = vld [vmem:[%s936 + $0x20] sm:$0xff]
  %v942 = vld [vmem:[%s936 + $0x28] sm:$0xff]
  %v943 = vld [vmem:[%s936 + $0x30] sm:$0xff]
  %v944 = vld [vmem:[%s936 + $0x38] sm:$0xff]
  %v945 = vld [vmem:[%s936 + $0x40] sm:$0xff]
  %v946 = vld [vmem:[%s936 + $0x48] sm:$0xff]
  %v947 = vld [vmem:[%s936 + $0x50] sm:$0xff]
  %v948 = vld [vmem:[%s936 + $0x58] sm:$0xff]
  %v949 = vld [vmem:[%s936 + $0x60] sm:$0xff]
  %v950 = vld [vmem:[%s936 + $0x68] sm:$0xff]
  %v951 = vld [vmem:[%s936 + $0x70] sm:$0xff]
  %v952 = vld [vmem:[%s936 + $0x78] sm:$0xff]
  %961 = vst [vmem:[#allocation1] ss:$2 sm:$0xff] %v928
  %s962 = scalar_lea.vmem [#allocation1], 1
  %963 = vst [vmem:[%s962] ss:$2 sm:$0xff] %v929
  %s964 = scalar_lea.vmem [#allocation1], 16
  %965 = vst [vmem:[%s964] ss:$2 sm:$0xff] %v930
  %s966 = scalar_lea.vmem [#allocation1], 17
  %967 = vst [vmem:[%s966] ss:$2 sm:$0xff] %v931
  %s968 = scalar_lea.vmem [#allocation1], 32
  %969 = vst [vmem:[%s968] ss:$2 sm:$0xff] %v932
  %s970 = scalar_lea.vmem [#allocation1], 33
  %971 = vst [vmem:[%s970] ss:$2 sm:$0xff] %v933
  %s972 = scalar_lea.vmem [#allocation1], 48
  %973 = vst [vmem:[%s972] ss:$2 sm:$0xff] %v934
  %s974 = scalar_lea.vmem [#allocation1], 49
  %975 = vst [vmem:[%s974] ss:$2 sm:$0xff] %v935
  %v976 = vld.sshfl [vmem:[#allocation1] sm:$0xff pattern:$0x75316420]
  %v977 = vld.sshfl [vmem:[#allocation1 + $0x10] sm:$0xff pattern:$0x75316420]
  %v978 = vld.sshfl [vmem:[#allocation1 + $0x20] sm:$0xff pattern:$0x75316420]
  %v979 = vld.sshfl [vmem:[#allocation1 + $0x30] sm:$0xff pattern:$0x75316420]
  %984 = vmatpush.msra.mxu0 %v952
  %985 = vmatpush.msra.mxu0 %v951
  %986 = vmatpush.msra.mxu0 %v950
  %987 = vmatpush.msra.mxu0 %v949
  %988 = vmatpush.msra.mxu0 %v948
  %989 = vmatpush.msra.mxu0 %v947
  %990 = vmatpush.msra.mxu0 %v946
  %991 = vmatpush.msra.mxu0 %v945
  %992 = vmatpush.msra.mxu0 %v944
  %993 = vmatpush.msra.mxu0 %v943
  %994 = vmatpush.msra.mxu0 %v942
  %995 = vmatpush.msra.mxu0 %v941
  %996 = vmatpush.msra.mxu0 %v940
  %997 = vmatpush.msra.mxu0 %v939
  %998 = vmatpush.msra.mxu0 %v938
  %999 = vmatpush.msra.mxu0 %v937
  %1000 = vmatmul.f32.gmra.mxu0 %v976
  %v1001 = vpop.f32.mrf.mxu0
  %v1002 = vadd.f32 0.0, %v1001
  %1003 = vmatmul.f32.gmra.mxu0 %v977
  %v1004 = vpop.f32.mrf.mxu0
  %v1005 = vadd.f32 0.0, %v1004
  %1006 = vmatmul.f32.gmra.mxu0 %v978
  %v1007 = vpop.f32.mrf.mxu0
  %v1008 = vadd.f32 0.0, %v1007
  %1009 = vmatmul.f32.gmra.mxu0 %v979
  %v1010 = vpop.f32.mrf.mxu0
  %v1011 = vadd.f32 0.0, %v1010
  %1012 = vdwg.mxu0
  %v1013 = vadd.f32 %v924, %v1002
  %v1014 = vadd.f32 %v925, %v1005
  %v1015 = vadd.f32 %v926, %v1008
  %v1016 = vadd.f32 %v927, %v1011
  %v1017 = vld [vmem:[%s303 + $0x1] sm:$0xf]
  %v1018 = vld [vmem:[%s303 + $0x9] sm:$0xf]
  %v1019 = vld [vmem:[%s303 + $0x11] sm:$0xf]
  %v1020 = vld [vmem:[%s303 + $0x19] sm:$0xf]
  %v1021 = vld [vmem:[%s303 + $0x29] sm:$0xf]
  %v1022 = vld [vmem:[%s303 + $0x31] sm:$0xf]
  %v1023 = vld [vmem:[%s303 + $0x39] sm:$0xf]
  %v1024 = vld [vmem:[%s303 + $0x41] sm:$0xf]
  %s1025 = scalar_lea.vmem %s2, 1024
  %v1026 = vld [vmem:[%s1025] sm:$0xff]
  %v1027 = vld [vmem:[%s1025 + $0x8] sm:$0xff]
  %v1028 = vld [vmem:[%s1025 + $0x10] sm:$0xff]
  %v1029 = vld [vmem:[%s1025 + $0x18] sm:$0xff]
  %v1030 = vld [vmem:[%s1025 + $0x20] sm:$0xff]
  %v1031 = vld [vmem:[%s1025 + $0x28] sm:$0xff]
  %v1032 = vld [vmem:[%s1025 + $0x30] sm:$0xff]
  %v1033 = vld [vmem:[%s1025 + $0x38] sm:$0xff]
  %v1034 = vld [vmem:[%s1025 + $0x40] sm:$0xff]
  %v1035 = vld [vmem:[%s1025 + $0x48] sm:$0xff]
  %v1036 = vld [vmem:[%s1025 + $0x50] sm:$0xff]
  %v1037 = vld [vmem:[%s1025 + $0x58] sm:$0xff]
  %v1038 = vld [vmem:[%s1025 + $0x60] sm:$0xff]
  %v1039 = vld [vmem:[%s1025 + $0x68] sm:$0xff]
  %v1040 = vld [vmem:[%s1025 + $0x70] sm:$0xff]
  %v1041 = vld [vmem:[%s1025 + $0x78] sm:$0xff]
  %1050 = vst [vmem:[#allocation1] ss:$2 sm:$0xff] %v1017
  %s1051 = scalar_lea.vmem [#allocation1], 1
  %1052 = vst [vmem:[%s1051] ss:$2 sm:$0xff] %v1018
  %s1053 = scalar_lea.vmem [#allocation1], 16
  %1054 = vst [vmem:[%s1053] ss:$2 sm:$0xff] %v1019
  %s1055 = scalar_lea.vmem [#allocation1], 17
  %1056 = vst [vmem:[%s1055] ss:$2 sm:$0xff] %v1020
  %s1057 = scalar_lea.vmem [#allocation1], 32
  %1058 = vst [vmem:[%s1057] ss:$2 sm:$0xff] %v1021
  %s1059 = scalar_lea.vmem [#allocation1], 33
  %1060 = vst [vmem:[%s1059] ss:$2 sm:$0xff] %v1022
  %s1061 = scalar_lea.vmem [#allocation1], 48
  %1062 = vst [vmem:[%s1061] ss:$2 sm:$0xff] %v1023
  %s1063 = scalar_lea.vmem [#allocation1], 49
  %1064 = vst [vmem:[%s1063] ss:$2 sm:$0xff] %v1024
  %v1065 = vld.sshfl [vmem:[#allocation1] sm:$0xff pattern:$0x75316420]
  %v1066 = vld.sshfl [vmem:[#allocation1 + $0x10] sm:$0xff pattern:$0x75316420]
  %v1067 = vld.sshfl [vmem:[#allocation1 + $0x20] sm:$0xff pattern:$0x75316420]
  %v1068 = vld.sshfl [vmem:[#allocation1 + $0x30] sm:$0xff pattern:$0x75316420]
  %1073 = vmatpush.msra.mxu0 %v1041
  %1074 = vmatpush.msra.mxu0 %v1040
  %1075 = vmatpush.msra.mxu0 %v1039
  %1076 = vmatpush.msra.mxu0 %v1038
  %1077 = vmatpush.msra.mxu0 %v1037
  %1078 = vmatpush.msra.mxu0 %v1036
  %1079 = vmatpush.msra.mxu0 %v1035
  %1080 = vmatpush.msra.mxu0 %v1034
  %1081 = vmatpush.msra.mxu0 %v1033
  %1082 = vmatpush.msra.mxu0 %v1032
  %1083 = vmatpush.msra.mxu0 %v1031
  %1084 = vmatpush.msra.mxu0 %v1030
  %1085 = vmatpush.msra.mxu0 %v1029
  %1086 = vmatpush.msra.mxu0 %v1028
  %1087 = vmatpush.msra.mxu0 %v1027
  %1088 = vmatpush.msra.mxu0 %v1026
  %1089 = vmatmul.f32.gmra.mxu0 %v1065
  %v1090 = vpop.f32.mrf.mxu0
  %v1091 = vadd.f32 0.0, %v1090
  %1092 = vmatmul.f32.gmra.mxu0 %v1066
  %v1093 = vpop.f32.mrf.mxu0
  %v1094 = vadd.f32 0.0, %v1093
  %1095 = vmatmul.f32.gmra.mxu0 %v1067
  %v1096 = vpop.f32.mrf.mxu0
  %v1097 = vadd.f32 0.0, %v1096
  %1098 = vmatmul.f32.gmra.mxu0 %v1068
  %v1099 = vpop.f32.mrf.mxu0
  %v1100 = vadd.f32 0.0, %v1099
  %1101 = vdwg.mxu0
  %v1102 = vadd.f32 %v1013, %v1091
  %v1103 = vadd.f32 %v1014, %v1094
  %v1104 = vadd.f32 %v1015, %v1097
  %v1105 = vadd.f32 %v1016, %v1100
  %v1106 = vperm.slane %v312, 0
  %v1107 = vadd.f32 %v1102, %v1106
  %v1108 = vadd.f32 %v1103, %v1106
  %v1109 = vadd.f32 %v1104, %v1106
  %v1110 = vadd.f32 %v1105, %v1106
  %v1111 = vmax.f32 %v1107, 0.0
  %v1112 = vmax.f32 %v1108, 0.0
  %v1113 = vmax.f32 %v1109, 0.0
  %v1114 = vmax.f32 %v1110, 0.0
  %v1119 = vrot.slane %v1111, 4
  %v1120 = vrot.slane %v1112, 4
  %v1121 = vrot.slane %v1113, 4
  %v1122 = vrot.slane %v1114, 4
  %1127 = vst [vmem:[#allocation3] sm:$0xf] %v1111
  %1128 = vst [vmem:[#allocation3 + $0x8] sm:$0xf] %v1119
  %1129 = vst [vmem:[#allocation3 + $0x10] sm:$0xf] %v1112
  %1130 = vst [vmem:[#allocation3 + $0x18] sm:$0xf] %v1120
  %1131 = vst [vmem:[#allocation3 + $0x28] sm:$0xf] %v1113
  %1132 = vst [vmem:[#allocation3 + $0x30] sm:$0xf] %v1121
  %1133 = vst [vmem:[#allocation3 + $0x38] sm:$0xf] %v1114
  %1134 = vst [vmem:[#allocation3 + $0x40] sm:$0xf] %v1122
  %v1135 = vld [vmem:[%s5 + $0x2] sm:$0x1]
  %v1136 = vld [vmem:[#allocation3] sm:$0xf]
  %v1137 = vld [vmem:[#allocation3 + $0x8] sm:$0xf]
  %v1138 = vld [vmem:[#allocation3 + $0x10] sm:$0xf]
  %v1139 = vld [vmem:[#allocation3 + $0x18] sm:$0xf]
  %v1140 = vld [vmem:[#allocation3 + $0x28] sm:$0xf]
  %v1141 = vld [vmem:[#allocation3 + $0x30] sm:$0xf]
  %v1142 = vld [vmem:[#allocation3 + $0x38] sm:$0xf]
  %v1143 = vld [vmem:[#allocation3 + $0x40] sm:$0xf]
  %v1144 = vld [vmem:[#allocation3 + $0x1] sm:$0xf]
  %v1145 = vld [vmem:[#allocation3 + $0x9] sm:$0xf]
  %v1146 = vld [vmem:[#allocation3 + $0x11] sm:$0xf]
  %v1147 = vld [vmem:[#allocation3 + $0x19] sm:$0xf]
  %v1148 = vld [vmem:[#allocation3 + $0x29] sm:$0xf]
  %v1149 = vld [vmem:[#allocation3 + $0x31] sm:$0xf]
  %v1150 = vld [vmem:[#allocation3 + $0x39] sm:$0xf]
  %v1151 = vld [vmem:[#allocation3 + $0x41] sm:$0xf]
  %s1152 = scalar_lea.vmem [#allocation3], 8
  %v1153 = vld [vmem:[%s1152] sm:$0xf]
  %v1154 = vld [vmem:[%s1152 + $0x8] sm:$0xf]
  %v1155 = vld [vmem:[%s1152 + $0x10] sm:$0xf]
  %v1156 = vld [vmem:[%s1152 + $0x18] sm:$0xf]
  %v1157 = vld [vmem:[%s1152 + $0x28] sm:$0xf]
  %v1158 = vld [vmem:[%s1152 + $0x30] sm:$0xf]
  %v1159 = vld [vmem:[%s1152 + $0x38] sm:$0xf]
  %v1160 = vld [vmem:[%s1152 + $0x40] sm:$0xf]
  %v1161 = vld [vmem:[%s1152 + $0x1] sm:$0xf]
  %v1162 = vld [vmem:[%s1152 + $0x9] sm:$0xf]
  %v1163 = vld [vmem:[%s1152 + $0x11] sm:$0xf]
  %v1164 = vld [vmem:[%s1152 + $0x19] sm:$0xf]
  %v1165 = vld [vmem:[%s1152 + $0x29] sm:$0xf]
  %v1166 = vld [vmem:[%s1152 + $0x31] sm:$0xf]
  %v1167 = vld [vmem:[%s1152 + $0x39] sm:$0xf]
  %v1168 = vld [vmem:[%s1152 + $0x41] sm:$0xf]
  %s1169 = scalar_lea.vmem %s3, 512
  %v1170 = vld [vmem:[%s1169] sm:$0xff]
  %v1171 = vld [vmem:[%s1169 + $0x8] sm:$0xff]
  %v1172 = vld [vmem:[%s1169 + $0x10] sm:$0xff]
  %v1173 = vld [vmem:[%s1169 + $0x18] sm:$0xff]
  %v1174 = vld [vmem:[%s1169 + $0x20] sm:$0xff]
  %v1175 = vld [vmem:[%s1169 + $0x28] sm:$0xff]
  %v1176 = vld [vmem:[%s1169 + $0x30] sm:$0xff]
  %v1177 = vld [vmem:[%s1169 + $0x38] sm:$0xff]
  %v1178 = vld [vmem:[%s1169 + $0x40] sm:$0xff]
  %v1179 = vld [vmem:[%s1169 + $0x48] sm:$0xff]
  %v1180 = vld [vmem:[%s1169 + $0x50] sm:$0xff]
  %v1181 = vld [vmem:[%s1169 + $0x58] sm:$0xff]
  %v1182 = vld [vmem:[%s1169 + $0x60] sm:$0xff]
  %v1183 = vld [vmem:[%s1169 + $0x68] sm:$0xff]
  %v1184 = vld [vmem:[%s1169 + $0x70] sm:$0xff]
  %v1185 = vld [vmem:[%s1169 + $0x78] sm:$0xff]
  %v1186 = vperm.slane %v1135, 0
  %1195 = vst [vmem:[#allocation1] ss:$2 sm:$0xff] %v1136
  %s1196 = scalar_lea.vmem [#allocation1], 1
  %1197 = vst [vmem:[%s1196] ss:$2 sm:$0xff] %v1137
  %s1198 = scalar_lea.vmem [#allocation1], 16
  %1199 = vst [vmem:[%s1198] ss:$2 sm:$0xff] %v1138
  %s1200 = scalar_lea.vmem [#allocation1], 17
  %1201 = vst [vmem:[%s1200] ss:$2 sm:$0xff] %v1139
  %s1202 = scalar_lea.vmem [#allocation1], 32
  %1203 = vst [vmem:[%s1202] ss:$2 sm:$0xff] %v1140
  %s1204 = scalar_lea.vmem [#allocation1], 33
  %1205 = vst [vmem:[%s1204] ss:$2 sm:$0xff] %v1141
  %s1206 = scalar_lea.vmem [#allocation1], 48
  %1207 = vst [vmem:[%s1206] ss:$2 sm:$0xff] %v1142
  %s1208 = scalar_lea.vmem [#allocation1], 49
  %1209 = vst [vmem:[%s1208] ss:$2 sm:$0xff] %v1143
  %v1210 = vld.sshfl [vmem:[#allocation1] sm:$0xff pattern:$0x75316420]
  %v1211 = vld.sshfl [vmem:[#allocation1 + $0x10] sm:$0xff pattern:$0x75316420]
  %v1212 = vld.sshfl [vmem:[#allocation1 + $0x20] sm:$0xff pattern:$0x75316420]
  %v1213 = vld.sshfl [vmem:[#allocation1 + $0x30] sm:$0xff pattern:$0x75316420]
  %1218 = vmatpush.msra.mxu0 %v1185
  %1219 = vmatpush.msra.mxu0 %v1184
  %1220 = vmatpush.msra.mxu0 %v1183
  %1221 = vmatpush.msra.mxu0 %v1182
  %1222 = vmatpush.msra.mxu0 %v1181
  %1223 = vmatpush.msra.mxu0 %v1180
  %1224 = vmatpush.msra.mxu0 %v1179
  %1225 = vmatpush.msra.mxu0 %v1178
  %1226 = vmatpush.msra.mxu0 %v1177
  %1227 = vmatpush.msra.mxu0 %v1176
  %1228 = vmatpush.msra.mxu0 %v1175
  %1229 = vmatpush.msra.mxu0 %v1174
  %1230 = vmatpush.msra.mxu0 %v1173
  %1231 = vmatpush.msra.mxu0 %v1172
  %1232 = vmatpush.msra.mxu0 %v1171
  %1233 = vmatpush.msra.mxu0 %v1170
  %1234 = vmatmul.f32.gmra.mxu0 %v1210
  %v1235 = vpop.f32.mrf.mxu0
  %v1236 = vadd.f32 %v1186, %v1235
  %1237 = vmatmul.f32.gmra.mxu0 %v1211
  %v1238 = vpop.f32.mrf.mxu0
  %v1239 = vadd.f32 %v1186, %v1238
  %1240 = vmatmul.f32.gmra.mxu0 %v1212
  %v1241 = vpop.f32.mrf.mxu0
  %v1242 = vadd.f32 %v1186, %v1241
  %1243 = vmatmul.f32.gmra.mxu0 %v1213
  %v1244 = vpop.f32.mrf.mxu0
  %v1245 = vadd.f32 %v1186, %v1244
  %1246 = vdwg.mxu0
  %v1247 = vmax.f32 %v1236, 0.0
  %v1248 = vmax.f32 %v1239, 0.0
  %v1249 = vmax.f32 %v1242, 0.0
  %v1250 = vmax.f32 %v1245, 0.0
  %v1255 = vrot.slane %v1247, 4
  %v1256 = vrot.slane %v1248, 4
  %v1257 = vrot.slane %v1249, 4
  %v1258 = vrot.slane %v1250, 4
  %1263 = vst [vmem:[#allocation4] sm:$0xf] %v1247
  %1264 = vst [vmem:[#allocation4 + $0x8] sm:$0xf] %v1255
  %1265 = vst [vmem:[#allocation4 + $0x10] sm:$0xf] %v1248
  %1266 = vst [vmem:[#allocation4 + $0x18] sm:$0xf] %v1256
  %1267 = vst [vmem:[#allocation4 + $0x28] sm:$0xf] %v1249
  %1268 = vst [vmem:[#allocation4 + $0x30] sm:$0xf] %v1257
  %1269 = vst [vmem:[#allocation4 + $0x38] sm:$0xf] %v1250
  %1270 = vst [vmem:[#allocation4 + $0x40] sm:$0xf] %v1258
  %s1271 = scalar_lea.vmem %s3, 384
  %v1272 = vld [vmem:[%s1271] sm:$0xff]
  %v1273 = vld [vmem:[%s1271 + $0x8] sm:$0xff]
  %v1274 = vld [vmem:[%s1271 + $0x10] sm:$0xff]
  %v1275 = vld [vmem:[%s1271 + $0x18] sm:$0xff]
  %v1276 = vld [vmem:[%s1271 + $0x20] sm:$0xff]
  %v1277 = vld [vmem:[%s1271 + $0x28] sm:$0xff]
  %v1278 = vld [vmem:[%s1271 + $0x30] sm:$0xff]
  %v1279 = vld [vmem:[%s1271 + $0x38] sm:$0xff]
  %v1280 = vld [vmem:[%s1271 + $0x40] sm:$0xff]
  %v1281 = vld [vmem:[%s1271 + $0x48] sm:$0xff]
  %v1282 = vld [vmem:[%s1271 + $0x50] sm:$0xff]
  %v1283 = vld [vmem:[%s1271 + $0x58] sm:$0xff]
  %v1284 = vld [vmem:[%s1271 + $0x60] sm:$0xff]
  %v1285 = vld [vmem:[%s1271 + $0x68] sm:$0xff]
  %v1286 = vld [vmem:[%s1271 + $0x70] sm:$0xff]
  %v1287 = vld [vmem:[%s1271 + $0x78] sm:$0xff]
  %s1288 = scalar_lea.vmem %s3, 640
  %v1289 = vld [vmem:[%s1288] sm:$0xff]
  %v1290 = vld [vmem:[%s1288 + $0x8] sm:$0xff]
  %v1291 = vld [vmem:[%s1288 + $0x10] sm:$0xff]
  %v1292 = vld [vmem:[%s1288 + $0x18] sm:$0xff]
  %v1293 = vld [vmem:[%s1288 + $0x20] sm:$0xff]
  %v1294 = vld [vmem:[%s1288 + $0x28] sm:$0xff]
  %v1295 = vld [vmem:[%s1288 + $0x30] sm:$0xff]
  %v1296 = vld [vmem:[%s1288 + $0x38] sm:$0xff]
  %v1297 = vld [vmem:[%s1288 + $0x40] sm:$0xff]
  %v1298 = vld [vmem:[%s1288 + $0x48] sm:$0xff]
  %v1299 = vld [vmem:[%s1288 + $0x50] sm:$0xff]
  %v1300 = vld [vmem:[%s1288 + $0x58] sm:$0xff]
  %v1301 = vld [vmem:[%s1288 + $0x60] sm:$0xff]
  %v1302 = vld [vmem:[%s1288 + $0x68] sm:$0xff]
  %v1303 = vld [vmem:[%s1288 + $0x70] sm:$0xff]
  %v1304 = vld [vmem:[%s1288 + $0x78] sm:$0xff]
  %1305 = vst [vmem:[#allocation1] ss:$2 sm:$0xff] %v1136
  %s1306 = scalar_lea.vmem [#allocation1], 1
  %1307 = vst [vmem:[%s1306] ss:$2 sm:$0xff] %v1137
  %s1308 = scalar_lea.vmem [#allocation1], 16
  %1309 = vst [vmem:[%s1308] ss:$2 sm:$0xff] %v1138
  %s1310 = scalar_lea.vmem [#allocation1], 17
  %1311 = vst [vmem:[%s1310] ss:$2 sm:$0xff] %v1139
  %s1312 = scalar_lea.vmem [#allocation1], 32
  %1313 = vst [vmem:[%s1312] ss:$2 sm:$0xff] %v1140
  %s1314 = scalar_lea.vmem [#allocation1], 33
  %1315 = vst [vmem:[%s1314] ss:$2 sm:$0xff] %v1141
  %s1316 = scalar_lea.vmem [#allocation1], 48
  %1317 = vst [vmem:[%s1316] ss:$2 sm:$0xff] %v1142
  %s1318 = scalar_lea.vmem [#allocation1], 49
  %1319 = vst [vmem:[%s1318] ss:$2 sm:$0xff] %v1143
  %v1320 = vld.sshfl [vmem:[#allocation1] sm:$0xff pattern:$0x75316420]
  %v1321 = vld.sshfl [vmem:[#allocation1 + $0x10] sm:$0xff pattern:$0x75316420]
  %v1322 = vld.sshfl [vmem:[#allocation1 + $0x20] sm:$0xff pattern:$0x75316420]
  %v1323 = vld.sshfl [vmem:[#allocation1 + $0x30] sm:$0xff pattern:$0x75316420]
  %1328 = vmatpush.msra.mxu0 %v1304
  %1329 = vmatpush.msra.mxu0 %v1303
  %1330 = vmatpush.msra.mxu0 %v1302
  %1331 = vmatpush.msra.mxu0 %v1301
  %1332 = vmatpush.msra.mxu0 %v1300
  %1333 = vmatpush.msra.mxu0 %v1299
  %1334 = vmatpush.msra.mxu0 %v1298
  %1335 = vmatpush.msra.mxu0 %v1297
  %1336 = vmatpush.msra.mxu0 %v1296
  %1337 = vmatpush.msra.mxu0 %v1295
  %1338 = vmatpush.msra.mxu0 %v1294
  %1339 = vmatpush.msra.mxu0 %v1293
  %1340 = vmatpush.msra.mxu0 %v1292
  %1341 = vmatpush.msra.mxu0 %v1291
  %1342 = vmatpush.msra.mxu0 %v1290
  %1343 = vmatpush.msra.mxu0 %v1289
  %1344 = vmatmul.f32.gmra.mxu0 %v1320
  %v1345 = vpop.f32.mrf.mxu0
  %v1346 = vadd.f32 0.0, %v1345
  %1347 = vmatmul.f32.gmra.mxu0 %v1321
  %v1348 = vpop.f32.mrf.mxu0
  %v1349 = vadd.f32 0.0, %v1348
  %1350 = vmatmul.f32.gmra.mxu0 %v1322
  %v1351 = vpop.f32.mrf.mxu0
  %v1352 = vadd.f32 0.0, %v1351
  %1353 = vmatmul.f32.gmra.mxu0 %v1323
  %v1354 = vpop.f32.mrf.mxu0
  %v1355 = vadd.f32 0.0, %v1354
  %1356 = vdwg.mxu0
  %1365 = vst [vmem:[#allocation1] ss:$2 sm:$0xff] %v1144
  %s1366 = scalar_lea.vmem [#allocation1], 1
  %1367 = vst [vmem:[%s1366] ss:$2 sm:$0xff] %v1145
  %s1368 = scalar_lea.vmem [#allocation1], 16
  %1369 = vst [vmem:[%s1368] ss:$2 sm:$0xff] %v1146
  %s1370 = scalar_lea.vmem [#allocation1], 17
  %1371 = vst [vmem:[%s1370] ss:$2 sm:$0xff] %v1147
  %s1372 = scalar_lea.vmem [#allocation1], 32
  %1373 = vst [vmem:[%s1372] ss:$2 sm:$0xff] %v1148
  %s1374 = scalar_lea.vmem [#allocation1], 33
  %1375 = vst [vmem:[%s1374] ss:$2 sm:$0xff] %v1149
  %s1376 = scalar_lea.vmem [#allocation1], 48
  %1377 = vst [vmem:[%s1376] ss:$2 sm:$0xff] %v1150
  %s1378 = scalar_lea.vmem [#allocation1], 49
  %1379 = vst [vmem:[%s1378] ss:$2 sm:$0xff] %v1151
  %v1380 = vld.sshfl [vmem:[#allocation1] sm:$0xff pattern:$0x75316420]
  %v1381 = vld.sshfl [vmem:[#allocation1 + $0x10] sm:$0xff pattern:$0x75316420]
  %v1382 = vld.sshfl [vmem:[#allocation1 + $0x20] sm:$0xff pattern:$0x75316420]
  %v1383 = vld.sshfl [vmem:[#allocation1 + $0x30] sm:$0xff pattern:$0x75316420]
  %1388 = vmatpush.msra.mxu0 %v1287
  %1389 = vmatpush.msra.mxu0 %v1286
  %1390 = vmatpush.msra.mxu0 %v1285
  %1391 = vmatpush.msra.mxu0 %v1284
  %1392 = vmatpush.msra.mxu0 %v1283
  %1393 = vmatpush.msra.mxu0 %v1282
  %1394 = vmatpush.msra.mxu0 %v1281
  %1395 = vmatpush.msra.mxu0 %v1280
  %1396 = vmatpush.msra.mxu0 %v1279
  %1397 = vmatpush.msra.mxu0 %v1278
  %1398 = vmatpush.msra.mxu0 %v1277
  %1399 = vmatpush.msra.mxu0 %v1276
  %1400 = vmatpush.msra.mxu0 %v1275
  %1401 = vmatpush.msra.mxu0 %v1274
  %1402 = vmatpush.msra.mxu0 %v1273
  %1403 = vmatpush.msra.mxu0 %v1272
  %1404 = vmatmul.f32.gmra.mxu0 %v1380
  %v1405 = vpop.f32.mrf.mxu0
  %v1406 = vadd.f32 %v1346, %v1405
  %1407 = vmatmul.f32.gmra.mxu0 %v1381
  %v1408 = vpop.f32.mrf.mxu0
  %v1409 = vadd.f32 %v1349, %v1408
  %1410 = vmatmul.f32.gmra.mxu0 %v1382
  %v1411 = vpop.f32.mrf.mxu0
  %v1412 = vadd.f32 %v1352, %v1411
  %1413 = vmatmul.f32.gmra.mxu0 %v1383
  %v1414 = vpop.f32.mrf.mxu0
  %v1415 = vadd.f32 %v1355, %v1414
  %1416 = vdwg.mxu0
  %v1417 = vadd.f32 %v1406, %v1186
  %v1418 = vadd.f32 %v1409, %v1186
  %v1419 = vadd.f32 %v1412, %v1186
  %v1420 = vadd.f32 %v1415, %v1186
  %v1421 = vmax.f32 %v1417, 0.0
  %v1422 = vmax.f32 %v1418, 0.0
  %v1423 = vmax.f32 %v1419, 0.0
  %v1424 = vmax.f32 %v1420, 0.0
  %v1429 = vrot.slane %v1421, 4
  %v1430 = vrot.slane %v1422, 4
  %v1431 = vrot.slane %v1423, 4
  %v1432 = vrot.slane %v1424, 4
  %s1437 = scalar_lea.vmem [#allocation4], 80
  %1438 = vst [vmem:[%s1437] sm:$0xf] %v1421
  %1439 = vst [vmem:[%s1437 + $0x8] sm:$0xf] %v1429
  %1440 = vst [vmem:[%s1437 + $0x10] sm:$0xf] %v1422
  %1441 = vst [vmem:[%s1437 + $0x18] sm:$0xf] %v1430
  %1442 = vst [vmem:[%s1437 + $0x28] sm:$0xf] %v1423
  %1443 = vst [vmem:[%s1437 + $0x30] sm:$0xf] %v1431
  %1444 = vst [vmem:[%s1437 + $0x38] sm:$0xf] %v1424
  %1445 = vst [vmem:[%s1437 + $0x40] sm:$0xf] %v1432
  %s1446 = scalar_lea.vmem %s3, 128
  %v1447 = vld [vmem:[%s1446] sm:$0xff]
  %v1448 = vld [vmem:[%s1446 + $0x8] sm:$0xff]
  %v1449 = vld [vmem:[%s1446 + $0x10] sm:$0xff]
  %v1450 = vld [vmem:[%s1446 + $0x18] sm:$0xff]
  %v1451 = vld [vmem:[%s1446 + $0x20] sm:$0xff]
  %v1452 = vld [vmem:[%s1446 + $0x28] sm:$0xff]
  %v1453 = vld [vmem:[%s1446 + $0x30] sm:$0xff]
  %v1454 = vld [vmem:[%s1446 + $0x38] sm:$0xff]
  %v1455 = vld [vmem:[%s1446 + $0x40] sm:$0xff]
  %v1456 = vld [vmem:[%s1446 + $0x48] sm:$0xff]
  %v1457 = vld [vmem:[%s1446 + $0x50] sm:$0xff]
  %v1458 = vld [vmem:[%s1446 + $0x58] sm:$0xff]
  %v1459 = vld [vmem:[%s1446 + $0x60] sm:$0xff]
  %v1460 = vld [vmem:[%s1446 + $0x68] sm:$0xff]
  %v1461 = vld [vmem:[%s1446 + $0x70] sm:$0xff]
  %v1462 = vld [vmem:[%s1446 + $0x78] sm:$0xff]
  %s1463 = scalar_lea.vmem %s3, 896
  %v1464 = vld [vmem:[%s1463] sm:$0xff]
  %v1465 = vld [vmem:[%s1463 + $0x8] sm:$0xff]
  %v1466 = vld [vmem:[%s1463 + $0x10] sm:$0xff]
  %v1467 = vld [vmem:[%s1463 + $0x18] sm:$0xff]
  %v1468 = vld [vmem:[%s1463 + $0x20] sm:$0xff]
  %v1469 = vld [vmem:[%s1463 + $0x28] sm:$0xff]
  %v1470 = vld [vmem:[%s1463 + $0x30] sm:$0xff]
  %v1471 = vld [vmem:[%s1463 + $0x38] sm:$0xff]
  %v1472 = vld [vmem:[%s1463 + $0x40] sm:$0xff]
  %v1473 = vld [vmem:[%s1463 + $0x48] sm:$0xff]
  %v1474 = vld [vmem:[%s1463 + $0x50] sm:$0xff]
  %v1475 = vld [vmem:[%s1463 + $0x58] sm:$0xff]
  %v1476 = vld [vmem:[%s1463 + $0x60] sm:$0xff]
  %v1477 = vld [vmem:[%s1463 + $0x68] sm:$0xff]
  %v1478 = vld [vmem:[%s1463 + $0x70] sm:$0xff]
  %v1479 = vld [vmem:[%s1463 + $0x78] sm:$0xff]
  %1480 = vst [vmem:[#allocation1] ss:$2 sm:$0xff] %v1136
  %s1481 = scalar_lea.vmem [#allocation1], 1
  %1482 = vst [vmem:[%s1481] ss:$2 sm:$0xff] %v1137
  %s1483 = scalar_lea.vmem [#allocation1], 16
  %1484 = vst [vmem:[%s1483] ss:$2 sm:$0xff] %v1138
  %s1485 = scalar_lea.vmem [#allocation1], 17
  %1486 = vst [vmem:[%s1485] ss:$2 sm:$0xff] %v1139
  %s1487 = scalar_lea.vmem [#allocation1], 32
  %1488 = vst [vmem:[%s1487] ss:$2 sm:$0xff] %v1140
  %s1489 = scalar_lea.vmem [#allocation1], 33
  %1490 = vst [vmem:[%s1489] ss:$2 sm:$0xff] %v1141
  %s1491 = scalar_lea.vmem [#allocation1], 48
  %1492 = vst [vmem:[%s1491] ss:$2 sm:$0xff] %v1142
  %s1493 = scalar_lea.vmem [#allocation1], 49
  %1494 = vst [vmem:[%s1493] ss:$2 sm:$0xff] %v1143
  %v1495 = vld.sshfl [vmem:[#allocation1] sm:$0xff pattern:$0x75316420]
  %v1496 = vld.sshfl [vmem:[#allocation1 + $0x10] sm:$0xff pattern:$0x75316420]
  %v1497 = vld.sshfl [vmem:[#allocation1 + $0x20] sm:$0xff pattern:$0x75316420]
  %v1498 = vld.sshfl [vmem:[#allocation1 + $0x30] sm:$0xff pattern:$0x75316420]
  %1503 = vmatpush.msra.mxu0 %v1479
  %1504 = vmatpush.msra.mxu0 %v1478
  %1505 = vmatpush.msra.mxu0 %v1477
  %1506 = vmatpush.msra.mxu0 %v1476
  %1507 = vmatpush.msra.mxu0 %v1475
  %1508 = vmatpush.msra.mxu0 %v1474
  %1509 = vmatpush.msra.mxu0 %v1473
  %1510 = vmatpush.msra.mxu0 %v1472
  %1511 = vmatpush.msra.mxu0 %v1471
  %1512 = vmatpush.msra.mxu0 %v1470
  %1513 = vmatpush.msra.mxu0 %v1469
  %1514 = vmatpush.msra.mxu0 %v1468
  %1515 = vmatpush.msra.mxu0 %v1467
  %1516 = vmatpush.msra.mxu0 %v1466
  %1517 = vmatpush.msra.mxu0 %v1465
  %1518 = vmatpush.msra.mxu0 %v1464
  %1519 = vmatmul.f32.gmra.mxu0 %v1495
  %v1520 = vpop.f32.mrf.mxu0
  %v1521 = vadd.f32 0.0, %v1520
  %1522 = vmatmul.f32.gmra.mxu0 %v1496
  %v1523 = vpop.f32.mrf.mxu0
  %v1524 = vadd.f32 0.0, %v1523
  %1525 = vmatmul.f32.gmra.mxu0 %v1497
  %v1526 = vpop.f32.mrf.mxu0
  %v1527 = vadd.f32 0.0, %v1526
  %1528 = vmatmul.f32.gmra.mxu0 %v1498
  %v1529 = vpop.f32.mrf.mxu0
  %v1530 = vadd.f32 0.0, %v1529
  %1531 = vdwg.mxu0
  %1540 = vst [vmem:[#allocation1] ss:$2 sm:$0xff] %v1153
  %s1541 = scalar_lea.vmem [#allocation1], 1
  %1542 = vst [vmem:[%s1541] ss:$2 sm:$0xff] %v1154
  %s1543 = scalar_lea.vmem [#allocation1], 16
  %1544 = vst [vmem:[%s1543] ss:$2 sm:$0xff] %v1155
  %s1545 = scalar_lea.vmem [#allocation1], 17
  %1546 = vst [vmem:[%s1545] ss:$2 sm:$0xff] %v1156
  %s1547 = scalar_lea.vmem [#allocation1], 32
  %1548 = vst [vmem:[%s1547] ss:$2 sm:$0xff] %v1157
  %s1549 = scalar_lea.vmem [#allocation1], 33
  %1550 = vst [vmem:[%s1549] ss:$2 sm:$0xff] %v1158
  %s1551 = scalar_lea.vmem [#allocation1], 48
  %1552 = vst [vmem:[%s1551] ss:$2 sm:$0xff] %v1159
  %s1553 = scalar_lea.vmem [#allocation1], 49
  %1554 = vst [vmem:[%s1553] ss:$2 sm:$0xff] %v1160
  %v1555 = vld.sshfl [vmem:[#allocation1] sm:$0xff pattern:$0x75316420]
  %v1556 = vld.sshfl [vmem:[#allocation1 + $0x10] sm:$0xff pattern:$0x75316420]
  %v1557 = vld.sshfl [vmem:[#allocation1 + $0x20] sm:$0xff pattern:$0x75316420]
  %v1558 = vld.sshfl [vmem:[#allocation1 + $0x30] sm:$0xff pattern:$0x75316420]
  %1563 = vmatpush.msra.mxu0 %v1462
  %1564 = vmatpush.msra.mxu0 %v1461
  %1565 = vmatpush.msra.mxu0 %v1460
  %1566 = vmatpush.msra.mxu0 %v1459
  %1567 = vmatpush.msra.mxu0 %v1458
  %1568 = vmatpush.msra.mxu0 %v1457
  %1569 = vmatpush.msra.mxu0 %v1456
  %1570 = vmatpush.msra.mxu0 %v1455
  %1571 = vmatpush.msra.mxu0 %v1454
  %1572 = vmatpush.msra.mxu0 %v1453
  %1573 = vmatpush.msra.mxu0 %v1452
  %1574 = vmatpush.msra.mxu0 %v1451
  %1575 = vmatpush.msra.mxu0 %v1450
  %1576 = vmatpush.msra.mxu0 %v1449
  %1577 = vmatpush.msra.mxu0 %v1448
  %1578 = vmatpush.msra.mxu0 %v1447
  %1579 = vmatmul.f32.gmra.mxu0 %v1555
  %v1580 = vpop.f32.mrf.mxu0
  %v1581 = vadd.f32 %v1521, %v1580
  %1582 = vmatmul.f32.gmra.mxu0 %v1556
  %v1583 = vpop.f32.mrf.mxu0
  %v1584 = vadd.f32 %v1524, %v1583
  %1585 = vmatmul.f32.gmra.mxu0 %v1557
  %v1586 = vpop.f32.mrf.mxu0
  %v1587 = vadd.f32 %v1527, %v1586
  %1588 = vmatmul.f32.gmra.mxu0 %v1558
  %v1589 = vpop.f32.mrf.mxu0
  %v1590 = vadd.f32 %v1530, %v1589
  %1591 = vdwg.mxu0
  %v1592 = vadd.f32 %v1581, %v1186
  %v1593 = vadd.f32 %v1584, %v1186
  %v1594 = vadd.f32 %v1587, %v1186
  %v1595 = vadd.f32 %v1590, %v1186
  %v1596 = vmax.f32 %v1592, 0.0
  %v1597 = vmax.f32 %v1593, 0.0
  %v1598 = vmax.f32 %v1594, 0.0
  %v1599 = vmax.f32 %v1595, 0.0
  %v1604 = vrot.slane %v1596, 4
  %v1605 = vrot.slane %v1597, 4
  %v1606 = vrot.slane %v1598, 4
  %v1607 = vrot.slane %v1599, 4
  %s1612 = scalar_lea.vmem [#allocation4], 160
  %1613 = vst [vmem:[%s1612] sm:$0xf] %v1596
  %1614 = vst [vmem:[%s1612 + $0x8] sm:$0xf] %v1604
  %1615 = vst [vmem:[%s1612 + $0x10] sm:$0xf] %v1597
  %1616 = vst [vmem:[%s1612 + $0x18] sm:$0xf] %v1605
  %1617 = vst [vmem:[%s1612 + $0x28] sm:$0xf] %v1598
  %1618 = vst [vmem:[%s1612 + $0x30] sm:$0xf] %v1606
  %1619 = vst [vmem:[%s1612 + $0x38] sm:$0xf] %v1599
  %1620 = vst [vmem:[%s1612 + $0x40] sm:$0xf] %v1607
  %v1621 = vld [vmem:[%s3] sm:$0xff]
  %v1622 = vld [vmem:[%s3 + $0x8] sm:$0xff]
  %v1623 = vld [vmem:[%s3 + $0x10] sm:$0xff]
  %v1624 = vld [vmem:[%s3 + $0x18] sm:$0xff]
  %v1625 = vld [vmem:[%s3 + $0x20] sm:$0xff]
  %v1626 = vld [vmem:[%s3 + $0x28] sm:$0xff]
  %v1627 = vld [vmem:[%s3 + $0x30] sm:$0xff]
  %v1628 = vld [vmem:[%s3 + $0x38] sm:$0xff]
  %v1629 = vld [vmem:[%s3 + $0x40] sm:$0xff]
  %v1630 = vld [vmem:[%s3 + $0x48] sm:$0xff]
  %v1631 = vld [vmem:[%s3 + $0x50] sm:$0xff]
  %v1632 = vld [vmem:[%s3 + $0x58] sm:$0xff]
  %v1633 = vld [vmem:[%s3 + $0x60] sm:$0xff]
  %v1634 = vld [vmem:[%s3 + $0x68] sm:$0xff]
  %v1635 = vld [vmem:[%s3 + $0x70] sm:$0xff]
  %v1636 = vld [vmem:[%s3 + $0x78] sm:$0xff]
  %s1637 = scalar_lea.vmem %s3, 256
  %v1638 = vld [vmem:[%s1637] sm:$0xff]
  %v1639 = vld [vmem:[%s1637 + $0x8] sm:$0xff]
  %v1640 = vld [vmem:[%s1637 + $0x10] sm:$0xff]
  %v1641 = vld [vmem:[%s1637 + $0x18] sm:$0xff]
  %v1642 = vld [vmem:[%s1637 + $0x20] sm:$0xff]
  %v1643 = vld [vmem:[%s1637 + $0x28] sm:$0xff]
  %v1644 = vld [vmem:[%s1637 + $0x30] sm:$0xff]
  %v1645 = vld [vmem:[%s1637 + $0x38] sm:$0xff]
  %v1646 = vld [vmem:[%s1637 + $0x40] sm:$0xff]
  %v1647 = vld [vmem:[%s1637 + $0x48] sm:$0xff]
  %v1648 = vld [vmem:[%s1637 + $0x50] sm:$0xff]
  %v1649 = vld [vmem:[%s1637 + $0x58] sm:$0xff]
  %v1650 = vld [vmem:[%s1637 + $0x60] sm:$0xff]
  %v1651 = vld [vmem:[%s1637 + $0x68] sm:$0xff]
  %v1652 = vld [vmem:[%s1637 + $0x70] sm:$0xff]
  %v1653 = vld [vmem:[%s1637 + $0x78] sm:$0xff]
  %1654 = vst [vmem:[#allocation1] ss:$2 sm:$0xff] %v1153
  %s1655 = scalar_lea.vmem [#allocation1], 1
  %1656 = vst [vmem:[%s1655] ss:$2 sm:$0xff] %v1154
  %s1657 = scalar_lea.vmem [#allocation1], 16
  %1658 = vst [vmem:[%s1657] ss:$2 sm:$0xff] %v1155
  %s1659 = scalar_lea.vmem [#allocation1], 17
  %1660 = vst [vmem:[%s1659] ss:$2 sm:$0xff] %v1156
  %s1661 = scalar_lea.vmem [#allocation1], 32
  %1662 = vst [vmem:[%s1661] ss:$2 sm:$0xff] %v1157
  %s1663 = scalar_lea.vmem [#allocation1], 33
  %1664 = vst [vmem:[%s1663] ss:$2 sm:$0xff] %v1158
  %s1665 = scalar_lea.vmem [#allocation1], 48
  %1666 = vst [vmem:[%s1665] ss:$2 sm:$0xff] %v1159
  %s1667 = scalar_lea.vmem [#allocation1], 49
  %1668 = vst [vmem:[%s1667] ss:$2 sm:$0xff] %v1160
  %v1669 = vld.sshfl [vmem:[#allocation1] sm:$0xff pattern:$0x75316420]
  %v1670 = vld.sshfl [vmem:[#allocation1 + $0x10] sm:$0xff pattern:$0x75316420]
  %v1671 = vld.sshfl [vmem:[#allocation1 + $0x20] sm:$0xff pattern:$0x75316420]
  %v1672 = vld.sshfl [vmem:[#allocation1 + $0x30] sm:$0xff pattern:$0x75316420]
  %1677 = vmatpush.msra.mxu0 %v1653
  %1678 = vmatpush.msra.mxu0 %v1652
  %1679 = vmatpush.msra.mxu0 %v1651
  %1680 = vmatpush.msra.mxu0 %v1650
  %1681 = vmatpush.msra.mxu0 %v1649
  %1682 = vmatpush.msra.mxu0 %v1648
  %1683 = vmatpush.msra.mxu0 %v1647
  %1684 = vmatpush.msra.mxu0 %v1646
  %1685 = vmatpush.msra.mxu0 %v1645
  %1686 = vmatpush.msra.mxu0 %v1644
  %1687 = vmatpush.msra.mxu0 %v1643
  %1688 = vmatpush.msra.mxu0 %v1642
  %1689 = vmatpush.msra.mxu0 %v1641
  %1690 = vmatpush.msra.mxu0 %v1640
  %1691 = vmatpush.msra.mxu0 %v1639
  %1692 = vmatpush.msra.mxu0 %v1638
  %1693 = vmatmul.f32.gmra.mxu0 %v1669
  %v1694 = vpop.f32.mrf.mxu0
  %v1695 = vadd.f32 0.0, %v1694
  %1696 = vmatmul.f32.gmra.mxu0 %v1670
  %v1697 = vpop.f32.mrf.mxu0
  %v1698 = vadd.f32 0.0, %v1697
  %1699 = vmatmul.f32.gmra.mxu0 %v1671
  %v1700 = vpop.f32.mrf.mxu0
  %v1701 = vadd.f32 0.0, %v1700
  %1702 = vmatmul.f32.gmra.mxu0 %v1672
  %v1703 = vpop.f32.mrf.mxu0
  %v1704 = vadd.f32 0.0, %v1703
  %1705 = vdwg.mxu0
  %1714 = vst [vmem:[#allocation1] ss:$2 sm:$0xff] %v1161
  %s1715 = scalar_lea.vmem [#allocation1], 1
  %1716 = vst [vmem:[%s1715] ss:$2 sm:$0xff] %v1162
  %s1717 = scalar_lea.vmem [#allocation1], 16
  %1718 = vst [vmem:[%s1717] ss:$2 sm:$0xff] %v1163
  %s1719 = scalar_lea.vmem [#allocation1], 17
  %1720 = vst [vmem:[%s1719] ss:$2 sm:$0xff] %v1164
  %s1721 = scalar_lea.vmem [#allocation1], 32
  %1722 = vst [vmem:[%s1721] ss:$2 sm:$0xff] %v1165
  %s1723 = scalar_lea.vmem [#allocation1], 33
  %1724 = vst [vmem:[%s1723] ss:$2 sm:$0xff] %v1166
  %s1725 = scalar_lea.vmem [#allocation1], 48
  %1726 = vst [vmem:[%s1725] ss:$2 sm:$0xff] %v1167
  %s1727 = scalar_lea.vmem [#allocation1], 49
  %1728 = vst [vmem:[%s1727] ss:$2 sm:$0xff] %v1168
  %v1729 = vld.sshfl [vmem:[#allocation1] sm:$0xff pattern:$0x75316420]
  %v1730 = vld.sshfl [vmem:[#allocation1 + $0x10] sm:$0xff pattern:$0x75316420]
  %v1731 = vld.sshfl [vmem:[#allocation1 + $0x20] sm:$0xff pattern:$0x75316420]
  %v1732 = vld.sshfl [vmem:[#allocation1 + $0x30] sm:$0xff pattern:$0x75316420]
  %1737 = vmatpush.msra.mxu0 %v1636
  %1738 = vmatpush.msra.mxu0 %v1635
  %1739 = vmatpush.msra.mxu0 %v1634
  %1740 = vmatpush.msra.mxu0 %v1633
  %1741 = vmatpush.msra.mxu0 %v1632
  %1742 = vmatpush.msra.mxu0 %v1631
  %1743 = vmatpush.msra.mxu0 %v1630
  %1744 = vmatpush.msra.mxu0 %v1629
  %1745 = vmatpush.msra.mxu0 %v1628
  %1746 = vmatpush.msra.mxu0 %v1627
  %1747 = vmatpush.msra.mxu0 %v1626
  %1748 = vmatpush.msra.mxu0 %v1625
  %1749 = vmatpush.msra.mxu0 %v1624
  %1750 = vmatpush.msra.mxu0 %v1623
  %1751 = vmatpush.msra.mxu0 %v1622
  %1752 = vmatpush.msra.mxu0 %v1621
  %1753 = vmatmul.f32.gmra.mxu0 %v1729
  %v1754 = vpop.f32.mrf.mxu0
  %v1755 = vadd.f32 %v1695, %v1754
  %1756 = vmatmul.f32.gmra.mxu0 %v1730
  %v1757 = vpop.f32.mrf.mxu0
  %v1758 = vadd.f32 %v1698, %v1757
  %1759 = vmatmul.f32.gmra.mxu0 %v1731
  %v1760 = vpop.f32.mrf.mxu0
  %v1761 = vadd.f32 %v1701, %v1760
  %1762 = vmatmul.f32.gmra.mxu0 %v1732
  %v1763 = vpop.f32.mrf.mxu0
  %v1764 = vadd.f32 %v1704, %v1763
  %1765 = vdwg.mxu0
  %s1766 = scalar_lea.vmem %s3, 768
  %v1767 = vld [vmem:[%s1766] sm:$0xff]
  %v1768 = vld [vmem:[%s1766 + $0x8] sm:$0xff]
  %v1769 = vld [vmem:[%s1766 + $0x10] sm:$0xff]
  %v1770 = vld [vmem:[%s1766 + $0x18] sm:$0xff]
  %v1771 = vld [vmem:[%s1766 + $0x20] sm:$0xff]
  %v1772 = vld [vmem:[%s1766 + $0x28] sm:$0xff]
  %v1773 = vld [vmem:[%s1766 + $0x30] sm:$0xff]
  %v1774 = vld [vmem:[%s1766 + $0x38] sm:$0xff]
  %v1775 = vld [vmem:[%s1766 + $0x40] sm:$0xff]
  %v1776 = vld [vmem:[%s1766 + $0x48] sm:$0xff]
  %v1777 = vld [vmem:[%s1766 + $0x50] sm:$0xff]
  %v1778 = vld [vmem:[%s1766 + $0x58] sm:$0xff]
  %v1779 = vld [vmem:[%s1766 + $0x60] sm:$0xff]
  %v1780 = vld [vmem:[%s1766 + $0x68] sm:$0xff]
  %v1781 = vld [vmem:[%s1766 + $0x70] sm:$0xff]
  %v1782 = vld [vmem:[%s1766 + $0x78] sm:$0xff]
  %1783 = vst [vmem:[#allocation1] ss:$2 sm:$0xff] %v1144
  %s1784 = scalar_lea.vmem [#allocation1], 1
  %1785 = vst [vmem:[%s1784] ss:$2 sm:$0xff] %v1145
  %s1786 = scalar_lea.vmem [#allocation1], 16
  %1787 = vst [vmem:[%s1786] ss:$2 sm:$0xff] %v1146
  %s1788 = scalar_lea.vmem [#allocation1], 17
  %1789 = vst [vmem:[%s1788] ss:$2 sm:$0xff] %v1147
  %s1790 = scalar_lea.vmem [#allocation1], 32
  %1791 = vst [vmem:[%s1790] ss:$2 sm:$0xff] %v1148
  %s1792 = scalar_lea.vmem [#allocation1], 33
  %1793 = vst [vmem:[%s1792] ss:$2 sm:$0xff] %v1149
  %s1794 = scalar_lea.vmem [#allocation1], 48
  %1795 = vst [vmem:[%s1794] ss:$2 sm:$0xff] %v1150
  %s1796 = scalar_lea.vmem [#allocation1], 49
  %1797 = vst [vmem:[%s1796] ss:$2 sm:$0xff] %v1151
  %v1798 = vld.sshfl [vmem:[#allocation1] sm:$0xff pattern:$0x75316420]
  %v1799 = vld.sshfl [vmem:[#allocation1 + $0x10] sm:$0xff pattern:$0x75316420]
  %v1800 = vld.sshfl [vmem:[#allocation1 + $0x20] sm:$0xff pattern:$0x75316420]
  %v1801 = vld.sshfl [vmem:[#allocation1 + $0x30] sm:$0xff pattern:$0x75316420]
  %1806 = vmatpush.msra.mxu0 %v1782
  %1807 = vmatpush.msra.mxu0 %v1781
  %1808 = vmatpush.msra.mxu0 %v1780
  %1809 = vmatpush.msra.mxu0 %v1779
  %1810 = vmatpush.msra.mxu0 %v1778
  %1811 = vmatpush.msra.mxu0 %v1777
  %1812 = vmatpush.msra.mxu0 %v1776
  %1813 = vmatpush.msra.mxu0 %v1775
  %1814 = vmatpush.msra.mxu0 %v1774
  %1815 = vmatpush.msra.mxu0 %v1773
  %1816 = vmatpush.msra.mxu0 %v1772
  %1817 = vmatpush.msra.mxu0 %v1771
  %1818 = vmatpush.msra.mxu0 %v1770
  %1819 = vmatpush.msra.mxu0 %v1769
  %1820 = vmatpush.msra.mxu0 %v1768
  %1821 = vmatpush.msra.mxu0 %v1767
  %1822 = vmatmul.f32.gmra.mxu0 %v1798
  %v1823 = vpop.f32.mrf.mxu0
  %v1824 = vadd.f32 0.0, %v1823
  %1825 = vmatmul.f32.gmra.mxu0 %v1799
  %v1826 = vpop.f32.mrf.mxu0
  %v1827 = vadd.f32 0.0, %v1826
  %1828 = vmatmul.f32.gmra.mxu0 %v1800
  %v1829 = vpop.f32.mrf.mxu0
  %v1830 = vadd.f32 0.0, %v1829
  %1831 = vmatmul.f32.gmra.mxu0 %v1801
  %v1832 = vpop.f32.mrf.mxu0
  %v1833 = vadd.f32 0.0, %v1832
  %1834 = vdwg.mxu0
  %v1835 = vadd.f32 %v1755, %v1824
  %v1836 = vadd.f32 %v1758, %v1827
  %v1837 = vadd.f32 %v1761, %v1830
  %v1838 = vadd.f32 %v1764, %v1833
  %s1839 = scalar_lea.vmem %s3, 1024
  %v1840 = vld [vmem:[%s1839] sm:$0xff]
  %v1841 = vld [vmem:[%s1839 + $0x8] sm:$0xff]
  %v1842 = vld [vmem:[%s1839 + $0x10] sm:$0xff]
  %v1843 = vld [vmem:[%s1839 + $0x18] sm:$0xff]
  %v1844 = vld [vmem:[%s1839 + $0x20] sm:$0xff]
  %v1845 = vld [vmem:[%s1839 + $0x28] sm:$0xff]
  %v1846 = vld [vmem:[%s1839 + $0x30] sm:$0xff]
  %v1847 = vld [vmem:[%s1839 + $0x38] sm:$0xff]
  %v1848 = vld [vmem:[%s1839 + $0x40] sm:$0xff]
  %v1849 = vld [vmem:[%s1839 + $0x48] sm:$0xff]
  %v1850 = vld [vmem:[%s1839 + $0x50] sm:$0xff]
  %v1851 = vld [vmem:[%s1839 + $0x58] sm:$0xff]
  %v1852 = vld [vmem:[%s1839 + $0x60] sm:$0xff]
  %v1853 = vld [vmem:[%s1839 + $0x68] sm:$0xff]
  %v1854 = vld [vmem:[%s1839 + $0x70] sm:$0xff]
  %v1855 = vld [vmem:[%s1839 + $0x78] sm:$0xff]
  %1856 = vst [vmem:[#allocation1] ss:$2 sm:$0xff] %v1136
  %s1857 = scalar_lea.vmem [#allocation1], 1
  %1858 = vst [vmem:[%s1857] ss:$2 sm:$0xff] %v1137
  %s1859 = scalar_lea.vmem [#allocation1], 16
  %1860 = vst [vmem:[%s1859] ss:$2 sm:$0xff] %v1138
  %s1861 = scalar_lea.vmem [#allocation1], 17
  %1862 = vst [vmem:[%s1861] ss:$2 sm:$0xff] %v1139
  %s1863 = scalar_lea.vmem [#allocation1], 32
  %1864 = vst [vmem:[%s1863] ss:$2 sm:$0xff] %v1140
  %s1865 = scalar_lea.vmem [#allocation1], 33
  %1866 = vst [vmem:[%s1865] ss:$2 sm:$0xff] %v1141
  %s1867 = scalar_lea.vmem [#allocation1], 48
  %1868 = vst [vmem:[%s1867] ss:$2 sm:$0xff] %v1142
  %s1869 = scalar_lea.vmem [#allocation1], 49
  %1870 = vst [vmem:[%s1869] ss:$2 sm:$0xff] %v1143
  %v1871 = vld.sshfl [vmem:[#allocation1] sm:$0xff pattern:$0x75316420]
  %v1872 = vld.sshfl [vmem:[#allocation1 + $0x10] sm:$0xff pattern:$0x75316420]
  %v1873 = vld.sshfl [vmem:[#allocation1 + $0x20] sm:$0xff pattern:$0x75316420]
  %v1874 = vld.sshfl [vmem:[#allocation1 + $0x30] sm:$0xff pattern:$0x75316420]
  %1879 = vmatpush.msra.mxu0 %v1855
  %1880 = vmatpush.msra.mxu0 %v1854
  %1881 = vmatpush.msra.mxu0 %v1853
  %1882 = vmatpush.msra.mxu0 %v1852
  %1883 = vmatpush.msra.mxu0 %v1851
  %1884 = vmatpush.msra.mxu0 %v1850
  %1885 = vmatpush.msra.mxu0 %v1849
  %1886 = vmatpush.msra.mxu0 %v1848
  %1887 = vmatpush.msra.mxu0 %v1847
  %1888 = vmatpush.msra.mxu0 %v1846
  %1889 = vmatpush.msra.mxu0 %v1845
  %1890 = vmatpush.msra.mxu0 %v1844
  %1891 = vmatpush.msra.mxu0 %v1843
  %1892 = vmatpush.msra.mxu0 %v1842
  %1893 = vmatpush.msra.mxu0 %v1841
  %1894 = vmatpush.msra.mxu0 %v1840
  %1895 = vmatmul.f32.gmra.mxu0 %v1871
  %v1896 = vpop.f32.mrf.mxu0
  %v1897 = vadd.f32 0.0, %v1896
  %1898 = vmatmul.f32.gmra.mxu0 %v1872
  %v1899 = vpop.f32.mrf.mxu0
  %v1900 = vadd.f32 0.0, %v1899
  %1901 = vmatmul.f32.gmra.mxu0 %v1873
  %v1902 = vpop.f32.mrf.mxu0
  %v1903 = vadd.f32 0.0, %v1902
  %1904 = vmatmul.f32.gmra.mxu0 %v1874
  %v1905 = vpop.f32.mrf.mxu0
  %v1906 = vadd.f32 0.0, %v1905
  %1907 = vdwg.mxu0
  %v1908 = vadd.f32 %v1835, %v1897
  %v1909 = vadd.f32 %v1836, %v1900
  %v1910 = vadd.f32 %v1837, %v1903
  %v1911 = vadd.f32 %v1838, %v1906
  %v1912 = vadd.f32 %v1908, %v1186
  %v1913 = vadd.f32 %v1909, %v1186
  %v1914 = vadd.f32 %v1910, %v1186
  %v1915 = vadd.f32 %v1911, %v1186
  %v1916 = vmax.f32 %v1912, 0.0
  %v1917 = vmax.f32 %v1913, 0.0
  %v1918 = vmax.f32 %v1914, 0.0
  %v1919 = vmax.f32 %v1915, 0.0
  %v1924 = vrot.slane %v1916, 4
  %v1925 = vrot.slane %v1917, 4
  %v1926 = vrot.slane %v1918, 4
  %v1927 = vrot.slane %v1919, 4
  %s1932 = scalar_lea.vmem [#allocation4], 240
  %1933 = vst [vmem:[%s1932] sm:$0xf] %v1916
  %1934 = vst [vmem:[%s1932 + $0x8] sm:$0xf] %v1924
  %1935 = vst [vmem:[%s1932 + $0x10] sm:$0xf] %v1917
  %1936 = vst [vmem:[%s1932 + $0x18] sm:$0xf] %v1925
  %1937 = vst [vmem:[%s1932 + $0x28] sm:$0xf] %v1918
  %1938 = vst [vmem:[%s1932 + $0x30] sm:$0xf] %v1926
  %1939 = vst [vmem:[%s1932 + $0x38] sm:$0xf] %v1919
  %1940 = vst [vmem:[%s1932 + $0x40] sm:$0xf] %v1927
  %v1941 = vld [vmem:[%s5 + $0x3] sm:$0x1]
  %v1942 = vld [vmem:[#allocation4] sm:$0xf]
  %v1943 = vld [vmem:[#allocation4 + $0x8] sm:$0xf]
  %v1944 = vld [vmem:[#allocation4 + $0x10] sm:$0xf]
  %v1945 = vld [vmem:[#allocation4 + $0x18] sm:$0xf]
  %v1946 = vld [vmem:[#allocation4 + $0x28] sm:$0xf]
  %v1947 = vld [vmem:[#allocation4 + $0x30] sm:$0xf]
  %v1948 = vld [vmem:[#allocation4 + $0x38] sm:$0xf]
  %v1949 = vld [vmem:[#allocation4 + $0x40] sm:$0xf]
  %v1950 = vld [vmem:[%s1437] sm:$0xf]
  %v1951 = vld [vmem:[%s1437 + $0x8] sm:$0xf]
  %v1952 = vld [vmem:[%s1437 + $0x10] sm:$0xf]
  %v1953 = vld [vmem:[%s1437 + $0x18] sm:$0xf]
  %v1954 = vld [vmem:[%s1437 + $0x28] sm:$0xf]
  %v1955 = vld [vmem:[%s1437 + $0x30] sm:$0xf]
  %v1956 = vld [vmem:[%s1437 + $0x38] sm:$0xf]
  %v1957 = vld [vmem:[%s1437 + $0x40] sm:$0xf]
  %v1958 = vld [vmem:[%s1612] sm:$0xf]
  %v1959 = vld [vmem:[%s1612 + $0x8] sm:$0xf]
  %v1960 = vld [vmem:[%s1612 + $0x10] sm:$0xf]
  %v1961 = vld [vmem:[%s1612 + $0x18] sm:$0xf]
  %v1962 = vld [vmem:[%s1612 + $0x28] sm:$0xf]
  %v1963 = vld [vmem:[%s1612 + $0x30] sm:$0xf]
  %v1964 = vld [vmem:[%s1612 + $0x38] sm:$0xf]
  %v1965 = vld [vmem:[%s1612 + $0x40] sm:$0xf]
  %v1966 = vld [vmem:[%s1932] sm:$0xf]
  %v1967 = vld [vmem:[%s1932 + $0x8] sm:$0xf]
  %v1968 = vld [vmem:[%s1932 + $0x10] sm:$0xf]
  %v1969 = vld [vmem:[%s1932 + $0x18] sm:$0xf]
  %v1970 = vld [vmem:[%s1932 + $0x28] sm:$0xf]
  %v1971 = vld [vmem:[%s1932 + $0x30] sm:$0xf]
  %v1972 = vld [vmem:[%s1932 + $0x38] sm:$0xf]
  %v1973 = vld [vmem:[%s1932 + $0x40] sm:$0xf]
  %s1974 = scalar_lea.vmem %s4, 512
  %v1975 = vld [vmem:[%s1974] sm:$0xff]
  %v1976 = vld [vmem:[%s1974 + $0x8] sm:$0xff]
  %v1977 = vld [vmem:[%s1974 + $0x10] sm:$0xff]
  %v1978 = vld [vmem:[%s1974 + $0x18] sm:$0xff]
  %v1979 = vld [vmem:[%s1974 + $0x20] sm:$0xff]
  %v1980 = vld [vmem:[%s1974 + $0x28] sm:$0xff]
  %v1981 = vld [vmem:[%s1974 + $0x30] sm:$0xff]
  %v1982 = vld [vmem:[%s1974 + $0x38] sm:$0xff]
  %v1983 = vld [vmem:[%s1974 + $0x40] sm:$0xff]
  %v1984 = vld [vmem:[%s1974 + $0x48] sm:$0xff]
  %v1985 = vld [vmem:[%s1974 + $0x50] sm:$0xff]
  %v1986 = vld [vmem:[%s1974 + $0x58] sm:$0xff]
  %v1987 = vld [vmem:[%s1974 + $0x60] sm:$0xff]
  %v1988 = vld [vmem:[%s1974 + $0x68] sm:$0xff]
  %v1989 = vld [vmem:[%s1974 + $0x70] sm:$0xff]
  %v1990 = vld [vmem:[%s1974 + $0x78] sm:$0xff]
  %v1991 = vperm.slane %v1941, 0
  %2000 = vst [vmem:[#allocation1] ss:$2 sm:$0xff] %v1942
  %s2001 = scalar_lea.vmem [#allocation1], 1
  %2002 = vst [vmem:[%s2001] ss:$2 sm:$0xff] %v1943
  %s2003 = scalar_lea.vmem [#allocation1], 16
  %2004 = vst [vmem:[%s2003] ss:$2 sm:$0xff] %v1944
  %s2005 = scalar_lea.vmem [#allocation1], 17
  %2006 = vst [vmem:[%s2005] ss:$2 sm:$0xff] %v1945
  %s2007 = scalar_lea.vmem [#allocation1], 32
  %2008 = vst [vmem:[%s2007] ss:$2 sm:$0xff] %v1946
  %s2009 = scalar_lea.vmem [#allocation1], 33
  %2010 = vst [vmem:[%s2009] ss:$2 sm:$0xff] %v1947
  %s2011 = scalar_lea.vmem [#allocation1], 48
  %2012 = vst [vmem:[%s2011] ss:$2 sm:$0xff] %v1948
  %s2013 = scalar_lea.vmem [#allocation1], 49
  %2014 = vst [vmem:[%s2013] ss:$2 sm:$0xff] %v1949
  %v2015 = vld.sshfl [vmem:[#allocation1] sm:$0xff pattern:$0x75316420]
  %v2016 = vld.sshfl [vmem:[#allocation1 + $0x10] sm:$0xff pattern:$0x75316420]
  %v2017 = vld.sshfl [vmem:[#allocation1 + $0x20] sm:$0xff pattern:$0x75316420]
  %v2018 = vld.sshfl [vmem:[#allocation1 + $0x30] sm:$0xff pattern:$0x75316420]
  %2023 = vmatpush.msra.mxu0 %v1990
  %2024 = vmatpush.msra.mxu0 %v1989
  %2025 = vmatpush.msra.mxu0 %v1988
  %2026 = vmatpush.msra.mxu0 %v1987
  %2027 = vmatpush.msra.mxu0 %v1986
  %2028 = vmatpush.msra.mxu0 %v1985
  %2029 = vmatpush.msra.mxu0 %v1984
  %2030 = vmatpush.msra.mxu0 %v1983
  %2031 = vmatpush.msra.mxu0 %v1982
  %2032 = vmatpush.msra.mxu0 %v1981
  %2033 = vmatpush.msra.mxu0 %v1980
  %2034 = vmatpush.msra.mxu0 %v1979
  %2035 = vmatpush.msra.mxu0 %v1978
  %2036 = vmatpush.msra.mxu0 %v1977
  %2037 = vmatpush.msra.mxu0 %v1976
  %2038 = vmatpush.msra.mxu0 %v1975
  %2039 = vmatmul.f32.gmra.mxu0 %v2015
  %v2040 = vpop.f32.mrf.mxu0
  %v2041 = vadd.f32 %v1991, %v2040
  %2042 = vmatmul.f32.gmra.mxu0 %v2016
  %v2043 = vpop.f32.mrf.mxu0
  %v2044 = vadd.f32 %v1991, %v2043
  %2045 = vmatmul.f32.gmra.mxu0 %v2017
  %v2046 = vpop.f32.mrf.mxu0
  %v2047 = vadd.f32 %v1991, %v2046
  %2048 = vmatmul.f32.gmra.mxu0 %v2018
  %v2049 = vpop.f32.mrf.mxu0
  %v2050 = vadd.f32 %v1991, %v2049
  %2051 = vdwg.mxu0
  %2052 = vst [vmem:[%s6] sm:$0xff] %v2041
  %2053 = vst [vmem:[%s6 + $0x8] sm:$0xff] %v2044
  %2054 = vst [vmem:[%s6 + $0x10] sm:$0xff] %v2047
  %2055 = vst [vmem:[%s6 + $0x18] sm:$0xff] %v2050
  %s2056 = scalar_lea.vmem %s4, 384
  %v2057 = vld [vmem:[%s2056] sm:$0xff]
  %v2058 = vld [vmem:[%s2056 + $0x8] sm:$0xff]
  %v2059 = vld [vmem:[%s2056 + $0x10] sm:$0xff]
  %v2060 = vld [vmem:[%s2056 + $0x18] sm:$0xff]
  %v2061 = vld [vmem:[%s2056 + $0x20] sm:$0xff]
  %v2062 = vld [vmem:[%s2056 + $0x28] sm:$0xff]
  %v2063 = vld [vmem:[%s2056 + $0x30] sm:$0xff]
  %v2064 = vld [vmem:[%s2056 + $0x38] sm:$0xff]
  %v2065 = vld [vmem:[%s2056 + $0x40] sm:$0xff]
  %v2066 = vld [vmem:[%s2056 + $0x48] sm:$0xff]
  %v2067 = vld [vmem:[%s2056 + $0x50] sm:$0xff]
  %v2068 = vld [vmem:[%s2056 + $0x58] sm:$0xff]
  %v2069 = vld [vmem:[%s2056 + $0x60] sm:$0xff]
  %v2070 = vld [vmem:[%s2056 + $0x68] sm:$0xff]
  %v2071 = vld [vmem:[%s2056 + $0x70] sm:$0xff]
  %v2072 = vld [vmem:[%s2056 + $0x78] sm:$0xff]
  %s2073 = scalar_lea.vmem %s4, 640
  %v2074 = vld [vmem:[%s2073] sm:$0xff]
  %v2075 = vld [vmem:[%s2073 + $0x8] sm:$0xff]
  %v2076 = vld [vmem:[%s2073 + $0x10] sm:$0xff]
  %v2077 = vld [vmem:[%s2073 + $0x18] sm:$0xff]
  %v2078 = vld [vmem:[%s2073 + $0x20] sm:$0xff]
  %v2079 = vld [vmem:[%s2073 + $0x28] sm:$0xff]
  %v2080 = vld [vmem:[%s2073 + $0x30] sm:$0xff]
  %v2081 = vld [vmem:[%s2073 + $0x38] sm:$0xff]
  %v2082 = vld [vmem:[%s2073 + $0x40] sm:$0xff]
  %v2083 = vld [vmem:[%s2073 + $0x48] sm:$0xff]
  %v2084 = vld [vmem:[%s2073 + $0x50] sm:$0xff]
  %v2085 = vld [vmem:[%s2073 + $0x58] sm:$0xff]
  %v2086 = vld [vmem:[%s2073 + $0x60] sm:$0xff]
  %v2087 = vld [vmem:[%s2073 + $0x68] sm:$0xff]
  %v2088 = vld [vmem:[%s2073 + $0x70] sm:$0xff]
  %v2089 = vld [vmem:[%s2073 + $0x78] sm:$0xff]
  %2090 = vst [vmem:[#allocation1] ss:$2 sm:$0xff] %v1942
  %s2091 = scalar_lea.vmem [#allocation1], 1
  %2092 = vst [vmem:[%s2091] ss:$2 sm:$0xff] %v1943
  %s2093 = scalar_lea.vmem [#allocation1], 16
  %2094 = vst [vmem:[%s2093] ss:$2 sm:$0xff] %v1944
  %s2095 = scalar_lea.vmem [#allocation1], 17
  %2096 = vst [vmem:[%s2095] ss:$2 sm:$0xff] %v1945
  %s2097 = scalar_lea.vmem [#allocation1], 32
  %2098 = vst [vmem:[%s2097] ss:$2 sm:$0xff] %v1946
  %s2099 = scalar_lea.vmem [#allocation1], 33
  %2100 = vst [vmem:[%s2099] ss:$2 sm:$0xff] %v1947
  %s2101 = scalar_lea.vmem [#allocation1], 48
  %2102 = vst [vmem:[%s2101] ss:$2 sm:$0xff] %v1948
  %s2103 = scalar_lea.vmem [#allocation1], 49
  %2104 = vst [vmem:[%s2103] ss:$2 sm:$0xff] %v1949
  %v2105 = vld.sshfl [vmem:[#allocation1] sm:$0xff pattern:$0x75316420]
  %v2106 = vld.sshfl [vmem:[#allocation1 + $0x10] sm:$0xff pattern:$0x75316420]
  %v2107 = vld.sshfl [vmem:[#allocation1 + $0x20] sm:$0xff pattern:$0x75316420]
  %v2108 = vld.sshfl [vmem:[#allocation1 + $0x30] sm:$0xff pattern:$0x75316420]
  %2113 = vmatpush.msra.mxu0 %v2089
  %2114 = vmatpush.msra.mxu0 %v2088
  %2115 = vmatpush.msra.mxu0 %v2087
  %2116 = vmatpush.msra.mxu0 %v2086
  %2117 = vmatpush.msra.mxu0 %v2085
  %2118 = vmatpush.msra.mxu0 %v2084
  %2119 = vmatpush.msra.mxu0 %v2083
  %2120 = vmatpush.msra.mxu0 %v2082
  %2121 = vmatpush.msra.mxu0 %v2081
  %2122 = vmatpush.msra.mxu0 %v2080
  %2123 = vmatpush.msra.mxu0 %v2079
  %2124 = vmatpush.msra.mxu0 %v2078
  %2125 = vmatpush.msra.mxu0 %v2077
  %2126 = vmatpush.msra.mxu0 %v2076
  %2127 = vmatpush.msra.mxu0 %v2075
  %2128 = vmatpush.msra.mxu0 %v2074
  %2129 = vmatmul.f32.gmra.mxu0 %v2105
  %v2130 = vpop.f32.mrf.mxu0
  %v2131 = vadd.f32 0.0, %v2130
  %2132 = vmatmul.f32.gmra.mxu0 %v2106
  %v2133 = vpop.f32.mrf.mxu0
  %v2134 = vadd.f32 0.0, %v2133
  %2135 = vmatmul.f32.gmra.mxu0 %v2107
  %v2136 = vpop.f32.mrf.mxu0
  %v2137 = vadd.f32 0.0, %v2136
  %2138 = vmatmul.f32.gmra.mxu0 %v2108
  %v2139 = vpop.f32.mrf.mxu0
  %v2140 = vadd.f32 0.0, %v2139
  %2141 = vdwg.mxu0
  %2150 = vst [vmem:[#allocation1] ss:$2 sm:$0xff] %v1950
  %s2151 = scalar_lea.vmem [#allocation1], 1
  %2152 = vst [vmem:[%s2151] ss:$2 sm:$0xff] %v1951
  %s2153 = scalar_lea.vmem [#allocation1], 16
  %2154 = vst [vmem:[%s2153] ss:$2 sm:$0xff] %v1952
  %s2155 = scalar_lea.vmem [#allocation1], 17
  %2156 = vst [vmem:[%s2155] ss:$2 sm:$0xff] %v1953
  %s2157 = scalar_lea.vmem [#allocation1], 32
  %2158 = vst [vmem:[%s2157] ss:$2 sm:$0xff] %v1954
  %s2159 = scalar_lea.vmem [#allocation1], 33
  %2160 = vst [vmem:[%s2159] ss:$2 sm:$0xff] %v1955
  %s2161 = scalar_lea.vmem [#allocation1], 48
  %2162 = vst [vmem:[%s2161] ss:$2 sm:$0xff] %v1956
  %s2163 = scalar_lea.vmem [#allocation1], 49
  %2164 = vst [vmem:[%s2163] ss:$2 sm:$0xff] %v1957
  %v2165 = vld.sshfl [vmem:[#allocation1] sm:$0xff pattern:$0x75316420]
  %v2166 = vld.sshfl [vmem:[#allocation1 + $0x10] sm:$0xff pattern:$0x75316420]
  %v2167 = vld.sshfl [vmem:[#allocation1 + $0x20] sm:$0xff pattern:$0x75316420]
  %v2168 = vld.sshfl [vmem:[#allocation1 + $0x30] sm:$0xff pattern:$0x75316420]
  %2173 = vmatpush.msra.mxu0 %v2072
  %2174 = vmatpush.msra.mxu0 %v2071
  %2175 = vmatpush.msra.mxu0 %v2070
  %2176 = vmatpush.msra.mxu0 %v2069
  %2177 = vmatpush.msra.mxu0 %v2068
  %2178 = vmatpush.msra.mxu0 %v2067
  %2179 = vmatpush.msra.mxu0 %v2066
  %2180 = vmatpush.msra.mxu0 %v2065
  %2181 = vmatpush.msra.mxu0 %v2064
  %2182 = vmatpush.msra.mxu0 %v2063
  %2183 = vmatpush.msra.mxu0 %v2062
  %2184 = vmatpush.msra.mxu0 %v2061
  %2185 = vmatpush.msra.mxu0 %v2060
  %2186 = vmatpush.msra.mxu0 %v2059
  %2187 = vmatpush.msra.mxu0 %v2058
  %2188 = vmatpush.msra.mxu0 %v2057
  %2189 = vmatmul.f32.gmra.mxu0 %v2165
  %v2190 = vpop.f32.mrf.mxu0
  %v2191 = vadd.f32 %v2131, %v2190
  %2192 = vmatmul.f32.gmra.mxu0 %v2166
  %v2193 = vpop.f32.mrf.mxu0
  %v2194 = vadd.f32 %v2134, %v2193
  %2195 = vmatmul.f32.gmra.mxu0 %v2167
  %v2196 = vpop.f32.mrf.mxu0
  %v2197 = vadd.f32 %v2137, %v2196
  %2198 = vmatmul.f32.gmra.mxu0 %v2168
  %v2199 = vpop.f32.mrf.mxu0
  %v2200 = vadd.f32 %v2140, %v2199
  %2201 = vdwg.mxu0
  %v2202 = vadd.f32 %v2191, %v1991
  %v2203 = vadd.f32 %v2194, %v1991
  %v2204 = vadd.f32 %v2197, %v1991
  %v2205 = vadd.f32 %v2200, %v1991
  %s2206 = scalar_lea.vmem %s6, 32
  %2207 = vst [vmem:[%s2206] sm:$0xff] %v2202
  %2208 = vst [vmem:[%s2206 + $0x8] sm:$0xff] %v2203
  %2209 = vst [vmem:[%s2206 + $0x10] sm:$0xff] %v2204
  %2210 = vst [vmem:[%s2206 + $0x18] sm:$0xff] %v2205
  %s2211 = scalar_lea.vmem %s4, 128
  %v2212 = vld [vmem:[%s2211] sm:$0xff]
  %v2213 = vld [vmem:[%s2211 + $0x8] sm:$0xff]
  %v2214 = vld [vmem:[%s2211 + $0x10] sm:$0xff]
  %v2215 = vld [vmem:[%s2211 + $0x18] sm:$0xff]
  %v2216 = vld [vmem:[%s2211 + $0x20] sm:$0xff]
  %v2217 = vld [vmem:[%s2211 + $0x28] sm:$0xff]
  %v2218 = vld [vmem:[%s2211 + $0x30] sm:$0xff]
  %v2219 = vld [vmem:[%s2211 + $0x38] sm:$0xff]
  %v2220 = vld [vmem:[%s2211 + $0x40] sm:$0xff]
  %v2221 = vld [vmem:[%s2211 + $0x48] sm:$0xff]
  %v2222 = vld [vmem:[%s2211 + $0x50] sm:$0xff]
  %v2223 = vld [vmem:[%s2211 + $0x58] sm:$0xff]
  %v2224 = vld [vmem:[%s2211 + $0x60] sm:$0xff]
  %v2225 = vld [vmem:[%s2211 + $0x68] sm:$0xff]
  %v2226 = vld [vmem:[%s2211 + $0x70] sm:$0xff]
  %v2227 = vld [vmem:[%s2211 + $0x78] sm:$0xff]
  %s2228 = scalar_lea.vmem %s4, 896
  %v2229 = vld [vmem:[%s2228] sm:$0xff]
  %v2230 = vld [vmem:[%s2228 + $0x8] sm:$0xff]
  %v2231 = vld [vmem:[%s2228 + $0x10] sm:$0xff]
  %v2232 = vld [vmem:[%s2228 + $0x18] sm:$0xff]
  %v2233 = vld [vmem:[%s2228 + $0x20] sm:$0xff]
  %v2234 = vld [vmem:[%s2228 + $0x28] sm:$0xff]
  %v2235 = vld [vmem:[%s2228 + $0x30] sm:$0xff]
  %v2236 = vld [vmem:[%s2228 + $0x38] sm:$0xff]
  %v2237 = vld [vmem:[%s2228 + $0x40] sm:$0xff]
  %v2238 = vld [vmem:[%s2228 + $0x48] sm:$0xff]
  %v2239 = vld [vmem:[%s2228 + $0x50] sm:$0xff]
  %v2240 = vld [vmem:[%s2228 + $0x58] sm:$0xff]
  %v2241 = vld [vmem:[%s2228 + $0x60] sm:$0xff]
  %v2242 = vld [vmem:[%s2228 + $0x68] sm:$0xff]
  %v2243 = vld [vmem:[%s2228 + $0x70] sm:$0xff]
  %v2244 = vld [vmem:[%s2228 + $0x78] sm:$0xff]
  %2245 = vst [vmem:[#allocation1] ss:$2 sm:$0xff] %v1942
  %s2246 = scalar_lea.vmem [#allocation1], 1
  %2247 = vst [vmem:[%s2246] ss:$2 sm:$0xff] %v1943
  %s2248 = scalar_lea.vmem [#allocation1], 16
  %2249 = vst [vmem:[%s2248] ss:$2 sm:$0xff] %v1944
  %s2250 = scalar_lea.vmem [#allocation1], 17
  %2251 = vst [vmem:[%s2250] ss:$2 sm:$0xff] %v1945
  %s2252 = scalar_lea.vmem [#allocation1], 32
  %2253 = vst [vmem:[%s2252] ss:$2 sm:$0xff] %v1946
  %s2254 = scalar_lea.vmem [#allocation1], 33
  %2255 = vst [vmem:[%s2254] ss:$2 sm:$0xff] %v1947
  %s2256 = scalar_lea.vmem [#allocation1], 48
  %2257 = vst [vmem:[%s2256] ss:$2 sm:$0xff] %v1948
  %s2258 = scalar_lea.vmem [#allocation1], 49
  %2259 = vst [vmem:[%s2258] ss:$2 sm:$0xff] %v1949
  %v2260 = vld.sshfl [vmem:[#allocation1] sm:$0xff pattern:$0x75316420]
  %v2261 = vld.sshfl [vmem:[#allocation1 + $0x10] sm:$0xff pattern:$0x75316420]
  %v2262 = vld.sshfl [vmem:[#allocation1 + $0x20] sm:$0xff pattern:$0x75316420]
  %v2263 = vld.sshfl [vmem:[#allocation1 + $0x30] sm:$0xff pattern:$0x75316420]
  %2268 = vmatpush.msra.mxu0 %v2244
  %2269 = vmatpush.msra.mxu0 %v2243
  %2270 = vmatpush.msra.mxu0 %v2242
  %2271 = vmatpush.msra.mxu0 %v2241
  %2272 = vmatpush.msra.mxu0 %v2240
  %2273 = vmatpush.msra.mxu0 %v2239
  %2274 = vmatpush.msra.mxu0 %v2238
  %2275 = vmatpush.msra.mxu0 %v2237
  %2276 = vmatpush.msra.mxu0 %v2236
  %2277 = vmatpush.msra.mxu0 %v2235
  %2278 = vmatpush.msra.mxu0 %v2234
  %2279 = vmatpush.msra.mxu0 %v2233
  %2280 = vmatpush.msra.mxu0 %v2232
  %2281 = vmatpush.msra.mxu0 %v2231
  %2282 = vmatpush.msra.mxu0 %v2230
  %2283 = vmatpush.msra.mxu0 %v2229
  %2284 = vmatmul.f32.gmra.mxu0 %v2260
  %v2285 = vpop.f32.mrf.mxu0
  %v2286 = vadd.f32 0.0, %v2285
  %2287 = vmatmul.f32.gmra.mxu0 %v2261
  %v2288 = vpop.f32.mrf.mxu0
  %v2289 = vadd.f32 0.0, %v2288
  %2290 = vmatmul.f32.gmra.mxu0 %v2262
  %v2291 = vpop.f32.mrf.mxu0
  %v2292 = vadd.f32 0.0, %v2291
  %2293 = vmatmul.f32.gmra.mxu0 %v2263
  %v2294 = vpop.f32.mrf.mxu0
  %v2295 = vadd.f32 0.0, %v2294
  %2296 = vdwg.mxu0
  %2305 = vst [vmem:[#allocation1] ss:$2 sm:$0xff] %v1958
  %s2306 = scalar_lea.vmem [#allocation1], 1
  %2307 = vst [vmem:[%s2306] ss:$2 sm:$0xff] %v1959
  %s2308 = scalar_lea.vmem [#allocation1], 16
  %2309 = vst [vmem:[%s2308] ss:$2 sm:$0xff] %v1960
  %s2310 = scalar_lea.vmem [#allocation1], 17
  %2311 = vst [vmem:[%s2310] ss:$2 sm:$0xff] %v1961
  %s2312 = scalar_lea.vmem [#allocation1], 32
  %2313 = vst [vmem:[%s2312] ss:$2 sm:$0xff] %v1962
  %s2314 = scalar_lea.vmem [#allocation1], 33
  %2315 = vst [vmem:[%s2314] ss:$2 sm:$0xff] %v1963
  %s2316 = scalar_lea.vmem [#allocation1], 48
  %2317 = vst [vmem:[%s2316] ss:$2 sm:$0xff] %v1964
  %s2318 = scalar_lea.vmem [#allocation1], 49
  %2319 = vst [vmem:[%s2318] ss:$2 sm:$0xff] %v1965
  %v2320 = vld.sshfl [vmem:[#allocation1] sm:$0xff pattern:$0x75316420]
  %v2321 = vld.sshfl [vmem:[#allocation1 + $0x10] sm:$0xff pattern:$0x75316420]
  %v2322 = vld.sshfl [vmem:[#allocation1 + $0x20] sm:$0xff pattern:$0x75316420]
  %v2323 = vld.sshfl [vmem:[#allocation1 + $0x30] sm:$0xff pattern:$0x75316420]
  %2328 = vmatpush.msra.mxu0 %v2227
  %2329 = vmatpush.msra.mxu0 %v2226
  %2330 = vmatpush.msra.mxu0 %v2225
  %2331 = vmatpush.msra.mxu0 %v2224
  %2332 = vmatpush.msra.mxu0 %v2223
  %2333 = vmatpush.msra.mxu0 %v2222
  %2334 = vmatpush.msra.mxu0 %v2221
  %2335 = vmatpush.msra.mxu0 %v2220
  %2336 = vmatpush.msra.mxu0 %v2219
  %2337 = vmatpush.msra.mxu0 %v2218
  %2338 = vmatpush.msra.mxu0 %v2217
  %2339 = vmatpush.msra.mxu0 %v2216
  %2340 = vmatpush.msra.mxu0 %v2215
  %2341 = vmatpush.msra.mxu0 %v2214
  %2342 = vmatpush.msra.mxu0 %v2213
  %2343 = vmatpush.msra.mxu0 %v2212
  %2344 = vmatmul.f32.gmra.mxu0 %v2320
  %v2345 = vpop.f32.mrf.mxu0
  %v2346 = vadd.f32 %v2286, %v2345
  %2347 = vmatmul.f32.gmra.mxu0 %v2321
  %v2348 = vpop.f32.mrf.mxu0
  %v2349 = vadd.f32 %v2289, %v2348
  %2350 = vmatmul.f32.gmra.mxu0 %v2322
  %v2351 = vpop.f32.mrf.mxu0
  %v2352 = vadd.f32 %v2292, %v2351
  %2353 = vmatmul.f32.gmra.mxu0 %v2323
  %v2354 = vpop.f32.mrf.mxu0
  %v2355 = vadd.f32 %v2295, %v2354
  %2356 = vdwg.mxu0
  %v2357 = vadd.f32 %v2346, %v1991
  %v2358 = vadd.f32 %v2349, %v1991
  %v2359 = vadd.f32 %v2352, %v1991
  %v2360 = vadd.f32 %v2355, %v1991
  %s2361 = scalar_lea.vmem %s6, 128
  %2362 = vst [vmem:[%s2361] sm:$0xff] %v2357
  %2363 = vst [vmem:[%s2361 + $0x8] sm:$0xff] %v2358
  %2364 = vst [vmem:[%s2361 + $0x10] sm:$0xff] %v2359
  %2365 = vst [vmem:[%s2361 + $0x18] sm:$0xff] %v2360
  %v2366 = vld [vmem:[%s4] sm:$0xff]
  %v2367 = vld [vmem:[%s4 + $0x8] sm:$0xff]
  %v2368 = vld [vmem:[%s4 + $0x10] sm:$0xff]
  %v2369 = vld [vmem:[%s4 + $0x18] sm:$0xff]
  %v2370 = vld [vmem:[%s4 + $0x20] sm:$0xff]
  %v2371 = vld [vmem:[%s4 + $0x28] sm:$0xff]
  %v2372 = vld [vmem:[%s4 + $0x30] sm:$0xff]
  %v2373 = vld [vmem:[%s4 + $0x38] sm:$0xff]
  %v2374 = vld [vmem:[%s4 + $0x40] sm:$0xff]
  %v2375 = vld [vmem:[%s4 + $0x48] sm:$0xff]
  %v2376 = vld [vmem:[%s4 + $0x50] sm:$0xff]
  %v2377 = vld [vmem:[%s4 + $0x58] sm:$0xff]
  %v2378 = vld [vmem:[%s4 + $0x60] sm:$0xff]
  %v2379 = vld [vmem:[%s4 + $0x68] sm:$0xff]
  %v2380 = vld [vmem:[%s4 + $0x70] sm:$0xff]
  %v2381 = vld [vmem:[%s4 + $0x78] sm:$0xff]
  %s2382 = scalar_lea.vmem %s4, 256
  %v2383 = vld [vmem:[%s2382] sm:$0xff]
  %v2384 = vld [vmem:[%s2382 + $0x8] sm:$0xff]
  %v2385 = vld [vmem:[%s2382 + $0x10] sm:$0xff]
  %v2386 = vld [vmem:[%s2382 + $0x18] sm:$0xff]
  %v2387 = vld [vmem:[%s2382 + $0x20] sm:$0xff]
  %v2388 = vld [vmem:[%s2382 + $0x28] sm:$0xff]
  %v2389 = vld [vmem:[%s2382 + $0x30] sm:$0xff]
  %v2390 = vld [vmem:[%s2382 + $0x38] sm:$0xff]
  %v2391 = vld [vmem:[%s2382 + $0x40] sm:$0xff]
  %v2392 = vld [vmem:[%s2382 + $0x48] sm:$0xff]
  %v2393 = vld [vmem:[%s2382 + $0x50] sm:$0xff]
  %v2394 = vld [vmem:[%s2382 + $0x58] sm:$0xff]
  %v2395 = vld [vmem:[%s2382 + $0x60] sm:$0xff]
  %v2396 = vld [vmem:[%s2382 + $0x68] sm:$0xff]
  %v2397 = vld [vmem:[%s2382 + $0x70] sm:$0xff]
  %v2398 = vld [vmem:[%s2382 + $0x78] sm:$0xff]
  %2399 = vst [vmem:[#allocation1] ss:$2 sm:$0xff] %v1958
  %s2400 = scalar_lea.vmem [#allocation1], 1
  %2401 = vst [vmem:[%s2400] ss:$2 sm:$0xff] %v1959
  %s2402 = scalar_lea.vmem [#allocation1], 16
  %2403 = vst [vmem:[%s2402] ss:$2 sm:$0xff] %v1960
  %s2404 = scalar_lea.vmem [#allocation1], 17
  %2405 = vst [vmem:[%s2404] ss:$2 sm:$0xff] %v1961
  %s2406 = scalar_lea.vmem [#allocation1], 32
  %2407 = vst [vmem:[%s2406] ss:$2 sm:$0xff] %v1962
  %s2408 = scalar_lea.vmem [#allocation1], 33
  %2409 = vst [vmem:[%s2408] ss:$2 sm:$0xff] %v1963
  %s2410 = scalar_lea.vmem [#allocation1], 48
  %2411 = vst [vmem:[%s2410] ss:$2 sm:$0xff] %v1964
  %s2412 = scalar_lea.vmem [#allocation1], 49
  %2413 = vst [vmem:[%s2412] ss:$2 sm:$0xff] %v1965
  %v2414 = vld.sshfl [vmem:[#allocation1] sm:$0xff pattern:$0x75316420]
  %v2415 = vld.sshfl [vmem:[#allocation1 + $0x10] sm:$0xff pattern:$0x75316420]
  %v2416 = vld.sshfl [vmem:[#allocation1 + $0x20] sm:$0xff pattern:$0x75316420]
  %v2417 = vld.sshfl [vmem:[#allocation1 + $0x30] sm:$0xff pattern:$0x75316420]
  %2422 = vmatpush.msra.mxu0 %v2398
  %2423 = vmatpush.msra.mxu0 %v2397
  %2424 = vmatpush.msra.mxu0 %v2396
  %2425 = vmatpush.msra.mxu0 %v2395
  %2426 = vmatpush.msra.mxu0 %v2394
  %2427 = vmatpush.msra.mxu0 %v2393
  %2428 = vmatpush.msra.mxu0 %v2392
  %2429 = vmatpush.msra.mxu0 %v2391
  %2430 = vmatpush.msra.mxu0 %v2390
  %2431 = vmatpush.msra.mxu0 %v2389
  %2432 = vmatpush.msra.mxu0 %v2388
  %2433 = vmatpush.msra.mxu0 %v2387
  %2434 = vmatpush.msra.mxu0 %v2386
  %2435 = vmatpush.msra.mxu0 %v2385
  %2436 = vmatpush.msra.mxu0 %v2384
  %2437 = vmatpush.msra.mxu0 %v2383
  %2438 = vmatmul.f32.gmra.mxu0 %v2414
  %v2439 = vpop.f32.mrf.mxu0
  %v2440 = vadd.f32 0.0, %v2439
  %2441 = vmatmul.f32.gmra.mxu0 %v2415
  %v2442 = vpop.f32.mrf.mxu0
  %v2443 = vadd.f32 0.0, %v2442
  %2444 = vmatmul.f32.gmra.mxu0 %v2416
  %v2445 = vpop.f32.mrf.mxu0
  %v2446 = vadd.f32 0.0, %v2445
  %2447 = vmatmul.f32.gmra.mxu0 %v2417
  %v2448 = vpop.f32.mrf.mxu0
  %v2449 = vadd.f32 0.0, %v2448
  %2450 = vdwg.mxu0
  %2459 = vst [vmem:[#allocation1] ss:$2 sm:$0xff] %v1966
  %s2460 = scalar_lea.vmem [#allocation1], 1
  %2461 = vst [vmem:[%s2460] ss:$2 sm:$0xff] %v1967
  %s2462 = scalar_lea.vmem [#allocation1], 16
  %2463 = vst [vmem:[%s2462] ss:$2 sm:$0xff] %v1968
  %s2464 = scalar_lea.vmem [#allocation1], 17
  %2465 = vst [vmem:[%s2464] ss:$2 sm:$0xff] %v1969
  %s2466 = scalar_lea.vmem [#allocation1], 32
  %2467 = vst [vmem:[%s2466] ss:$2 sm:$0xff] %v1970
  %s2468 = scalar_lea.vmem [#allocation1], 33
  %2469 = vst [vmem:[%s2468] ss:$2 sm:$0xff] %v1971
  %s2470 = scalar_lea.vmem [#allocation1], 48
  %2471 = vst [vmem:[%s2470] ss:$2 sm:$0xff] %v1972
  %s2472 = scalar_lea.vmem [#allocation1], 49
  %2473 = vst [vmem:[%s2472] ss:$2 sm:$0xff] %v1973
  %v2474 = vld.sshfl [vmem:[#allocation1] sm:$0xff pattern:$0x75316420]
  %v2475 = vld.sshfl [vmem:[#allocation1 + $0x10] sm:$0xff pattern:$0x75316420]
  %v2476 = vld.sshfl [vmem:[#allocation1 + $0x20] sm:$0xff pattern:$0x75316420]
  %v2477 = vld.sshfl [vmem:[#allocation1 + $0x30] sm:$0xff pattern:$0x75316420]
  %2482 = vmatpush.msra.mxu0 %v2381
  %2483 = vmatpush.msra.mxu0 %v2380
  %2484 = vmatpush.msra.mxu0 %v2379
  %2485 = vmatpush.msra.mxu0 %v2378
  %2486 = vmatpush.msra.mxu0 %v2377
  %2487 = vmatpush.msra.mxu0 %v2376
  %2488 = vmatpush.msra.mxu0 %v2375
  %2489 = vmatpush.msra.mxu0 %v2374
  %2490 = vmatpush.msra.mxu0 %v2373
  %2491 = vmatpush.msra.mxu0 %v2372
  %2492 = vmatpush.msra.mxu0 %v2371
  %2493 = vmatpush.msra.mxu0 %v2370
  %2494 = vmatpush.msra.mxu0 %v2369
  %2495 = vmatpush.msra.mxu0 %v2368
  %2496 = vmatpush.msra.mxu0 %v2367
  %2497 = vmatpush.msra.mxu0 %v2366
  %2498 = vmatmul.f32.gmra.mxu0 %v2474
  %v2499 = vpop.f32.mrf.mxu0
  %v2500 = vadd.f32 %v2440, %v2499
  %2501 = vmatmul.f32.gmra.mxu0 %v2475
  %v2502 = vpop.f32.mrf.mxu0
  %v2503 = vadd.f32 %v2443, %v2502
  %2504 = vmatmul.f32.gmra.mxu0 %v2476
  %v2505 = vpop.f32.mrf.mxu0
  %v2506 = vadd.f32 %v2446, %v2505
  %2507 = vmatmul.f32.gmra.mxu0 %v2477
  %v2508 = vpop.f32.mrf.mxu0
  %v2509 = vadd.f32 %v2449, %v2508
  %2510 = vdwg.mxu0
  %s2511 = scalar_lea.vmem %s4, 768
  %v2512 = vld [vmem:[%s2511] sm:$0xff]
  %v2513 = vld [vmem:[%s2511 + $0x8] sm:$0xff]
  %v2514 = vld [vmem:[%s2511 + $0x10] sm:$0xff]
  %v2515 = vld [vmem:[%s2511 + $0x18] sm:$0xff]
  %v2516 = vld [vmem:[%s2511 + $0x20] sm:$0xff]
  %v2517 = vld [vmem:[%s2511 + $0x28] sm:$0xff]
  %v2518 = vld [vmem:[%s2511 + $0x30] sm:$0xff]
  %v2519 = vld [vmem:[%s2511 + $0x38] sm:$0xff]
  %v2520 = vld [vmem:[%s2511 + $0x40] sm:$0xff]
  %v2521 = vld [vmem:[%s2511 + $0x48] sm:$0xff]
  %v2522 = vld [vmem:[%s2511 + $0x50] sm:$0xff]
  %v2523 = vld [vmem:[%s2511 + $0x58] sm:$0xff]
  %v2524 = vld [vmem:[%s2511 + $0x60] sm:$0xff]
  %v2525 = vld [vmem:[%s2511 + $0x68] sm:$0xff]
  %v2526 = vld [vmem:[%s2511 + $0x70] sm:$0xff]
  %v2527 = vld [vmem:[%s2511 + $0x78] sm:$0xff]
  %2528 = vst [vmem:[#allocation1] ss:$2 sm:$0xff] %v1950
  %s2529 = scalar_lea.vmem [#allocation1], 1
  %2530 = vst [vmem:[%s2529] ss:$2 sm:$0xff] %v1951
  %s2531 = scalar_lea.vmem [#allocation1], 16
  %2532 = vst [vmem:[%s2531] ss:$2 sm:$0xff] %v1952
  %s2533 = scalar_lea.vmem [#allocation1], 17
  %2534 = vst [vmem:[%s2533] ss:$2 sm:$0xff] %v1953
  %s2535 = scalar_lea.vmem [#allocation1], 32
  %2536 = vst [vmem:[%s2535] ss:$2 sm:$0xff] %v1954
  %s2537 = scalar_lea.vmem [#allocation1], 33
  %2538 = vst [vmem:[%s2537] ss:$2 sm:$0xff] %v1955
  %s2539 = scalar_lea.vmem [#allocation1], 48
  %2540 = vst [vmem:[%s2539] ss:$2 sm:$0xff] %v1956
  %s2541 = scalar_lea.vmem [#allocation1], 49
  %2542 = vst [vmem:[%s2541] ss:$2 sm:$0xff] %v1957
  %v2543 = vld.sshfl [vmem:[#allocation1] sm:$0xff pattern:$0x75316420]
  %v2544 = vld.sshfl [vmem:[#allocation1 + $0x10] sm:$0xff pattern:$0x75316420]
  %v2545 = vld.sshfl [vmem:[#allocation1 + $0x20] sm:$0xff pattern:$0x75316420]
  %v2546 = vld.sshfl [vmem:[#allocation1 + $0x30] sm:$0xff pattern:$0x75316420]
  %2551 = vmatpush.msra.mxu0 %v2527
  %2552 = vmatpush.msra.mxu0 %v2526
  %2553 = vmatpush.msra.mxu0 %v2525
  %2554 = vmatpush.msra.mxu0 %v2524
  %2555 = vmatpush.msra.mxu0 %v2523
  %2556 = vmatpush.msra.mxu0 %v2522
  %2557 = vmatpush.msra.mxu0 %v2521
  %2558 = vmatpush.msra.mxu0 %v2520
  %2559 = vmatpush.msra.mxu0 %v2519
  %2560 = vmatpush.msra.mxu0 %v2518
  %2561 = vmatpush.msra.mxu0 %v2517
  %2562 = vmatpush.msra.mxu0 %v2516
  %2563 = vmatpush.msra.mxu0 %v2515
  %2564 = vmatpush.msra.mxu0 %v2514
  %2565 = vmatpush.msra.mxu0 %v2513
  %2566 = vmatpush.msra.mxu0 %v2512
  %2567 = vmatmul.f32.gmra.mxu0 %v2543
  %v2568 = vpop.f32.mrf.mxu0
  %v2569 = vadd.f32 0.0, %v2568
  %2570 = vmatmul.f32.gmra.mxu0 %v2544
  %v2571 = vpop.f32.mrf.mxu0
  %v2572 = vadd.f32 0.0, %v2571
  %2573 = vmatmul.f32.gmra.mxu0 %v2545
  %v2574 = vpop.f32.mrf.mxu0
  %v2575 = vadd.f32 0.0, %v2574
  %2576 = vmatmul.f32.gmra.mxu0 %v2546
  %v2577 = vpop.f32.mrf.mxu0
  %v2578 = vadd.f32 0.0, %v2577
  %2579 = vdwg.mxu0
  %v2580 = vadd.f32 %v2500, %v2569
  %v2581 = vadd.f32 %v2503, %v2572
  %v2582 = vadd.f32 %v2506, %v2575
  %v2583 = vadd.f32 %v2509, %v2578
  %s2584 = scalar_lea.vmem %s4, 1024
  %v2585 = vld [vmem:[%s2584] sm:$0xff]
  %v2586 = vld [vmem:[%s2584 + $0x8] sm:$0xff]
  %v2587 = vld [vmem:[%s2584 + $0x10] sm:$0xff]
  %v2588 = vld [vmem:[%s2584 + $0x18] sm:$0xff]
  %v2589 = vld [vmem:[%s2584 + $0x20] sm:$0xff]
  %v2590 = vld [vmem:[%s2584 + $0x28] sm:$0xff]
  %v2591 = vld [vmem:[%s2584 + $0x30] sm:$0xff]
  %v2592 = vld [vmem:[%s2584 + $0x38] sm:$0xff]
  %v2593 = vld [vmem:[%s2584 + $0x40] sm:$0xff]
  %v2594 = vld [vmem:[%s2584 + $0x48] sm:$0xff]
  %v2595 = vld [vmem:[%s2584 + $0x50] sm:$0xff]
  %v2596 = vld [vmem:[%s2584 + $0x58] sm:$0xff]
  %v2597 = vld [vmem:[%s2584 + $0x60] sm:$0xff]
  %v2598 = vld [vmem:[%s2584 + $0x68] sm:$0xff]
  %v2599 = vld [vmem:[%s2584 + $0x70] sm:$0xff]
  %v2600 = vld [vmem:[%s2584 + $0x78] sm:$0xff]
  %2601 = vst [vmem:[#allocation1] ss:$2 sm:$0xff] %v1942
  %s2602 = scalar_lea.vmem [#allocation1], 1
  %2603 = vst [vmem:[%s2602] ss:$2 sm:$0xff] %v1943
  %s2604 = scalar_lea.vmem [#allocation1], 16
  %2605 = vst [vmem:[%s2604] ss:$2 sm:$0xff] %v1944
  %s2606 = scalar_lea.vmem [#allocation1], 17
  %2607 = vst [vmem:[%s2606] ss:$2 sm:$0xff] %v1945
  %s2608 = scalar_lea.vmem [#allocation1], 32
  %2609 = vst [vmem:[%s2608] ss:$2 sm:$0xff] %v1946
  %s2610 = scalar_lea.vmem [#allocation1], 33
  %2611 = vst [vmem:[%s2610] ss:$2 sm:$0xff] %v1947
  %s2612 = scalar_lea.vmem [#allocation1], 48
  %2613 = vst [vmem:[%s2612] ss:$2 sm:$0xff] %v1948
  %s2614 = scalar_lea.vmem [#allocation1], 49
  %2615 = vst [vmem:[%s2614] ss:$2 sm:$0xff] %v1949
  %v2616 = vld.sshfl [vmem:[#allocation1] sm:$0xff pattern:$0x75316420]
  %v2617 = vld.sshfl [vmem:[#allocation1 + $0x10] sm:$0xff pattern:$0x75316420]
  %v2618 = vld.sshfl [vmem:[#allocation1 + $0x20] sm:$0xff pattern:$0x75316420]
  %v2619 = vld.sshfl [vmem:[#allocation1 + $0x30] sm:$0xff pattern:$0x75316420]
  %2624 = vmatpush.msra.mxu0 %v2600
  %2625 = vmatpush.msra.mxu0 %v2599
  %2626 = vmatpush.msra.mxu0 %v2598
  %2627 = vmatpush.msra.mxu0 %v2597
  %2628 = vmatpush.msra.mxu0 %v2596
  %2629 = vmatpush.msra.mxu0 %v2595
  %2630 = vmatpush.msra.mxu0 %v2594
  %2631 = vmatpush.msra.mxu0 %v2593
  %2632 = vmatpush.msra.mxu0 %v2592
  %2633 = vmatpush.msra.mxu0 %v2591
  %2634 = vmatpush.msra.mxu0 %v2590
  %2635 = vmatpush.msra.mxu0 %v2589
  %2636 = vmatpush.msra.mxu0 %v2588
  %2637 = vmatpush.msra.mxu0 %v2587
  %2638 = vmatpush.msra.mxu0 %v2586
  %2639 = vmatpush.msra.mxu0 %v2585
  %2640 = vmatmul.f32.gmra.mxu0 %v2616
  %v2641 = vpop.f32.mrf.mxu0
  %v2642 = vadd.f32 0.0, %v2641
  %2643 = vmatmul.f32.gmra.mxu0 %v2617
  %v2644 = vpop.f32.mrf.mxu0
  %v2645 = vadd.f32 0.0, %v2644
  %2646 = vmatmul.f32.gmra.mxu0 %v2618
  %v2647 = vpop.f32.mrf.mxu0
  %v2648 = vadd.f32 0.0, %v2647
  %2649 = vmatmul.f32.gmra.mxu0 %v2619
  %v2650 = vpop.f32.mrf.mxu0
  %v2651 = vadd.f32 0.0, %v2650
  %2652 = vdwg.mxu0
  %v2653 = vadd.f32 %v2580, %v2642
  %v2654 = vadd.f32 %v2581, %v2645
  %v2655 = vadd.f32 %v2582, %v2648
  %v2656 = vadd.f32 %v2583, %v2651
  %v2657 = vadd.f32 %v2653, %v1991
  %v2658 = vadd.f32 %v2654, %v1991
  %v2659 = vadd.f32 %v2655, %v1991
  %v2660 = vadd.f32 %v2656, %v1991
  %s2661 = scalar_lea.vmem %s6, 160
  %2662 = vst [vmem:[%s2661] sm:$0xff] %v2657
  %2663 = vst [vmem:[%s2661 + $0x8] sm:$0xff] %v2658
  %2664 = vst [vmem:[%s2661 + $0x10] sm:$0xff] %v2659
  %2665 = vst [vmem:[%s2661 + $0x18] sm:$0xff] %v2660
  %v2666 = vld [vmem:[%s1437] sm:$0xf]
  %v2667 = vld [vmem:[%s1437 + $0x8] sm:$0xf]
  %v2668 = vld [vmem:[%s1437 + $0x10] sm:$0xf]
  %v2669 = vld [vmem:[%s1437 + $0x18] sm:$0xf]
  %v2670 = vld [vmem:[%s1437 + $0x28] sm:$0xf]
  %v2671 = vld [vmem:[%s1437 + $0x30] sm:$0xf]
  %v2672 = vld [vmem:[%s1437 + $0x38] sm:$0xf]
  %v2673 = vld [vmem:[%s1437 + $0x40] sm:$0xf]
  %v2674 = vld [vmem:[#allocation4 + $0x1] sm:$0xf]
  %v2675 = vld [vmem:[#allocation4 + $0x9] sm:$0xf]
  %v2676 = vld [vmem:[#allocation4 + $0x11] sm:$0xf]
  %v2677 = vld [vmem:[#allocation4 + $0x19] sm:$0xf]
  %v2678 = vld [vmem:[#allocation4 + $0x29] sm:$0xf]
  %v2679 = vld [vmem:[#allocation4 + $0x31] sm:$0xf]
  %v2680 = vld [vmem:[#allocation4 + $0x39] sm:$0xf]
  %v2681 = vld [vmem:[#allocation4 + $0x41] sm:$0xf]
  %v2682 = vld [vmem:[%s1932] sm:$0xf]
  %v2683 = vld [vmem:[%s1932 + $0x8] sm:$0xf]
  %v2684 = vld [vmem:[%s1932 + $0x10] sm:$0xf]
  %v2685 = vld [vmem:[%s1932 + $0x18] sm:$0xf]
  %v2686 = vld [vmem:[%s1932 + $0x28] sm:$0xf]
  %v2687 = vld [vmem:[%s1932 + $0x30] sm:$0xf]
  %v2688 = vld [vmem:[%s1932 + $0x38] sm:$0xf]
  %v2689 = vld [vmem:[%s1932 + $0x40] sm:$0xf]
  %v2690 = vld [vmem:[%s1612 + $0x1] sm:$0xf]
  %v2691 = vld [vmem:[%s1612 + $0x9] sm:$0xf]
  %v2692 = vld [vmem:[%s1612 + $0x11] sm:$0xf]
  %v2693 = vld [vmem:[%s1612 + $0x19] sm:$0xf]
  %v2694 = vld [vmem:[%s1612 + $0x29] sm:$0xf]
  %v2695 = vld [vmem:[%s1612 + $0x31] sm:$0xf]
  %v2696 = vld [vmem:[%s1612 + $0x39] sm:$0xf]
  %v2697 = vld [vmem:[%s1612 + $0x41] sm:$0xf]
  %v2698 = vld [vmem:[%s1974] sm:$0xff]
  %v2699 = vld [vmem:[%s1974 + $0x8] sm:$0xff]
  %v2700 = vld [vmem:[%s1974 + $0x10] sm:$0xff]
  %v2701 = vld [vmem:[%s1974 + $0x18] sm:$0xff]
  %v2702 = vld [vmem:[%s1974 + $0x20] sm:$0xff]
  %v2703 = vld [vmem:[%s1974 + $0x28] sm:$0xff]
  %v2704 = vld [vmem:[%s1974 + $0x30] sm:$0xff]
  %v2705 = vld [vmem:[%s1974 + $0x38] sm:$0xff]
  %v2706 = vld [vmem:[%s1974 + $0x40] sm:$0xff]
  %v2707 = vld [vmem:[%s1974 + $0x48] sm:$0xff]
  %v2708 = vld [vmem:[%s1974 + $0x50] sm:$0xff]
  %v2709 = vld [vmem:[%s1974 + $0x58] sm:$0xff]
  %v2710 = vld [vmem:[%s1974 + $0x60] sm:$0xff]
  %v2711 = vld [vmem:[%s1974 + $0x68] sm:$0xff]
  %v2712 = vld [vmem:[%s1974 + $0x70] sm:$0xff]
  %v2713 = vld [vmem:[%s1974 + $0x78] sm:$0xff]
  %2722 = vst [vmem:[#allocation1] ss:$2 sm:$0xff] %v2666
  %s2723 = scalar_lea.vmem [#allocation1], 1
  %2724 = vst [vmem:[%s2723] ss:$2 sm:$0xff] %v2667
  %s2725 = scalar_lea.vmem [#allocation1], 16
  %2726 = vst [vmem:[%s2725] ss:$2 sm:$0xff] %v2668
  %s2727 = scalar_lea.vmem [#allocation1], 17
  %2728 = vst [vmem:[%s2727] ss:$2 sm:$0xff] %v2669
  %s2729 = scalar_lea.vmem [#allocation1], 32
  %2730 = vst [vmem:[%s2729] ss:$2 sm:$0xff] %v2670
  %s2731 = scalar_lea.vmem [#allocation1], 33
  %2732 = vst [vmem:[%s2731] ss:$2 sm:$0xff] %v2671
  %s2733 = scalar_lea.vmem [#allocation1], 48
  %2734 = vst [vmem:[%s2733] ss:$2 sm:$0xff] %v2672
  %s2735 = scalar_lea.vmem [#allocation1], 49
  %2736 = vst [vmem:[%s2735] ss:$2 sm:$0xff] %v2673
  %v2737 = vld.sshfl [vmem:[#allocation1] sm:$0xff pattern:$0x75316420]
  %v2738 = vld.sshfl [vmem:[#allocation1 + $0x10] sm:$0xff pattern:$0x75316420]
  %v2739 = vld.sshfl [vmem:[#allocation1 + $0x20] sm:$0xff pattern:$0x75316420]
  %v2740 = vld.sshfl [vmem:[#allocation1 + $0x30] sm:$0xff pattern:$0x75316420]
  %2745 = vmatpush.msra.mxu0 %v2713
  %2746 = vmatpush.msra.mxu0 %v2712
  %2747 = vmatpush.msra.mxu0 %v2711
  %2748 = vmatpush.msra.mxu0 %v2710
  %2749 = vmatpush.msra.mxu0 %v2709
  %2750 = vmatpush.msra.mxu0 %v2708
  %2751 = vmatpush.msra.mxu0 %v2707
  %2752 = vmatpush.msra.mxu0 %v2706
  %2753 = vmatpush.msra.mxu0 %v2705
  %2754 = vmatpush.msra.mxu0 %v2704
  %2755 = vmatpush.msra.mxu0 %v2703
  %2756 = vmatpush.msra.mxu0 %v2702
  %2757 = vmatpush.msra.mxu0 %v2701
  %2758 = vmatpush.msra.mxu0 %v2700
  %2759 = vmatpush.msra.mxu0 %v2699
  %2760 = vmatpush.msra.mxu0 %v2698
  %2761 = vmatmul.f32.gmra.mxu0 %v2737
  %v2762 = vpop.f32.mrf.mxu0
  %v2763 = vadd.f32 %v1991, %v2762
  %2764 = vmatmul.f32.gmra.mxu0 %v2738
  %v2765 = vpop.f32.mrf.mxu0
  %v2766 = vadd.f32 %v1991, %v2765
  %2767 = vmatmul.f32.gmra.mxu0 %v2739
  %v2768 = vpop.f32.mrf.mxu0
  %v2769 = vadd.f32 %v1991, %v2768
  %2770 = vmatmul.f32.gmra.mxu0 %v2740
  %v2771 = vpop.f32.mrf.mxu0
  %v2772 = vadd.f32 %v1991, %v2771
  %2773 = vdwg.mxu0
  %s2774 = scalar_lea.vmem %s6, 64
  %2775 = vst [vmem:[%s2774] sm:$0xff] %v2763
  %2776 = vst [vmem:[%s2774 + $0x8] sm:$0xff] %v2766
  %2777 = vst [vmem:[%s2774 + $0x10] sm:$0xff] %v2769
  %2778 = vst [vmem:[%s2774 + $0x18] sm:$0xff] %v2772
  %v2779 = vld [vmem:[%s2056] sm:$0xff]
  %v2780 = vld [vmem:[%s2056 + $0x8] sm:$0xff]
  %v2781 = vld [vmem:[%s2056 + $0x10] sm:$0xff]
  %v2782 = vld [vmem:[%s2056 + $0x18] sm:$0xff]
  %v2783 = vld [vmem:[%s2056 + $0x20] sm:$0xff]
  %v2784 = vld [vmem:[%s2056 + $0x28] sm:$0xff]
  %v2785 = vld [vmem:[%s2056 + $0x30] sm:$0xff]
  %v2786 = vld [vmem:[%s2056 + $0x38] sm:$0xff]
  %v2787 = vld [vmem:[%s2056 + $0x40] sm:$0xff]
  %v2788 = vld [vmem:[%s2056 + $0x48] sm:$0xff]
  %v2789 = vld [vmem:[%s2056 + $0x50] sm:$0xff]
  %v2790 = vld [vmem:[%s2056 + $0x58] sm:$0xff]
  %v2791 = vld [vmem:[%s2056 + $0x60] sm:$0xff]
  %v2792 = vld [vmem:[%s2056 + $0x68] sm:$0xff]
  %v2793 = vld [vmem:[%s2056 + $0x70] sm:$0xff]
  %v2794 = vld [vmem:[%s2056 + $0x78] sm:$0xff]
  %v2795 = vld [vmem:[%s2073] sm:$0xff]
  %v2796 = vld [vmem:[%s2073 + $0x8] sm:$0xff]
  %v2797 = vld [vmem:[%s2073 + $0x10] sm:$0xff]
  %v2798 = vld [vmem:[%s2073 + $0x18] sm:$0xff]
  %v2799 = vld [vmem:[%s2073 + $0x20] sm:$0xff]
  %v2800 = vld [vmem:[%s2073 + $0x28] sm:$0xff]
  %v2801 = vld [vmem:[%s2073 + $0x30] sm:$0xff]
  %v2802 = vld [vmem:[%s2073 + $0x38] sm:$0xff]
  %v2803 = vld [vmem:[%s2073 + $0x40] sm:$0xff]
  %v2804 = vld [vmem:[%s2073 + $0x48] sm:$0xff]
  %v2805 = vld [vmem:[%s2073 + $0x50] sm:$0xff]
  %v2806 = vld [vmem:[%s2073 + $0x58] sm:$0xff]
  %v2807 = vld [vmem:[%s2073 + $0x60] sm:$0xff]
  %v2808 = vld [vmem:[%s2073 + $0x68] sm:$0xff]
  %v2809 = vld [vmem:[%s2073 + $0x70] sm:$0xff]
  %v2810 = vld [vmem:[%s2073 + $0x78] sm:$0xff]
  %2811 = vst [vmem:[#allocation1] ss:$2 sm:$0xff] %v2666
  %s2812 = scalar_lea.vmem [#allocation1], 1
  %2813 = vst [vmem:[%s2812] ss:$2 sm:$0xff] %v2667
  %s2814 = scalar_lea.vmem [#allocation1], 16
  %2815 = vst [vmem:[%s2814] ss:$2 sm:$0xff] %v2668
  %s2816 = scalar_lea.vmem [#allocation1], 17
  %2817 = vst [vmem:[%s2816] ss:$2 sm:$0xff] %v2669
  %s2818 = scalar_lea.vmem [#allocation1], 32
  %2819 = vst [vmem:[%s2818] ss:$2 sm:$0xff] %v2670
  %s2820 = scalar_lea.vmem [#allocation1], 33
  %2821 = vst [vmem:[%s2820] ss:$2 sm:$0xff] %v2671
  %s2822 = scalar_lea.vmem [#allocation1], 48
  %2823 = vst [vmem:[%s2822] ss:$2 sm:$0xff] %v2672
  %s2824 = scalar_lea.vmem [#allocation1], 49
  %2825 = vst [vmem:[%s2824] ss:$2 sm:$0xff] %v2673
  %v2826 = vld.sshfl [vmem:[#allocation1] sm:$0xff pattern:$0x75316420]
  %v2827 = vld.sshfl [vmem:[#allocation1 + $0x10] sm:$0xff pattern:$0x75316420]
  %v2828 = vld.sshfl [vmem:[#allocation1 + $0x20] sm:$0xff pattern:$0x75316420]
  %v2829 = vld.sshfl [vmem:[#allocation1 + $0x30] sm:$0xff pattern:$0x75316420]
  %2834 = vmatpush.msra.mxu0 %v2810
  %2835 = vmatpush.msra.mxu0 %v2809
  %2836 = vmatpush.msra.mxu0 %v2808
  %2837 = vmatpush.msra.mxu0 %v2807
  %2838 = vmatpush.msra.mxu0 %v2806
  %2839 = vmatpush.msra.mxu0 %v2805
  %2840 = vmatpush.msra.mxu0 %v2804
  %2841 = vmatpush.msra.mxu0 %v2803
  %2842 = vmatpush.msra.mxu0 %v2802
  %2843 = vmatpush.msra.mxu0 %v2801
  %2844 = vmatpush.msra.mxu0 %v2800
  %2845 = vmatpush.msra.mxu0 %v2799
  %2846 = vmatpush.msra.mxu0 %v2798
  %2847 = vmatpush.msra.mxu0 %v2797
  %2848 = vmatpush.msra.mxu0 %v2796
  %2849 = vmatpush.msra.mxu0 %v2795
  %2850 = vmatmul.f32.gmra.mxu0 %v2826
  %v2851 = vpop.f32.mrf.mxu0
  %v2852 = vadd.f32 0.0, %v2851
  %2853 = vmatmul.f32.gmra.mxu0 %v2827
  %v2854 = vpop.f32.mrf.mxu0
  %v2855 = vadd.f32 0.0, %v2854
  %2856 = vmatmul.f32.gmra.mxu0 %v2828
  %v2857 = vpop.f32.mrf.mxu0
  %v2858 = vadd.f32 0.0, %v2857
  %2859 = vmatmul.f32.gmra.mxu0 %v2829
  %v2860 = vpop.f32.mrf.mxu0
  %v2861 = vadd.f32 0.0, %v2860
  %2862 = vdwg.mxu0
  %2871 = vst [vmem:[#allocation1] ss:$2 sm:$0xff] %v2674
  %s2872 = scalar_lea.vmem [#allocation1], 1
  %2873 = vst [vmem:[%s2872] ss:$2 sm:$0xff] %v2675
  %s2874 = scalar_lea.vmem [#allocation1], 16
  %2875 = vst [vmem:[%s2874] ss:$2 sm:$0xff] %v2676
  %s2876 = scalar_lea.vmem [#allocation1], 17
  %2877 = vst [vmem:[%s2876] ss:$2 sm:$0xff] %v2677
  %s2878 = scalar_lea.vmem [#allocation1], 32
  %2879 = vst [vmem:[%s2878] ss:$2 sm:$0xff] %v2678
  %s2880 = scalar_lea.vmem [#allocation1], 33
  %2881 = vst [vmem:[%s2880] ss:$2 sm:$0xff] %v2679
  %s2882 = scalar_lea.vmem [#allocation1], 48
  %2883 = vst [vmem:[%s2882] ss:$2 sm:$0xff] %v2680
  %s2884 = scalar_lea.vmem [#allocation1], 49
  %2885 = vst [vmem:[%s2884] ss:$2 sm:$0xff] %v2681
  %v2886 = vld.sshfl [vmem:[#allocation1] sm:$0xff pattern:$0x75316420]
  %v2887 = vld.sshfl [vmem:[#allocation1 + $0x10] sm:$0xff pattern:$0x75316420]
  %v2888 = vld.sshfl [vmem:[#allocation1 + $0x20] sm:$0xff pattern:$0x75316420]
  %v2889 = vld.sshfl [vmem:[#allocation1 + $0x30] sm:$0xff pattern:$0x75316420]
  %2894 = vmatpush.msra.mxu0 %v2794
  %2895 = vmatpush.msra.mxu0 %v2793
  %2896 = vmatpush.msra.mxu0 %v2792
  %2897 = vmatpush.msra.mxu0 %v2791
  %2898 = vmatpush.msra.mxu0 %v2790
  %2899 = vmatpush.msra.mxu0 %v2789
  %2900 = vmatpush.msra.mxu0 %v2788
  %2901 = vmatpush.msra.mxu0 %v2787
  %2902 = vmatpush.msra.mxu0 %v2786
  %2903 = vmatpush.msra.mxu0 %v2785
  %2904 = vmatpush.msra.mxu0 %v2784
  %2905 = vmatpush.msra.mxu0 %v2783
  %2906 = vmatpush.msra.mxu0 %v2782
  %2907 = vmatpush.msra.mxu0 %v2781
  %2908 = vmatpush.msra.mxu0 %v2780
  %2909 = vmatpush.msra.mxu0 %v2779
  %2910 = vmatmul.f32.gmra.mxu0 %v2886
  %v2911 = vpop.f32.mrf.mxu0
  %v2912 = vadd.f32 %v2852, %v2911
  %2913 = vmatmul.f32.gmra.mxu0 %v2887
  %v2914 = vpop.f32.mrf.mxu0
  %v2915 = vadd.f32 %v2855, %v2914
  %2916 = vmatmul.f32.gmra.mxu0 %v2888
  %v2917 = vpop.f32.mrf.mxu0
  %v2918 = vadd.f32 %v2858, %v2917
  %2919 = vmatmul.f32.gmra.mxu0 %v2889
  %v2920 = vpop.f32.mrf.mxu0
  %v2921 = vadd.f32 %v2861, %v2920
  %2922 = vdwg.mxu0
  %v2923 = vadd.f32 %v2912, %v1991
  %v2924 = vadd.f32 %v2915, %v1991
  %v2925 = vadd.f32 %v2918, %v1991
  %v2926 = vadd.f32 %v2921, %v1991
  %s2927 = scalar_lea.vmem %s6, 96
  %2928 = vst [vmem:[%s2927] sm:$0xff] %v2923
  %2929 = vst [vmem:[%s2927 + $0x8] sm:$0xff] %v2924
  %2930 = vst [vmem:[%s2927 + $0x10] sm:$0xff] %v2925
  %2931 = vst [vmem:[%s2927 + $0x18] sm:$0xff] %v2926
  %v2932 = vld [vmem:[%s2211] sm:$0xff]
  %v2933 = vld [vmem:[%s2211 + $0x8] sm:$0xff]
  %v2934 = vld [vmem:[%s2211 + $0x10] sm:$0xff]
  %v2935 = vld [vmem:[%s2211 + $0x18] sm:$0xff]
  %v2936 = vld [vmem:[%s2211 + $0x20] sm:$0xff]
  %v2937 = vld [vmem:[%s2211 + $0x28] sm:$0xff]
  %v2938 = vld [vmem:[%s2211 + $0x30] sm:$0xff]
  %v2939 = vld [vmem:[%s2211 + $0x38] sm:$0xff]
  %v2940 = vld [vmem:[%s2211 + $0x40] sm:$0xff]
  %v2941 = vld [vmem:[%s2211 + $0x48] sm:$0xff]
  %v2942 = vld [vmem:[%s2211 + $0x50] sm:$0xff]
  %v2943 = vld [vmem:[%s2211 + $0x58] sm:$0xff]
  %v2944 = vld [vmem:[%s2211 + $0x60] sm:$0xff]
  %v2945 = vld [vmem:[%s2211 + $0x68] sm:$0xff]
  %v2946 = vld [vmem:[%s2211 + $0x70] sm:$0xff]
  %v2947 = vld [vmem:[%s2211 + $0x78] sm:$0xff]
  %v2948 = vld [vmem:[%s2228] sm:$0xff]
  %v2949 = vld [vmem:[%s2228 + $0x8] sm:$0xff]
  %v2950 = vld [vmem:[%s2228 + $0x10] sm:$0xff]
  %v2951 = vld [vmem:[%s2228 + $0x18] sm:$0xff]
  %v2952 = vld [vmem:[%s2228 + $0x20] sm:$0xff]
  %v2953 = vld [vmem:[%s2228 + $0x28] sm:$0xff]
  %v2954 = vld [vmem:[%s2228 + $0x30] sm:$0xff]
  %v2955 = vld [vmem:[%s2228 + $0x38] sm:$0xff]
  %v2956 = vld [vmem:[%s2228 + $0x40] sm:$0xff]
  %v2957 = vld [vmem:[%s2228 + $0x48] sm:$0xff]
  %v2958 = vld [vmem:[%s2228 + $0x50] sm:$0xff]
  %v2959 = vld [vmem:[%s2228 + $0x58] sm:$0xff]
  %v2960 = vld [vmem:[%s2228 + $0x60] sm:$0xff]
  %v2961 = vld [vmem:[%s2228 + $0x68] sm:$0xff]
  %v2962 = vld [vmem:[%s2228 + $0x70] sm:$0xff]
  %v2963 = vld [vmem:[%s2228 + $0x78] sm:$0xff]
  %2964 = vst [vmem:[#allocation1] ss:$2 sm:$0xff] %v2666
  %s2965 = scalar_lea.vmem [#allocation1], 1
  %2966 = vst [vmem:[%s2965] ss:$2 sm:$0xff] %v2667
  %s2967 = scalar_lea.vmem [#allocation1], 16
  %2968 = vst [vmem:[%s2967] ss:$2 sm:$0xff] %v2668
  %s2969 = scalar_lea.vmem [#allocation1], 17
  %2970 = vst [vmem:[%s2969] ss:$2 sm:$0xff] %v2669
  %s2971 = scalar_lea.vmem [#allocation1], 32
  %2972 = vst [vmem:[%s2971] ss:$2 sm:$0xff] %v2670
  %s2973 = scalar_lea.vmem [#allocation1], 33
  %2974 = vst [vmem:[%s2973] ss:$2 sm:$0xff] %v2671
  %s2975 = scalar_lea.vmem [#allocation1], 48
  %2976 = vst [vmem:[%s2975] ss:$2 sm:$0xff] %v2672
  %s2977 = scalar_lea.vmem [#allocation1], 49
  %2978 = vst [vmem:[%s2977] ss:$2 sm:$0xff] %v2673
  %v2979 = vld.sshfl [vmem:[#allocation1] sm:$0xff pattern:$0x75316420]
  %v2980 = vld.sshfl [vmem:[#allocation1 + $0x10] sm:$0xff pattern:$0x75316420]
  %v2981 = vld.sshfl [vmem:[#allocation1 + $0x20] sm:$0xff pattern:$0x75316420]
  %v2982 = vld.sshfl [vmem:[#allocation1 + $0x30] sm:$0xff pattern:$0x75316420]
  %2987 = vmatpush.msra.mxu0 %v2963
  %2988 = vmatpush.msra.mxu0 %v2962
  %2989 = vmatpush.msra.mxu0 %v2961
  %2990 = vmatpush.msra.mxu0 %v2960
  %2991 = vmatpush.msra.mxu0 %v2959
  %2992 = vmatpush.msra.mxu0 %v2958
  %2993 = vmatpush.msra.mxu0 %v2957
  %2994 = vmatpush.msra.mxu0 %v2956
  %2995 = vmatpush.msra.mxu0 %v2955
  %2996 = vmatpush.msra.mxu0 %v2954
  %2997 = vmatpush.msra.mxu0 %v2953
  %2998 = vmatpush.msra.mxu0 %v2952
  %2999 = vmatpush.msra.mxu0 %v2951
  %3000 = vmatpush.msra.mxu0 %v2950
  %3001 = vmatpush.msra.mxu0 %v2949
  %3002 = vmatpush.msra.mxu0 %v2948
  %3003 = vmatmul.f32.gmra.mxu0 %v2979
  %v3004 = vpop.f32.mrf.mxu0
  %v3005 = vadd.f32 0.0, %v3004
  %3006 = vmatmul.f32.gmra.mxu0 %v2980
  %v3007 = vpop.f32.mrf.mxu0
  %v3008 = vadd.f32 0.0, %v3007
  %3009 = vmatmul.f32.gmra.mxu0 %v2981
  %v3010 = vpop.f32.mrf.mxu0
  %v3011 = vadd.f32 0.0, %v3010
  %3012 = vmatmul.f32.gmra.mxu0 %v2982
  %v3013 = vpop.f32.mrf.mxu0
  %v3014 = vadd.f32 0.0, %v3013
  %3015 = vdwg.mxu0
  %3024 = vst [vmem:[#allocation1] ss:$2 sm:$0xff] %v2682
  %s3025 = scalar_lea.vmem [#allocation1], 1
  %3026 = vst [vmem:[%s3025] ss:$2 sm:$0xff] %v2683
  %s3027 = scalar_lea.vmem [#allocation1], 16
  %3028 = vst [vmem:[%s3027] ss:$2 sm:$0xff] %v2684
  %s3029 = scalar_lea.vmem [#allocation1], 17
  %3030 = vst [vmem:[%s3029] ss:$2 sm:$0xff] %v2685
  %s3031 = scalar_lea.vmem [#allocation1], 32
  %3032 = vst [vmem:[%s3031] ss:$2 sm:$0xff] %v2686
  %s3033 = scalar_lea.vmem [#allocation1], 33
  %3034 = vst [vmem:[%s3033] ss:$2 sm:$0xff] %v2687
  %s3035 = scalar_lea.vmem [#allocation1], 48
  %3036 = vst [vmem:[%s3035] ss:$2 sm:$0xff] %v2688
  %s3037 = scalar_lea.vmem [#allocation1], 49
  %3038 = vst [vmem:[%s3037] ss:$2 sm:$0xff] %v2689
  %v3039 = vld.sshfl [vmem:[#allocation1] sm:$0xff pattern:$0x75316420]
  %v3040 = vld.sshfl [vmem:[#allocation1 + $0x10] sm:$0xff pattern:$0x75316420]
  %v3041 = vld.sshfl [vmem:[#allocation1 + $0x20] sm:$0xff pattern:$0x75316420]
  %v3042 = vld.sshfl [vmem:[#allocation1 + $0x30] sm:$0xff pattern:$0x75316420]
  %3047 = vmatpush.msra.mxu0 %v2947
  %3048 = vmatpush.msra.mxu0 %v2946
  %3049 = vmatpush.msra.mxu0 %v2945
  %3050 = vmatpush.msra.mxu0 %v2944
  %3051 = vmatpush.msra.mxu0 %v2943
  %3052 = vmatpush.msra.mxu0 %v2942
  %3053 = vmatpush.msra.mxu0 %v2941
  %3054 = vmatpush.msra.mxu0 %v2940
  %3055 = vmatpush.msra.mxu0 %v2939
  %3056 = vmatpush.msra.mxu0 %v2938
  %3057 = vmatpush.msra.mxu0 %v2937
  %3058 = vmatpush.msra.mxu0 %v2936
  %3059 = vmatpush.msra.mxu0 %v2935
  %3060 = vmatpush.msra.mxu0 %v2934
  %3061 = vmatpush.msra.mxu0 %v2933
  %3062 = vmatpush.msra.mxu0 %v2932
  %3063 = vmatmul.f32.gmra.mxu0 %v3039
  %v3064 = vpop.f32.mrf.mxu0
  %v3065 = vadd.f32 %v3005, %v3064
  %3066 = vmatmul.f32.gmra.mxu0 %v3040
  %v3067 = vpop.f32.mrf.mxu0
  %v3068 = vadd.f32 %v3008, %v3067
  %3069 = vmatmul.f32.gmra.mxu0 %v3041
  %v3070 = vpop.f32.mrf.mxu0
  %v3071 = vadd.f32 %v3011, %v3070
  %3072 = vmatmul.f32.gmra.mxu0 %v3042
  %v3073 = vpop.f32.mrf.mxu0
  %v3074 = vadd.f32 %v3014, %v3073
  %3075 = vdwg.mxu0
  %v3076 = vadd.f32 %v3065, %v1991
  %v3077 = vadd.f32 %v3068, %v1991
  %v3078 = vadd.f32 %v3071, %v1991
  %v3079 = vadd.f32 %v3074, %v1991
  %s3080 = scalar_lea.vmem %s6, 192
  %3081 = vst [vmem:[%s3080] sm:$0xff] %v3076
  %3082 = vst [vmem:[%s3080 + $0x8] sm:$0xff] %v3077
  %3083 = vst [vmem:[%s3080 + $0x10] sm:$0xff] %v3078
  %3084 = vst [vmem:[%s3080 + $0x18] sm:$0xff] %v3079
  %v3085 = vld [vmem:[%s4] sm:$0xff]
  %v3086 = vld [vmem:[%s4 + $0x8] sm:$0xff]
  %v3087 = vld [vmem:[%s4 + $0x10] sm:$0xff]
  %v3088 = vld [vmem:[%s4 + $0x18] sm:$0xff]
  %v3089 = vld [vmem:[%s4 + $0x20] sm:$0xff]
  %v3090 = vld [vmem:[%s4 + $0x28] sm:$0xff]
  %v3091 = vld [vmem:[%s4 + $0x30] sm:$0xff]
  %v3092 = vld [vmem:[%s4 + $0x38] sm:$0xff]
  %v3093 = vld [vmem:[%s4 + $0x40] sm:$0xff]
  %v3094 = vld [vmem:[%s4 + $0x48] sm:$0xff]
  %v3095 = vld [vmem:[%s4 + $0x50] sm:$0xff]
  %v3096 = vld [vmem:[%s4 + $0x58] sm:$0xff]
  %v3097 = vld [vmem:[%s4 + $0x60] sm:$0xff]
  %v3098 = vld [vmem:[%s4 + $0x68] sm:$0xff]
  %v3099 = vld [vmem:[%s4 + $0x70] sm:$0xff]
  %v3100 = vld [vmem:[%s4 + $0x78] sm:$0xff]
  %v3101 = vld [vmem:[%s2382] sm:$0xff]
  %v3102 = vld [vmem:[%s2382 + $0x8] sm:$0xff]
  %v3103 = vld [vmem:[%s2382 + $0x10] sm:$0xff]
  %v3104 = vld [vmem:[%s2382 + $0x18] sm:$0xff]
  %v3105 = vld [vmem:[%s2382 + $0x20] sm:$0xff]
  %v3106 = vld [vmem:[%s2382 + $0x28] sm:$0xff]
  %v3107 = vld [vmem:[%s2382 + $0x30] sm:$0xff]
  %v3108 = vld [vmem:[%s2382 + $0x38] sm:$0xff]
  %v3109 = vld [vmem:[%s2382 + $0x40] sm:$0xff]
  %v3110 = vld [vmem:[%s2382 + $0x48] sm:$0xff]
  %v3111 = vld [vmem:[%s2382 + $0x50] sm:$0xff]
  %v3112 = vld [vmem:[%s2382 + $0x58] sm:$0xff]
  %v3113 = vld [vmem:[%s2382 + $0x60] sm:$0xff]
  %v3114 = vld [vmem:[%s2382 + $0x68] sm:$0xff]
  %v3115 = vld [vmem:[%s2382 + $0x70] sm:$0xff]
  %v3116 = vld [vmem:[%s2382 + $0x78] sm:$0xff]
  %3117 = vst [vmem:[#allocation1] ss:$2 sm:$0xff] %v2682
  %s3118 = scalar_lea.vmem [#allocation1], 1
  %3119 = vst [vmem:[%s3118] ss:$2 sm:$0xff] %v2683
  %s3120 = scalar_lea.vmem [#allocation1], 16
  %3121 = vst [vmem:[%s3120] ss:$2 sm:$0xff] %v2684
  %s3122 = scalar_lea.vmem [#allocation1], 17
  %3123 = vst [vmem:[%s3122] ss:$2 sm:$0xff] %v2685
  %s3124 = scalar_lea.vmem [#allocation1], 32
  %3125 = vst [vmem:[%s3124] ss:$2 sm:$0xff] %v2686
  %s3126 = scalar_lea.vmem [#allocation1], 33
  %3127 = vst [vmem:[%s3126] ss:$2 sm:$0xff] %v2687
  %s3128 = scalar_lea.vmem [#allocation1], 48
  %3129 = vst [vmem:[%s3128] ss:$2 sm:$0xff] %v2688
  %s3130 = scalar_lea.vmem [#allocation1], 49
  %3131 = vst [vmem:[%s3130] ss:$2 sm:$0xff] %v2689
  %v3132 = vld.sshfl [vmem:[#allocation1] sm:$0xff pattern:$0x75316420]
  %v3133 = vld.sshfl [vmem:[#allocation1 + $0x10] sm:$0xff pattern:$0x75316420]
  %v3134 = vld.sshfl [vmem:[#allocation1 + $0x20] sm:$0xff pattern:$0x75316420]
  %v3135 = vld.sshfl [vmem:[#allocation1 + $0x30] sm:$0xff pattern:$0x75316420]
  %3140 = vmatpush.msra.mxu0 %v3116
  %3141 = vmatpush.msra.mxu0 %v3115
  %3142 = vmatpush.msra.mxu0 %v3114
  %3143 = vmatpush.msra.mxu0 %v3113
  %3144 = vmatpush.msra.mxu0 %v3112
  %3145 = vmatpush.msra.mxu0 %v3111
  %3146 = vmatpush.msra.mxu0 %v3110
  %3147 = vmatpush.msra.mxu0 %v3109
  %3148 = vmatpush.msra.mxu0 %v3108
  %3149 = vmatpush.msra.mxu0 %v3107
  %3150 = vmatpush.msra.mxu0 %v3106
  %3151 = vmatpush.msra.mxu0 %v3105
  %3152 = vmatpush.msra.mxu0 %v3104
  %3153 = vmatpush.msra.mxu0 %v3103
  %3154 = vmatpush.msra.mxu0 %v3102
  %3155 = vmatpush.msra.mxu0 %v3101
  %3156 = vmatmul.f32.gmra.mxu0 %v3132
  %v3157 = vpop.f32.mrf.mxu0
  %v3158 = vadd.f32 0.0, %v3157
  %3159 = vmatmul.f32.gmra.mxu0 %v3133
  %v3160 = vpop.f32.mrf.mxu0
  %v3161 = vadd.f32 0.0, %v3160
  %3162 = vmatmul.f32.gmra.mxu0 %v3134
  %v3163 = vpop.f32.mrf.mxu0
  %v3164 = vadd.f32 0.0, %v3163
  %3165 = vmatmul.f32.gmra.mxu0 %v3135
  %v3166 = vpop.f32.mrf.mxu0
  %v3167 = vadd.f32 0.0, %v3166
  %3168 = vdwg.mxu0
  %3177 = vst [vmem:[#allocation1] ss:$2 sm:$0xff] %v2690
  %s3178 = scalar_lea.vmem [#allocation1], 1
  %3179 = vst [vmem:[%s3178] ss:$2 sm:$0xff] %v2691
  %s3180 = scalar_lea.vmem [#allocation1], 16
  %3181 = vst [vmem:[%s3180] ss:$2 sm:$0xff] %v2692
  %s3182 = scalar_lea.vmem [#allocation1], 17
  %3183 = vst [vmem:[%s3182] ss:$2 sm:$0xff] %v2693
  %s3184 = scalar_lea.vmem [#allocation1], 32
  %3185 = vst [vmem:[%s3184] ss:$2 sm:$0xff] %v2694
  %s3186 = scalar_lea.vmem [#allocation1], 33
  %3187 = vst [vmem:[%s3186] ss:$2 sm:$0xff] %v2695
  %s3188 = scalar_lea.vmem [#allocation1], 48
  %3189 = vst [vmem:[%s3188] ss:$2 sm:$0xff] %v2696
  %s3190 = scalar_lea.vmem [#allocation1], 49
  %3191 = vst [vmem:[%s3190] ss:$2 sm:$0xff] %v2697
  %v3192 = vld.sshfl [vmem:[#allocation1] sm:$0xff pattern:$0x75316420]
  %v3193 = vld.sshfl [vmem:[#allocation1 + $0x10] sm:$0xff pattern:$0x75316420]
  %v3194 = vld.sshfl [vmem:[#allocation1 + $0x20] sm:$0xff pattern:$0x75316420]
  %v3195 = vld.sshfl [vmem:[#allocation1 + $0x30] sm:$0xff pattern:$0x75316420]
  %3200 = vmatpush.msra.mxu0 %v3100
  %3201 = vmatpush.msra.mxu0 %v3099
  %3202 = vmatpush.msra.mxu0 %v3098
  %3203 = vmatpush.msra.mxu0 %v3097
  %3204 = vmatpush.msra.mxu0 %v3096
  %3205 = vmatpush.msra.mxu0 %v3095
  %3206 = vmatpush.msra.mxu0 %v3094
  %3207 = vmatpush.msra.mxu0 %v3093
  %3208 = vmatpush.msra.mxu0 %v3092
  %3209 = vmatpush.msra.mxu0 %v3091
  %3210 = vmatpush.msra.mxu0 %v3090
  %3211 = vmatpush.msra.mxu0 %v3089
  %3212 = vmatpush.msra.mxu0 %v3088
  %3213 = vmatpush.msra.mxu0 %v3087
  %3214 = vmatpush.msra.mxu0 %v3086
  %3215 = vmatpush.msra.mxu0 %v3085
  %3216 = vmatmul.f32.gmra.mxu0 %v3192
  %v3217 = vpop.f32.mrf.mxu0
  %v3218 = vadd.f32 %v3158, %v3217
  %3219 = vmatmul.f32.gmra.mxu0 %v3193
  %v3220 = vpop.f32.mrf.mxu0
  %v3221 = vadd.f32 %v3161, %v3220
  %3222 = vmatmul.f32.gmra.mxu0 %v3194
  %v3223 = vpop.f32.mrf.mxu0
  %v3224 = vadd.f32 %v3164, %v3223
  %3225 = vmatmul.f32.gmra.mxu0 %v3195
  %v3226 = vpop.f32.mrf.mxu0
  %v3227 = vadd.f32 %v3167, %v3226
  %3228 = vdwg.mxu0
  %v3229 = vld [vmem:[%s2511] sm:$0xff]
  %v3230 = vld [vmem:[%s2511 + $0x8] sm:$0xff]
  %v3231 = vld [vmem:[%s2511 + $0x10] sm:$0xff]
  %v3232 = vld [vmem:[%s2511 + $0x18] sm:$0xff]
  %v3233 = vld [vmem:[%s2511 + $0x20] sm:$0xff]
  %v3234 = vld [vmem:[%s2511 + $0x28] sm:$0xff]
  %v3235 = vld [vmem:[%s2511 + $0x30] sm:$0xff]
  %v3236 = vld [vmem:[%s2511 + $0x38] sm:$0xff]
  %v3237 = vld [vmem:[%s2511 + $0x40] sm:$0xff]
  %v3238 = vld [vmem:[%s2511 + $0x48] sm:$0xff]
  %v3239 = vld [vmem:[%s2511 + $0x50] sm:$0xff]
  %v3240 = vld [vmem:[%s2511 + $0x58] sm:$0xff]
  %v3241 = vld [vmem:[%s2511 + $0x60] sm:$0xff]
  %v3242 = vld [vmem:[%s2511 + $0x68] sm:$0xff]
  %v3243 = vld [vmem:[%s2511 + $0x70] sm:$0xff]
  %v3244 = vld [vmem:[%s2511 + $0x78] sm:$0xff]
  %3245 = vst [vmem:[#allocation1] ss:$2 sm:$0xff] %v2674
  %s3246 = scalar_lea.vmem [#allocation1], 1
  %3247 = vst [vmem:[%s3246] ss:$2 sm:$0xff] %v2675
  %s3248 = scalar_lea.vmem [#allocation1], 16
  %3249 = vst [vmem:[%s3248] ss:$2 sm:$0xff] %v2676
  %s3250 = scalar_lea.vmem [#allocation1], 17
  %3251 = vst [vmem:[%s3250] ss:$2 sm:$0xff] %v2677
  %s3252 = scalar_lea.vmem [#allocation1], 32
  %3253 = vst [vmem:[%s3252] ss:$2 sm:$0xff] %v2678
  %s3254 = scalar_lea.vmem [#allocation1], 33
  %3255 = vst [vmem:[%s3254] ss:$2 sm:$0xff] %v2679
  %s3256 = scalar_lea.vmem [#allocation1], 48
  %3257 = vst [vmem:[%s3256] ss:$2 sm:$0xff] %v2680
  %s3258 = scalar_lea.vmem [#allocation1], 49
  %3259 = vst [vmem:[%s3258] ss:$2 sm:$0xff] %v2681
  %v3260 = vld.sshfl [vmem:[#allocation1] sm:$0xff pattern:$0x75316420]
  %v3261 = vld.sshfl [vmem:[#allocation1 + $0x10] sm:$0xff pattern:$0x75316420]
  %v3262 = vld.sshfl [vmem:[#allocation1 + $0x20] sm:$0xff pattern:$0x75316420]
  %v3263 = vld.sshfl [vmem:[#allocation1 + $0x30] sm:$0xff pattern:$0x75316420]
  %3268 = vmatpush.msra.mxu0 %v3244
  %3269 = vmatpush.msra.mxu0 %v3243
  %3270 = vmatpush.msra.mxu0 %v3242
  %3271 = vmatpush.msra.mxu0 %v3241
  %3272 = vmatpush.msra.mxu0 %v3240
  %3273 = vmatpush.msra.mxu0 %v3239
  %3274 = vmatpush.msra.mxu0 %v3238
  %3275 = vmatpush.msra.mxu0 %v3237
  %3276 = vmatpush.msra.mxu0 %v3236
  %3277 = vmatpush.msra.mxu0 %v3235
  %3278 = vmatpush.msra.mxu0 %v3234
  %3279 = vmatpush.msra.mxu0 %v3233
  %3280 = vmatpush.msra.mxu0 %v3232
  %3281 = vmatpush.msra.mxu0 %v3231
  %3282 = vmatpush.msra.mxu0 %v3230
  %3283 = vmatpush.msra.mxu0 %v3229
  %3284 = vmatmul.f32.gmra.mxu0 %v3260
  %v3285 = vpop.f32.mrf.mxu0
  %v3286 = vadd.f32 0.0, %v3285
  %3287 = vmatmul.f32.gmra.mxu0 %v3261
  %v3288 = vpop.f32.mrf.mxu0
  %v3289 = vadd.f32 0.0, %v3288
  %3290 = vmatmul.f32.gmra.mxu0 %v3262
  %v3291 = vpop.f32.mrf.mxu0
  %v3292 = vadd.f32 0.0, %v3291
  %3293 = vmatmul.f32.gmra.mxu0 %v3263
  %v3294 = vpop.f32.mrf.mxu0
  %v3295 = vadd.f32 0.0, %v3294
  %3296 = vdwg.mxu0
  %v3297 = vadd.f32 %v3218, %v3286
  %v3298 = vadd.f32 %v3221, %v3289
  %v3299 = vadd.f32 %v3224, %v3292
  %v3300 = vadd.f32 %v3227, %v3295
  %v3301 = vld [vmem:[%s2584] sm:$0xff]
  %v3302 = vld [vmem:[%s2584 + $0x8] sm:$0xff]
  %v3303 = vld [vmem:[%s2584 + $0x10] sm:$0xff]
  %v3304 = vld [vmem:[%s2584 + $0x18] sm:$0xff]
  %v3305 = vld [vmem:[%s2584 + $0x20] sm:$0xff]
  %v3306 = vld [vmem:[%s2584 + $0x28] sm:$0xff]
  %v3307 = vld [vmem:[%s2584 + $0x30] sm:$0xff]
  %v3308 = vld [vmem:[%s2584 + $0x38] sm:$0xff]
  %v3309 = vld [vmem:[%s2584 + $0x40] sm:$0xff]
  %v3310 = vld [vmem:[%s2584 + $0x48] sm:$0xff]
  %v3311 = vld [vmem:[%s2584 + $0x50] sm:$0xff]
  %v3312 = vld [vmem:[%s2584 + $0x58] sm:$0xff]
  %v3313 = vld [vmem:[%s2584 + $0x60] sm:$0xff]
  %v3314 = vld [vmem:[%s2584 + $0x68] sm:$0xff]
  %v3315 = vld [vmem:[%s2584 + $0x70] sm:$0xff]
  %v3316 = vld [vmem:[%s2584 + $0x78] sm:$0xff]
  %3317 = vst [vmem:[#allocation1] ss:$2 sm:$0xff] %v2666
  %s3318 = scalar_lea.vmem [#allocation1], 1
  %3319 = vst [vmem:[%s3318] ss:$2 sm:$0xff] %v2667
  %s3320 = scalar_lea.vmem [#allocation1], 16
  %3321 = vst [vmem:[%s3320] ss:$2 sm:$0xff] %v2668
  %s3322 = scalar_lea.vmem [#allocation1], 17
  %3323 = vst [vmem:[%s3322] ss:$2 sm:$0xff] %v2669
  %s3324 = scalar_lea.vmem [#allocation1], 32
  %3325 = vst [vmem:[%s3324] ss:$2 sm:$0xff] %v2670
  %s3326 = scalar_lea.vmem [#allocation1], 33
  %3327 = vst [vmem:[%s3326] ss:$2 sm:$0xff] %v2671
  %s3328 = scalar_lea.vmem [#allocation1], 48
  %3329 = vst [vmem:[%s3328] ss:$2 sm:$0xff] %v2672
  %s3330 = scalar_lea.vmem [#allocation1], 49
  %3331 = vst [vmem:[%s3330] ss:$2 sm:$0xff] %v2673
  %v3332 = vld.sshfl [vmem:[#allocation1] sm:$0xff pattern:$0x75316420]
  %v3333 = vld.sshfl [vmem:[#allocation1 + $0x10] sm:$0xff pattern:$0x75316420]
  %v3334 = vld.sshfl [vmem:[#allocation1 + $0x20] sm:$0xff pattern:$0x75316420]
  %v3335 = vld.sshfl [vmem:[#allocation1 + $0x30] sm:$0xff pattern:$0x75316420]
  %3340 = vmatpush.msra.mxu0 %v3316
  %3341 = vmatpush.msra.mxu0 %v3315
  %3342 = vmatpush.msra.mxu0 %v3314
  %3343 = vmatpush.msra.mxu0 %v3313
  %3344 = vmatpush.msra.mxu0 %v3312
  %3345 = vmatpush.msra.mxu0 %v3311
  %3346 = vmatpush.msra.mxu0 %v3310
  %3347 = vmatpush.msra.mxu0 %v3309
  %3348 = vmatpush.msra.mxu0 %v3308
  %3349 = vmatpush.msra.mxu0 %v3307
  %3350 = vmatpush.msra.mxu0 %v3306
  %3351 = vmatpush.msra.mxu0 %v3305
  %3352 = vmatpush.msra.mxu0 %v3304
  %3353 = vmatpush.msra.mxu0 %v3303
  %3354 = vmatpush.msra.mxu0 %v3302
  %3355 = vmatpush.msra.mxu0 %v3301
  %3356 = vmatmul.f32.gmra.mxu0 %v3332
  %v3357 = vpop.f32.mrf.mxu0
  %v3358 = vadd.f32 0.0, %v3357
  %3359 = vmatmul.f32.gmra.mxu0 %v3333
  %v3360 = vpop.f32.mrf.mxu0
  %v3361 = vadd.f32 0.0, %v3360
  %3362 = vmatmul.f32.gmra.mxu0 %v3334
  %v3363 = vpop.f32.mrf.mxu0
  %v3364 = vadd.f32 0.0, %v3363
  %3365 = vmatmul.f32.gmra.mxu0 %v3335
  %v3366 = vpop.f32.mrf.mxu0
  %v3367 = vadd.f32 0.0, %v3366
  %3368 = vdwg.mxu0
  %v3369 = vadd.f32 %v3297, %v3358
  %v3370 = vadd.f32 %v3298, %v3361
  %v3371 = vadd.f32 %v3299, %v3364
  %v3372 = vadd.f32 %v3300, %v3367
  %v3373 = vadd.f32 %v3369, %v1991
  %v3374 = vadd.f32 %v3370, %v1991
  %v3375 = vadd.f32 %v3371, %v1991
  %v3376 = vadd.f32 %v3372, %v1991
  %s3377 = scalar_lea.vmem %s6, 224
  %3378 = vst [vmem:[%s3377] sm:$0xff] %v3373
  %3379 = vst [vmem:[%s3377 + $0x8] sm:$0xff] %v3374
  %3380 = vst [vmem:[%s3377 + $0x10] sm:$0xff] %v3375
  %3381 = vst [vmem:[%s3377 + $0x18] sm:$0xff] %v3376
  %v3382 = vld [vmem:[%s1612] sm:$0xf]
  %v3383 = vld [vmem:[%s1612 + $0x8] sm:$0xf]
  %v3384 = vld [vmem:[%s1612 + $0x10] sm:$0xf]
  %v3385 = vld [vmem:[%s1612 + $0x18] sm:$0xf]
  %v3386 = vld [vmem:[%s1612 + $0x28] sm:$0xf]
  %v3387 = vld [vmem:[%s1612 + $0x30] sm:$0xf]
  %v3388 = vld [vmem:[%s1612 + $0x38] sm:$0xf]
  %v3389 = vld [vmem:[%s1612 + $0x40] sm:$0xf]
  %v3390 = vld [vmem:[%s1932] sm:$0xf]
  %v3391 = vld [vmem:[%s1932 + $0x8] sm:$0xf]
  %v3392 = vld [vmem:[%s1932 + $0x10] sm:$0xf]
  %v3393 = vld [vmem:[%s1932 + $0x18] sm:$0xf]
  %v3394 = vld [vmem:[%s1932 + $0x28] sm:$0xf]
  %v3395 = vld [vmem:[%s1932 + $0x30] sm:$0xf]
  %v3396 = vld [vmem:[%s1932 + $0x38] sm:$0xf]
  %v3397 = vld [vmem:[%s1932 + $0x40] sm:$0xf]
  %s3398 = scalar_lea.vmem [#allocation4], 8
  %v3399 = vld [vmem:[%s3398] sm:$0xf]
  %v3400 = vld [vmem:[%s3398 + $0x8] sm:$0xf]
  %v3401 = vld [vmem:[%s3398 + $0x10] sm:$0xf]
  %v3402 = vld [vmem:[%s3398 + $0x18] sm:$0xf]
  %v3403 = vld [vmem:[%s3398 + $0x28] sm:$0xf]
  %v3404 = vld [vmem:[%s3398 + $0x30] sm:$0xf]
  %v3405 = vld [vmem:[%s3398 + $0x38] sm:$0xf]
  %v3406 = vld [vmem:[%s3398 + $0x40] sm:$0xf]
  %s3407 = scalar_lea.vmem [#allocation4], 88
  %v3408 = vld [vmem:[%s3407] sm:$0xf]
  %v3409 = vld [vmem:[%s3407 + $0x8] sm:$0xf]
  %v3410 = vld [vmem:[%s3407 + $0x10] sm:$0xf]
  %v3411 = vld [vmem:[%s3407 + $0x18] sm:$0xf]
  %v3412 = vld [vmem:[%s3407 + $0x28] sm:$0xf]
  %v3413 = vld [vmem:[%s3407 + $0x30] sm:$0xf]
  %v3414 = vld [vmem:[%s3407 + $0x38] sm:$0xf]
  %v3415 = vld [vmem:[%s3407 + $0x40] sm:$0xf]
  %v3416 = vld [vmem:[%s1974] sm:$0xff]
  %v3417 = vld [vmem:[%s1974 + $0x8] sm:$0xff]
  %v3418 = vld [vmem:[%s1974 + $0x10] sm:$0xff]
  %v3419 = vld [vmem:[%s1974 + $0x18] sm:$0xff]
  %v3420 = vld [vmem:[%s1974 + $0x20] sm:$0xff]
  %v3421 = vld [vmem:[%s1974 + $0x28] sm:$0xff]
  %v3422 = vld [vmem:[%s1974 + $0x30] sm:$0xff]
  %v3423 = vld [vmem:[%s1974 + $0x38] sm:$0xff]
  %v3424 = vld [vmem:[%s1974 + $0x40] sm:$0xff]
  %v3425 = vld [vmem:[%s1974 + $0x48] sm:$0xff]
  %v3426 = vld [vmem:[%s1974 + $0x50] sm:$0xff]
  %v3427 = vld [vmem:[%s1974 + $0x58] sm:$0xff]
  %v3428 = vld [vmem:[%s1974 + $0x60] sm:$0xff]
  %v3429 = vld [vmem:[%s1974 + $0x68] sm:$0xff]
  %v3430 = vld [vmem:[%s1974 + $0x70] sm:$0xff]
  %v3431 = vld [vmem:[%s1974 + $0x78] sm:$0xff]
  %3440 = vst [vmem:[#allocation1] ss:$2 sm:$0xff] %v3382
  %s3441 = scalar_lea.vmem [#allocation1], 1
  %3442 = vst [vmem:[%s3441] ss:$2 sm:$0xff] %v3383
  %s3443 = scalar_lea.vmem [#allocation1], 16
  %3444 = vst [vmem:[%s3443] ss:$2 sm:$0xff] %v3384
  %s3445 = scalar_lea.vmem [#allocation1], 17
  %3446 = vst [vmem:[%s3445] ss:$2 sm:$0xff] %v3385
  %s3447 = scalar_lea.vmem [#allocation1], 32
  %3448 = vst [vmem:[%s3447] ss:$2 sm:$0xff] %v3386
  %s3449 = scalar_lea.vmem [#allocation1], 33
  %3450 = vst [vmem:[%s3449] ss:$2 sm:$0xff] %v3387
  %s3451 = scalar_lea.vmem [#allocation1], 48
  %3452 = vst [vmem:[%s3451] ss:$2 sm:$0xff] %v3388
  %s3453 = scalar_lea.vmem [#allocation1], 49
  %3454 = vst [vmem:[%s3453] ss:$2 sm:$0xff] %v3389
  %v3455 = vld.sshfl [vmem:[#allocation1] sm:$0xff pattern:$0x75316420]
  %v3456 = vld.sshfl [vmem:[#allocation1 + $0x10] sm:$0xff pattern:$0x75316420]
  %v3457 = vld.sshfl [vmem:[#allocation1 + $0x20] sm:$0xff pattern:$0x75316420]
  %v3458 = vld.sshfl [vmem:[#allocation1 + $0x30] sm:$0xff pattern:$0x75316420]
  %3463 = vmatpush.msra.mxu0 %v3431
  %3464 = vmatpush.msra.mxu0 %v3430
  %3465 = vmatpush.msra.mxu0 %v3429
  %3466 = vmatpush.msra.mxu0 %v3428
  %3467 = vmatpush.msra.mxu0 %v3427
  %3468 = vmatpush.msra.mxu0 %v3426
  %3469 = vmatpush.msra.mxu0 %v3425
  %3470 = vmatpush.msra.mxu0 %v3424
  %3471 = vmatpush.msra.mxu0 %v3423
  %3472 = vmatpush.msra.mxu0 %v3422
  %3473 = vmatpush.msra.mxu0 %v3421
  %3474 = vmatpush.msra.mxu0 %v3420
  %3475 = vmatpush.msra.mxu0 %v3419
  %3476 = vmatpush.msra.mxu0 %v3418
  %3477 = vmatpush.msra.mxu0 %v3417
  %3478 = vmatpush.msra.mxu0 %v3416
  %3479 = vmatmul.f32.gmra.mxu0 %v3455
  %v3480 = vpop.f32.mrf.mxu0
  %v3481 = vadd.f32 %v1991, %v3480
  %3482 = vmatmul.f32.gmra.mxu0 %v3456
  %v3483 = vpop.f32.mrf.mxu0
  %v3484 = vadd.f32 %v1991, %v3483
  %3485 = vmatmul.f32.gmra.mxu0 %v3457
  %v3486 = vpop.f32.mrf.mxu0
  %v3487 = vadd.f32 %v1991, %v3486
  %3488 = vmatmul.f32.gmra.mxu0 %v3458
  %v3489 = vpop.f32.mrf.mxu0
  %v3490 = vadd.f32 %v1991, %v3489
  %3491 = vdwg.mxu0
  %s3492 = scalar_lea.vmem %s6, 256
  %3493 = vst [vmem:[%s3492] sm:$0xff] %v3481
  %3494 = vst [vmem:[%s3492 + $0x8] sm:$0xff] %v3484
  %3495 = vst [vmem:[%s3492 + $0x10] sm:$0xff] %v3487
  %3496 = vst [vmem:[%s3492 + $0x18] sm:$0xff] %v3490
  %v3497 = vld [vmem:[%s2056] sm:$0xff]
  %v3498 = vld [vmem:[%s2056 + $0x8] sm:$0xff]
  %v3499 = vld [vmem:[%s2056 + $0x10] sm:$0xff]
  %v3500 = vld [vmem:[%s2056 + $0x18] sm:$0xff]
  %v3501 = vld [vmem:[%s2056 + $0x20] sm:$0xff]
  %v3502 = vld [vmem:[%s2056 + $0x28] sm:$0xff]
  %v3503 = vld [vmem:[%s2056 + $0x30] sm:$0xff]
  %v3504 = vld [vmem:[%s2056 + $0x38] sm:$0xff]
  %v3505 = vld [vmem:[%s2056 + $0x40] sm:$0xff]
  %v3506 = vld [vmem:[%s2056 + $0x48] sm:$0xff]
  %v3507 = vld [vmem:[%s2056 + $0x50] sm:$0xff]
  %v3508 = vld [vmem:[%s2056 + $0x58] sm:$0xff]
  %v3509 = vld [vmem:[%s2056 + $0x60] sm:$0xff]
  %v3510 = vld [vmem:[%s2056 + $0x68] sm:$0xff]
  %v3511 = vld [vmem:[%s2056 + $0x70] sm:$0xff]
  %v3512 = vld [vmem:[%s2056 + $0x78] sm:$0xff]
  %v3513 = vld [vmem:[%s2073] sm:$0xff]
  %v3514 = vld [vmem:[%s2073 + $0x8] sm:$0xff]
  %v3515 = vld [vmem:[%s2073 + $0x10] sm:$0xff]
  %v3516 = vld [vmem:[%s2073 + $0x18] sm:$0xff]
  %v3517 = vld [vmem:[%s2073 + $0x20] sm:$0xff]
  %v3518 = vld [vmem:[%s2073 + $0x28] sm:$0xff]
  %v3519 = vld [vmem:[%s2073 + $0x30] sm:$0xff]
  %v3520 = vld [vmem:[%s2073 + $0x38] sm:$0xff]
  %v3521 = vld [vmem:[%s2073 + $0x40] sm:$0xff]
  %v3522 = vld [vmem:[%s2073 + $0x48] sm:$0xff]
  %v3523 = vld [vmem:[%s2073 + $0x50] sm:$0xff]
  %v3524 = vld [vmem:[%s2073 + $0x58] sm:$0xff]
  %v3525 = vld [vmem:[%s2073 + $0x60] sm:$0xff]
  %v3526 = vld [vmem:[%s2073 + $0x68] sm:$0xff]
  %v3527 = vld [vmem:[%s2073 + $0x70] sm:$0xff]
  %v3528 = vld [vmem:[%s2073 + $0x78] sm:$0xff]
  %3529 = vst [vmem:[#allocation1] ss:$2 sm:$0xff] %v3382
  %s3530 = scalar_lea.vmem [#allocation1], 1
  %3531 = vst [vmem:[%s3530] ss:$2 sm:$0xff] %v3383
  %s3532 = scalar_lea.vmem [#allocation1], 16
  %3533 = vst [vmem:[%s3532] ss:$2 sm:$0xff] %v3384
  %s3534 = scalar_lea.vmem [#allocation1], 17
  %3535 = vst [vmem:[%s3534] ss:$2 sm:$0xff] %v3385
  %s3536 = scalar_lea.vmem [#allocation1], 32
  %3537 = vst [vmem:[%s3536] ss:$2 sm:$0xff] %v3386
  %s3538 = scalar_lea.vmem [#allocation1], 33
  %3539 = vst [vmem:[%s3538] ss:$2 sm:$0xff] %v3387
  %s3540 = scalar_lea.vmem [#allocation1], 48
  %3541 = vst [vmem:[%s3540] ss:$2 sm:$0xff] %v3388
  %s3542 = scalar_lea.vmem [#allocation1], 49
  %3543 = vst [vmem:[%s3542] ss:$2 sm:$0xff] %v3389
  %v3544 = vld.sshfl [vmem:[#allocation1] sm:$0xff pattern:$0x75316420]
  %v3545 = vld.sshfl [vmem:[#allocation1 + $0x10] sm:$0xff pattern:$0x75316420]
  %v3546 = vld.sshfl [vmem:[#allocation1 + $0x20] sm:$0xff pattern:$0x75316420]
  %v3547 = vld.sshfl [vmem:[#allocation1 + $0x30] sm:$0xff pattern:$0x75316420]
  %3552 = vmatpush.msra.mxu0 %v3528
  %3553 = vmatpush.msra.mxu0 %v3527
  %3554 = vmatpush.msra.mxu0 %v3526
  %3555 = vmatpush.msra.mxu0 %v3525
  %3556 = vmatpush.msra.mxu0 %v3524
  %3557 = vmatpush.msra.mxu0 %v3523
  %3558 = vmatpush.msra.mxu0 %v3522
  %3559 = vmatpush.msra.mxu0 %v3521
  %3560 = vmatpush.msra.mxu0 %v3520
  %3561 = vmatpush.msra.mxu0 %v3519
  %3562 = vmatpush.msra.mxu0 %v3518
  %3563 = vmatpush.msra.mxu0 %v3517
  %3564 = vmatpush.msra.mxu0 %v3516
  %3565 = vmatpush.msra.mxu0 %v3515
  %3566 = vmatpush.msra.mxu0 %v3514
  %3567 = vmatpush.msra.mxu0 %v3513
  %3568 = vmatmul.f32.gmra.mxu0 %v3544
  %v3569 = vpop.f32.mrf.mxu0
  %v3570 = vadd.f32 0.0, %v3569
  %3571 = vmatmul.f32.gmra.mxu0 %v3545
  %v3572 = vpop.f32.mrf.mxu0
  %v3573 = vadd.f32 0.0, %v3572
  %3574 = vmatmul.f32.gmra.mxu0 %v3546
  %v3575 = vpop.f32.mrf.mxu0
  %v3576 = vadd.f32 0.0, %v3575
  %3577 = vmatmul.f32.gmra.mxu0 %v3547
  %v3578 = vpop.f32.mrf.mxu0
  %v3579 = vadd.f32 0.0, %v3578
  %3580 = vdwg.mxu0
  %3589 = vst [vmem:[#allocation1] ss:$2 sm:$0xff] %v3390
  %s3590 = scalar_lea.vmem [#allocation1], 1
  %3591 = vst [vmem:[%s3590] ss:$2 sm:$0xff] %v3391
  %s3592 = scalar_lea.vmem [#allocation1], 16
  %3593 = vst [vmem:[%s3592] ss:$2 sm:$0xff] %v3392
  %s3594 = scalar_lea.vmem [#allocation1], 17
  %3595 = vst [vmem:[%s3594] ss:$2 sm:$0xff] %v3393
  %s3596 = scalar_lea.vmem [#allocation1], 32
  %3597 = vst [vmem:[%s3596] ss:$2 sm:$0xff] %v3394
  %s3598 = scalar_lea.vmem [#allocation1], 33
  %3599 = vst [vmem:[%s3598] ss:$2 sm:$0xff] %v3395
  %s3600 = scalar_lea.vmem [#allocation1], 48
  %3601 = vst [vmem:[%s3600] ss:$2 sm:$0xff] %v3396
  %s3602 = scalar_lea.vmem [#allocation1], 49
  %3603 = vst [vmem:[%s3602] ss:$2 sm:$0xff] %v3397
  %v3604 = vld.sshfl [vmem:[#allocation1] sm:$0xff pattern:$0x75316420]
  %v3605 = vld.sshfl [vmem:[#allocation1 + $0x10] sm:$0xff pattern:$0x75316420]
  %v3606 = vld.sshfl [vmem:[#allocation1 + $0x20] sm:$0xff pattern:$0x75316420]
  %v3607 = vld.sshfl [vmem:[#allocation1 + $0x30] sm:$0xff pattern:$0x75316420]
  %3612 = vmatpush.msra.mxu0 %v3512
  %3613 = vmatpush.msra.mxu0 %v3511
  %3614 = vmatpush.msra.mxu0 %v3510
  %3615 = vmatpush.msra.mxu0 %v3509
  %3616 = vmatpush.msra.mxu0 %v3508
  %3617 = vmatpush.msra.mxu0 %v3507
  %3618 = vmatpush.msra.mxu0 %v3506
  %3619 = vmatpush.msra.mxu0 %v3505
  %3620 = vmatpush.msra.mxu0 %v3504
  %3621 = vmatpush.msra.mxu0 %v3503
  %3622 = vmatpush.msra.mxu0 %v3502
  %3623 = vmatpush.msra.mxu0 %v3501
  %3624 = vmatpush.msra.mxu0 %v3500
  %3625 = vmatpush.msra.mxu0 %v3499
  %3626 = vmatpush.msra.mxu0 %v3498
  %3627 = vmatpush.msra.mxu0 %v3497
  %3628 = vmatmul.f32.gmra.mxu0 %v3604
  %v3629 = vpop.f32.mrf.mxu0
  %v3630 = vadd.f32 %v3570, %v3629
  %3631 = vmatmul.f32.gmra.mxu0 %v3605
  %v3632 = vpop.f32.mrf.mxu0
  %v3633 = vadd.f32 %v3573, %v3632
  %3634 = vmatmul.f32.gmra.mxu0 %v3606
  %v3635 = vpop.f32.mrf.mxu0
  %v3636 = vadd.f32 %v3576, %v3635
  %3637 = vmatmul.f32.gmra.mxu0 %v3607
  %v3638 = vpop.f32.mrf.mxu0
  %v3639 = vadd.f32 %v3579, %v3638
  %3640 = vdwg.mxu0
  %v3641 = vadd.f32 %v3630, %v1991
  %v3642 = vadd.f32 %v3633, %v1991
  %v3643 = vadd.f32 %v3636, %v1991
  %v3644 = vadd.f32 %v3639, %v1991
  %s3645 = scalar_lea.vmem %s6, 288
  %3646 = vst [vmem:[%s3645] sm:$0xff] %v3641
  %3647 = vst [vmem:[%s3645 + $0x8] sm:$0xff] %v3642
  %3648 = vst [vmem:[%s3645 + $0x10] sm:$0xff] %v3643
  %3649 = vst [vmem:[%s3645 + $0x18] sm:$0xff] %v3644
  %v3650 = vld [vmem:[%s2211] sm:$0xff]
  %v3651 = vld [vmem:[%s2211 + $0x8] sm:$0xff]
  %v3652 = vld [vmem:[%s2211 + $0x10] sm:$0xff]
  %v3653 = vld [vmem:[%s2211 + $0x18] sm:$0xff]
  %v3654 = vld [vmem:[%s2211 + $0x20] sm:$0xff]
  %v3655 = vld [vmem:[%s2211 + $0x28] sm:$0xff]
  %v3656 = vld [vmem:[%s2211 + $0x30] sm:$0xff]
  %v3657 = vld [vmem:[%s2211 + $0x38] sm:$0xff]
  %v3658 = vld [vmem:[%s2211 + $0x40] sm:$0xff]
  %v3659 = vld [vmem:[%s2211 + $0x48] sm:$0xff]
  %v3660 = vld [vmem:[%s2211 + $0x50] sm:$0xff]
  %v3661 = vld [vmem:[%s2211 + $0x58] sm:$0xff]
  %v3662 = vld [vmem:[%s2211 + $0x60] sm:$0xff]
  %v3663 = vld [vmem:[%s2211 + $0x68] sm:$0xff]
  %v3664 = vld [vmem:[%s2211 + $0x70] sm:$0xff]
  %v3665 = vld [vmem:[%s2211 + $0x78] sm:$0xff]
  %v3666 = vld [vmem:[%s2228] sm:$0xff]
  %v3667 = vld [vmem:[%s2228 + $0x8] sm:$0xff]
  %v3668 = vld [vmem:[%s2228 + $0x10] sm:$0xff]
  %v3669 = vld [vmem:[%s2228 + $0x18] sm:$0xff]
  %v3670 = vld [vmem:[%s2228 + $0x20] sm:$0xff]
  %v3671 = vld [vmem:[%s2228 + $0x28] sm:$0xff]
  %v3672 = vld [vmem:[%s2228 + $0x30] sm:$0xff]
  %v3673 = vld [vmem:[%s2228 + $0x38] sm:$0xff]
  %v3674 = vld [vmem:[%s2228 + $0x40] sm:$0xff]
  %v3675 = vld [vmem:[%s2228 + $0x48] sm:$0xff]
  %v3676 = vld [vmem:[%s2228 + $0x50] sm:$0xff]
  %v3677 = vld [vmem:[%s2228 + $0x58] sm:$0xff]
  %v3678 = vld [vmem:[%s2228 + $0x60] sm:$0xff]
  %v3679 = vld [vmem:[%s2228 + $0x68] sm:$0xff]
  %v3680 = vld [vmem:[%s2228 + $0x70] sm:$0xff]
  %v3681 = vld [vmem:[%s2228 + $0x78] sm:$0xff]
  %3682 = vst [vmem:[#allocation1] ss:$2 sm:$0xff] %v3382
  %s3683 = scalar_lea.vmem [#allocation1], 1
  %3684 = vst [vmem:[%s3683] ss:$2 sm:$0xff] %v3383
  %s3685 = scalar_lea.vmem [#allocation1], 16
  %3686 = vst [vmem:[%s3685] ss:$2 sm:$0xff] %v3384
  %s3687 = scalar_lea.vmem [#allocation1], 17
  %3688 = vst [vmem:[%s3687] ss:$2 sm:$0xff] %v3385
  %s3689 = scalar_lea.vmem [#allocation1], 32
  %3690 = vst [vmem:[%s3689] ss:$2 sm:$0xff] %v3386
  %s3691 = scalar_lea.vmem [#allocation1], 33
  %3692 = vst [vmem:[%s3691] ss:$2 sm:$0xff] %v3387
  %s3693 = scalar_lea.vmem [#allocation1], 48
  %3694 = vst [vmem:[%s3693] ss:$2 sm:$0xff] %v3388
  %s3695 = scalar_lea.vmem [#allocation1], 49
  %3696 = vst [vmem:[%s3695] ss:$2 sm:$0xff] %v3389
  %v3697 = vld.sshfl [vmem:[#allocation1] sm:$0xff pattern:$0x75316420]
  %v3698 = vld.sshfl [vmem:[#allocation1 + $0x10] sm:$0xff pattern:$0x75316420]
  %v3699 = vld.sshfl [vmem:[#allocation1 + $0x20] sm:$0xff pattern:$0x75316420]
  %v3700 = vld.sshfl [vmem:[#allocation1 + $0x30] sm:$0xff pattern:$0x75316420]
  %3705 = vmatpush.msra.mxu0 %v3681
  %3706 = vmatpush.msra.mxu0 %v3680
  %3707 = vmatpush.msra.mxu0 %v3679
  %3708 = vmatpush.msra.mxu0 %v3678
  %3709 = vmatpush.msra.mxu0 %v3677
  %3710 = vmatpush.msra.mxu0 %v3676
  %3711 = vmatpush.msra.mxu0 %v3675
  %3712 = vmatpush.msra.mxu0 %v3674
  %3713 = vmatpush.msra.mxu0 %v3673
  %3714 = vmatpush.msra.mxu0 %v3672
  %3715 = vmatpush.msra.mxu0 %v3671
  %3716 = vmatpush.msra.mxu0 %v3670
  %3717 = vmatpush.msra.mxu0 %v3669
  %3718 = vmatpush.msra.mxu0 %v3668
  %3719 = vmatpush.msra.mxu0 %v3667
  %3720 = vmatpush.msra.mxu0 %v3666
  %3721 = vmatmul.f32.gmra.mxu0 %v3697
  %v3722 = vpop.f32.mrf.mxu0
  %v3723 = vadd.f32 0.0, %v3722
  %3724 = vmatmul.f32.gmra.mxu0 %v3698
  %v3725 = vpop.f32.mrf.mxu0
  %v3726 = vadd.f32 0.0, %v3725
  %3727 = vmatmul.f32.gmra.mxu0 %v3699
  %v3728 = vpop.f32.mrf.mxu0
  %v3729 = vadd.f32 0.0, %v3728
  %3730 = vmatmul.f32.gmra.mxu0 %v3700
  %v3731 = vpop.f32.mrf.mxu0
  %v3732 = vadd.f32 0.0, %v3731
  %3733 = vdwg.mxu0
  %3742 = vst [vmem:[#allocation1] ss:$2 sm:$0xff] %v3399
  %s3743 = scalar_lea.vmem [#allocation1], 1
  %3744 = vst [vmem:[%s3743] ss:$2 sm:$0xff] %v3400
  %s3745 = scalar_lea.vmem [#allocation1], 16
  %3746 = vst [vmem:[%s3745] ss:$2 sm:$0xff] %v3401
  %s3747 = scalar_lea.vmem [#allocation1], 17
  %3748 = vst [vmem:[%s3747] ss:$2 sm:$0xff] %v3402
  %s3749 = scalar_lea.vmem [#allocation1], 32
  %3750 = vst [vmem:[%s3749] ss:$2 sm:$0xff] %v3403
  %s3751 = scalar_lea.vmem [#allocation1], 33
  %3752 = vst [vmem:[%s3751] ss:$2 sm:$0xff] %v3404
  %s3753 = scalar_lea.vmem [#allocation1], 48
  %3754 = vst [vmem:[%s3753] ss:$2 sm:$0xff] %v3405
  %s3755 = scalar_lea.vmem [#allocation1], 49
  %3756 = vst [vmem:[%s3755] ss:$2 sm:$0xff] %v3406
  %v3757 = vld.sshfl [vmem:[#allocation1] sm:$0xff pattern:$0x75316420]
  %v3758 = vld.sshfl [vmem:[#allocation1 + $0x10] sm:$0xff pattern:$0x75316420]
  %v3759 = vld.sshfl [vmem:[#allocation1 + $0x20] sm:$0xff pattern:$0x75316420]
  %v3760 = vld.sshfl [vmem:[#allocation1 + $0x30] sm:$0xff pattern:$0x75316420]
  %3765 = vmatpush.msra.mxu0 %v3665
  %3766 = vmatpush.msra.mxu0 %v3664
  %3767 = vmatpush.msra.mxu0 %v3663
  %3768 = vmatpush.msra.mxu0 %v3662
  %3769 = vmatpush.msra.mxu0 %v3661
  %3770 = vmatpush.msra.mxu0 %v3660
  %3771 = vmatpush.msra.mxu0 %v3659
  %3772 = vmatpush.msra.mxu0 %v3658
  %3773 = vmatpush.msra.mxu0 %v3657
  %3774 = vmatpush.msra.mxu0 %v3656
  %3775 = vmatpush.msra.mxu0 %v3655
  %3776 = vmatpush.msra.mxu0 %v3654
  %3777 = vmatpush.msra.mxu0 %v3653
  %3778 = vmatpush.msra.mxu0 %v3652
  %3779 = vmatpush.msra.mxu0 %v3651
  %3780 = vmatpush.msra.mxu0 %v3650
  %3781 = vmatmul.f32.gmra.mxu0 %v3757
  %v3782 = vpop.f32.mrf.mxu0
  %v3783 = vadd.f32 %v3723, %v3782
  %3784 = vmatmul.f32.gmra.mxu0 %v3758
  %v3785 = vpop.f32.mrf.mxu0
  %v3786 = vadd.f32 %v3726, %v3785
  %3787 = vmatmul.f32.gmra.mxu0 %v3759
  %v3788 = vpop.f32.mrf.mxu0
  %v3789 = vadd.f32 %v3729, %v3788
  %3790 = vmatmul.f32.gmra.mxu0 %v3760
  %v3791 = vpop.f32.mrf.mxu0
  %v3792 = vadd.f32 %v3732, %v3791
  %3793 = vdwg.mxu0
  %v3794 = vadd.f32 %v3783, %v1991
  %v3795 = vadd.f32 %v3786, %v1991
  %v3796 = vadd.f32 %v3789, %v1991
  %v3797 = vadd.f32 %v3792, %v1991
  %s3798 = scalar_lea.vmem %s6, 384
  %3799 = vst [vmem:[%s3798] sm:$0xff] %v3794
  %3800 = vst [vmem:[%s3798 + $0x8] sm:$0xff] %v3795
  %3801 = vst [vmem:[%s3798 + $0x10] sm:$0xff] %v3796
  %3802 = vst [vmem:[%s3798 + $0x18] sm:$0xff] %v3797
  %v3803 = vld [vmem:[%s4] sm:$0xff]
  %v3804 = vld [vmem:[%s4 + $0x8] sm:$0xff]
  %v3805 = vld [vmem:[%s4 + $0x10] sm:$0xff]
  %v3806 = vld [vmem:[%s4 + $0x18] sm:$0xff]
  %v3807 = vld [vmem:[%s4 + $0x20] sm:$0xff]
  %v3808 = vld [vmem:[%s4 + $0x28] sm:$0xff]
  %v3809 = vld [vmem:[%s4 + $0x30] sm:$0xff]
  %v3810 = vld [vmem:[%s4 + $0x38] sm:$0xff]
  %v3811 = vld [vmem:[%s4 + $0x40] sm:$0xff]
  %v3812 = vld [vmem:[%s4 + $0x48] sm:$0xff]
  %v3813 = vld [vmem:[%s4 + $0x50] sm:$0xff]
  %v3814 = vld [vmem:[%s4 + $0x58] sm:$0xff]
  %v3815 = vld [vmem:[%s4 + $0x60] sm:$0xff]
  %v3816 = vld [vmem:[%s4 + $0x68] sm:$0xff]
  %v3817 = vld [vmem:[%s4 + $0x70] sm:$0xff]
  %v3818 = vld [vmem:[%s4 + $0x78] sm:$0xff]
  %v3819 = vld [vmem:[%s2382] sm:$0xff]
  %v3820 = vld [vmem:[%s2382 + $0x8] sm:$0xff]
  %v3821 = vld [vmem:[%s2382 + $0x10] sm:$0xff]
  %v3822 = vld [vmem:[%s2382 + $0x18] sm:$0xff]
  %v3823 = vld [vmem:[%s2382 + $0x20] sm:$0xff]
  %v3824 = vld [vmem:[%s2382 + $0x28] sm:$0xff]
  %v3825 = vld [vmem:[%s2382 + $0x30] sm:$0xff]
  %v3826 = vld [vmem:[%s2382 + $0x38] sm:$0xff]
  %v3827 = vld [vmem:[%s2382 + $0x40] sm:$0xff]
  %v3828 = vld [vmem:[%s2382 + $0x48] sm:$0xff]
  %v3829 = vld [vmem:[%s2382 + $0x50] sm:$0xff]
  %v3830 = vld [vmem:[%s2382 + $0x58] sm:$0xff]
  %v3831 = vld [vmem:[%s2382 + $0x60] sm:$0xff]
  %v3832 = vld [vmem:[%s2382 + $0x68] sm:$0xff]
  %v3833 = vld [vmem:[%s2382 + $0x70] sm:$0xff]
  %v3834 = vld [vmem:[%s2382 + $0x78] sm:$0xff]
  %3835 = vst [vmem:[#allocation1] ss:$2 sm:$0xff] %v3399
  %s3836 = scalar_lea.vmem [#allocation1], 1
  %3837 = vst [vmem:[%s3836] ss:$2 sm:$0xff] %v3400
  %s3838 = scalar_lea.vmem [#allocation1], 16
  %3839 = vst [vmem:[%s3838] ss:$2 sm:$0xff] %v3401
  %s3840 = scalar_lea.vmem [#allocation1], 17
  %3841 = vst [vmem:[%s3840] ss:$2 sm:$0xff] %v3402
  %s3842 = scalar_lea.vmem [#allocation1], 32
  %3843 = vst [vmem:[%s3842] ss:$2 sm:$0xff] %v3403
  %s3844 = scalar_lea.vmem [#allocation1], 33
  %3845 = vst [vmem:[%s3844] ss:$2 sm:$0xff] %v3404
  %s3846 = scalar_lea.vmem [#allocation1], 48
  %3847 = vst [vmem:[%s3846] ss:$2 sm:$0xff] %v3405
  %s3848 = scalar_lea.vmem [#allocation1], 49
  %3849 = vst [vmem:[%s3848] ss:$2 sm:$0xff] %v3406
  %v3850 = vld.sshfl [vmem:[#allocation1] sm:$0xff pattern:$0x75316420]
  %v3851 = vld.sshfl [vmem:[#allocation1 + $0x10] sm:$0xff pattern:$0x75316420]
  %v3852 = vld.sshfl [vmem:[#allocation1 + $0x20] sm:$0xff pattern:$0x75316420]
  %v3853 = vld.sshfl [vmem:[#allocation1 + $0x30] sm:$0xff pattern:$0x75316420]
  %3858 = vmatpush.msra.mxu0 %v3834
  %3859 = vmatpush.msra.mxu0 %v3833
  %3860 = vmatpush.msra.mxu0 %v3832
  %3861 = vmatpush.msra.mxu0 %v3831
  %3862 = vmatpush.msra.mxu0 %v3830
  %3863 = vmatpush.msra.mxu0 %v3829
  %3864 = vmatpush.msra.mxu0 %v3828
  %3865 = vmatpush.msra.mxu0 %v3827
  %3866 = vmatpush.msra.mxu0 %v3826
  %3867 = vmatpush.msra.mxu0 %v3825
  %3868 = vmatpush.msra.mxu0 %v3824
  %3869 = vmatpush.msra.mxu0 %v3823
  %3870 = vmatpush.msra.mxu0 %v3822
  %3871 = vmatpush.msra.mxu0 %v3821
  %3872 = vmatpush.msra.mxu0 %v3820
  %3873 = vmatpush.msra.mxu0 %v3819
  %3874 = vmatmul.f32.gmra.mxu0 %v3850
  %v3875 = vpop.f32.mrf.mxu0
  %v3876 = vadd.f32 0.0, %v3875
  %3877 = vmatmul.f32.gmra.mxu0 %v3851
  %v3878 = vpop.f32.mrf.mxu0
  %v3879 = vadd.f32 0.0, %v3878
  %3880 = vmatmul.f32.gmra.mxu0 %v3852
  %v3881 = vpop.f32.mrf.mxu0
  %v3882 = vadd.f32 0.0, %v3881
  %3883 = vmatmul.f32.gmra.mxu0 %v3853
  %v3884 = vpop.f32.mrf.mxu0
  %v3885 = vadd.f32 0.0, %v3884
  %3886 = vdwg.mxu0
  %3895 = vst [vmem:[#allocation1] ss:$2 sm:$0xff] %v3408
  %s3896 = scalar_lea.vmem [#allocation1], 1
  %3897 = vst [vmem:[%s3896] ss:$2 sm:$0xff] %v3409
  %s3898 = scalar_lea.vmem [#allocation1], 16
  %3899 = vst [vmem:[%s3898] ss:$2 sm:$0xff] %v3410
  %s3900 = scalar_lea.vmem [#allocation1], 17
  %3901 = vst [vmem:[%s3900] ss:$2 sm:$0xff] %v3411
  %s3902 = scalar_lea.vmem [#allocation1], 32
  %3903 = vst [vmem:[%s3902] ss:$2 sm:$0xff] %v3412
  %s3904 = scalar_lea.vmem [#allocation1], 33
  %3905 = vst [vmem:[%s3904] ss:$2 sm:$0xff] %v3413
  %s3906 = scalar_lea.vmem [#allocation1], 48
  %3907 = vst [vmem:[%s3906] ss:$2 sm:$0xff] %v3414
  %s3908 = scalar_lea.vmem [#allocation1], 49
  %3909 = vst [vmem:[%s3908] ss:$2 sm:$0xff] %v3415
  %v3910 = vld.sshfl [vmem:[#allocation1] sm:$0xff pattern:$0x75316420]
  %v3911 = vld.sshfl [vmem:[#allocation1 + $0x10] sm:$0xff pattern:$0x75316420]
  %v3912 = vld.sshfl [vmem:[#allocation1 + $0x20] sm:$0xff pattern:$0x75316420]
  %v3913 = vld.sshfl [vmem:[#allocation1 + $0x30] sm:$0xff pattern:$0x75316420]
  %3918 = vmatpush.msra.mxu0 %v3818
  %3919 = vmatpush.msra.mxu0 %v3817
  %3920 = vmatpush.msra.mxu0 %v3816
  %3921 = vmatpush.msra.mxu0 %v3815
  %3922 = vmatpush.msra.mxu0 %v3814
  %3923 = vmatpush.msra.mxu0 %v3813
  %3924 = vmatpush.msra.mxu0 %v3812
  %3925 = vmatpush.msra.mxu0 %v3811
  %3926 = vmatpush.msra.mxu0 %v3810
  %3927 = vmatpush.msra.mxu0 %v3809
  %3928 = vmatpush.msra.mxu0 %v3808
  %3929 = vmatpush.msra.mxu0 %v3807
  %3930 = vmatpush.msra.mxu0 %v3806
  %3931 = vmatpush.msra.mxu0 %v3805
  %3932 = vmatpush.msra.mxu0 %v3804
  %3933 = vmatpush.msra.mxu0 %v3803
  %3934 = vmatmul.f32.gmra.mxu0 %v3910
  %v3935 = vpop.f32.mrf.mxu0
  %v3936 = vadd.f32 %v3876, %v3935
  %3937 = vmatmul.f32.gmra.mxu0 %v3911
  %v3938 = vpop.f32.mrf.mxu0
  %v3939 = vadd.f32 %v3879, %v3938
  %3940 = vmatmul.f32.gmra.mxu0 %v3912
  %v3941 = vpop.f32.mrf.mxu0
  %v3942 = vadd.f32 %v3882, %v3941
  %3943 = vmatmul.f32.gmra.mxu0 %v3913
  %v3944 = vpop.f32.mrf.mxu0
  %v3945 = vadd.f32 %v3885, %v3944
  %3946 = vdwg.mxu0
  %v3947 = vld [vmem:[%s2511] sm:$0xff]
  %v3948 = vld [vmem:[%s2511 + $0x8] sm:$0xff]
  %v3949 = vld [vmem:[%s2511 + $0x10] sm:$0xff]
  %v3950 = vld [vmem:[%s2511 + $0x18] sm:$0xff]
  %v3951 = vld [vmem:[%s2511 + $0x20] sm:$0xff]
  %v3952 = vld [vmem:[%s2511 + $0x28] sm:$0xff]
  %v3953 = vld [vmem:[%s2511 + $0x30] sm:$0xff]
  %v3954 = vld [vmem:[%s2511 + $0x38] sm:$0xff]
  %v3955 = vld [vmem:[%s2511 + $0x40] sm:$0xff]
  %v3956 = vld [vmem:[%s2511 + $0x48] sm:$0xff]
  %v3957 = vld [vmem:[%s2511 + $0x50] sm:$0xff]
  %v3958 = vld [vmem:[%s2511 + $0x58] sm:$0xff]
  %v3959 = vld [vmem:[%s2511 + $0x60] sm:$0xff]
  %v3960 = vld [vmem:[%s2511 + $0x68] sm:$0xff]
  %v3961 = vld [vmem:[%s2511 + $0x70] sm:$0xff]
  %v3962 = vld [vmem:[%s2511 + $0x78] sm:$0xff]
  %3963 = vst [vmem:[#allocation1] ss:$2 sm:$0xff] %v3390
  %s3964 = scalar_lea.vmem [#allocation1], 1
  %3965 = vst [vmem:[%s3964] ss:$2 sm:$0xff] %v3391
  %s3966 = scalar_lea.vmem [#allocation1], 16
  %3967 = vst [vmem:[%s3966] ss:$2 sm:$0xff] %v3392
  %s3968 = scalar_lea.vmem [#allocation1], 17
  %3969 = vst [vmem:[%s3968] ss:$2 sm:$0xff] %v3393
  %s3970 = scalar_lea.vmem [#allocation1], 32
  %3971 = vst [vmem:[%s3970] ss:$2 sm:$0xff] %v3394
  %s3972 = scalar_lea.vmem [#allocation1], 33
  %3973 = vst [vmem:[%s3972] ss:$2 sm:$0xff] %v3395
  %s3974 = scalar_lea.vmem [#allocation1], 48
  %3975 = vst [vmem:[%s3974] ss:$2 sm:$0xff] %v3396
  %s3976 = scalar_lea.vmem [#allocation1], 49
  %3977 = vst [vmem:[%s3976] ss:$2 sm:$0xff] %v3397
  %v3978 = vld.sshfl [vmem:[#allocation1] sm:$0xff pattern:$0x75316420]
  %v3979 = vld.sshfl [vmem:[#allocation1 + $0x10] sm:$0xff pattern:$0x75316420]
  %v3980 = vld.sshfl [vmem:[#allocation1 + $0x20] sm:$0xff pattern:$0x75316420]
  %v3981 = vld.sshfl [vmem:[#allocation1 + $0x30] sm:$0xff pattern:$0x75316420]
  %3986 = vmatpush.msra.mxu0 %v3962
  %3987 = vmatpush.msra.mxu0 %v3961
  %3988 = vmatpush.msra.mxu0 %v3960
  %3989 = vmatpush.msra.mxu0 %v3959
  %3990 = vmatpush.msra.mxu0 %v3958
  %3991 = vmatpush.msra.mxu0 %v3957
  %3992 = vmatpush.msra.mxu0 %v3956
  %3993 = vmatpush.msra.mxu0 %v3955
  %3994 = vmatpush.msra.mxu0 %v3954
  %3995 = vmatpush.msra.mxu0 %v3953
  %3996 = vmatpush.msra.mxu0 %v3952
  %3997 = vmatpush.msra.mxu0 %v3951
  %3998 = vmatpush.msra.mxu0 %v3950
  %3999 = vmatpush.msra.mxu0 %v3949
  %4000 = vmatpush.msra.mxu0 %v3948
  %4001 = vmatpush.msra.mxu0 %v3947
  %4002 = vmatmul.f32.gmra.mxu0 %v3978
  %v4003 = vpop.f32.mrf.mxu0
  %v4004 = vadd.f32 0.0, %v4003
  %4005 = vmatmul.f32.gmra.mxu0 %v3979
  %v4006 = vpop.f32.mrf.mxu0
  %v4007 = vadd.f32 0.0, %v4006
  %4008 = vmatmul.f32.gmra.mxu0 %v3980
  %v4009 = vpop.f32.mrf.mxu0
  %v4010 = vadd.f32 0.0, %v4009
  %4011 = vmatmul.f32.gmra.mxu0 %v3981
  %v4012 = vpop.f32.mrf.mxu0
  %v4013 = vadd.f32 0.0, %v4012
  %4014 = vdwg.mxu0
  %v4015 = vadd.f32 %v3936, %v4004
  %v4016 = vadd.f32 %v3939, %v4007
  %v4017 = vadd.f32 %v3942, %v4010
  %v4018 = vadd.f32 %v3945, %v4013
  %v4019 = vld [vmem:[%s2584] sm:$0xff]
  %v4020 = vld [vmem:[%s2584 + $0x8] sm:$0xff]
  %v4021 = vld [vmem:[%s2584 + $0x10] sm:$0xff]
  %v4022 = vld [vmem:[%s2584 + $0x18] sm:$0xff]
  %v4023 = vld [vmem:[%s2584 + $0x20] sm:$0xff]
  %v4024 = vld [vmem:[%s2584 + $0x28] sm:$0xff]
  %v4025 = vld [vmem:[%s2584 + $0x30] sm:$0xff]
  %v4026 = vld [vmem:[%s2584 + $0x38] sm:$0xff]
  %v4027 = vld [vmem:[%s2584 + $0x40] sm:$0xff]
  %v4028 = vld [vmem:[%s2584 + $0x48] sm:$0xff]
  %v4029 = vld [vmem:[%s2584 + $0x50] sm:$0xff]
  %v4030 = vld [vmem:[%s2584 + $0x58] sm:$0xff]
  %v4031 = vld [vmem:[%s2584 + $0x60] sm:$0xff]
  %v4032 = vld [vmem:[%s2584 + $0x68] sm:$0xff]
  %v4033 = vld [vmem:[%s2584 + $0x70] sm:$0xff]
  %v4034 = vld [vmem:[%s2584 + $0x78] sm:$0xff]
  %4035 = vst [vmem:[#allocation1] ss:$2 sm:$0xff] %v3382
  %s4036 = scalar_lea.vmem [#allocation1], 1
  %4037 = vst [vmem:[%s4036] ss:$2 sm:$0xff] %v3383
  %s4038 = scalar_lea.vmem [#allocation1], 16
  %4039 = vst [vmem:[%s4038] ss:$2 sm:$0xff] %v3384
  %s4040 = scalar_lea.vmem [#allocation1], 17
  %4041 = vst [vmem:[%s4040] ss:$2 sm:$0xff] %v3385
  %s4042 = scalar_lea.vmem [#allocation1], 32
  %4043 = vst [vmem:[%s4042] ss:$2 sm:$0xff] %v3386
  %s4044 = scalar_lea.vmem [#allocation1], 33
  %4045 = vst [vmem:[%s4044] ss:$2 sm:$0xff] %v3387
  %s4046 = scalar_lea.vmem [#allocation1], 48
  %4047 = vst [vmem:[%s4046] ss:$2 sm:$0xff] %v3388
  %s4048 = scalar_lea.vmem [#allocation1], 49
  %4049 = vst [vmem:[%s4048] ss:$2 sm:$0xff] %v3389
  %v4050 = vld.sshfl [vmem:[#allocation1] sm:$0xff pattern:$0x75316420]
  %v4051 = vld.sshfl [vmem:[#allocation1 + $0x10] sm:$0xff pattern:$0x75316420]
  %v4052 = vld.sshfl [vmem:[#allocation1 + $0x20] sm:$0xff pattern:$0x75316420]
  %v4053 = vld.sshfl [vmem:[#allocation1 + $0x30] sm:$0xff pattern:$0x75316420]
  %4058 = vmatpush.msra.mxu0 %v4034
  %4059 = vmatpush.msra.mxu0 %v4033
  %4060 = vmatpush.msra.mxu0 %v4032
  %4061 = vmatpush.msra.mxu0 %v4031
  %4062 = vmatpush.msra.mxu0 %v4030
  %4063 = vmatpush.msra.mxu0 %v4029
  %4064 = vmatpush.msra.mxu0 %v4028
  %4065 = vmatpush.msra.mxu0 %v4027
  %4066 = vmatpush.msra.mxu0 %v4026
  %4067 = vmatpush.msra.mxu0 %v4025
  %4068 = vmatpush.msra.mxu0 %v4024
  %4069 = vmatpush.msra.mxu0 %v4023
  %4070 = vmatpush.msra.mxu0 %v4022
  %4071 = vmatpush.msra.mxu0 %v4021
  %4072 = vmatpush.msra.mxu0 %v4020
  %4073 = vmatpush.msra.mxu0 %v4019
  %4074 = vmatmul.f32.gmra.mxu0 %v4050
  %v4075 = vpop.f32.mrf.mxu0
  %v4076 = vadd.f32 0.0, %v4075
  %4077 = vmatmul.f32.gmra.mxu0 %v4051
  %v4078 = vpop.f32.mrf.mxu0
  %v4079 = vadd.f32 0.0, %v4078
  %4080 = vmatmul.f32.gmra.mxu0 %v4052
  %v4081 = vpop.f32.mrf.mxu0
  %v4082 = vadd.f32 0.0, %v4081
  %4083 = vmatmul.f32.gmra.mxu0 %v4053
  %v4084 = vpop.f32.mrf.mxu0
  %v4085 = vadd.f32 0.0, %v4084
  %4086 = vdwg.mxu0
  %v4087 = vadd.f32 %v4015, %v4076
  %v4088 = vadd.f32 %v4016, %v4079
  %v4089 = vadd.f32 %v4017, %v4082
  %v4090 = vadd.f32 %v4018, %v4085
  %v4091 = vadd.f32 %v4087, %v1991
  %v4092 = vadd.f32 %v4088, %v1991
  %v4093 = vadd.f32 %v4089, %v1991
  %v4094 = vadd.f32 %v4090, %v1991
  %s4095 = scalar_lea.vmem %s6, 416
  %4096 = vst [vmem:[%s4095] sm:$0xff] %v4091
  %4097 = vst [vmem:[%s4095 + $0x8] sm:$0xff] %v4092
  %4098 = vst [vmem:[%s4095 + $0x10] sm:$0xff] %v4093
  %4099 = vst [vmem:[%s4095 + $0x18] sm:$0xff] %v4094
  %v4100 = vld [vmem:[%s1932] sm:$0xf]
  %v4101 = vld [vmem:[%s1932 + $0x8] sm:$0xf]
  %v4102 = vld [vmem:[%s1932 + $0x10] sm:$0xf]
  %v4103 = vld [vmem:[%s1932 + $0x18] sm:$0xf]
  %v4104 = vld [vmem:[%s1932 + $0x28] sm:$0xf]
  %v4105 = vld [vmem:[%s1932 + $0x30] sm:$0xf]
  %v4106 = vld [vmem:[%s1932 + $0x38] sm:$0xf]
  %v4107 = vld [vmem:[%s1932 + $0x40] sm:$0xf]
  %v4108 = vld [vmem:[%s1612 + $0x1] sm:$0xf]
  %v4109 = vld [vmem:[%s1612 + $0x9] sm:$0xf]
  %v4110 = vld [vmem:[%s1612 + $0x11] sm:$0xf]
  %v4111 = vld [vmem:[%s1612 + $0x19] sm:$0xf]
  %v4112 = vld [vmem:[%s1612 + $0x29] sm:$0xf]
  %v4113 = vld [vmem:[%s1612 + $0x31] sm:$0xf]
  %v4114 = vld [vmem:[%s1612 + $0x39] sm:$0xf]
  %v4115 = vld [vmem:[%s1612 + $0x41] sm:$0xf]
  %v4116 = vld [vmem:[%s3407] sm:$0xf]
  %v4117 = vld [vmem:[%s3407 + $0x8] sm:$0xf]
  %v4118 = vld [vmem:[%s3407 + $0x10] sm:$0xf]
  %v4119 = vld [vmem:[%s3407 + $0x18] sm:$0xf]
  %v4120 = vld [vmem:[%s3407 + $0x28] sm:$0xf]
  %v4121 = vld [vmem:[%s3407 + $0x30] sm:$0xf]
  %v4122 = vld [vmem:[%s3407 + $0x38] sm:$0xf]
  %v4123 = vld [vmem:[%s3407 + $0x40] sm:$0xf]
  %v4124 = vld [vmem:[%s3398 + $0x1] sm:$0xf]
  %v4125 = vld [vmem:[%s3398 + $0x9] sm:$0xf]
  %v4126 = vld [vmem:[%s3398 + $0x11] sm:$0xf]
  %v4127 = vld [vmem:[%s3398 + $0x19] sm:$0xf]
  %v4128 = vld [vmem:[%s3398 + $0x29] sm:$0xf]
  %v4129 = vld [vmem:[%s3398 + $0x31] sm:$0xf]
  %v4130 = vld [vmem:[%s3398 + $0x39] sm:$0xf]
  %v4131 = vld [vmem:[%s3398 + $0x41] sm:$0xf]
  %v4132 = vld [vmem:[%s1974] sm:$0xff]
  %v4133 = vld [vmem:[%s1974 + $0x8] sm:$0xff]
  %v4134 = vld [vmem:[%s1974 + $0x10] sm:$0xff]
  %v4135 = vld [vmem:[%s1974 + $0x18] sm:$0xff]
  %v4136 = vld [vmem:[%s1974 + $0x20] sm:$0xff]
  %v4137 = vld [vmem:[%s1974 + $0x28] sm:$0xff]
  %v4138 = vld [vmem:[%s1974 + $0x30] sm:$0xff]
  %v4139 = vld [vmem:[%s1974 + $0x38] sm:$0xff]
  %v4140 = vld [vmem:[%s1974 + $0x40] sm:$0xff]
  %v4141 = vld [vmem:[%s1974 + $0x48] sm:$0xff]
  %v4142 = vld [vmem:[%s1974 + $0x50] sm:$0xff]
  %v4143 = vld [vmem:[%s1974 + $0x58] sm:$0xff]
  %v4144 = vld [vmem:[%s1974 + $0x60] sm:$0xff]
  %v4145 = vld [vmem:[%s1974 + $0x68] sm:$0xff]
  %v4146 = vld [vmem:[%s1974 + $0x70] sm:$0xff]
  %v4147 = vld [vmem:[%s1974 + $0x78] sm:$0xff]
  %4156 = vst [vmem:[#allocation1] ss:$2 sm:$0xff] %v4100
  %s4157 = scalar_lea.vmem [#allocation1], 1
  %4158 = vst [vmem:[%s4157] ss:$2 sm:$0xff] %v4101
  %s4159 = scalar_lea.vmem [#allocation1], 16
  %4160 = vst [vmem:[%s4159] ss:$2 sm:$0xff] %v4102
  %s4161 = scalar_lea.vmem [#allocation1], 17
  %4162 = vst [vmem:[%s4161] ss:$2 sm:$0xff] %v4103
  %s4163 = scalar_lea.vmem [#allocation1], 32
  %4164 = vst [vmem:[%s4163] ss:$2 sm:$0xff] %v4104
  %s4165 = scalar_lea.vmem [#allocation1], 33
  %4166 = vst [vmem:[%s4165] ss:$2 sm:$0xff] %v4105
  %s4167 = scalar_lea.vmem [#allocation1], 48
  %4168 = vst [vmem:[%s4167] ss:$2 sm:$0xff] %v4106
  %s4169 = scalar_lea.vmem [#allocation1], 49
  %4170 = vst [vmem:[%s4169] ss:$2 sm:$0xff] %v4107
  %v4171 = vld.sshfl [vmem:[#allocation1] sm:$0xff pattern:$0x75316420]
  %v4172 = vld.sshfl [vmem:[#allocation1 + $0x10] sm:$0xff pattern:$0x75316420]
  %v4173 = vld.sshfl [vmem:[#allocation1 + $0x20] sm:$0xff pattern:$0x75316420]
  %v4174 = vld.sshfl [vmem:[#allocation1 + $0x30] sm:$0xff pattern:$0x75316420]
  %4179 = vmatpush.msra.mxu0 %v4147
  %4180 = vmatpush.msra.mxu0 %v4146
  %4181 = vmatpush.msra.mxu0 %v4145
  %4182 = vmatpush.msra.mxu0 %v4144
  %4183 = vmatpush.msra.mxu0 %v4143
  %4184 = vmatpush.msra.mxu0 %v4142
  %4185 = vmatpush.msra.mxu0 %v4141
  %4186 = vmatpush.msra.mxu0 %v4140
  %4187 = vmatpush.msra.mxu0 %v4139
  %4188 = vmatpush.msra.mxu0 %v4138
  %4189 = vmatpush.msra.mxu0 %v4137
  %4190 = vmatpush.msra.mxu0 %v4136
  %4191 = vmatpush.msra.mxu0 %v4135
  %4192 = vmatpush.msra.mxu0 %v4134
  %4193 = vmatpush.msra.mxu0 %v4133
  %4194 = vmatpush.msra.mxu0 %v4132
  %4195 = vmatmul.f32.gmra.mxu0 %v4171
  %v4196 = vpop.f32.mrf.mxu0
  %v4197 = vadd.f32 %v1991, %v4196
  %4198 = vmatmul.f32.gmra.mxu0 %v4172
  %v4199 = vpop.f32.mrf.mxu0
  %v4200 = vadd.f32 %v1991, %v4199
  %4201 = vmatmul.f32.gmra.mxu0 %v4173
  %v4202 = vpop.f32.mrf.mxu0
  %v4203 = vadd.f32 %v1991, %v4202
  %4204 = vmatmul.f32.gmra.mxu0 %v4174
  %v4205 = vpop.f32.mrf.mxu0
  %v4206 = vadd.f32 %v1991, %v4205
  %4207 = vdwg.mxu0
  %s4208 = scalar_lea.vmem %s6, 320
  %4209 = vst [vmem:[%s4208] sm:$0xff] %v4197
  %4210 = vst [vmem:[%s4208 + $0x8] sm:$0xff] %v4200
  %4211 = vst [vmem:[%s4208 + $0x10] sm:$0xff] %v4203
  %4212 = vst [vmem:[%s4208 + $0x18] sm:$0xff] %v4206
  %v4213 = vld [vmem:[%s2056] sm:$0xff]
  %v4214 = vld [vmem:[%s2056 + $0x8] sm:$0xff]
  %v4215 = vld [vmem:[%s2056 + $0x10] sm:$0xff]
  %v4216 = vld [vmem:[%s2056 + $0x18] sm:$0xff]
  %v4217 = vld [vmem:[%s2056 + $0x20] sm:$0xff]
  %v4218 = vld [vmem:[%s2056 + $0x28] sm:$0xff]
  %v4219 = vld [vmem:[%s2056 + $0x30] sm:$0xff]
  %v4220 = vld [vmem:[%s2056 + $0x38] sm:$0xff]
  %v4221 = vld [vmem:[%s2056 + $0x40] sm:$0xff]
  %v4222 = vld [vmem:[%s2056 + $0x48] sm:$0xff]
  %v4223 = vld [vmem:[%s2056 + $0x50] sm:$0xff]
  %v4224 = vld [vmem:[%s2056 + $0x58] sm:$0xff]
  %v4225 = vld [vmem:[%s2056 + $0x60] sm:$0xff]
  %v4226 = vld [vmem:[%s2056 + $0x68] sm:$0xff]
  %v4227 = vld [vmem:[%s2056 + $0x70] sm:$0xff]
  %v4228 = vld [vmem:[%s2056 + $0x78] sm:$0xff]
  %v4229 = vld [vmem:[%s2073] sm:$0xff]
  %v4230 = vld [vmem:[%s2073 + $0x8] sm:$0xff]
  %v4231 = vld [vmem:[%s2073 + $0x10] sm:$0xff]
  %v4232 = vld [vmem:[%s2073 + $0x18] sm:$0xff]
  %v4233 = vld [vmem:[%s2073 + $0x20] sm:$0xff]
  %v4234 = vld [vmem:[%s2073 + $0x28] sm:$0xff]
  %v4235 = vld [vmem:[%s2073 + $0x30] sm:$0xff]
  %v4236 = vld [vmem:[%s2073 + $0x38] sm:$0xff]
  %v4237 = vld [vmem:[%s2073 + $0x40] sm:$0xff]
  %v4238 = vld [vmem:[%s2073 + $0x48] sm:$0xff]
  %v4239 = vld [vmem:[%s2073 + $0x50] sm:$0xff]
  %v4240 = vld [vmem:[%s2073 + $0x58] sm:$0xff]
  %v4241 = vld [vmem:[%s2073 + $0x60] sm:$0xff]
  %v4242 = vld [vmem:[%s2073 + $0x68] sm:$0xff]
  %v4243 = vld [vmem:[%s2073 + $0x70] sm:$0xff]
  %v4244 = vld [vmem:[%s2073 + $0x78] sm:$0xff]
  %4245 = vst [vmem:[#allocation1] ss:$2 sm:$0xff] %v4100
  %s4246 = scalar_lea.vmem [#allocation1], 1
  %4247 = vst [vmem:[%s4246] ss:$2 sm:$0xff] %v4101
  %s4248 = scalar_lea.vmem [#allocation1], 16
  %4249 = vst [vmem:[%s4248] ss:$2 sm:$0xff] %v4102
  %s4250 = scalar_lea.vmem [#allocation1], 17
  %4251 = vst [vmem:[%s4250] ss:$2 sm:$0xff] %v4103
  %s4252 = scalar_lea.vmem [#allocation1], 32
  %4253 = vst [vmem:[%s4252] ss:$2 sm:$0xff] %v4104
  %s4254 = scalar_lea.vmem [#allocation1], 33
  %4255 = vst [vmem:[%s4254] ss:$2 sm:$0xff] %v4105
  %s4256 = scalar_lea.vmem [#allocation1], 48
  %4257 = vst [vmem:[%s4256] ss:$2 sm:$0xff] %v4106
  %s4258 = scalar_lea.vmem [#allocation1], 49
  %4259 = vst [vmem:[%s4258] ss:$2 sm:$0xff] %v4107
  %v4260 = vld.sshfl [vmem:[#allocation1] sm:$0xff pattern:$0x75316420]
  %v4261 = vld.sshfl [vmem:[#allocation1 + $0x10] sm:$0xff pattern:$0x75316420]
  %v4262 = vld.sshfl [vmem:[#allocation1 + $0x20] sm:$0xff pattern:$0x75316420]
  %v4263 = vld.sshfl [vmem:[#allocation1 + $0x30] sm:$0xff pattern:$0x75316420]
  %4268 = vmatpush.msra.mxu0 %v4244
  %4269 = vmatpush.msra.mxu0 %v4243
  %4270 = vmatpush.msra.mxu0 %v4242
  %4271 = vmatpush.msra.mxu0 %v4241
  %4272 = vmatpush.msra.mxu0 %v4240
  %4273 = vmatpush.msra.mxu0 %v4239
  %4274 = vmatpush.msra.mxu0 %v4238
  %4275 = vmatpush.msra.mxu0 %v4237
  %4276 = vmatpush.msra.mxu0 %v4236
  %4277 = vmatpush.msra.mxu0 %v4235
  %4278 = vmatpush.msra.mxu0 %v4234
  %4279 = vmatpush.msra.mxu0 %v4233
  %4280 = vmatpush.msra.mxu0 %v4232
  %4281 = vmatpush.msra.mxu0 %v4231
  %4282 = vmatpush.msra.mxu0 %v4230
  %4283 = vmatpush.msra.mxu0 %v4229
  %4284 = vmatmul.f32.gmra.mxu0 %v4260
  %v4285 = vpop.f32.mrf.mxu0
  %v4286 = vadd.f32 0.0, %v4285
  %4287 = vmatmul.f32.gmra.mxu0 %v4261
  %v4288 = vpop.f32.mrf.mxu0
  %v4289 = vadd.f32 0.0, %v4288
  %4290 = vmatmul.f32.gmra.mxu0 %v4262
  %v4291 = vpop.f32.mrf.mxu0
  %v4292 = vadd.f32 0.0, %v4291
  %4293 = vmatmul.f32.gmra.mxu0 %v4263
  %v4294 = vpop.f32.mrf.mxu0
  %v4295 = vadd.f32 0.0, %v4294
  %4296 = vdwg.mxu0
  %4305 = vst [vmem:[#allocation1] ss:$2 sm:$0xff] %v4108
  %s4306 = scalar_lea.vmem [#allocation1], 1
  %4307 = vst [vmem:[%s4306] ss:$2 sm:$0xff] %v4109
  %s4308 = scalar_lea.vmem [#allocation1], 16
  %4309 = vst [vmem:[%s4308] ss:$2 sm:$0xff] %v4110
  %s4310 = scalar_lea.vmem [#allocation1], 17
  %4311 = vst [vmem:[%s4310] ss:$2 sm:$0xff] %v4111
  %s4312 = scalar_lea.vmem [#allocation1], 32
  %4313 = vst [vmem:[%s4312] ss:$2 sm:$0xff] %v4112
  %s4314 = scalar_lea.vmem [#allocation1], 33
  %4315 = vst [vmem:[%s4314] ss:$2 sm:$0xff] %v4113
  %s4316 = scalar_lea.vmem [#allocation1], 48
  %4317 = vst [vmem:[%s4316] ss:$2 sm:$0xff] %v4114
  %s4318 = scalar_lea.vmem [#allocation1], 49
  %4319 = vst [vmem:[%s4318] ss:$2 sm:$0xff] %v4115
  %v4320 = vld.sshfl [vmem:[#allocation1] sm:$0xff pattern:$0x75316420]
  %v4321 = vld.sshfl [vmem:[#allocation1 + $0x10] sm:$0xff pattern:$0x75316420]
  %v4322 = vld.sshfl [vmem:[#allocation1 + $0x20] sm:$0xff pattern:$0x75316420]
  %v4323 = vld.sshfl [vmem:[#allocation1 + $0x30] sm:$0xff pattern:$0x75316420]
  %4328 = vmatpush.msra.mxu0 %v4228
  %4329 = vmatpush.msra.mxu0 %v4227
  %4330 = vmatpush.msra.mxu0 %v4226
  %4331 = vmatpush.msra.mxu0 %v4225
  %4332 = vmatpush.msra.mxu0 %v4224
  %4333 = vmatpush.msra.mxu0 %v4223
  %4334 = vmatpush.msra.mxu0 %v4222
  %4335 = vmatpush.msra.mxu0 %v4221
  %4336 = vmatpush.msra.mxu0 %v4220
  %4337 = vmatpush.msra.mxu0 %v4219
  %4338 = vmatpush.msra.mxu0 %v4218
  %4339 = vmatpush.msra.mxu0 %v4217
  %4340 = vmatpush.msra.mxu0 %v4216
  %4341 = vmatpush.msra.mxu0 %v4215
  %4342 = vmatpush.msra.mxu0 %v4214
  %4343 = vmatpush.msra.mxu0 %v4213
  %4344 = vmatmul.f32.gmra.mxu0 %v4320
  %v4345 = vpop.f32.mrf.mxu0
  %v4346 = vadd.f32 %v4286, %v4345
  %4347 = vmatmul.f32.gmra.mxu0 %v4321
  %v4348 = vpop.f32.mrf.mxu0
  %v4349 = vadd.f32 %v4289, %v4348
  %4350 = vmatmul.f32.gmra.mxu0 %v4322
  %v4351 = vpop.f32.mrf.mxu0
  %v4352 = vadd.f32 %v4292, %v4351
  %4353 = vmatmul.f32.gmra.mxu0 %v4323
  %v4354 = vpop.f32.mrf.mxu0
  %v4355 = vadd.f32 %v4295, %v4354
  %4356 = vdwg.mxu0
  %v4357 = vadd.f32 %v4346, %v1991
  %v4358 = vadd.f32 %v4349, %v1991
  %v4359 = vadd.f32 %v4352, %v1991
  %v4360 = vadd.f32 %v4355, %v1991
  %s4361 = scalar_lea.vmem %s6, 352
  %4362 = vst [vmem:[%s4361] sm:$0xff] %v4357
  %4363 = vst [vmem:[%s4361 + $0x8] sm:$0xff] %v4358
  %4364 = vst [vmem:[%s4361 + $0x10] sm:$0xff] %v4359
  %4365 = vst [vmem:[%s4361 + $0x18] sm:$0xff] %v4360
  %v4366 = vld [vmem:[%s2211] sm:$0xff]
  %v4367 = vld [vmem:[%s2211 + $0x8] sm:$0xff]
  %v4368 = vld [vmem:[%s2211 + $0x10] sm:$0xff]
  %v4369 = vld [vmem:[%s2211 + $0x18] sm:$0xff]
  %v4370 = vld [vmem:[%s2211 + $0x20] sm:$0xff]
  %v4371 = vld [vmem:[%s2211 + $0x28] sm:$0xff]
  %v4372 = vld [vmem:[%s2211 + $0x30] sm:$0xff]
  %v4373 = vld [vmem:[%s2211 + $0x38] sm:$0xff]
  %v4374 = vld [vmem:[%s2211 + $0x40] sm:$0xff]
  %v4375 = vld [vmem:[%s2211 + $0x48] sm:$0xff]
  %v4376 = vld [vmem:[%s2211 + $0x50] sm:$0xff]
  %v4377 = vld [vmem:[%s2211 + $0x58] sm:$0xff]
  %v4378 = vld [vmem:[%s2211 + $0x60] sm:$0xff]
  %v4379 = vld [vmem:[%s2211 + $0x68] sm:$0xff]
  %v4380 = vld [vmem:[%s2211 + $0x70] sm:$0xff]
  %v4381 = vld [vmem:[%s2211 + $0x78] sm:$0xff]
  %v4382 = vld [vmem:[%s2228] sm:$0xff]
  %v4383 = vld [vmem:[%s2228 + $0x8] sm:$0xff]
  %v4384 = vld [vmem:[%s2228 + $0x10] sm:$0xff]
  %v4385 = vld [vmem:[%s2228 + $0x18] sm:$0xff]
  %v4386 = vld [vmem:[%s2228 + $0x20] sm:$0xff]
  %v4387 = vld [vmem:[%s2228 + $0x28] sm:$0xff]
  %v4388 = vld [vmem:[%s2228 + $0x30] sm:$0xff]
  %v4389 = vld [vmem:[%s2228 + $0x38] sm:$0xff]
  %v4390 = vld [vmem:[%s2228 + $0x40] sm:$0xff]
  %v4391 = vld [vmem:[%s2228 + $0x48] sm:$0xff]
  %v4392 = vld [vmem:[%s2228 + $0x50] sm:$0xff]
  %v4393 = vld [vmem:[%s2228 + $0x58] sm:$0xff]
  %v4394 = vld [vmem:[%s2228 + $0x60] sm:$0xff]
  %v4395 = vld [vmem:[%s2228 + $0x68] sm:$0xff]
  %v4396 = vld [vmem:[%s2228 + $0x70] sm:$0xff]
  %v4397 = vld [vmem:[%s2228 + $0x78] sm:$0xff]
  %4398 = vst [vmem:[#allocation1] ss:$2 sm:$0xff] %v4100
  %s4399 = scalar_lea.vmem [#allocation1], 1
  %4400 = vst [vmem:[%s4399] ss:$2 sm:$0xff] %v4101
  %s4401 = scalar_lea.vmem [#allocation1], 16
  %4402 = vst [vmem:[%s4401] ss:$2 sm:$0xff] %v4102
  %s4403 = scalar_lea.vmem [#allocation1], 17
  %4404 = vst [vmem:[%s4403] ss:$2 sm:$0xff] %v4103
  %s4405 = scalar_lea.vmem [#allocation1], 32
  %4406 = vst [vmem:[%s4405] ss:$2 sm:$0xff] %v4104
  %s4407 = scalar_lea.vmem [#allocation1], 33
  %4408 = vst [vmem:[%s4407] ss:$2 sm:$0xff] %v4105
  %s4409 = scalar_lea.vmem [#allocation1], 48
  %4410 = vst [vmem:[%s4409] ss:$2 sm:$0xff] %v4106
  %s4411 = scalar_lea.vmem [#allocation1], 49
  %4412 = vst [vmem:[%s4411] ss:$2 sm:$0xff] %v4107
  %v4413 = vld.sshfl [vmem:[#allocation1] sm:$0xff pattern:$0x75316420]
  %v4414 = vld.sshfl [vmem:[#allocation1 + $0x10] sm:$0xff pattern:$0x75316420]
  %v4415 = vld.sshfl [vmem:[#allocation1 + $0x20] sm:$0xff pattern:$0x75316420]
  %v4416 = vld.sshfl [vmem:[#allocation1 + $0x30] sm:$0xff pattern:$0x75316420]
  %4421 = vmatpush.msra.mxu0 %v4397
  %4422 = vmatpush.msra.mxu0 %v4396
  %4423 = vmatpush.msra.mxu0 %v4395
  %4424 = vmatpush.msra.mxu0 %v4394
  %4425 = vmatpush.msra.mxu0 %v4393
  %4426 = vmatpush.msra.mxu0 %v4392
  %4427 = vmatpush.msra.mxu0 %v4391
  %4428 = vmatpush.msra.mxu0 %v4390
  %4429 = vmatpush.msra.mxu0 %v4389
  %4430 = vmatpush.msra.mxu0 %v4388
  %4431 = vmatpush.msra.mxu0 %v4387
  %4432 = vmatpush.msra.mxu0 %v4386
  %4433 = vmatpush.msra.mxu0 %v4385
  %4434 = vmatpush.msra.mxu0 %v4384
  %4435 = vmatpush.msra.mxu0 %v4383
  %4436 = vmatpush.msra.mxu0 %v4382
  %4437 = vmatmul.f32.gmra.mxu0 %v4413
  %v4438 = vpop.f32.mrf.mxu0
  %v4439 = vadd.f32 0.0, %v4438
  %4440 = vmatmul.f32.gmra.mxu0 %v4414
  %v4441 = vpop.f32.mrf.mxu0
  %v4442 = vadd.f32 0.0, %v4441
  %4443 = vmatmul.f32.gmra.mxu0 %v4415
  %v4444 = vpop.f32.mrf.mxu0
  %v4445 = vadd.f32 0.0, %v4444
  %4446 = vmatmul.f32.gmra.mxu0 %v4416
  %v4447 = vpop.f32.mrf.mxu0
  %v4448 = vadd.f32 0.0, %v4447
  %4449 = vdwg.mxu0
  %4458 = vst [vmem:[#allocation1] ss:$2 sm:$0xff] %v4116
  %s4459 = scalar_lea.vmem [#allocation1], 1
  %4460 = vst [vmem:[%s4459] ss:$2 sm:$0xff] %v4117
  %s4461 = scalar_lea.vmem [#allocation1], 16
  %4462 = vst [vmem:[%s4461] ss:$2 sm:$0xff] %v4118
  %s4463 = scalar_lea.vmem [#allocation1], 17
  %4464 = vst [vmem:[%s4463] ss:$2 sm:$0xff] %v4119
  %s4465 = scalar_lea.vmem [#allocation1], 32
  %4466 = vst [vmem:[%s4465] ss:$2 sm:$0xff] %v4120
  %s4467 = scalar_lea.vmem [#allocation1], 33
  %4468 = vst [vmem:[%s4467] ss:$2 sm:$0xff] %v4121
  %s4469 = scalar_lea.vmem [#allocation1], 48
  %4470 = vst [vmem:[%s4469] ss:$2 sm:$0xff] %v4122
  %s4471 = scalar_lea.vmem [#allocation1], 49
  %4472 = vst [vmem:[%s4471] ss:$2 sm:$0xff] %v4123
  %v4473 = vld.sshfl [vmem:[#allocation1] sm:$0xff pattern:$0x75316420]
  %v4474 = vld.sshfl [vmem:[#allocation1 + $0x10] sm:$0xff pattern:$0x75316420]
  %v4475 = vld.sshfl [vmem:[#allocation1 + $0x20] sm:$0xff pattern:$0x75316420]
  %v4476 = vld.sshfl [vmem:[#allocation1 + $0x30] sm:$0xff pattern:$0x75316420]
  %4481 = vmatpush.msra.mxu0 %v4381
  %4482 = vmatpush.msra.mxu0 %v4380
  %4483 = vmatpush.msra.mxu0 %v4379
  %4484 = vmatpush.msra.mxu0 %v4378
  %4485 = vmatpush.msra.mxu0 %v4377
  %4486 = vmatpush.msra.mxu0 %v4376
  %4487 = vmatpush.msra.mxu0 %v4375
  %4488 = vmatpush.msra.mxu0 %v4374
  %4489 = vmatpush.msra.mxu0 %v4373
  %4490 = vmatpush.msra.mxu0 %v4372
  %4491 = vmatpush.msra.mxu0 %v4371
  %4492 = vmatpush.msra.mxu0 %v4370
  %4493 = vmatpush.msra.mxu0 %v4369
  %4494 = vmatpush.msra.mxu0 %v4368
  %4495 = vmatpush.msra.mxu0 %v4367
  %4496 = vmatpush.msra.mxu0 %v4366
  %4497 = vmatmul.f32.gmra.mxu0 %v4473
  %v4498 = vpop.f32.mrf.mxu0
  %v4499 = vadd.f32 %v4439, %v4498
  %4500 = vmatmul.f32.gmra.mxu0 %v4474
  %v4501 = vpop.f32.mrf.mxu0
  %v4502 = vadd.f32 %v4442, %v4501
  %4503 = vmatmul.f32.gmra.mxu0 %v4475
  %v4504 = vpop.f32.mrf.mxu0
  %v4505 = vadd.f32 %v4445, %v4504
  %4506 = vmatmul.f32.gmra.mxu0 %v4476
  %v4507 = vpop.f32.mrf.mxu0
  %v4508 = vadd.f32 %v4448, %v4507
  %4509 = vdwg.mxu0
  %v4510 = vadd.f32 %v4499, %v1991
  %v4511 = vadd.f32 %v4502, %v1991
  %v4512 = vadd.f32 %v4505, %v1991
  %v4513 = vadd.f32 %v4508, %v1991
  %s4514 = scalar_lea.vmem %s6, 448
  %4515 = vst [vmem:[%s4514] sm:$0xff] %v4510
  %4516 = vst [vmem:[%s4514 + $0x8] sm:$0xff] %v4511
  %4517 = vst [vmem:[%s4514 + $0x10] sm:$0xff] %v4512
  %4518 = vst [vmem:[%s4514 + $0x18] sm:$0xff] %v4513
  %v4519 = vld [vmem:[%s4] sm:$0xff]
  %v4520 = vld [vmem:[%s4 + $0x8] sm:$0xff]
  %v4521 = vld [vmem:[%s4 + $0x10] sm:$0xff]
  %v4522 = vld [vmem:[%s4 + $0x18] sm:$0xff]
  %v4523 = vld [vmem:[%s4 + $0x20] sm:$0xff]
  %v4524 = vld [vmem:[%s4 + $0x28] sm:$0xff]
  %v4525 = vld [vmem:[%s4 + $0x30] sm:$0xff]
  %v4526 = vld [vmem:[%s4 + $0x38] sm:$0xff]
  %v4527 = vld [vmem:[%s4 + $0x40] sm:$0xff]
  %v4528 = vld [vmem:[%s4 + $0x48] sm:$0xff]
  %v4529 = vld [vmem:[%s4 + $0x50] sm:$0xff]
  %v4530 = vld [vmem:[%s4 + $0x58] sm:$0xff]
  %v4531 = vld [vmem:[%s4 + $0x60] sm:$0xff]
  %v4532 = vld [vmem:[%s4 + $0x68] sm:$0xff]
  %v4533 = vld [vmem:[%s4 + $0x70] sm:$0xff]
  %v4534 = vld [vmem:[%s4 + $0x78] sm:$0xff]
  %v4535 = vld [vmem:[%s2382] sm:$0xff]
  %v4536 = vld [vmem:[%s2382 + $0x8] sm:$0xff]
  %v4537 = vld [vmem:[%s2382 + $0x10] sm:$0xff]
  %v4538 = vld [vmem:[%s2382 + $0x18] sm:$0xff]
  %v4539 = vld [vmem:[%s2382 + $0x20] sm:$0xff]
  %v4540 = vld [vmem:[%s2382 + $0x28] sm:$0xff]
  %v4541 = vld [vmem:[%s2382 + $0x30] sm:$0xff]
  %v4542 = vld [vmem:[%s2382 + $0x38] sm:$0xff]
  %v4543 = vld [vmem:[%s2382 + $0x40] sm:$0xff]
  %v4544 = vld [vmem:[%s2382 + $0x48] sm:$0xff]
  %v4545 = vld [vmem:[%s2382 + $0x50] sm:$0xff]
  %v4546 = vld [vmem:[%s2382 + $0x58] sm:$0xff]
  %v4547 = vld [vmem:[%s2382 + $0x60] sm:$0xff]
  %v4548 = vld [vmem:[%s2382 + $0x68] sm:$0xff]
  %v4549 = vld [vmem:[%s2382 + $0x70] sm:$0xff]
  %v4550 = vld [vmem:[%s2382 + $0x78] sm:$0xff]
  %4551 = vst [vmem:[#allocation1] ss:$2 sm:$0xff] %v4116
  %s4552 = scalar_lea.vmem [#allocation1], 1
  %4553 = vst [vmem:[%s4552] ss:$2 sm:$0xff] %v4117
  %s4554 = scalar_lea.vmem [#allocation1], 16
  %4555 = vst [vmem:[%s4554] ss:$2 sm:$0xff] %v4118
  %s4556 = scalar_lea.vmem [#allocation1], 17
  %4557 = vst [vmem:[%s4556] ss:$2 sm:$0xff] %v4119
  %s4558 = scalar_lea.vmem [#allocation1], 32
  %4559 = vst [vmem:[%s4558] ss:$2 sm:$0xff] %v4120
  %s4560 = scalar_lea.vmem [#allocation1], 33
  %4561 = vst [vmem:[%s4560] ss:$2 sm:$0xff] %v4121
  %s4562 = scalar_lea.vmem [#allocation1], 48
  %4563 = vst [vmem:[%s4562] ss:$2 sm:$0xff] %v4122
  %s4564 = scalar_lea.vmem [#allocation1], 49
  %4565 = vst [vmem:[%s4564] ss:$2 sm:$0xff] %v4123
  %v4566 = vld.sshfl [vmem:[#allocation1] sm:$0xff pattern:$0x75316420]
  %v4567 = vld.sshfl [vmem:[#allocation1 + $0x10] sm:$0xff pattern:$0x75316420]
  %v4568 = vld.sshfl [vmem:[#allocation1 + $0x20] sm:$0xff pattern:$0x75316420]
  %v4569 = vld.sshfl [vmem:[#allocation1 + $0x30] sm:$0xff pattern:$0x75316420]
  %4574 = vmatpush.msra.mxu0 %v4550
  %4575 = vmatpush.msra.mxu0 %v4549
  %4576 = vmatpush.msra.mxu0 %v4548
  %4577 = vmatpush.msra.mxu0 %v4547
  %4578 = vmatpush.msra.mxu0 %v4546
  %4579 = vmatpush.msra.mxu0 %v4545
  %4580 = vmatpush.msra.mxu0 %v4544
  %4581 = vmatpush.msra.mxu0 %v4543
  %4582 = vmatpush.msra.mxu0 %v4542
  %4583 = vmatpush.msra.mxu0 %v4541
  %4584 = vmatpush.msra.mxu0 %v4540
  %4585 = vmatpush.msra.mxu0 %v4539
  %4586 = vmatpush.msra.mxu0 %v4538
  %4587 = vmatpush.msra.mxu0 %v4537
  %4588 = vmatpush.msra.mxu0 %v4536
  %4589 = vmatpush.msra.mxu0 %v4535
  %4590 = vmatmul.f32.gmra.mxu0 %v4566
  %v4591 = vpop.f32.mrf.mxu0
  %v4592 = vadd.f32 0.0, %v4591
  %4593 = vmatmul.f32.gmra.mxu0 %v4567
  %v4594 = vpop.f32.mrf.mxu0
  %v4595 = vadd.f32 0.0, %v4594
  %4596 = vmatmul.f32.gmra.mxu0 %v4568
  %v4597 = vpop.f32.mrf.mxu0
  %v4598 = vadd.f32 0.0, %v4597
  %4599 = vmatmul.f32.gmra.mxu0 %v4569
  %v4600 = vpop.f32.mrf.mxu0
  %v4601 = vadd.f32 0.0, %v4600
  %4602 = vdwg.mxu0
  %4611 = vst [vmem:[#allocation1] ss:$2 sm:$0xff] %v4124
  %s4612 = scalar_lea.vmem [#allocation1], 1
  %4613 = vst [vmem:[%s4612] ss:$2 sm:$0xff] %v4125
  %s4614 = scalar_lea.vmem [#allocation1], 16
  %4615 = vst [vmem:[%s4614] ss:$2 sm:$0xff] %v4126
  %s4616 = scalar_lea.vmem [#allocation1], 17
  %4617 = vst [vmem:[%s4616] ss:$2 sm:$0xff] %v4127
  %s4618 = scalar_lea.vmem [#allocation1], 32
  %4619 = vst [vmem:[%s4618] ss:$2 sm:$0xff] %v4128
  %s4620 = scalar_lea.vmem [#allocation1], 33
  %4621 = vst [vmem:[%s4620] ss:$2 sm:$0xff] %v4129
  %s4622 = scalar_lea.vmem [#allocation1], 48
  %4623 = vst [vmem:[%s4622] ss:$2 sm:$0xff] %v4130
  %s4624 = scalar_lea.vmem [#allocation1], 49
  %4625 = vst [vmem:[%s4624] ss:$2 sm:$0xff] %v4131
  %v4626 = vld.sshfl [vmem:[#allocation1] sm:$0xff pattern:$0x75316420]
  %v4627 = vld.sshfl [vmem:[#allocation1 + $0x10] sm:$0xff pattern:$0x75316420]
  %v4628 = vld.sshfl [vmem:[#allocation1 + $0x20] sm:$0xff pattern:$0x75316420]
  %v4629 = vld.sshfl [vmem:[#allocation1 + $0x30] sm:$0xff pattern:$0x75316420]
  %4634 = vmatpush.msra.mxu0 %v4534
  %4635 = vmatpush.msra.mxu0 %v4533
  %4636 = vmatpush.msra.mxu0 %v4532
  %4637 = vmatpush.msra.mxu0 %v4531
  %4638 = vmatpush.msra.mxu0 %v4530
  %4639 = vmatpush.msra.mxu0 %v4529
  %4640 = vmatpush.msra.mxu0 %v4528
  %4641 = vmatpush.msra.mxu0 %v4527
  %4642 = vmatpush.msra.mxu0 %v4526
  %4643 = vmatpush.msra.mxu0 %v4525
  %4644 = vmatpush.msra.mxu0 %v4524
  %4645 = vmatpush.msra.mxu0 %v4523
  %4646 = vmatpush.msra.mxu0 %v4522
  %4647 = vmatpush.msra.mxu0 %v4521
  %4648 = vmatpush.msra.mxu0 %v4520
  %4649 = vmatpush.msra.mxu0 %v4519
  %4650 = vmatmul.f32.gmra.mxu0 %v4626
  %v4651 = vpop.f32.mrf.mxu0
  %v4652 = vadd.f32 %v4592, %v4651
  %4653 = vmatmul.f32.gmra.mxu0 %v4627
  %v4654 = vpop.f32.mrf.mxu0
  %v4655 = vadd.f32 %v4595, %v4654
  %4656 = vmatmul.f32.gmra.mxu0 %v4628
  %v4657 = vpop.f32.mrf.mxu0
  %v4658 = vadd.f32 %v4598, %v4657
  %4659 = vmatmul.f32.gmra.mxu0 %v4629
  %v4660 = vpop.f32.mrf.mxu0
  %v4661 = vadd.f32 %v4601, %v4660
  %4662 = vdwg.mxu0
  %v4663 = vld [vmem:[%s2511] sm:$0xff]
  %v4664 = vld [vmem:[%s2511 + $0x8] sm:$0xff]
  %v4665 = vld [vmem:[%s2511 + $0x10] sm:$0xff]
  %v4666 = vld [vmem:[%s2511 + $0x18] sm:$0xff]
  %v4667 = vld [vmem:[%s2511 + $0x20] sm:$0xff]
  %v4668 = vld [vmem:[%s2511 + $0x28] sm:$0xff]
  %v4669 = vld [vmem:[%s2511 + $0x30] sm:$0xff]
  %v4670 = vld [vmem:[%s2511 + $0x38] sm:$0xff]
  %v4671 = vld [vmem:[%s2511 + $0x40] sm:$0xff]
  %v4672 = vld [vmem:[%s2511 + $0x48] sm:$0xff]
  %v4673 = vld [vmem:[%s2511 + $0x50] sm:$0xff]
  %v4674 = vld [vmem:[%s2511 + $0x58] sm:$0xff]
  %v4675 = vld [vmem:[%s2511 + $0x60] sm:$0xff]
  %v4676 = vld [vmem:[%s2511 + $0x68] sm:$0xff]
  %v4677 = vld [vmem:[%s2511 + $0x70] sm:$0xff]
  %v4678 = vld [vmem:[%s2511 + $0x78] sm:$0xff]
  %4679 = vst [vmem:[#allocation1] ss:$2 sm:$0xff] %v4108
  %s4680 = scalar_lea.vmem [#allocation1], 1
  %4681 = vst [vmem:[%s4680] ss:$2 sm:$0xff] %v4109
  %s4682 = scalar_lea.vmem [#allocation1], 16
  %4683 = vst [vmem:[%s4682] ss:$2 sm:$0xff] %v4110
  %s4684 = scalar_lea.vmem [#allocation1], 17
  %4685 = vst [vmem:[%s4684] ss:$2 sm:$0xff] %v4111
  %s4686 = scalar_lea.vmem [#allocation1], 32
  %4687 = vst [vmem:[%s4686] ss:$2 sm:$0xff] %v4112
  %s4688 = scalar_lea.vmem [#allocation1], 33
  %4689 = vst [vmem:[%s4688] ss:$2 sm:$0xff] %v4113
  %s4690 = scalar_lea.vmem [#allocation1], 48
  %4691 = vst [vmem:[%s4690] ss:$2 sm:$0xff] %v4114
  %s4692 = scalar_lea.vmem [#allocation1], 49
  %4693 = vst [vmem:[%s4692] ss:$2 sm:$0xff] %v4115
  %v4694 = vld.sshfl [vmem:[#allocation1] sm:$0xff pattern:$0x75316420]
  %v4695 = vld.sshfl [vmem:[#allocation1 + $0x10] sm:$0xff pattern:$0x75316420]
  %v4696 = vld.sshfl [vmem:[#allocation1 + $0x20] sm:$0xff pattern:$0x75316420]
  %v4697 = vld.sshfl [vmem:[#allocation1 + $0x30] sm:$0xff pattern:$0x75316420]
  %4702 = vmatpush.msra.mxu0 %v4678
  %4703 = vmatpush.msra.mxu0 %v4677
  %4704 = vmatpush.msra.mxu0 %v4676
  %4705 = vmatpush.msra.mxu0 %v4675
  %4706 = vmatpush.msra.mxu0 %v4674
  %4707 = vmatpush.msra.mxu0 %v4673
  %4708 = vmatpush.msra.mxu0 %v4672
  %4709 = vmatpush.msra.mxu0 %v4671
  %4710 = vmatpush.msra.mxu0 %v4670
  %4711 = vmatpush.msra.mxu0 %v4669
  %4712 = vmatpush.msra.mxu0 %v4668
  %4713 = vmatpush.msra.mxu0 %v4667
  %4714 = vmatpush.msra.mxu0 %v4666
  %4715 = vmatpush.msra.mxu0 %v4665
  %4716 = vmatpush.msra.mxu0 %v4664
  %4717 = vmatpush.msra.mxu0 %v4663
  %4718 = vmatmul.f32.gmra.mxu0 %v4694
  %v4719 = vpop.f32.mrf.mxu0
  %v4720 = vadd.f32 0.0, %v4719
  %4721 = vmatmul.f32.gmra.mxu0 %v4695
  %v4722 = vpop.f32.mrf.mxu0
  %v4723 = vadd.f32 0.0, %v4722
  %4724 = vmatmul.f32.gmra.mxu0 %v4696
  %v4725 = vpop.f32.mrf.mxu0
  %v4726 = vadd.f32 0.0, %v4725
  %4727 = vmatmul.f32.gmra.mxu0 %v4697
  %v4728 = vpop.f32.mrf.mxu0
  %v4729 = vadd.f32 0.0, %v4728
  %4730 = vdwg.mxu0
  %v4731 = vadd.f32 %v4652, %v4720
  %v4732 = vadd.f32 %v4655, %v4723
  %v4733 = vadd.f32 %v4658, %v4726
  %v4734 = vadd.f32 %v4661, %v4729
  %v4735 = vld [vmem:[%s2584] sm:$0xff]
  %v4736 = vld [vmem:[%s2584 + $0x8] sm:$0xff]
  %v4737 = vld [vmem:[%s2584 + $0x10] sm:$0xff]
  %v4738 = vld [vmem:[%s2584 + $0x18] sm:$0xff]
  %v4739 = vld [vmem:[%s2584 + $0x20] sm:$0xff]
  %v4740 = vld [vmem:[%s2584 + $0x28] sm:$0xff]
  %v4741 = vld [vmem:[%s2584 + $0x30] sm:$0xff]
  %v4742 = vld [vmem:[%s2584 + $0x38] sm:$0xff]
  %v4743 = vld [vmem:[%s2584 + $0x40] sm:$0xff]
  %v4744 = vld [vmem:[%s2584 + $0x48] sm:$0xff]
  %v4745 = vld [vmem:[%s2584 + $0x50] sm:$0xff]
  %v4746 = vld [vmem:[%s2584 + $0x58] sm:$0xff]
  %v4747 = vld [vmem:[%s2584 + $0x60] sm:$0xff]
  %v4748 = vld [vmem:[%s2584 + $0x68] sm:$0xff]
  %v4749 = vld [vmem:[%s2584 + $0x70] sm:$0xff]
  %v4750 = vld [vmem:[%s2584 + $0x78] sm:$0xff]
  %4751 = vst [vmem:[#allocation1] ss:$2 sm:$0xff] %v4100
  %s4752 = scalar_lea.vmem [#allocation1], 1
  %4753 = vst [vmem:[%s4752] ss:$2 sm:$0xff] %v4101
  %s4754 = scalar_lea.vmem [#allocation1], 16
  %4755 = vst [vmem:[%s4754] ss:$2 sm:$0xff] %v4102
  %s4756 = scalar_lea.vmem [#allocation1], 17
  %4757 = vst [vmem:[%s4756] ss:$2 sm:$0xff] %v4103
  %s4758 = scalar_lea.vmem [#allocation1], 32
  %4759 = vst [vmem:[%s4758] ss:$2 sm:$0xff] %v4104
  %s4760 = scalar_lea.vmem [#allocation1], 33
  %4761 = vst [vmem:[%s4760] ss:$2 sm:$0xff] %v4105
  %s4762 = scalar_lea.vmem [#allocation1], 48
  %4763 = vst [vmem:[%s4762] ss:$2 sm:$0xff] %v4106
  %s4764 = scalar_lea.vmem [#allocation1], 49
  %4765 = vst [vmem:[%s4764] ss:$2 sm:$0xff] %v4107
  %v4766 = vld.sshfl [vmem:[#allocation1] sm:$0xff pattern:$0x75316420]
  %v4767 = vld.sshfl [vmem:[#allocation1 + $0x10] sm:$0xff pattern:$0x75316420]
  %v4768 = vld.sshfl [vmem:[#allocation1 + $0x20] sm:$0xff pattern:$0x75316420]
  %v4769 = vld.sshfl [vmem:[#allocation1 + $0x30] sm:$0xff pattern:$0x75316420]
  %4774 = vmatpush.msra.mxu0 %v4750
  %4775 = vmatpush.msra.mxu0 %v4749
  %4776 = vmatpush.msra.mxu0 %v4748
  %4777 = vmatpush.msra.mxu0 %v4747
  %4778 = vmatpush.msra.mxu0 %v4746
  %4779 = vmatpush.msra.mxu0 %v4745
  %4780 = vmatpush.msra.mxu0 %v4744
  %4781 = vmatpush.msra.mxu0 %v4743
  %4782 = vmatpush.msra.mxu0 %v4742
  %4783 = vmatpush.msra.mxu0 %v4741
  %4784 = vmatpush.msra.mxu0 %v4740
  %4785 = vmatpush.msra.mxu0 %v4739
  %4786 = vmatpush.msra.mxu0 %v4738
  %4787 = vmatpush.msra.mxu0 %v4737
  %4788 = vmatpush.msra.mxu0 %v4736
  %4789 = vmatpush.msra.mxu0 %v4735
  %4790 = vmatmul.f32.gmra.mxu0 %v4766
  %v4791 = vpop.f32.mrf.mxu0
  %v4792 = vadd.f32 0.0, %v4791
  %4793 = vmatmul.f32.gmra.mxu0 %v4767
  %v4794 = vpop.f32.mrf.mxu0
  %v4795 = vadd.f32 0.0, %v4794
  %4796 = vmatmul.f32.gmra.mxu0 %v4768
  %v4797 = vpop.f32.mrf.mxu0
  %v4798 = vadd.f32 0.0, %v4797
  %4799 = vmatmul.f32.gmra.mxu0 %v4769
  %v4800 = vpop.f32.mrf.mxu0
  %v4801 = vadd.f32 0.0, %v4800
  %4802 = vdwg.mxu0
  %v4803 = vadd.f32 %v4731, %v4792
  %v4804 = vadd.f32 %v4732, %v4795
  %v4805 = vadd.f32 %v4733, %v4798
  %v4806 = vadd.f32 %v4734, %v4801
  %v4807 = vadd.f32 %v4803, %v1991
  %v4808 = vadd.f32 %v4804, %v1991
  %v4809 = vadd.f32 %v4805, %v1991
  %v4810 = vadd.f32 %v4806, %v1991
  %s4811 = scalar_lea.vmem %s6, 480
  %4812 = vst [vmem:[%s4811] sm:$0xff] %v4807
  %4813 = vst [vmem:[%s4811 + $0x8] sm:$0xff] %v4808
  %4814 = vst [vmem:[%s4811 + $0x10] sm:$0xff] %v4809
  %4815 = vst [vmem:[%s4811 + $0x18] sm:$0xff] %v4810
  // Predicated region
  $region26: #{aut_enc_a_forward.1} parent=0 // pred_check
    _
  $region27: #{aut_enc_a_forward.1} parent=0 // pred_check_branch
    %4817 = sbr.rel (0) target = $region29
  $region28: #{aut_enc_a_forward.1} parent=0 // pred_region
    _
  $region29: #{aut_enc_a_forward.1} parent=0 // pred_fallthru
    _
  // Predicated region
  $region30: #{aut_enc_a_forward.1} parent=0 // pred_check
    _
  $region31: #{aut_enc_a_forward.1} parent=0 // pred_check_branch
    %4819 = sbr.rel (0) target = $region33
  $region32: #{aut_enc_a_forward.1} parent=0 // pred_region
    _
  $region33: #{aut_enc_a_forward.1} parent=0 // pred_fallthru
    _

</llo_original>
